<compile_context>
chip_gen: v7x
topology: tpu7x:2x2x1
jax: 0.10.0
libtpu: 0.0.40
codegen_flags: <defaults>
</compile_context>

<pallas_src>
import functools

import jax
import jax.numpy as jnp
from jax.experimental import pallas as pl
from jax.experimental.pallas import tpu as pltpu

LANES = 128


# ------------------------------- helpers -------------------------------

def _pick_tile(m, candidates=(2048, 1024, 512, 256, 128, 64, 32, 16)):
    """Largest candidate dividing m, preferring >= 4 grid steps (pipelining +
    megacore), then >= 2, else the largest divisor; falls back to m (1 step)."""
    for min_steps in (4, 2, 1):
        for c in candidates:
            if m % c == 0 and m // c >= min_steps:
                return c
    return m


# ----------------------------- Pallas kernels -----------------------------

def _fc0_kernel(x_ref, w_ref, b_ref, o32_ref, o16_ref):
    # Lift channels -> width.  K=4 is a degenerate MXU shape, but this runs once
    # and emitting both f32 and bf16 outputs here avoids a separate cast pass.
    x = x_ref[...].astype(w_ref.dtype)
    y = jnp.dot(x, w_ref[...], preferred_element_type=jnp.float32) + b_ref[...]
    o32_ref[...] = y
    o16_ref[...] = y.astype(jnp.bfloat16)


def fc0_pallas(x, w16, b, *, tm):
    M, K = x.shape
    N = w16.shape[1]
    return pl.pallas_call(
        _fc0_kernel,
        out_shape=(jax.ShapeDtypeStruct((M, N), jnp.float32),
                   jax.ShapeDtypeStruct((M, N), jnp.bfloat16)),
        grid=(M // tm,),
        in_specs=[pl.BlockSpec((tm, K), lambda i: (i, 0)),
                  pl.BlockSpec((K, N), lambda i: (0, 0)),
                  pl.BlockSpec((1, N), lambda i: (0, 0))],
        out_specs=(pl.BlockSpec((tm, N), lambda i: (i, 0)),
                   pl.BlockSpec((tm, N), lambda i: (i, 0))),
        compiler_params=pltpu.CompilerParams(
            dimension_semantics=("parallel",)),
    )(x, w16, b.reshape(1, N))


def _spectral_kernel(re_ref, im_ref, w_ref, ore_ref, oim_ref, *, width):
    # One real-embedded complex matmul per retained frequency:
    #   [re|im] @ [[wr, wi], [-wi, wr]] = [out_re | out_im]
    # Static Python loop -> fully unrolled back-to-back MXU pushes.
    fb = w_ref.shape[0]
    for f in range(fb):
        a = jnp.concatenate([re_ref[f], im_ref[f]], axis=-1)        # (B, 2w) bf16
        o = jnp.dot(a, w_ref[f], preferred_element_type=jnp.float32)  # (B, 2w) f32
        ore_ref[f] = o[:, :width]
        oim_ref[f] = o[:, width:]


def spectral_pallas(a_re, a_im, w_emb, *, fb, width):
    F, B, w = a_re.shape
    return pl.pallas_call(
        functools.partial(_spectral_kernel, width=width),
        out_shape=(jax.ShapeDtypeStruct((F, B, w), jnp.float32),
                   jax.ShapeDtypeStruct((F, B, w), jnp.float32)),
        grid=(F // fb,),
        in_specs=[pl.BlockSpec((fb, B, w), lambda p: (p, 0, 0)),
                  pl.BlockSpec((fb, B, w), lambda p: (p, 0, 0)),
                  pl.BlockSpec((fb, 2 * w, 2 * w), lambda p: (p, 0, 0))],
        out_specs=(pl.BlockSpec((fb, B, w), lambda p: (p, 0, 0)),
                   pl.BlockSpec((fb, B, w), lambda p: (p, 0, 0))),
        compiler_params=pltpu.CompilerParams(
            dimension_semantics=("parallel",)),
    )(a_re, a_im, w_emb)


def _conv_add_stats_kernel(spec_ref, x_ref, w_ref, b_ref,
                           s_ref, sum_ref, ssq_ref):
    # s = spec + (x @ blockdiag(W)) + b   (everything lane dense, 128 lanes)
    # plus per-tile PARTIAL sum / sum-of-squares (8,128) for training-mode BN
    # stats; final reduction happens outside (keeps the grid "parallel" so v7x
    # megacore can shard it).
    conv = jnp.dot(x_ref[...], w_ref[...], preferred_element_type=jnp.float32)
    s = spec_ref[...] + conv + b_ref[...]
    s_ref[...] = s
    tm4, L = s.shape
    sg = s.reshape(tm4 // 8, 8, L)          # aligns with (8,128) vreg tiling
    sum_ref[...] = jnp.sum(sg, axis=0)
    ssq_ref[...] = jnp.sum(sg * sg, axis=0)


def conv_add_stats_pallas(spec, x16, w_blk, b128, *, tm4):
    M4, L = spec.shape
    assert tm4 % 8 == 0
    nt = M4 // tm4
    return pl.pallas_call(
        _conv_add_stats_kernel,
        out_shape=(jax.ShapeDtypeStruct((M4, L), jnp.float32),
                   jax.ShapeDtypeStruct((nt * 8, L), jnp.float32),
                   jax.ShapeDtypeStruct((nt * 8, L), jnp.float32)),
        grid=(nt,),
        in_specs=[pl.BlockSpec((tm4, L), lambda i: (i, 0)),
                  pl.BlockSpec((tm4, L), lambda i: (i, 0)),
                  pl.BlockSpec((L, L), lambda i: (0, 0)),
                  pl.BlockSpec((1, L), lambda i: (0, 0))],
        out_specs=(pl.BlockSpec((tm4, L), lambda i: (i, 0)),
                   pl.BlockSpec((8, L), lambda i: (i, 0)),
                   pl.BlockSpec((8, L), lambda i: (i, 0))),
        compiler_params=pltpu.CompilerParams(
            dimension_semantics=("parallel",)),
    )(spec, x16, w_blk, b128.reshape(1, L))


def _bn_apply_kernel(s_ref, scale_ref, shift_ref, o32_ref, o16_ref, *, relu):
    # Lane-dense BN affine (+ optional ReLU); emits f32 (rfft2 input) and the
    # bf16 copy for the next block's 1x1 conv in one pass.
    y = s_ref[...] * scale_ref[...] + shift_ref[...]
    if relu:
        y = jnp.maximum(y, 0.0)
    o32_ref[...] = y
    o16_ref[...] = y.astype(jnp.bfloat16)


def bn_apply_pallas(s, scale128, shift128, *, relu, tm4):
    M4, L = s.shape
    return pl.pallas_call(
        functools.partial(_bn_apply_kernel, relu=relu),
        out_shape=(jax.ShapeDtypeStruct((M4, L), jnp.float32),
                   jax.ShapeDtypeStruct((M4, L), jnp.bfloat16)),
        grid=(M4 // tm4,),
        in_specs=[pl.BlockSpec((tm4, L), lambda i: (i, 0)),
                  pl.BlockSpec((1, L), lambda i: (0, 0)),
                  pl.BlockSpec((1, L), lambda i: (0, 0))],
        out_specs=(pl.BlockSpec((tm4, L), lambda i: (i, 0)),
                   pl.BlockSpec((tm4, L), lambda i: (i, 0))),
        compiler_params=pltpu.CompilerParams(
            dimension_semantics=("parallel",)),
    )(s, scale128, shift128)


def _mlp_head_kernel(x_ref, w1_ref, b1_ref, w2_ref, b2_ref, o_ref):
    # fused fc1 + ReLU + fc2; intermediate (tm, 128) never touches HBM.
    h = jnp.dot(x_ref[...], w1_ref[...], preferred_element_type=jnp.float32)
    h = jnp.maximum(h + b1_ref[...], 0.0)
    y = jnp.dot(h.astype(jnp.bfloat16), w2_ref[...],
                preferred_element_type=jnp.float32)
    o_ref[...] = y + b2_ref[...]


def mlp_head_pallas(x16, w1, b1, w2_pad, b2_pad, *, tm):
    M, K = x16.shape
    Nh = w1.shape[1]
    Np = w2_pad.shape[1]
    return pl.pallas_call(
        _mlp_head_kernel,
        out_shape=jax.ShapeDtypeStruct((M, Np), jnp.float32),
        grid=(M // tm,),
        in_specs=[pl.BlockSpec((tm, K), lambda i: (i, 0)),
                  pl.BlockSpec((K, Nh), lambda i: (0, 0)),
                  pl.BlockSpec((1, Nh), lambda i: (0, 0)),
                  pl.BlockSpec((Nh, Np), lambda i: (0, 0)),
                  pl.BlockSpec((1, Np), lambda i: (0, 0))],
        out_specs=pl.BlockSpec((tm, Np), lambda i: (i, 0)),  # lane-dense slab
        compiler_params=pltpu.CompilerParams(
            dimension_semantics=("parallel",)),
    )(x16, w1, b1.reshape(1, Nh), w2_pad, b2_pad.reshape(1, Np))


# ------------------------------ parameters ------------------------------

def init_params(key, *, n_layers, n_modes, width, channels):
    n1, n2 = n_modes
    F = 2 * n1 * n2        # retained frequencies: [weights1 modes ; weights2 modes]
    hidden = 128           # fc1 output width (fixed by the module)
    assert LANES % width == 0, "width must divide 128 for lane-dense packing"
    group = LANES // width

    def uniform(k, shape, lo, hi):
        return jax.random.uniform(k, shape, jnp.float32, lo, hi)

    keys = iter(jax.random.split(key, 6 + 4 * n_layers))
    params = {}

    b0 = 1.0 / (channels ** 0.5)
    params['fc0_w'] = uniform(next(keys), (channels, width), -b0, b0).astype(jnp.bfloat16)
    params['fc0_b'] = uniform(next(keys), (width,), -b0, b0)

    b1 = 1.0 / (width ** 0.5)
    params['fc1_w'] = uniform(next(keys), (width, hidden), -b1, b1).astype(jnp.bfloat16)
    params['fc1_b'] = uniform(next(keys), (hidden,), -b1, b1)

    b2 = 1.0 / (hidden ** 0.5)
    fc2_w = uniform(next(keys), (hidden, channels), -b2, b2)
    fc2_b = uniform(next(keys), (channels,), -b2, b2)
    # Lane-padded fc2 -> unmasked 128-wide stores; wrapper slices [:, :channels]
    n_pad = ((channels + LANES - 1) // LANES) * LANES
    params['fc2_w_pad'] = (jnp.zeros((hidden, n_pad), jnp.float32)
                           .at[:, :channels].set(fc2_w).astype(jnp.bfloat16))
    params['fc2_b_pad'] = jnp.zeros((n_pad,), jnp.float32).at[:channels].set(fc2_b)

    spec_scale = 1.0 / (width * width)
    bw = 1.0 / (width ** 0.5)              # Conv1d(width, width, 1) default bound
    blocks = []
    activations = []
    for layer in range(n_layers):
        # SpectralConv2d weights1 / weights2 (complex), stacked along frequency.
        w1 = spec_scale * uniform(next(keys), (n1, n2, width, width, 2), 0.0, 1.0)
        w2 = spec_scale * uniform(next(keys), (n1, n2, width, width, 2), 0.0, 1.0)
        wr = jnp.concatenate([w1[..., 0].reshape(n1 * n2, width, width),
                              w2[..., 0].reshape(n1 * n2, width, width)], axis=0)
        wi = jnp.concatenate([w1[..., 1].reshape(n1 * n2, width, width),
                              w2[..., 1].reshape(n1 * n2, width, width)], axis=0)
        # Compact per-frequency real embedding (no block-diagonal pair padding):
        #   [re|im] @ [[wr, wi], [-wi, wr]] = [out_re | out_im]
        w_emb = jnp.concatenate(
            [jnp.concatenate([wr, wi], axis=-1),
             jnp.concatenate([-wi, wr], axis=-1)], axis=-2)          # (F, 2w, 2w)

        w_mat = uniform(next(keys), (width, width), -bw, bw)         # (Cin, Cout)
        w_b = uniform(next(keys), (width,), -bw, bw)
        blocks.append({
            'spec_w': w_emb.astype(jnp.bfloat16),
            # 1x1 conv embedded block-diagonally so the residual path stays
            # lane dense: (M/4, 128) @ kron(I_group, W) == per-position x @ W.
            'w_blk': jnp.kron(jnp.eye(group, dtype=jnp.float32),
                              w_mat).astype(jnp.bfloat16),
            'w_b128': jnp.tile(w_b, group),                          # (128,)
            'bn_gamma': jnp.ones((width,), jnp.float32),
            'bn_beta': jnp.zeros((width,), jnp.float32),
        })
        activations.append(layer < n_layers - 1)   # last block: activation=False
    params['blocks'] = blocks
    return params, tuple(activations)


# ------------------------------- forward -------------------------------

def fno_forward(params, x, *, activations, n_modes, width):
    B, C_in, H, W = x.shape
    n1, n2 = n_modes
    M = B * H * W
    F = 2 * n1 * n2
    Wf = W // 2 + 1
    eps = 1e-5

    assert LANES % width == 0
    group = LANES // width
    assert (M * width) % LANES == 0
    M4 = (M * width) // LANES                      # rows of the lane-dense view

    tm = _pick_tile(M)                             # (M, .) kernels: fc0, mlp head
    tm4 = _pick_tile(M4)                           # lane-dense (M4, 128) kernels
    fb = _pick_tile(F, candidates=(32, 16, 8, 4, 2))   # frequencies per grid step

    # NCHW -> channels-last flat (tiny pass, fused by XLA with fc0 input DMA).
    x_flat = jnp.transpose(x, (0, 2, 3, 1)).reshape(M, C_in)

    # fc0: lift to `width` channels; emits f32 + bf16 in one pass.
    cur32, cur16 = fc0_pallas(x_flat, params['fc0_w'], params['fc0_b'], tm=tm)
    cur_dense = cur32.reshape(M4, LANES)           # free row-major views
    cur16_dense = cur16.reshape(M4, LANES)

    for blk, act in zip(params['blocks'], activations):
        # ---- SpectralConv2d ----
        # TODO(synk): rfft2 / irfft2 and the Fourier-mode scatter stay in plain
        # JAX -- there is no Pallas FFT primitive.
        x_ft = jnp.fft.rfft2(cur_dense.reshape(B, H, W, width), axes=(1, 2))
        modes = jnp.concatenate([x_ft[:, :n1, :n2, :],
                                 x_ft[:, H - n1:, :n2, :]], axis=1)  # (B,2n1,n2,w)
        modes = jnp.transpose(modes.reshape(B, F, width), (1, 0, 2))  # (F,B,w)
        m_re = jnp.real(modes).astype(jnp.bfloat16)
        m_im = jnp.imag(modes).astype(jnp.bfloat16)
        o_re, o_im = spectral_pallas(m_re, m_im, blk['spec_w'],
                                     fb=fb, width=width)
        o_c = jnp.transpose(jax.lax.complex(o_re, o_im), (1, 0, 2))
        o_c = o_c.reshape(B, 2 * n1, n2, width)
        out_ft = jnp.zeros((B, H, Wf, width), jnp.complex64)
        out_ft = out_ft.at[:, :n1, :n2, :].set(o_c[:, :n1])
        out_ft = out_ft.at[:, H - n1:, :n2, :].set(o_c[:, n1:])
        spec_dense = (jnp.fft.irfft2(out_ft, s=(H, W), axes=(1, 2))
                      .astype(jnp.float32).reshape(M4, LANES))

        # ---- fused 1x1 conv + residual add + BN partial stats (lane dense) ----
        s_dense, sum_p, ssq_p = conv_add_stats_pallas(
            spec_dense, cur16_dense, blk['w_blk'], blk['w_b128'], tm4=tm4)
        tot = jnp.sum(sum_p, axis=0).reshape(group, width).sum(axis=0)
        tsq = jnp.sum(ssq_p, axis=0).reshape(group, width).sum(axis=0)
        mean = tot / M
        var = jnp.maximum(tsq / M - mean * mean, 0.0)   # biased variance
        scale = blk['bn_gamma'] * jax.lax.rsqrt(var + eps)
        shift = blk['bn_beta'] - mean * scale
        scale128 = jnp.tile(scale, group).reshape(1, LANES)
        shift128 = jnp.tile(shift, group).reshape(1, LANES)

        # ---- BN affine (+ ReLU on all but the last block); emits f32 + bf16 ----
        cur_dense, cur16_dense = bn_apply_pallas(
            s_dense, scale128, shift128, relu=act, tm4=tm4)

    # ---- fused fc1 + ReLU + fc2 (lane-padded output slab) ----
    y_pad = mlp_head_pallas(cur16_dense.reshape(M, width),
                            params['fc1_w'], params['fc1_b'],
                            params['fc2_w_pad'], params['fc2_b_pad'], tm=tm)
    y = y_pad[:, :C_in]
    return jnp.transpose(y.reshape(B, H, W, C_in), (0, 3, 1, 2))


# --------------------------------- main ---------------------------------

if __name__ == "__main__":
    B, C, H, W = 2, 4, 16, 16
    width = 32
    n_modes = (8, 8)       # <= floor(N/2)+1
    n_layers = 2

    key = jax.random.PRNGKey(0)
    pkey, xkey = jax.random.split(key)
    params, activations = init_params(
        pkey, n_layers=n_layers, n_modes=n_modes, width=width, channels=C)
    x = jax.random.normal(xkey, (B, C, H, W), dtype=jnp.float32)

    fwd = jax.jit(functools.partial(
        fno_forward, activations=activations, n_modes=n_modes, width=width))
    out = jax.block_until_ready(fwd(params, x))

    assert out.shape == (B, C, H, W), out.shape
    assert out.dtype == jnp.float32
    assert bool(jnp.all(jnp.isfinite(out)))
    print("KERNEL_OK")
</pallas_src>

<mosaic_0001>
module attributes {stable_mosaic.version = 11 : i64} {
  func.func @_fc0_kernel(%arg0: i32, %arg1: memref<128x4xf32, #tpu.memory_space<vmem>>, %arg2: memref<4x32xbf16, #tpu.memory_space<vmem>>, %arg3: memref<1x32xf32, #tpu.memory_space<vmem>>, %arg4: memref<128x32xf32, #tpu.memory_space<vmem>>, %arg5: memref<128x32xbf16, #tpu.memory_space<vmem>>) attributes {dimension_semantics = [#tpu.dimension_semantics<parallel>], iteration_bounds = array<i64: 4>, scalar_prefetch = 0 : i64, scratch_operands = 0 : i64, tpu.core_type = #tpu.core_type<tc>, window_params = [{transform_indices = @transform_0, window_bounds = array<i64: 128, 4>}, {pipeline_mode = #tpu.pipeline_mode<synchronous>, transform_indices = @transform_1, window_bounds = array<i64: 4, 32>}, {pipeline_mode = #tpu.pipeline_mode<synchronous>, transform_indices = @transform_2, window_bounds = array<i64: 1, 32>}, {transform_indices = @transform_3, window_bounds = array<i64: 128, 32>}, {transform_indices = @transform_4, window_bounds = array<i64: 128, 32>}]} {
    %c0 = arith.constant 0 : index
    %c0_0 = arith.constant 0 : index
    %0 = vector.load %arg1[%c0, %c0_0] : memref<128x4xf32, #tpu.memory_space<vmem>>, vector<128x4xf32>
    %1 = arith.truncf %0 : vector<128x4xf32> to vector<128x4xbf16>
    %c0_1 = arith.constant 0 : index
    %c0_2 = arith.constant 0 : index
    %2 = vector.load %arg2[%c0_1, %c0_2] : memref<4x32xbf16, #tpu.memory_space<vmem>>, vector<4x32xbf16>
    %cst = arith.constant dense<0.000000e+00> : vector<128x32xf32>
    %3 = tpu.matmul %1, %2, %cst {dimension_numbers = #tpu.dot_dimension_numbers<[1], [0], [0], [1], [0, 0, 1, 1], [], []>} : vector<128x4xbf16>, vector<4x32xbf16>, vector<128x32xf32> -> vector<128x32xf32>
    %c0_3 = arith.constant 0 : index
    %c0_4 = arith.constant 0 : index
    %4 = vector.load %arg3[%c0_3, %c0_4] : memref<1x32xf32, #tpu.memory_space<vmem>>, vector<1x32xf32>
    %5 = vector.broadcast %4 : vector<1x32xf32> to vector<128x32xf32>
    %6 = arith.addf %3, %5 : vector<128x32xf32>
    %c0_5 = arith.constant 0 : index
    %c0_6 = arith.constant 0 : index
    %7 = vector.load %arg4[%c0_5, %c0_6] : memref<128x32xf32, #tpu.memory_space<vmem>>, vector<128x32xf32>
    tpu.vector_store %arg4[%c0_5, %c0_6], %6 {strides = array<i32>} : memref<128x32xf32, #tpu.memory_space<vmem>>, vector<128x32xf32>,
    %8 = arith.truncf %6 : vector<128x32xf32> to vector<128x32xbf16>
    %c0_7 = arith.constant 0 : index
    %c0_8 = arith.constant 0 : index
    %9 = vector.load %arg5[%c0_7, %c0_8] : memref<128x32xbf16, #tpu.memory_space<vmem>>, vector<128x32xbf16>
    tpu.vector_store %arg5[%c0_7, %c0_8], %8 {strides = array<i32>} : memref<128x32xbf16, #tpu.memory_space<vmem>>, vector<128x32xbf16>,
    return
  }
  func.func @transform_0(%arg0: i32) -> (i32, i32) {
    %c0_i32 = arith.constant 0 : i32
    %c0_i32_0 = arith.constant 0 : i32
    return %arg0, %c0_i32 : i32, i32
  }
  func.func @transform_1(%arg0: i32) -> (i32, i32) {
    %c0_i32 = arith.constant 0 : i32
    %c0_i32_0 = arith.constant 0 : i32
    %c0_i32_1 = arith.constant 0 : i32
    return %c0_i32, %c0_i32_0 : i32, i32
  }
  func.func @transform_2(%arg0: i32) -> (i32, i32) {
    %c0_i32 = arith.constant 0 : i32
    %c0_i32_0 = arith.constant 0 : i32
    %c0_i32_1 = arith.constant 0 : i32
    return %c0_i32, %c0_i32_0 : i32, i32
  }
  func.func @transform_3(%arg0: i32) -> (i32, i32) {
    %c0_i32 = arith.constant 0 : i32
    %c0_i32_0 = arith.constant 0 : i32
    return %arg0, %c0_i32 : i32, i32
  }
  func.func @transform_4(%arg0: i32) -> (i32, i32) {
    %c0_i32 = arith.constant 0 : i32
    %c0_i32_0 = arith.constant 0 : i32
    return %arg0, %c0_i32 : i32, i32
  }
}

module attributes {stable_mosaic.version = 11 : i64} {
  func.func @_spectral_kernel(%arg0: i32, %arg1: memref<32x2x32xbf16, #tpu.memory_space<vmem>>, %arg2: memref<32x2x32xbf16, #tpu.memory_space<vmem>>, %arg3: memref<32x64x64xbf16, #tpu.memory_space<vmem>>, %arg4: memref<32x2x32xf32, #tpu.memory_space<vmem>>, %arg5: memref<32x2x32xf32, #tpu.memory_space<vmem>>) attributes {dimension_semantics = [#tpu.dimension_semantics<parallel>], iteration_bounds = array<i64: 4>, scalar_prefetch = 0 : i64, scratch_operands = 0 : i64, tpu.core_type = #tpu.core_type<tc>, window_params = [{transform_indices = @transform_0, window_bounds = array<i64: 32, 2, 32>}, {transform_indices = @transform_1, window_bounds = array<i64: 32, 2, 32>}, {transform_indices = @transform_2, window_bounds = array<i64: 32, 64, 64>}, {transform_indices = @transform_3, window_bounds = array<i64: 32, 2, 32>}, {transform_indices = @transform_4, window_bounds = array<i64: 32, 2, 32>}]} {
    %c0 = arith.constant 0 : index
    %c0_0 = arith.constant 0 : index
    %c0_1 = arith.constant 0 : index
    %0 = vector.load %arg1[%c0, %c0_0, %c0_1] : memref<32x2x32xbf16, #tpu.memory_space<vmem>>, vector<1x2x32xbf16>
    %1 = vector.shape_cast %0 : vector<1x2x32xbf16> to vector<2x32xbf16>
    %c0_2 = arith.constant 0 : index
    %c0_3 = arith.constant 0 : index
    %c0_4 = arith.constant 0 : index
    %2 = vector.load %arg2[%c0_2, %c0_3, %c0_4] : memref<32x2x32xbf16, #tpu.memory_space<vmem>>, vector<1x2x32xbf16>
    %3 = vector.shape_cast %2 : vector<1x2x32xbf16> to vector<2x32xbf16>
    %4 = tpu.concatenate %1, %3 in 1 : vector<2x32xbf16>, vector<2x32xbf16> -> vector<2x64xbf16>
    %c0_5 = arith.constant 0 : index
    %c0_6 = arith.constant 0 : index
    %c0_7 = arith.constant 0 : index
    %5 = vector.load %arg3[%c0_5, %c0_6, %c0_7] : memref<32x64x64xbf16, #tpu.memory_space<vmem>>, vector<1x64x64xbf16>
    %6 = vector.shape_cast %5 : vector<1x64x64xbf16> to vector<64x64xbf16>
    %cst = arith.constant dense<0.000000e+00> : vector<2x64xf32>
    %7 = tpu.matmul %4, %6, %cst {dimension_numbers = #tpu.dot_dimension_numbers<[1], [0], [0], [1], [0, 0, 1, 1], [], []>} : vector<2x64xbf16>, vector<64x64xbf16>, vector<2x64xf32> -> vector<2x64xf32>
    %8 = vector.extract_strided_slice %7 {offsets = [0, 0], sizes = [2, 32], strides = [1, 1]} : vector<2x64xf32> to vector<2x32xf32>
    %c0_8 = arith.constant 0 : index
    %c0_9 = arith.constant 0 : index
    %c0_10 = arith.constant 0 : index
    %9 = vector.load %arg4[%c0_8, %c0_9, %c0_10] : memref<32x2x32xf32, #tpu.memory_space<vmem>>, vector<1x2x32xf32>
    %10 = vector.shape_cast %9 : vector<1x2x32xf32> to vector<2x32xf32>
    %11 = vector.shape_cast %8 : vector<2x32xf32> to vector<1x2x32xf32>
    tpu.vector_store %arg4[%c0_8, %c0_9, %c0_10], %11 {strides = array<i32>} : memref<32x2x32xf32, #tpu.memory_space<vmem>>, vector<1x2x32xf32>,
    %12 = vector.extract_strided_slice %7 {offsets = [0, 32], sizes = [2, 32], strides = [1, 1]} : vector<2x64xf32> to vector<2x32xf32>
    %c0_11 = arith.constant 0 : index
    %c0_12 = arith.constant 0 : index
    %c0_13 = arith.constant 0 : index
    %13 = vector.load %arg5[%c0_11, %c0_12, %c0_13] : memref<32x2x32xf32, #tpu.memory_space<vmem>>, vector<1x2x32xf32>
    %14 = vector.shape_cast %13 : vector<1x2x32xf32> to vector<2x32xf32>
    %15 = vector.shape_cast %12 : vector<2x32xf32> to vector<1x2x32xf32>
    tpu.vector_store %arg5[%c0_11, %c0_12, %c0_13], %15 {strides = array<i32>} : memref<32x2x32xf32, #tpu.memory_space<vmem>>, vector<1x2x32xf32>,
    %c1 = arith.constant 1 : index
    %c0_14 = arith.constant 0 : index
    %c0_15 = arith.constant 0 : index
    %16 = vector.load %arg1[%c1, %c0_14, %c0_15] : memref<32x2x32xbf16, #tpu.memory_space<vmem>>, vector<1x2x32xbf16>
    %17 = vector.shape_cast %16 : vector<1x2x32xbf16> to vector<2x32xbf16>
    %c1_16 = arith.constant 1 : index
    %c0_17 = arith.constant 0 : index
    %c0_18 = arith.constant 0 : index
    %18 = vector.load %arg2[%c1_16, %c0_17, %c0_18] : memref<32x2x32xbf16, #tpu.memory_space<vmem>>, vector<1x2x32xbf16>
    %19 = vector.shape_cast %18 : vector<1x2x32xbf16> to vector<2x32xbf16>
    %20 = tpu.concatenate %17, %19 in 1 : vector<2x32xbf16>, vector<2x32xbf16> -> vector<2x64xbf16>
    %c1_19 = arith.constant 1 : index
    %c0_20 = arith.constant 0 : index
    %c0_21 = arith.constant 0 : index
    %21 = vector.load %arg3[%c1_19, %c0_20, %c0_21] : memref<32x64x64xbf16, #tpu.memory_space<vmem>>, vector<1x64x64xbf16>
    %22 = vector.shape_cast %21 : vector<1x64x64xbf16> to vector<64x64xbf16>
    %cst_22 = arith.constant dense<0.000000e+00> : vector<2x64xf32>
    %23 = tpu.matmul %20, %22, %cst_22 {dimension_numbers = #tpu.dot_dimension_numbers<[1], [0], [0], [1], [0, 0, 1, 1], [], []>} : vector<2x64xbf16>, vector<64x64xbf16>, vector<2x64xf32> -> vector<2x64xf32>
    %24 = vector.extract_strided_slice %23 {offsets = [0, 0], sizes = [2, 32], strides = [1, 1]} : vector<2x64xf32> to vector<2x32xf32>
    %c1_23 = arith.constant 1 : index
    %c0_24 = arith.constant 0 : index
    %c0_25 = arith.constant 0 : index
    %25 = vector.load %arg4[%c1_23, %c0_24, %c0_25] : memref<32x2x32xf32, #tpu.memory_space<vmem>>, vector<1x2x32xf32>
    %26 = vector.shape_cast %25 : vector<1x2x32xf32> to vector<2x32xf32>
    %27 = vector.shape_cast %24 : vector<2x32xf32> to vector<1x2x32xf32>
    tpu.vector_store %arg4[%c1_23, %c0_24, %c0_25], %27 {strides = array<i32>} : memref<32x2x32xf32, #tpu.memory_space<vmem>>, vector<1x2x32xf32>,
    %28 = vector.extract_strided_slice %23 {offsets = [0, 32], sizes = [2, 32], strides = [1, 1]} : vector<2x64xf32> to vector<2x32xf32>
    %c1_26 = arith.constant 1 : index
    %c0_27 = arith.constant 0 : index
    %c0_28 = arith.constant 0 : index
    %29 = vector.load %arg5[%c1_26, %c0_27, %c0_28] : memref<32x2x32xf32, #tpu.memory_space<vmem>>, vector<1x2x32xf32>
    %30 = vector.shape_cast %29 : vector<1x2x32xf32> to vector<2x32xf32>
    %31 = vector.shape_cast %28 : vector<2x32xf32> to vector<1x2x32xf32>
    tpu.vector_store %arg5[%c1_26, %c0_27, %c0_28], %31 {strides = array<i32>} : memref<32x2x32xf32, #tpu.memory_space<vmem>>, vector<1x2x32xf32>,
    %c2 = arith.constant 2 : index
    %c0_29 = arith.constant 0 : index
    %c0_30 = arith.constant 0 : index
    %32 = vector.load %arg1[%c2, %c0_29, %c0_30] : memref<32x2x32xbf16, #tpu.memory_space<vmem>>, vector<1x2x32xbf16>
    %33 = vector.shape_cast %32 : vector<1x2x32xbf16> to vector<2x32xbf16>
    %c2_31 = arith.constant 2 : index
    %c0_32 = arith.constant 0 : index
    %c0_33 = arith.constant 0 : index
    %34 = vector.load %arg2[%c2_31, %c0_32, %c0_33] : memref<32x2x32xbf16, #tpu.memory_space<vmem>>, vector<1x2x32xbf16>
    %35 = vector.shape_cast %34 : vector<1x2x32xbf16> to vector<2x32xbf16>
    %36 = tpu.concatenate %33, %35 in 1 : vector<2x32xbf16>, vector<2x32xbf16> -> vector<2x64xbf16>
    %c2_34 = arith.constant 2 : index
    %c0_35 = arith.constant 0 : index
    %c0_36 = arith.constant 0 : index
    %37 = vector.load %arg3[%c2_34, %c0_35, %c0_36] : memref<32x64x64xbf16, #tpu.memory_space<vmem>>, vector<1x64x64xbf16>
    %38 = vector.shape_cast %37 : vector<1x64x64xbf16> to vector<64x64xbf16>
    %cst_37 = arith.constant dense<0.000000e+00> : vector<2x64xf32>
    %39 = tpu.matmul %36, %38, %cst_37 {dimension_numbers = #tpu.dot_dimension_numbers<[1], [0], [0], [1], [0, 0, 1, 1], [], []>} : vector<2x64xbf16>, vector<64x64xbf16>, vector<2x64xf32> -> vector<2x64xf32>
    %40 = vector.extract_strided_slice %39 {offsets = [0, 0], sizes = [2, 32], strides = [1, 1]} : vector<2x64xf32> to vector<2x32xf32>
    %c2_38 = arith.constant 2 : index
    %c0_39 = arith.constant 0 : index
    %c0_40 = arith.constant 0 : index
    %41 = vector.load %arg4[%c2_38, %c0_39, %c0_40] : memref<32x2x32xf32, #tpu.memory_space<vmem>>, vector<1x2x32xf32>
    %42 = vector.shape_cast %41 : vector<1x2x32xf32> to vector<2x32xf32>
    %43 = vector.shape_cast %40 : vector<2x32xf32> to vector<1x2x32xf32>
    tpu.vector_store %arg4[%c2_38, %c0_39, %c0_40], %43 {strides = array<i32>} : memref<32x2x32xf32, #tpu.memory_space<vmem>>, vector<1x2x32xf32>,
    %44 = vector.extract_strided_slice %39 {offsets = [0, 32], sizes = [2, 32], strides = [1, 1]} : vector<2x64xf32> to vector<2x32xf32>
    %c2_41 = arith.constant 2 : index
    %c0_42 = arith.constant 0 : index
    %c0_43 = arith.constant 0 : index
    %45 = vector.load %arg5[%c2_41, %c0_42, %c0_43] : memref<32x2x32xf32, #tpu.memory_space<vmem>>, vector<1x2x32xf32>
    %46 = vector.shape_cast %45 : vector<1x2x32xf32> to vector<2x32xf32>
    %47 = vector.shape_cast %44 : vector<2x32xf32> to vector<1x2x32xf32>
    tpu.vector_store %arg5[%c2_41, %c0_42, %c0_43], %47 {strides = array<i32>} : memref<32x2x32xf32, #tpu.memory_space<vmem>>, vector<1x2x32xf32>,
    %c3 = arith.constant 3 : index
    %c0_44 = arith.constant 0 : index
    %c0_45 = arith.constant 0 : index
    %48 = vector.load %arg1[%c3, %c0_44, %c0_45] : memref<32x2x32xbf16, #tpu.memory_space<vmem>>, vector<1x2x32xbf16>
    %49 = vector.shape_cast %48 : vector<1x2x32xbf16> to vector<2x32xbf16>
    %c3_46 = arith.constant 3 : index
    %c0_47 = arith.constant 0 : index
    %c0_48 = arith.constant 0 : index
    %50 = vector.load %arg2[%c3_46, %c0_47, %c0_48] : memref<32x2x32xbf16, #tpu.memory_space<vmem>>, vector<1x2x32xbf16>
    %51 = vector.shape_cast %50 : vector<1x2x32xbf16> to vector<2x32xbf16>
    %52 = tpu.concatenate %49, %51 in 1 : vector<2x32xbf16>, vector<2x32xbf16> -> vector<2x64xbf16>
    %c3_49 = arith.constant 3 : index
    %c0_50 = arith.constant 0 : index
    %c0_51 = arith.constant 0 : index
    %53 = vector.load %arg3[%c3_49, %c0_50, %c0_51] : memref<32x64x64xbf16, #tpu.memory_space<vmem>>, vector<1x64x64xbf16>
    %54 = vector.shape_cast %53 : vector<1x64x64xbf16> to vector<64x64xbf16>
    %cst_52 = arith.constant dense<0.000000e+00> : vector<2x64xf32>
    %55 = tpu.matmul %52, %54, %cst_52 {dimension_numbers = #tpu.dot_dimension_numbers<[1], [0], [0], [1], [0, 0, 1, 1], [], []>} : vector<2x64xbf16>, vector<64x64xbf16>, vector<2x64xf32> -> vector<2x64xf32>
    %56 = vector.extract_strided_slice %55 {offsets = [0, 0], sizes = [2, 32], strides = [1, 1]} : vector<2x64xf32> to vector<2x32xf32>
    %c3_53 = arith.constant 3 : index
    %c0_54 = arith.constant 0 : index
    %c0_55 = arith.constant 0 : index
    %57 = vector.load %arg4[%c3_53, %c0_54, %c0_55] : memref<32x2x32xf32, #tpu.memory_space<vmem>>, vector<1x2x32xf32>
    %58 = vector.shape_cast %57 : vector<1x2x32xf32> to vector<2x32xf32>
    %59 = vector.shape_cast %56 : vector<2x32xf32> to vector<1x2x32xf32>
    tpu.vector_store %arg4[%c3_53, %c0_54, %c0_55], %59 {strides = array<i32>} : memref<32x2x32xf32, #tpu.memory_space<vmem>>, vector<1x2x32xf32>,
    %60 = vector.extract_strided_slice %55 {offsets = [0, 32], sizes = [2, 32], strides = [1, 1]} : vector<2x64xf32> to vector<2x32xf32>
    %c3_56 = arith.constant 3 : index
    %c0_57 = arith.constant 0 : index
    %c0_58 = arith.constant 0 : index
    %61 = vector.load %arg5[%c3_56, %c0_57, %c0_58] : memref<32x2x32xf32, #tpu.memory_space<vmem>>, vector<1x2x32xf32>
    %62 = vector.shape_cast %61 : vector<1x2x32xf32> to vector<2x32xf32>
    %63 = vector.shape_cast %60 : vector<2x32xf32> to vector<1x2x32xf32>
    tpu.vector_store %arg5[%c3_56, %c0_57, %c0_58], %63 {strides = array<i32>} : memref<32x2x32xf32, #tpu.memory_space<vmem>>, vector<1x2x32xf32>,
    %c4 = arith.constant 4 : index
    %c0_59 = arith.constant 0 : index
    %c0_60 = arith.constant 0 : index
    %64 = vector.load %arg1[%c4, %c0_59, %c0_60] : memref<32x2x32xbf16, #tpu.memory_space<vmem>>, vector<1x2x32xbf16>
    %65 = vector.shape_cast %64 : vector<1x2x32xbf16> to vector<2x32xbf16>
    %c4_61 = arith.constant 4 : index
    %c0_62 = arith.constant 0 : index
    %c0_63 = arith.constant 0 : index
    %66 = vector.load %arg2[%c4_61, %c0_62, %c0_63] : memref<32x2x32xbf16, #tpu.memory_space<vmem>>, vector<1x2x32xbf16>
    %67 = vector.shape_cast %66 : vector<1x2x32xbf16> to vector<2x32xbf16>
    %68 = tpu.concatenate %65, %67 in 1 : vector<2x32xbf16>, vector<2x32xbf16> -> vector<2x64xbf16>
    %c4_64 = arith.constant 4 : index
    %c0_65 = arith.constant 0 : index
    %c0_66 = arith.constant 0 : index
    %69 = vector.load %arg3[%c4_64, %c0_65, %c0_66] : memref<32x64x64xbf16, #tpu.memory_space<vmem>>, vector<1x64x64xbf16>
    %70 = vector.shape_cast %69 : vector<1x64x64xbf16> to vector<64x64xbf16>
    %cst_67 = arith.constant dense<0.000000e+00> : vector<2x64xf32>
    %71 = tpu.matmul %68, %70, %cst_67 {dimension_numbers = #tpu.dot_dimension_numbers<[1], [0], [0], [1], [0, 0, 1, 1], [], []>} : vector<2x64xbf16>, vector<64x64xbf16>, vector<2x64xf32> -> vector<2x64xf32>
    %72 = vector.extract_strided_slice %71 {offsets = [0, 0], sizes = [2, 32], strides = [1, 1]} : vector<2x64xf32> to vector<2x32xf32>
    %c4_68 = arith.constant 4 : index
    %c0_69 = arith.constant 0 : index
    %c0_70 = arith.constant 0 : index
    %73 = vector.load %arg4[%c4_68, %c0_69, %c0_70] : memref<32x2x32xf32, #tpu.memory_space<vmem>>, vector<1x2x32xf32>
    %74 = vector.shape_cast %73 : vector<1x2x32xf32> to vector<2x32xf32>
    %75 = vector.shape_cast %72 : vector<2x32xf32> to vector<1x2x32xf32>
    tpu.vector_store %arg4[%c4_68, %c0_69, %c0_70], %75 {strides = array<i32>} : memref<32x2x32xf32, #tpu.memory_space<vmem>>, vector<1x2x32xf32>,
    %76 = vector.extract_strided_slice %71 {offsets = [0, 32], sizes = [2, 32], strides = [1, 1]} : vector<2x64xf32> to vector<2x32xf32>
    %c4_71 = arith.constant 4 : index
    %c0_72 = arith.constant 0 : index
    %c0_73 = arith.constant 0 : index
    %77 = vector.load %arg5[%c4_71, %c0_72, %c0_73] : memref<32x2x32xf32, #tpu.memory_space<vmem>>, vector<1x2x32xf32>
    %78 = vector.shape_cast %77 : vector<1x2x32xf32> to vector<2x32xf32>
    %79 = vector.shape_cast %76 : vector<2x32xf32> to vector<1x2x32xf32>
    tpu.vector_store %arg5[%c4_71, %c0_72, %c0_73], %79 {strides = array<i32>} : memref<32x2x32xf32, #tpu.memory_space<vmem>>, vector<1x2x32xf32>,
    %c5 = arith.constant 5 : index
    %c0_74 = arith.constant 0 : index
    %c0_75 = arith.constant 0 : index
    %80 = vector.load %arg1[%c5, %c0_74, %c0_75] : memref<32x2x32xbf16, #tpu.memory_space<vmem>>, vector<1x2x32xbf16>
    %81 = vector.shape_cast %80 : vector<1x2x32xbf16> to vector<2x32xbf16>
    %c5_76 = arith.constant 5 : index
    %c0_77 = arith.constant 0 : index
    %c0_78 = arith.constant 0 : index
    %82 = vector.load %arg2[%c5_76, %c0_77, %c0_78] : memref<32x2x32xbf16, #tpu.memory_space<vmem>>, vector<1x2x32xbf16>
    %83 = vector.shape_cast %82 : vector<1x2x32xbf16> to vector<2x32xbf16>
    %84 = tpu.concatenate %81, %83 in 1 : vector<2x32xbf16>, vector<2x32xbf16> -> vector<2x64xbf16>
    %c5_79 = arith.constant 5 : index
    %c0_80 = arith.constant 0 : index
    %c0_81 = arith.constant 0 : index
    %85 = vector.load %arg3[%c5_79, %c0_80, %c0_81] : memref<32x64x64xbf16, #tpu.memory_space<vmem>>, vector<1x64x64xbf16>
    %86 = vector.shape_cast %85 : vector<1x64x64xbf16> to vector<64x64xbf16>
    %cst_82 = arith.constant dense<0.000000e+00> : vector<2x64xf32>
    %87 = tpu.matmul %84, %86, %cst_82 {dimension_numbers = #tpu.dot_dimension_numbers<[1], [0], [0], [1], [0, 0, 1, 1], [], []>} : vector<2x64xbf16>, vector<64x64xbf16>, vector<2x64xf32> -> vector<2x64xf32>
    %88 = vector.extract_strided_slice %87 {offsets = [0, 0], sizes = [2, 32], strides = [1, 1]} : vector<2x64xf32> to vector<2x32xf32>
    %c5_83 = arith.constant 5 : index
    %c0_84 = arith.constant 0 : index
    %c0_85 = arith.constant 0 : index
    %89 = vector.load %arg4[%c5_83, %c0_84, %c0_85] : memref<32x2x32xf32, #tpu.memory_space<vmem>>, vector<1x2x32xf32>
    %90 = vector.shape_cast %89 : vector<1x2x32xf32> to vector<2x32xf32>
    %91 = vector.shape_cast %88 : vector<2x32xf32> to vector<1x2x32xf32>
    tpu.vector_store %arg4[%c5_83, %c0_84, %c0_85], %91 {strides = array<i32>} : memref<32x2x32xf32, #tpu.memory_space<vmem>>, vector<1x2x32xf32>,
    %92 = vector.extract_strided_slice %87 {offsets = [0, 32], sizes = [2, 32], strides = [1, 1]} : vector<2x64xf32> to vector<2x32xf32>
    %c5_86 = arith.constant 5 : index
    %c0_87 = arith.constant 0 : index
    %c0_88 = arith.constant 0 : index
    %93 = vector.load %arg5[%c5_86, %c0_87, %c0_88] : memref<32x2x32xf32, #tpu.memory_space<vmem>>, vector<1x2x32xf32>
    %94 = vector.shape_cast %93 : vector<1x2x32xf32> to vector<2x32xf32>
    %95 = vector.shape_cast %92 : vector<2x32xf32> to vector<1x2x32xf32>
    tpu.vector_store %arg5[%c5_86, %c0_87, %c0_88], %95 {strides = array<i32>} : memref<32x2x32xf32, #tpu.memory_space<vmem>>, vector<1x2x32xf32>,
    %c6 = arith.constant 6 : index
    %c0_89 = arith.constant 0 : index
    %c0_90 = arith.constant 0 : index
    %96 = vector.load %arg1[%c6, %c0_89, %c0_90] : memref<32x2x32xbf16, #tpu.memory_space<vmem>>, vector<1x2x32xbf16>
    %97 = vector.shape_cast %96 : vector<1x2x32xbf16> to vector<2x32xbf16>
    %c6_91 = arith.constant 6 : index
    %c0_92 = arith.constant 0 : index
    %c0_93 = arith.constant 0 : index
    %98 = vector.load %arg2[%c6_91, %c0_92, %c0_93] : memref<32x2x32xbf16, #tpu.memory_space<vmem>>, vector<1x2x32xbf16>
    %99 = vector.shape_cast %98 : vector<1x2x32xbf16> to vector<2x32xbf16>
    %100 = tpu.concatenate %97, %99 in 1 : vector<2x32xbf16>, vector<2x32xbf16> -> vector<2x64xbf16>
    %c6_94 = arith.constant 6 : index
    %c0_95 = arith.constant 0 : index
    %c0_96 = arith.constant 0 : index
    %101 = vector.load %arg3[%c6_94, %c0_95, %c0_96] : memref<32x64x64xbf16, #tpu.memory_space<vmem>>, vector<1x64x64xbf16>
    %102 = vector.shape_cast %101 : vector<1x64x64xbf16> to vector<64x64xbf16>
    %cst_97 = arith.constant dense<0.000000e+00> : vector<2x64xf32>
    %103 = tpu.matmul %100, %102, %cst_97 {dimension_numbers = #tpu.dot_dimension_numbers<[1], [0], [0], [1], [0, 0, 1, 1], [], []>} : vector<2x64xbf16>, vector<64x64xbf16>, vector<2x64xf32> -> vector<2x64xf32>
    %104 = vector.extract_strided_slice %103 {offsets = [0, 0], sizes = [2, 32], strides = [1, 1]} : vector<2x64xf32> to vector<2x32xf32>
    %c6_98 = arith.constant 6 : index
    %c0_99 = arith.constant 0 : index
    %c0_100 = arith.constant 0 : index
    %105 = vector.load %arg4[%c6_98, %c0_99, %c0_100] : memref<32x2x32xf32, #tpu.memory_space<vmem>>, vector<1x2x32xf32>
    %106 = vector.shape_cast %105 : vector<1x2x32xf32> to vector<2x32xf32>
    %107 = vector.shape_cast %104 : vector<2x32xf32> to vector<1x2x32xf32>
    tpu.vector_store %arg4[%c6_98, %c0_99, %c0_100], %107 {strides = array<i32>} : memref<32x2x32xf32, #tpu.memory_space<vmem>>, vector<1x2x32xf32>,
    %108 = vector.extract_strided_slice %103 {offsets = [0, 32], sizes = [2, 32], strides = [1, 1]} : vector<2x64xf32> to vector<2x32xf32>
    %c6_101 = arith.constant 6 : index
    %c0_102 = arith.constant 0 : index
    %c0_103 = arith.constant 0 : index
    %109 = vector.load %arg5[%c6_101, %c0_102, %c0_103] : memref<32x2x32xf32, #tpu.memory_space<vmem>>, vector<1x2x32xf32>
    %110 = vector.shape_cast %109 : vector<1x2x32xf32> to vector<2x32xf32>
    %111 = vector.shape_cast %108 : vector<2x32xf32> to vector<1x2x32xf32>
    tpu.vector_store %arg5[%c6_101, %c0_102, %c0_103], %111 {strides = array<i32>} : memref<32x2x32xf32, #tpu.memory_space<vmem>>, vector<1x2x32xf32>,
    %c7 = arith.constant 7 : index
    %c0_104 = arith.constant 0 : index
    %c0_105 = arith.constant 0 : index
    %112 = vector.load %arg1[%c7, %c0_104, %c0_105] : memref<32x2x32xbf16, #tpu.memory_space<vmem>>, vector<1x2x32xbf16>
    %113 = vector.shape_cast %112 : vector<1x2x32xbf16> to vector<2x32xbf16>
    %c7_106 = arith.constant 7 : index
    %c0_107 = arith.constant 0 : index
    %c0_108 = arith.constant 0 : index
    %114 = vector.load %arg2[%c7_106, %c0_107, %c0_108] : memref<32x2x32xbf16, #tpu.memory_space<vmem>>, vector<1x2x32xbf16>
    %115 = vector.shape_cast %114 : vector<1x2x32xbf16> to vector<2x32xbf16>
    %116 = tpu.concatenate %113, %115 in 1 : vector<2x32xbf16>, vector<2x32xbf16> -> vector<2x64xbf16>
    %c7_109 = arith.constant 7 : index
    %c0_110 = arith.constant 0 : index
    %c0_111 = arith.constant 0 : index
    %117 = vector.load %arg3[%c7_109, %c0_110, %c0_111] : memref<32x64x64xbf16, #tpu.memory_space<vmem>>, vector<1x64x64xbf16>
    %118 = vector.shape_cast %117 : vector<1x64x64xbf16> to vector<64x64xbf16>
    %cst_112 = arith.constant dense<0.000000e+00> : vector<2x64xf32>
    %119 = tpu.matmul %116, %118, %cst_112 {dimension_numbers = #tpu.dot_dimension_numbers<[1], [0], [0], [1], [0, 0, 1, 1], [], []>} : vector<2x64xbf16>, vector<64x64xbf16>, vector<2x64xf32> -> vector<2x64xf32>
    %120 = vector.extract_strided_slice %119 {offsets = [0, 0], sizes = [2, 32], strides = [1, 1]} : vector<2x64xf32> to vector<2x32xf32>
    %c7_113 = arith.constant 7 : index
    %c0_114 = arith.constant 0 : index
    %c0_115 = arith.constant 0 : index
    %121 = vector.load %arg4[%c7_113, %c0_114, %c0_115] : memref<32x2x32xf32, #tpu.memory_space<vmem>>, vector<1x2x32xf32>
    %122 = vector.shape_cast %121 : vector<1x2x32xf32> to vector<2x32xf32>
    %123 = vector.shape_cast %120 : vector<2x32xf32> to vector<1x2x32xf32>
    tpu.vector_store %arg4[%c7_113, %c0_114, %c0_115], %123 {strides = array<i32>} : memref<32x2x32xf32, #tpu.memory_space<vmem>>, vector<1x2x32xf32>,
    %124 = vector.extract_strided_slice %119 {offsets = [0, 32], sizes = [2, 32], strides = [1, 1]} : vector<2x64xf32> to vector<2x32xf32>
    %c7_116 = arith.constant 7 : index
    %c0_117 = arith.constant 0 : index
    %c0_118 = arith.constant 0 : index
    %125 = vector.load %arg5[%c7_116, %c0_117, %c0_118] : memref<32x2x32xf32, #tpu.memory_space<vmem>>, vector<1x2x32xf32>
    %126 = vector.shape_cast %125 : vector<1x2x32xf32> to vector<2x32xf32>
    %127 = vector.shape_cast %124 : vector<2x32xf32> to vector<1x2x32xf32>
    tpu.vector_store %arg5[%c7_116, %c0_117, %c0_118], %127 {strides = array<i32>} : memref<32x2x32xf32, #tpu.memory_space<vmem>>, vector<1x2x32xf32>,
    %c8 = arith.constant 8 : index
    %c0_119 = arith.constant 0 : index
    %c0_120 = arith.constant 0 : index
    %128 = vector.load %arg1[%c8, %c0_119, %c0_120] : memref<32x2x32xbf16, #tpu.memory_space<vmem>>, vector<1x2x32xbf16>
    %129 = vector.shape_cast %128 : vector<1x2x32xbf16> to vector<2x32xbf16>
    %c8_121 = arith.constant 8 : index
    %c0_122 = arith.constant 0 : index
    %c0_123 = arith.constant 0 : index
    %130 = vector.load %arg2[%c8_121, %c0_122, %c0_123] : memref<32x2x32xbf16, #tpu.memory_space<vmem>>, vector<1x2x32xbf16>
    %131 = vector.shape_cast %130 : vector<1x2x32xbf16> to vector<2x32xbf16>
    %132 = tpu.concatenate %129, %131 in 1 : vector<2x32xbf16>, vector<2x32xbf16> -> vector<2x64xbf16>
    %c8_124 = arith.constant 8 : index
    %c0_125 = arith.constant 0 : index
    %c0_126 = arith.constant 0 : index
    %133 = vector.load %arg3[%c8_124, %c0_125, %c0_126] : memref<32x64x64xbf16, #tpu.memory_space<vmem>>, vector<1x64x64xbf16>
    %134 = vector.shape_cast %133 : vector<1x64x64xbf16> to vector<64x64xbf16>
    %cst_127 = arith.constant dense<0.000000e+00> : vector<2x64xf32>
    %135 = tpu.matmul %132, %134, %cst_127 {dimension_numbers = #tpu.dot_dimension_numbers<[1], [0], [0], [1], [0, 0, 1, 1], [], []>} : vector<2x64xbf16>, vector<64x64xbf16>, vector<2x64xf32> -> vector<2x64xf32>
    %136 = vector.extract_strided_slice %135 {offsets = [0, 0], sizes = [2, 32], strides = [1, 1]} : vector<2x64xf32> to vector<2x32xf32>
    %c8_128 = arith.constant 8 : index
    %c0_129 = arith.constant 0 : index
    %c0_130 = arith.constant 0 : index
    %137 = vector.load %arg4[%c8_128, %c0_129, %c0_130] : memref<32x2x32xf32, #tpu.memory_space<vmem>>, vector<1x2x32xf32>
    %138 = vector.shape_cast %137 : vector<1x2x32xf32> to vector<2x32xf32>
    %139 = vector.shape_cast %136 : vector<2x32xf32> to vector<1x2x32xf32>
    tpu.vector_store %arg4[%c8_128, %c0_129, %c0_130], %139 {strides = array<i32>} : memref<32x2x32xf32, #tpu.memory_space<vmem>>, vector<1x2x32xf32>,
    %140 = vector.extract_strided_slice %135 {offsets = [0, 32], sizes = [2, 32], strides = [1, 1]} : vector<2x64xf32> to vector<2x32xf32>
    %c8_131 = arith.constant 8 : index
    %c0_132 = arith.constant 0 : index
    %c0_133 = arith.constant 0 : index
    %141 = vector.load %arg5[%c8_131, %c0_132, %c0_133] : memref<32x2x32xf32, #tpu.memory_space<vmem>>, vector<1x2x32xf32>
    %142 = vector.shape_cast %141 : vector<1x2x32xf32> to vector<2x32xf32>
    %143 = vector.shape_cast %140 : vector<2x32xf32> to vector<1x2x32xf32>
    tpu.vector_store %arg5[%c8_131, %c0_132, %c0_133], %143 {strides = array<i32>} : memref<32x2x32xf32, #tpu.memory_space<vmem>>, vector<1x2x32xf32>,
    %c9 = arith.constant 9 : index
    %c0_134 = arith.constant 0 : index
    %c0_135 = arith.constant 0 : index
    %144 = vector.load %arg1[%c9, %c0_134, %c0_135] : memref<32x2x32xbf16, #tpu.memory_space<vmem>>, vector<1x2x32xbf16>
    %145 = vector.shape_cast %144 : vector<1x2x32xbf16> to vector<2x32xbf16>
    %c9_136 = arith.constant 9 : index
    %c0_137 = arith.constant 0 : index
    %c0_138 = arith.constant 0 : index
    %146 = vector.load %arg2[%c9_136, %c0_137, %c0_138] : memref<32x2x32xbf16, #tpu.memory_space<vmem>>, vector<1x2x32xbf16>
    %147 = vector.shape_cast %146 : vector<1x2x32xbf16> to vector<2x32xbf16>
    %148 = tpu.concatenate %145, %147 in 1 : vector<2x32xbf16>, vector<2x32xbf16> -> vector<2x64xbf16>
    %c9_139 = arith.constant 9 : index
    %c0_140 = arith.constant 0 : index
    %c0_141 = arith.constant 0 : index
    %149 = vector.load %arg3[%c9_139, %c0_140, %c0_141] : memref<32x64x64xbf16, #tpu.memory_space<vmem>>, vector<1x64x64xbf16>
    %150 = vector.shape_cast %149 : vector<1x64x64xbf16> to vector<64x64xbf16>
    %cst_142 = arith.constant dense<0.000000e+00> : vector<2x64xf32>
    %151 = tpu.matmul %148, %150, %cst_142 {dimension_numbers = #tpu.dot_dimension_numbers<[1], [0], [0], [1], [0, 0, 1, 1], [], []>} : vector<2x64xbf16>, vector<64x64xbf16>, vector<2x64xf32> -> vector<2x64xf32>
    %152 = vector.extract_strided_slice %151 {offsets = [0, 0], sizes = [2, 32], strides = [1, 1]} : vector<2x64xf32> to vector<2x32xf32>
    %c9_143 = arith.constant 9 : index
    %c0_144 = arith.constant 0 : index
    %c0_145 = arith.constant 0 : index
    %153 = vector.load %arg4[%c9_143, %c0_144, %c0_145] : memref<32x2x32xf32, #tpu.memory_space<vmem>>, vector<1x2x32xf32>
    %154 = vector.shape_cast %153 : vector<1x2x32xf32> to vector<2x32xf32>
    %155 = vector.shape_cast %152 : vector<2x32xf32> to vector<1x2x32xf32>
    tpu.vector_store %arg4[%c9_143, %c0_144, %c0_145], %155 {strides = array<i32>} : memref<32x2x32xf32, #tpu.memory_space<vmem>>, vector<1x2x32xf32>,
    %156 = vector.extract_strided_slice %151 {offsets = [0, 32], sizes = [2, 32], strides = [1, 1]} : vector<2x64xf32> to vector<2x32xf32>
    %c9_146 = arith.constant 9 : index
    %c0_147 = arith.constant 0 : index
    %c0_148 = arith.constant 0 : index
    %157 = vector.load %arg5[%c9_146, %c0_147, %c0_148] : memref<32x2x32xf32, #tpu.memory_space<vmem>>, vector<1x2x32xf32>
    %158 = vector.shape_cast %157 : vector<1x2x32xf32> to vector<2x32xf32>
    %159 = vector.shape_cast %156 : vector<2x32xf32> to vector<1x2x32xf32>
    tpu.vector_store %arg5[%c9_146, %c0_147, %c0_148], %159 {strides = array<i32>} : memref<32x2x32xf32, #tpu.memory_space<vmem>>, vector<1x2x32xf32>,
    %c10 = arith.constant 10 : index
    %c0_149 = arith.constant 0 : index
    %c0_150 = arith.constant 0 : index
    %160 = vector.load %arg1[%c10, %c0_149, %c0_150] : memref<32x2x32xbf16, #tpu.memory_space<vmem>>, vector<1x2x32xbf16>
    %161 = vector.shape_cast %160 : vector<1x2x32xbf16> to vector<2x32xbf16>
    %c10_151 = arith.constant 10 : index
    %c0_152 = arith.constant 0 : index
    %c0_153 = arith.constant 0 : index
    %162 = vector.load %arg2[%c10_151, %c0_152, %c0_153] : memref<32x2x32xbf16, #tpu.memory_space<vmem>>, vector<1x2x32xbf16>
    %163 = vector.shape_cast %162 : vector<1x2x32xbf16> to vector<2x32xbf16>
    %164 = tpu.concatenate %161, %163 in 1 : vector<2x32xbf16>, vector<2x32xbf16> -> vector<2x64xbf16>
    %c10_154 = arith.constant 10 : index
    %c0_155 = arith.constant 0 : index
    %c0_156 = arith.constant 0 : index
    %165 = vector.load %arg3[%c10_154, %c0_155, %c0_156] : memref<32x64x64xbf16, #tpu.memory_space<vmem>>, vector<1x64x64xbf16>
    %166 = vector.shape_cast %165 : vector<1x64x64xbf16> to vector<64x64xbf16>
    %cst_157 = arith.constant dense<0.000000e+00> : vector<2x64xf32>
    %167 = tpu.matmul %164, %166, %cst_157 {dimension_numbers = #tpu.dot_dimension_numbers<[1], [0], [0], [1], [0, 0, 1, 1], [], []>} : vector<2x64xbf16>, vector<64x64xbf16>, vector<2x64xf32> -> vector<2x64xf32>
    %168 = vector.extract_strided_slice %167 {offsets = [0, 0], sizes = [2, 32], strides = [1, 1]} : vector<2x64xf32> to vector<2x32xf32>
    %c10_158 = arith.constant 10 : index
    %c0_159 = arith.constant 0 : index
    %c0_160 = arith.constant 0 : index
    %169 = vector.load %arg4[%c10_158, %c0_159, %c0_160] : memref<32x2x32xf32, #tpu.memory_space<vmem>>, vector<1x2x32xf32>
    %170 = vector.shape_cast %169 : vector<1x2x32xf32> to vector<2x32xf32>
    %171 = vector.shape_cast %168 : vector<2x32xf32> to vector<1x2x32xf32>
    tpu.vector_store %arg4[%c10_158, %c0_159, %c0_160], %171 {strides = array<i32>} : memref<32x2x32xf32, #tpu.memory_space<vmem>>, vector<1x2x32xf32>,
    %172 = vector.extract_strided_slice %167 {offsets = [0, 32], sizes = [2, 32], strides = [1, 1]} : vector<2x64xf32> to vector<2x32xf32>
    %c10_161 = arith.constant 10 : index
    %c0_162 = arith.constant 0 : index
    %c0_163 = arith.constant 0 : index
    %173 = vector.load %arg5[%c10_161, %c0_162, %c0_163] : memref<32x2x32xf32, #tpu.memory_space<vmem>>, vector<1x2x32xf32>
    %174 = vector.shape_cast %173 : vector<1x2x32xf32> to vector<2x32xf32>
    %175 = vector.shape_cast %172 : vector<2x32xf32> to vector<1x2x32xf32>
    tpu.vector_store %arg5[%c10_161, %c0_162, %c0_163], %175 {strides = array<i32>} : memref<32x2x32xf32, #tpu.memory_space<vmem>>, vector<1x2x32xf32>,
    %c11 = arith.constant 11 : index
    %c0_164 = arith.constant 0 : index
    %c0_165 = arith.constant 0 : index
    %176 = vector.load %arg1[%c11, %c0_164, %c0_165] : memref<32x2x32xbf16, #tpu.memory_space<vmem>>, vector<1x2x32xbf16>
    %177 = vector.shape_cast %176 : vector<1x2x32xbf16> to vector<2x32xbf16>
    %c11_166 = arith.constant 11 : index
    %c0_167 = arith.constant 0 : index
    %c0_168 = arith.constant 0 : index
    %178 = vector.load %arg2[%c11_166, %c0_167, %c0_168] : memref<32x2x32xbf16, #tpu.memory_space<vmem>>, vector<1x2x32xbf16>
    %179 = vector.shape_cast %178 : vector<1x2x32xbf16> to vector<2x32xbf16>
    %180 = tpu.concatenate %177, %179 in 1 : vector<2x32xbf16>, vector<2x32xbf16> -> vector<2x64xbf16>
    %c11_169 = arith.constant 11 : index
    %c0_170 = arith.constant 0 : index
    %c0_171 = arith.constant 0 : index
    %181 = vector.load %arg3[%c11_169, %c0_170, %c0_171] : memref<32x64x64xbf16, #tpu.memory_space<vmem>>, vector<1x64x64xbf16>
    %182 = vector.shape_cast %181 : vector<1x64x64xbf16> to vector<64x64xbf16>
    %cst_172 = arith.constant dense<0.000000e+00> : vector<2x64xf32>
    %183 = tpu.matmul %180, %182, %cst_172 {dimension_numbers = #tpu.dot_dimension_numbers<[1], [0], [0], [1], [0, 0, 1, 1], [], []>} : vector<2x64xbf16>, vector<64x64xbf16>, vector<2x64xf32> -> vector<2x64xf32>
    %184 = vector.extract_strided_slice %183 {offsets = [0, 0], sizes = [2, 32], strides = [1, 1]} : vector<2x64xf32> to vector<2x32xf32>
    %c11_173 = arith.constant 11 : index
    %c0_174 = arith.constant 0 : index
    %c0_175 = arith.constant 0 : index
    %185 = vector.load %arg4[%c11_173, %c0_174, %c0_175] : memref<32x2x32xf32, #tpu.memory_space<vmem>>, vector<1x2x32xf32>
    %186 = vector.shape_cast %185 : vector<1x2x32xf32> to vector<2x32xf32>
    %187 = vector.shape_cast %184 : vector<2x32xf32> to vector<1x2x32xf32>
    tpu.vector_store %arg4[%c11_173, %c0_174, %c0_175], %187 {strides = array<i32>} : memref<32x2x32xf32, #tpu.memory_space<vmem>>, vector<1x2x32xf32>,
    %188 = vector.extract_strided_slice %183 {offsets = [0, 32], sizes = [2, 32], strides = [1, 1]} : vector<2x64xf32> to vector<2x32xf32>
    %c11_176 = arith.constant 11 : index
    %c0_177 = arith.constant 0 : index
    %c0_178 = arith.constant 0 : index
    %189 = vector.load %arg5[%c11_176, %c0_177, %c0_178] : memref<32x2x32xf32, #tpu.memory_space<vmem>>, vector<1x2x32xf32>
    %190 = vector.shape_cast %189 : vector<1x2x32xf32> to vector<2x32xf32>
    %191 = vector.shape_cast %188 : vector<2x32xf32> to vector<1x2x32xf32>
    tpu.vector_store %arg5[%c11_176, %c0_177, %c0_178], %191 {strides = array<i32>} : memref<32x2x32xf32, #tpu.memory_space<vmem>>, vector<1x2x32xf32>,
    %c12 = arith.constant 12 : index
    %c0_179 = arith.constant 0 : index
    %c0_180 = arith.constant 0 : index
    %192 = vector.load %arg1[%c12, %c0_179, %c0_180] : memref<32x2x32xbf16, #tpu.memory_space<vmem>>, vector<1x2x32xbf16>
    %193 = vector.shape_cast %192 : vector<1x2x32xbf16> to vector<2x32xbf16>
    %c12_181 = arith.constant 12 : index
    %c0_182 = arith.constant 0 : index
    %c0_183 = arith.constant 0 : index
    %194 = vector.load %arg2[%c12_181, %c0_182, %c0_183] : memref<32x2x32xbf16, #tpu.memory_space<vmem>>, vector<1x2x32xbf16>
    %195 = vector.shape_cast %194 : vector<1x2x32xbf16> to vector<2x32xbf16>
    %196 = tpu.concatenate %193, %195 in 1 : vector<2x32xbf16>, vector<2x32xbf16> -> vector<2x64xbf16>
    %c12_184 = arith.constant 12 : index
    %c0_185 = arith.constant 0 : index
    %c0_186 = arith.constant 0 : index
    %197 = vector.load %arg3[%c12_184, %c0_185, %c0_186] : memref<32x64x64xbf16, #tpu.memory_space<vmem>>, vector<1x64x64xbf16>
    %198 = vector.shape_cast %197 : vector<1x64x64xbf16> to vector<64x64xbf16>
    %cst_187 = arith.constant dense<0.000000e+00> : vector<2x64xf32>
    %199 = tpu.matmul %196, %198, %cst_187 {dimension_numbers = #tpu.dot_dimension_numbers<[1], [0], [0], [1], [0, 0, 1, 1], [], []>} : vector<2x64xbf16>, vector<64x64xbf16>, vector<2x64xf32> -> vector<2x64xf32>
    %200 = vector.extract_strided_slice %199 {offsets = [0, 0], sizes = [2, 32], strides = [1, 1]} : vector<2x64xf32> to vector<2x32xf32>
    %c12_188 = arith.constant 12 : index
    %c0_189 = arith.constant 0 : index
    %c0_190 = arith.constant 0 : index
    %201 = vector.load %arg4[%c12_188, %c0_189, %c0_190] : memref<32x2x32xf32, #tpu.memory_space<vmem>>, vector<1x2x32xf32>
    %202 = vector.shape_cast %201 : vector<1x2x32xf32> to vector<2x32xf32>
    %203 = vector.shape_cast %200 : vector<2x32xf32> to vector<1x2x32xf32>
    tpu.vector_store %arg4[%c12_188, %c0_189, %c0_190], %203 {strides = array<i32>} : memref<32x2x32xf32, #tpu.memory_space<vmem>>, vector<1x2x32xf32>,
    %204 = vector.extract_strided_slice %199 {offsets = [0, 32], sizes = [2, 32], strides = [1, 1]} : vector<2x64xf32> to vector<2x32xf32>
    %c12_191 = arith.constant 12 : index
    %c0_192 = arith.constant 0 : index
    %c0_193 = arith.constant 0 : index
    %205 = vector.load %arg5[%c12_191, %c0_192, %c0_193] : memref<32x2x32xf32, #tpu.memory_space<vmem>>, vector<1x2x32xf32>
    %206 = vector.shape_cast %205 : vector<1x2x32xf32> to vector<2x32xf32>
    %207 = vector.shape_cast %204 : vector<2x32xf32> to vector<1x2x32xf32>
    tpu.vector_store %arg5[%c12_191, %c0_192, %c0_193], %207 {strides = array<i32>} : memref<32x2x32xf32, #tpu.memory_space<vmem>>, vector<1x2x32xf32>,
    %c13 = arith.constant 13 : index
    %c0_194 = arith.constant 0 : index
    %c0_195 = arith.constant 0 : index
    %208 = vector.load %arg1[%c13, %c0_194, %c0_195] : memref<32x2x32xbf16, #tpu.memory_space<vmem>>, vector<1x2x32xbf16>
    %209 = vector.shape_cast %208 : vector<1x2x32xbf16> to vector<2x32xbf16>
    %c13_196 = arith.constant 13 : index
    %c0_197 = arith.constant 0 : index
    %c0_198 = arith.constant 0 : index
    %210 = vector.load %arg2[%c13_196, %c0_197, %c0_198] : memref<32x2x32xbf16, #tpu.memory_space<vmem>>, vector<1x2x32xbf16>
    %211 = vector.shape_cast %210 : vector<1x2x32xbf16> to vector<2x32xbf16>
    %212 = tpu.concatenate %209, %211 in 1 : vector<2x32xbf16>, vector<2x32xbf16> -> vector<2x64xbf16>
    %c13_199 = arith.constant 13 : index
    %c0_200 = arith.constant 0 : index
    %c0_201 = arith.constant 0 : index
    %213 = vector.load %arg3[%c13_199, %c0_200, %c0_201] : memref<32x64x64xbf16, #tpu.memory_space<vmem>>, vector<1x64x64xbf16>
    %214 = vector.shape_cast %213 : vector<1x64x64xbf16> to vector<64x64xbf16>
    %cst_202 = arith.constant dense<0.000000e+00> : vector<2x64xf32>
    %215 = tpu.matmul %212, %214, %cst_202 {dimension_numbers = #tpu.dot_dimension_numbers<[1], [0], [0], [1], [0, 0, 1, 1], [], []>} : vector<2x64xbf16>, vector<64x64xbf16>, vector<2x64xf32> -> vector<2x64xf32>
    %216 = vector.extract_strided_slice %215 {offsets = [0, 0], sizes = [2, 32], strides = [1, 1]} : vector<2x64xf32> to vector<2x32xf32>
    %c13_203 = arith.constant 13 : index
    %c0_204 = arith.constant 0 : index
    %c0_205 = arith.constant 0 : index
    %217 = vector.load %arg4[%c13_203, %c0_204, %c0_205] : memref<32x2x32xf32, #tpu.memory_space<vmem>>, vector<1x2x32xf32>
    %218 = vector.shape_cast %217 : vector<1x2x32xf32> to vector<2x32xf32>
    %219 = vector.shape_cast %216 : vector<2x32xf32> to vector<1x2x32xf32>
    tpu.vector_store %arg4[%c13_203, %c0_204, %c0_205], %219 {strides = array<i32>} : memref<32x2x32xf32, #tpu.memory_space<vmem>>, vector<1x2x32xf32>,
    %220 = vector.extract_strided_slice %215 {offsets = [0, 32], sizes = [2, 32], strides = [1, 1]} : vector<2x64xf32> to vector<2x32xf32>
    %c13_206 = arith.constant 13 : index
    %c0_207 = arith.constant 0 : index
    %c0_208 = arith.constant 0 : index
    %221 = vector.load %arg5[%c13_206, %c0_207, %c0_208] : memref<32x2x32xf32, #tpu.memory_space<vmem>>, vector<1x2x32xf32>
    %222 = vector.shape_cast %221 : vector<1x2x32xf32> to vector<2x32xf32>
    %223 = vector.shape_cast %220 : vector<2x32xf32> to vector<1x2x32xf32>
    tpu.vector_store %arg5[%c13_206, %c0_207, %c0_208], %223 {strides = array<i32>} : memref<32x2x32xf32, #tpu.memory_space<vmem>>, vector<1x2x32xf32>,
    %c14 = arith.constant 14 : index
    %c0_209 = arith.constant 0 : index
    %c0_210 = arith.constant 0 : index
    %224 = vector.load %arg1[%c14, %c0_209, %c0_210] : memref<32x2x32xbf16, #tpu.memory_space<vmem>>, vector<1x2x32xbf16>
    %225 = vector.shape_cast %224 : vector<1x2x32xbf16> to vector<2x32xbf16>
    %c14_211 = arith.constant 14 : index
    %c0_212 = arith.constant 0 : index
    %c0_213 = arith.constant 0 : index
    %226 = vector.load %arg2[%c14_211, %c0_212, %c0_213] : memref<32x2x32xbf16, #tpu.memory_space<vmem>>, vector<1x2x32xbf16>
    %227 = vector.shape_cast %226 : vector<1x2x32xbf16> to vector<2x32xbf16>
    %228 = tpu.concatenate %225, %227 in 1 : vector<2x32xbf16>, vector<2x32xbf16> -> vector<2x64xbf16>
    %c14_214 = arith.constant 14 : index
    %c0_215 = arith.constant 0 : index
    %c0_216 = arith.constant 0 : index
    %229 = vector.load %arg3[%c14_214, %c0_215, %c0_216] : memref<32x64x64xbf16, #tpu.memory_space<vmem>>, vector<1x64x64xbf16>
    %230 = vector.shape_cast %229 : vector<1x64x64xbf16> to vector<64x64xbf16>
    %cst_217 = arith.constant dense<0.000000e+00> : vector<2x64xf32>
    %231 = tpu.matmul %228, %230, %cst_217 {dimension_numbers = #tpu.dot_dimension_numbers<[1], [0], [0], [1], [0, 0, 1, 1], [], []>} : vector<2x64xbf16>, vector<64x64xbf16>, vector<2x64xf32> -> vector<2x64xf32>
    %232 = vector.extract_strided_slice %231 {offsets = [0, 0], sizes = [2, 32], strides = [1, 1]} : vector<2x64xf32> to vector<2x32xf32>
    %c14_218 = arith.constant 14 : index
    %c0_219 = arith.constant 0 : index
    %c0_220 = arith.constant 0 : index
    %233 = vector.load %arg4[%c14_218, %c0_219, %c0_220] : memref<32x2x32xf32, #tpu.memory_space<vmem>>, vector<1x2x32xf32>
    %234 = vector.shape_cast %233 : vector<1x2x32xf32> to vector<2x32xf32>
    %235 = vector.shape_cast %232 : vector<2x32xf32> to vector<1x2x32xf32>
    tpu.vector_store %arg4[%c14_218, %c0_219, %c0_220], %235 {strides = array<i32>} : memref<32x2x32xf32, #tpu.memory_space<vmem>>, vector<1x2x32xf32>,
    %236 = vector.extract_strided_slice %231 {offsets = [0, 32], sizes = [2, 32], strides = [1, 1]} : vector<2x64xf32> to vector<2x32xf32>
    %c14_221 = arith.constant 14 : index
    %c0_222 = arith.constant 0 : index
    %c0_223 = arith.constant 0 : index
    %237 = vector.load %arg5[%c14_221, %c0_222, %c0_223] : memref<32x2x32xf32, #tpu.memory_space<vmem>>, vector<1x2x32xf32>
    %238 = vector.shape_cast %237 : vector<1x2x32xf32> to vector<2x32xf32>
    %239 = vector.shape_cast %236 : vector<2x32xf32> to vector<1x2x32xf32>
    tpu.vector_store %arg5[%c14_221, %c0_222, %c0_223], %239 {strides = array<i32>} : memref<32x2x32xf32, #tpu.memory_space<vmem>>, vector<1x2x32xf32>,
    %c15 = arith.constant 15 : index
    %c0_224 = arith.constant 0 : index
    %c0_225 = arith.constant 0 : index
    %240 = vector.load %arg1[%c15, %c0_224, %c0_225] : memref<32x2x32xbf16, #tpu.memory_space<vmem>>, vector<1x2x32xbf16>
    %241 = vector.shape_cast %240 : vector<1x2x32xbf16> to vector<2x32xbf16>
    %c15_226 = arith.constant 15 : index
    %c0_227 = arith.constant 0 : index
    %c0_228 = arith.constant 0 : index
    %242 = vector.load %arg2[%c15_226, %c0_227, %c0_228] : memref<32x2x32xbf16, #tpu.memory_space<vmem>>, vector<1x2x32xbf16>
    %243 = vector.shape_cast %242 : vector<1x2x32xbf16> to vector<2x32xbf16>
    %244 = tpu.concatenate %241, %243 in 1 : vector<2x32xbf16>, vector<2x32xbf16> -> vector<2x64xbf16>
    %c15_229 = arith.constant 15 : index
    %c0_230 = arith.constant 0 : index
    %c0_231 = arith.constant 0 : index
    %245 = vector.load %arg3[%c15_229, %c0_230, %c0_231] : memref<32x64x64xbf16, #tpu.memory_space<vmem>>, vector<1x64x64xbf16>
    %246 = vector.shape_cast %245 : vector<1x64x64xbf16> to vector<64x64xbf16>
    %cst_232 = arith.constant dense<0.000000e+00> : vector<2x64xf32>
    %247 = tpu.matmul %244, %246, %cst_232 {dimension_numbers = #tpu.dot_dimension_numbers<[1], [0], [0], [1], [0, 0, 1, 1], [], []>} : vector<2x64xbf16>, vector<64x64xbf16>, vector<2x64xf32> -> vector<2x64xf32>
    %248 = vector.extract_strided_slice %247 {offsets = [0, 0], sizes = [2, 32], strides = [1, 1]} : vector<2x64xf32> to vector<2x32xf32>
    %c15_233 = arith.constant 15 : index
    %c0_234 = arith.constant 0 : index
    %c0_235 = arith.constant 0 : index
    %249 = vector.load %arg4[%c15_233, %c0_234, %c0_235] : memref<32x2x32xf32, #tpu.memory_space<vmem>>, vector<1x2x32xf32>
    %250 = vector.shape_cast %249 : vector<1x2x32xf32> to vector<2x32xf32>
    %251 = vector.shape_cast %248 : vector<2x32xf32> to vector<1x2x32xf32>
    tpu.vector_store %arg4[%c15_233, %c0_234, %c0_235], %251 {strides = array<i32>} : memref<32x2x32xf32, #tpu.memory_space<vmem>>, vector<1x2x32xf32>,
    %252 = vector.extract_strided_slice %247 {offsets = [0, 32], sizes = [2, 32], strides = [1, 1]} : vector<2x64xf32> to vector<2x32xf32>
    %c15_236 = arith.constant 15 : index
    %c0_237 = arith.constant 0 : index
    %c0_238 = arith.constant 0 : index
    %253 = vector.load %arg5[%c15_236, %c0_237, %c0_238] : memref<32x2x32xf32, #tpu.memory_space<vmem>>, vector<1x2x32xf32>
    %254 = vector.shape_cast %253 : vector<1x2x32xf32> to vector<2x32xf32>
    %255 = vector.shape_cast %252 : vector<2x32xf32> to vector<1x2x32xf32>
    tpu.vector_store %arg5[%c15_236, %c0_237, %c0_238], %255 {strides = array<i32>} : memref<32x2x32xf32, #tpu.memory_space<vmem>>, vector<1x2x32xf32>,
    %c16 = arith.constant 16 : index
    %c0_239 = arith.constant 0 : index
    %c0_240 = arith.constant 0 : index
    %256 = vector.load %arg1[%c16, %c0_239, %c0_240] : memref<32x2x32xbf16, #tpu.memory_space<vmem>>, vector<1x2x32xbf16>
    %257 = vector.shape_cast %256 : vector<1x2x32xbf16> to vector<2x32xbf16>
    %c16_241 = arith.constant 16 : index
    %c0_242 = arith.constant 0 : index
    %c0_243 = arith.constant 0 : index
    %258 = vector.load %arg2[%c16_241, %c0_242, %c0_243] : memref<32x2x32xbf16, #tpu.memory_space<vmem>>, vector<1x2x32xbf16>
    %259 = vector.shape_cast %258 : vector<1x2x32xbf16> to vector<2x32xbf16>
    %260 = tpu.concatenate %257, %259 in 1 : vector<2x32xbf16>, vector<2x32xbf16> -> vector<2x64xbf16>
    %c16_244 = arith.constant 16 : index
    %c0_245 = arith.constant 0 : index
    %c0_246 = arith.constant 0 : index
    %261 = vector.load %arg3[%c16_244, %c0_245, %c0_246] : memref<32x64x64xbf16, #tpu.memory_space<vmem>>, vector<1x64x64xbf16>
    %262 = vector.shape_cast %261 : vector<1x64x64xbf16> to vector<64x64xbf16>
    %cst_247 = arith.constant dense<0.000000e+00> : vector<2x64xf32>
    %263 = tpu.matmul %260, %262, %cst_247 {dimension_numbers = #tpu.dot_dimension_numbers<[1], [0], [0], [1], [0, 0, 1, 1], [], []>} : vector<2x64xbf16>, vector<64x64xbf16>, vector<2x64xf32> -> vector<2x64xf32>
    %264 = vector.extract_strided_slice %263 {offsets = [0, 0], sizes = [2, 32], strides = [1, 1]} : vector<2x64xf32> to vector<2x32xf32>
    %c16_248 = arith.constant 16 : index
    %c0_249 = arith.constant 0 : index
    %c0_250 = arith.constant 0 : index
    %265 = vector.load %arg4[%c16_248, %c0_249, %c0_250] : memref<32x2x32xf32, #tpu.memory_space<vmem>>, vector<1x2x32xf32>
    %266 = vector.shape_cast %265 : vector<1x2x32xf32> to vector<2x32xf32>
    %267 = vector.shape_cast %264 : vector<2x32xf32> to vector<1x2x32xf32>
    tpu.vector_store %arg4[%c16_248, %c0_249, %c0_250], %267 {strides = array<i32>} : memref<32x2x32xf32, #tpu.memory_space<vmem>>, vector<1x2x32xf32>,
    %268 = vector.extract_strided_slice %263 {offsets = [0, 32], sizes = [2, 32], strides = [1, 1]} : vector<2x64xf32> to vector<2x32xf32>
    %c16_251 = arith.constant 16 : index
    %c0_252 = arith.constant 0 : index
    %c0_253 = arith.constant 0 : index
    %269 = vector.load %arg5[%c16_251, %c0_252, %c0_253] : memref<32x2x32xf32, #tpu.memory_space<vmem>>, vector<1x2x32xf32>
    %270 = vector.shape_cast %269 : vector<1x2x32xf32> to vector<2x32xf32>
    %271 = vector.shape_cast %268 : vector<2x32xf32> to vector<1x2x32xf32>
    tpu.vector_store %arg5[%c16_251, %c0_252, %c0_253], %271 {strides = array<i32>} : memref<32x2x32xf32, #tpu.memory_space<vmem>>, vector<1x2x32xf32>,
    %c17 = arith.constant 17 : index
    %c0_254 = arith.constant 0 : index
    %c0_255 = arith.constant 0 : index
    %272 = vector.load %arg1[%c17, %c0_254, %c0_255] : memref<32x2x32xbf16, #tpu.memory_space<vmem>>, vector<1x2x32xbf16>
    %273 = vector.shape_cast %272 : vector<1x2x32xbf16> to vector<2x32xbf16>
    %c17_256 = arith.constant 17 : index
    %c0_257 = arith.constant 0 : index
    %c0_258 = arith.constant 0 : index
    %274 = vector.load %arg2[%c17_256, %c0_257, %c0_258] : memref<32x2x32xbf16, #tpu.memory_space<vmem>>, vector<1x2x32xbf16>
    %275 = vector.shape_cast %274 : vector<1x2x32xbf16> to vector<2x32xbf16>
    %276 = tpu.concatenate %273, %275 in 1 : vector<2x32xbf16>, vector<2x32xbf16> -> vector<2x64xbf16>
    %c17_259 = arith.constant 17 : index
    %c0_260 = arith.constant 0 : index
    %c0_261 = arith.constant 0 : index
    %277 = vector.load %arg3[%c17_259, %c0_260, %c0_261] : memref<32x64x64xbf16, #tpu.memory_space<vmem>>, vector<1x64x64xbf16>
    %278 = vector.shape_cast %277 : vector<1x64x64xbf16> to vector<64x64xbf16>
    %cst_262 = arith.constant dense<0.000000e+00> : vector<2x64xf32>
    %279 = tpu.matmul %276, %278, %cst_262 {dimension_numbers = #tpu.dot_dimension_numbers<[1], [0], [0], [1], [0, 0, 1, 1], [], []>} : vector<2x64xbf16>, vector<64x64xbf16>, vector<2x64xf32> -> vector<2x64xf32>
    %280 = vector.extract_strided_slice %279 {offsets = [0, 0], sizes = [2, 32], strides = [1, 1]} : vector<2x64xf32> to vector<2x32xf32>
    %c17_263 = arith.constant 17 : index
    %c0_264 = arith.constant 0 : index
    %c0_265 = arith.constant 0 : index
    %281 = vector.load %arg4[%c17_263, %c0_264, %c0_265] : memref<32x2x32xf32, #tpu.memory_space<vmem>>, vector<1x2x32xf32>
    %282 = vector.shape_cast %281 : vector<1x2x32xf32> to vector<2x32xf32>
    %283 = vector.shape_cast %280 : vector<2x32xf32> to vector<1x2x32xf32>
    tpu.vector_store %arg4[%c17_263, %c0_264, %c0_265], %283 {strides = array<i32>} : memref<32x2x32xf32, #tpu.memory_space<vmem>>, vector<1x2x32xf32>,
    %284 = vector.extract_strided_slice %279 {offsets = [0, 32], sizes = [2, 32], strides = [1, 1]} : vector<2x64xf32> to vector<2x32xf32>
    %c17_266 = arith.constant 17 : index
    %c0_267 = arith.constant 0 : index
    %c0_268 = arith.constant 0 : index
    %285 = vector.load %arg5[%c17_266, %c0_267, %c0_268] : memref<32x2x32xf32, #tpu.memory_space<vmem>>, vector<1x2x32xf32>
    %286 = vector.shape_cast %285 : vector<1x2x32xf32> to vector<2x32xf32>
    %287 = vector.shape_cast %284 : vector<2x32xf32> to vector<1x2x32xf32>
    tpu.vector_store %arg5[%c17_266, %c0_267, %c0_268], %287 {strides = array<i32>} : memref<32x2x32xf32, #tpu.memory_space<vmem>>, vector<1x2x32xf32>,
    %c18 = arith.constant 18 : index
    %c0_269 = arith.constant 0 : index
    %c0_270 = arith.constant 0 : index
    %288 = vector.load %arg1[%c18, %c0_269, %c0_270] : memref<32x2x32xbf16, #tpu.memory_space<vmem>>, vector<1x2x32xbf16>
    %289 = vector.shape_cast %288 : vector<1x2x32xbf16> to vector<2x32xbf16>
    %c18_271 = arith.constant 18 : index
    %c0_272 = arith.constant 0 : index
    %c0_273 = arith.constant 0 : index
    %290 = vector.load %arg2[%c18_271, %c0_272, %c0_273] : memref<32x2x32xbf16, #tpu.memory_space<vmem>>, vector<1x2x32xbf16>
    %291 = vector.shape_cast %290 : vector<1x2x32xbf16> to vector<2x32xbf16>
    %292 = tpu.concatenate %289, %291 in 1 : vector<2x32xbf16>, vector<2x32xbf16> -> vector<2x64xbf16>
    %c18_274 = arith.constant 18 : index
    %c0_275 = arith.constant 0 : index
    %c0_276 = arith.constant 0 : index
    %293 = vector.load %arg3[%c18_274, %c0_275, %c0_276] : memref<32x64x64xbf16, #tpu.memory_space<vmem>>, vector<1x64x64xbf16>
    %294 = vector.shape_cast %293 : vector<1x64x64xbf16> to vector<64x64xbf16>
    %cst_277 = arith.constant dense<0.000000e+00> : vector<2x64xf32>
    %295 = tpu.matmul %292, %294, %cst_277 {dimension_numbers = #tpu.dot_dimension_numbers<[1], [0], [0], [1], [0, 0, 1, 1], [], []>} : vector<2x64xbf16>, vector<64x64xbf16>, vector<2x64xf32> -> vector<2x64xf32>
    %296 = vector.extract_strided_slice %295 {offsets = [0, 0], sizes = [2, 32], strides = [1, 1]} : vector<2x64xf32> to vector<2x32xf32>
    %c18_278 = arith.constant 18 : index
    %c0_279 = arith.constant 0 : index
    %c0_280 = arith.constant 0 : index
    %297 = vector.load %arg4[%c18_278, %c0_279, %c0_280] : memref<32x2x32xf32, #tpu.memory_space<vmem>>, vector<1x2x32xf32>
    %298 = vector.shape_cast %297 : vector<1x2x32xf32> to vector<2x32xf32>
    %299 = vector.shape_cast %296 : vector<2x32xf32> to vector<1x2x32xf32>
    tpu.vector_store %arg4[%c18_278, %c0_279, %c0_280], %299 {strides = array<i32>} : memref<32x2x32xf32, #tpu.memory_space<vmem>>, vector<1x2x32xf32>,
    %300 = vector.extract_strided_slice %295 {offsets = [0, 32], sizes = [2, 32], strides = [1, 1]} : vector<2x64xf32> to vector<2x32xf32>
    %c18_281 = arith.constant 18 : index
    %c0_282 = arith.constant 0 : index
    %c0_283 = arith.constant 0 : index
    %301 = vector.load %arg5[%c18_281, %c0_282, %c0_283] : memref<32x2x32xf32, #tpu.memory_space<vmem>>, vector<1x2x32xf32>
    %302 = vector.shape_cast %301 : vector<1x2x32xf32> to vector<2x32xf32>
    %303 = vector.shape_cast %300 : vector<2x32xf32> to vector<1x2x32xf32>
    tpu.vector_store %arg5[%c18_281, %c0_282, %c0_283], %303 {strides = array<i32>} : memref<32x2x32xf32, #tpu.memory_space<vmem>>, vector<1x2x32xf32>,
    %c19 = arith.constant 19 : index
    %c0_284 = arith.constant 0 : index
    %c0_285 = arith.constant 0 : index
    %304 = vector.load %arg1[%c19, %c0_284, %c0_285] : memref<32x2x32xbf16, #tpu.memory_space<vmem>>, vector<1x2x32xbf16>
    %305 = vector.shape_cast %304 : vector<1x2x32xbf16> to vector<2x32xbf16>
    %c19_286 = arith.constant 19 : index
    %c0_287 = arith.constant 0 : index
    %c0_288 = arith.constant 0 : index
    %306 = vector.load %arg2[%c19_286, %c0_287, %c0_288] : memref<32x2x32xbf16, #tpu.memory_space<vmem>>, vector<1x2x32xbf16>
    %307 = vector.shape_cast %306 : vector<1x2x32xbf16> to vector<2x32xbf16>
    %308 = tpu.concatenate %305, %307 in 1 : vector<2x32xbf16>, vector<2x32xbf16> -> vector<2x64xbf16>
    %c19_289 = arith.constant 19 : index
    %c0_290 = arith.constant 0 : index
    %c0_291 = arith.constant 0 : index
    %309 = vector.load %arg3[%c19_289, %c0_290, %c0_291] : memref<32x64x64xbf16, #tpu.memory_space<vmem>>, vector<1x64x64xbf16>
    %310 = vector.shape_cast %309 : vector<1x64x64xbf16> to vector<64x64xbf16>
    %cst_292 = arith.constant dense<0.000000e+00> : vector<2x64xf32>
    %311 = tpu.matmul %308, %310, %cst_292 {dimension_numbers = #tpu.dot_dimension_numbers<[1], [0], [0], [1], [0, 0, 1, 1], [], []>} : vector<2x64xbf16>, vector<64x64xbf16>, vector<2x64xf32> -> vector<2x64xf32>
    %312 = vector.extract_strided_slice %311 {offsets = [0, 0], sizes = [2, 32], strides = [1, 1]} : vector<2x64xf32> to vector<2x32xf32>
    %c19_293 = arith.constant 19 : index
    %c0_294 = arith.constant 0 : index
    %c0_295 = arith.constant 0 : index
    %313 = vector.load %arg4[%c19_293, %c0_294, %c0_295] : memref<32x2x32xf32, #tpu.memory_space<vmem>>, vector<1x2x32xf32>
    %314 = vector.shape_cast %313 : vector<1x2x32xf32> to vector<2x32xf32>
    %315 = vector.shape_cast %312 : vector<2x32xf32> to vector<1x2x32xf32>
    tpu.vector_store %arg4[%c19_293, %c0_294, %c0_295], %315 {strides = array<i32>} : memref<32x2x32xf32, #tpu.memory_space<vmem>>, vector<1x2x32xf32>,
    %316 = vector.extract_strided_slice %311 {offsets = [0, 32], sizes = [2, 32], strides = [1, 1]} : vector<2x64xf32> to vector<2x32xf32>
    %c19_296 = arith.constant 19 : index
    %c0_297 = arith.constant 0 : index
    %c0_298 = arith.constant 0 : index
    %317 = vector.load %arg5[%c19_296, %c0_297, %c0_298] : memref<32x2x32xf32, #tpu.memory_space<vmem>>, vector<1x2x32xf32>
    %318 = vector.shape_cast %317 : vector<1x2x32xf32> to vector<2x32xf32>
    %319 = vector.shape_cast %316 : vector<2x32xf32> to vector<1x2x32xf32>
    tpu.vector_store %arg5[%c19_296, %c0_297, %c0_298], %319 {strides = array<i32>} : memref<32x2x32xf32, #tpu.memory_space<vmem>>, vector<1x2x32xf32>,
    %c20 = arith.constant 20 : index
    %c0_299 = arith.constant 0 : index
    %c0_300 = arith.constant 0 : index
    %320 = vector.load %arg1[%c20, %c0_299, %c0_300] : memref<32x2x32xbf16, #tpu.memory_space<vmem>>, vector<1x2x32xbf16>
    %321 = vector.shape_cast %320 : vector<1x2x32xbf16> to vector<2x32xbf16>
    %c20_301 = arith.constant 20 : index
    %c0_302 = arith.constant 0 : index
    %c0_303 = arith.constant 0 : index
    %322 = vector.load %arg2[%c20_301, %c0_302, %c0_303] : memref<32x2x32xbf16, #tpu.memory_space<vmem>>, vector<1x2x32xbf16>
    %323 = vector.shape_cast %322 : vector<1x2x32xbf16> to vector<2x32xbf16>
    %324 = tpu.concatenate %321, %323 in 1 : vector<2x32xbf16>, vector<2x32xbf16> -> vector<2x64xbf16>
    %c20_304 = arith.constant 20 : index
    %c0_305 = arith.constant 0 : index
    %c0_306 = arith.constant 0 : index
    %325 = vector.load %arg3[%c20_304, %c0_305, %c0_306] : memref<32x64x64xbf16, #tpu.memory_space<vmem>>, vector<1x64x64xbf16>
    %326 = vector.shape_cast %325 : vector<1x64x64xbf16> to vector<64x64xbf16>
    %cst_307 = arith.constant dense<0.000000e+00> : vector<2x64xf32>
    %327 = tpu.matmul %324, %326, %cst_307 {dimension_numbers = #tpu.dot_dimension_numbers<[1], [0], [0], [1], [0, 0, 1, 1], [], []>} : vector<2x64xbf16>, vector<64x64xbf16>, vector<2x64xf32> -> vector<2x64xf32>
    %328 = vector.extract_strided_slice %327 {offsets = [0, 0], sizes = [2, 32], strides = [1, 1]} : vector<2x64xf32> to vector<2x32xf32>
    %c20_308 = arith.constant 20 : index
    %c0_309 = arith.constant 0 : index
    %c0_310 = arith.constant 0 : index
    %329 = vector.load %arg4[%c20_308, %c0_309, %c0_310] : memref<32x2x32xf32, #tpu.memory_space<vmem>>, vector<1x2x32xf32>
    %330 = vector.shape_cast %329 : vector<1x2x32xf32> to vector<2x32xf32>
    %331 = vector.shape_cast %328 : vector<2x32xf32> to vector<1x2x32xf32>
    tpu.vector_store %arg4[%c20_308, %c0_309, %c0_310], %331 {strides = array<i32>} : memref<32x2x32xf32, #tpu.memory_space<vmem>>, vector<1x2x32xf32>,
    %332 = vector.extract_strided_slice %327 {offsets = [0, 32], sizes = [2, 32], strides = [1, 1]} : vector<2x64xf32> to vector<2x32xf32>
    %c20_311 = arith.constant 20 : index
    %c0_312 = arith.constant 0 : index
    %c0_313 = arith.constant 0 : index
    %333 = vector.load %arg5[%c20_311, %c0_312, %c0_313] : memref<32x2x32xf32, #tpu.memory_space<vmem>>, vector<1x2x32xf32>
    %334 = vector.shape_cast %333 : vector<1x2x32xf32> to vector<2x32xf32>
    %335 = vector.shape_cast %332 : vector<2x32xf32> to vector<1x2x32xf32>
    tpu.vector_store %arg5[%c20_311, %c0_312, %c0_313], %335 {strides = array<i32>} : memref<32x2x32xf32, #tpu.memory_space<vmem>>, vector<1x2x32xf32>,
    %c21 = arith.constant 21 : index
    %c0_314 = arith.constant 0 : index
    %c0_315 = arith.constant 0 : index
    %336 = vector.load %arg1[%c21, %c0_314, %c0_315] : memref<32x2x32xbf16, #tpu.memory_space<vmem>>, vector<1x2x32xbf16>
    %337 = vector.shape_cast %336 : vector<1x2x32xbf16> to vector<2x32xbf16>
    %c21_316 = arith.constant 21 : index
    %c0_317 = arith.constant 0 : index
    %c0_318 = arith.constant 0 : index
    %338 = vector.load %arg2[%c21_316, %c0_317, %c0_318] : memref<32x2x32xbf16, #tpu.memory_space<vmem>>, vector<1x2x32xbf16>
    %339 = vector.shape_cast %338 : vector<1x2x32xbf16> to vector<2x32xbf16>
    %340 = tpu.concatenate %337, %339 in 1 : vector<2x32xbf16>, vector<2x32xbf16> -> vector<2x64xbf16>
    %c21_319 = arith.constant 21 : index
    %c0_320 = arith.constant 0 : index
    %c0_321 = arith.constant 0 : index
    %341 = vector.load %arg3[%c21_319, %c0_320, %c0_321] : memref<32x64x64xbf16, #tpu.memory_space<vmem>>, vector<1x64x64xbf16>
    %342 = vector.shape_cast %341 : vector<1x64x64xbf16> to vector<64x64xbf16>
    %cst_322 = arith.constant dense<0.000000e+00> : vector<2x64xf32>
    %343 = tpu.matmul %340, %342, %cst_322 {dimension_numbers = #tpu.dot_dimension_numbers<[1], [0], [0], [1], [0, 0, 1, 1], [], []>} : vector<2x64xbf16>, vector<64x64xbf16>, vector<2x64xf32> -> vector<2x64xf32>
    %344 = vector.extract_strided_slice %343 {offsets = [0, 0], sizes = [2, 32], strides = [1, 1]} : vector<2x64xf32> to vector<2x32xf32>
    %c21_323 = arith.constant 21 : index
    %c0_324 = arith.constant 0 : index
    %c0_325 = arith.constant 0 : index
    %345 = vector.load %arg4[%c21_323, %c0_324, %c0_325] : memref<32x2x32xf32, #tpu.memory_space<vmem>>, vector<1x2x32xf32>
    %346 = vector.shape_cast %345 : vector<1x2x32xf32> to vector<2x32xf32>
    %347 = vector.shape_cast %344 : vector<2x32xf32> to vector<1x2x32xf32>
    tpu.vector_store %arg4[%c21_323, %c0_324, %c0_325], %347 {strides = array<i32>} : memref<32x2x32xf32, #tpu.memory_space<vmem>>, vector<1x2x32xf32>,
    %348 = vector.extract_strided_slice %343 {offsets = [0, 32], sizes = [2, 32], strides = [1, 1]} : vector<2x64xf32> to vector<2x32xf32>
    %c21_326 = arith.constant 21 : index
    %c0_327 = arith.constant 0 : index
    %c0_328 = arith.constant 0 : index
    %349 = vector.load %arg5[%c21_326, %c0_327, %c0_328] : memref<32x2x32xf32, #tpu.memory_space<vmem>>, vector<1x2x32xf32>
    %350 = vector.shape_cast %349 : vector<1x2x32xf32> to vector<2x32xf32>
    %351 = vector.shape_cast %348 : vector<2x32xf32> to vector<1x2x32xf32>
    tpu.vector_store %arg5[%c21_326, %c0_327, %c0_328], %351 {strides = array<i32>} : memref<32x2x32xf32, #tpu.memory_space<vmem>>, vector<1x2x32xf32>,
    %c22 = arith.constant 22 : index
    %c0_329 = arith.constant 0 : index
    %c0_330 = arith.constant 0 : index
    %352 = vector.load %arg1[%c22, %c0_329, %c0_330] : memref<32x2x32xbf16, #tpu.memory_space<vmem>>, vector<1x2x32xbf16>
    %353 = vector.shape_cast %352 : vector<1x2x32xbf16> to vector<2x32xbf16>
    %c22_331 = arith.constant 22 : index
    %c0_332 = arith.constant 0 : index
    %c0_333 = arith.constant 0 : index
    %354 = vector.load %arg2[%c22_331, %c0_332, %c0_333] : memref<32x2x32xbf16, #tpu.memory_space<vmem>>, vector<1x2x32xbf16>
    %355 = vector.shape_cast %354 : vector<1x2x32xbf16> to vector<2x32xbf16>
    %356 = tpu.concatenate %353, %355 in 1 : vector<2x32xbf16>, vector<2x32xbf16> -> vector<2x64xbf16>
    %c22_334 = arith.constant 22 : index
    %c0_335 = arith.constant 0 : index
    %c0_336 = arith.constant 0 : index
    %357 = vector.load %arg3[%c22_334, %c0_335, %c0_336] : memref<32x64x64xbf16, #tpu.memory_space<vmem>>, vector<1x64x64xbf16>
    %358 = vector.shape_cast %357 : vector<1x64x64xbf16> to vector<64x64xbf16>
    %cst_337 = arith.constant dense<0.000000e+00> : vector<2x64xf32>
    %359 = tpu.matmul %356, %358, %cst_337 {dimension_numbers = #tpu.dot_dimension_numbers<[1], [0], [0], [1], [0, 0, 1, 1], [], []>} : vector<2x64xbf16>, vector<64x64xbf16>, vector<2x64xf32> -> vector<2x64xf32>
    %360 = vector.extract_strided_slice %359 {offsets = [0, 0], sizes = [2, 32], strides = [1, 1]} : vector<2x64xf32> to vector<2x32xf32>
    %c22_338 = arith.constant 22 : index
    %c0_339 = arith.constant 0 : index
    %c0_340 = arith.constant 0 : index
    %361 = vector.load %arg4[%c22_338, %c0_339, %c0_340] : memref<32x2x32xf32, #tpu.memory_space<vmem>>, vector<1x2x32xf32>
    %362 = vector.shape_cast %361 : vector<1x2x32xf32> to vector<2x32xf32>
    %363 = vector.shape_cast %360 : vector<2x32xf32> to vector<1x2x32xf32>
    tpu.vector_store %arg4[%c22_338, %c0_339, %c0_340], %363 {strides = array<i32>} : memref<32x2x32xf32, #tpu.memory_space<vmem>>, vector<1x2x32xf32>,
    %364 = vector.extract_strided_slice %359 {offsets = [0, 32], sizes = [2, 32], strides = [1, 1]} : vector<2x64xf32> to vector<2x32xf32>
    %c22_341 = arith.constant 22 : index
    %c0_342 = arith.constant 0 : index
    %c0_343 = arith.constant 0 : index
    %365 = vector.load %arg5[%c22_341, %c0_342, %c0_343] : memref<32x2x32xf32, #tpu.memory_space<vmem>>, vector<1x2x32xf32>
    %366 = vector.shape_cast %365 : vector<1x2x32xf32> to vector<2x32xf32>
    %367 = vector.shape_cast %364 : vector<2x32xf32> to vector<1x2x32xf32>
    tpu.vector_store %arg5[%c22_341, %c0_342, %c0_343], %367 {strides = array<i32>} : memref<32x2x32xf32, #tpu.memory_space<vmem>>, vector<1x2x32xf32>,
    %c23 = arith.constant 23 : index
    %c0_344 = arith.constant 0 : index
    %c0_345 = arith.constant 0 : index
    %368 = vector.load %arg1[%c23, %c0_344, %c0_345] : memref<32x2x32xbf16, #tpu.memory_space<vmem>>, vector<1x2x32xbf16>
    %369 = vector.shape_cast %368 : vector<1x2x32xbf16> to vector<2x32xbf16>
    %c23_346 = arith.constant 23 : index
    %c0_347 = arith.constant 0 : index
    %c0_348 = arith.constant 0 : index
    %370 = vector.load %arg2[%c23_346, %c0_347, %c0_348] : memref<32x2x32xbf16, #tpu.memory_space<vmem>>, vector<1x2x32xbf16>
    %371 = vector.shape_cast %370 : vector<1x2x32xbf16> to vector<2x32xbf16>
    %372 = tpu.concatenate %369, %371 in 1 : vector<2x32xbf16>, vector<2x32xbf16> -> vector<2x64xbf16>
    %c23_349 = arith.constant 23 : index
    %c0_350 = arith.constant 0 : index
    %c0_351 = arith.constant 0 : index
    %373 = vector.load %arg3[%c23_349, %c0_350, %c0_351] : memref<32x64x64xbf16, #tpu.memory_space<vmem>>, vector<1x64x64xbf16>
    %374 = vector.shape_cast %373 : vector<1x64x64xbf16> to vector<64x64xbf16>
    %cst_352 = arith.constant dense<0.000000e+00> : vector<2x64xf32>
    %375 = tpu.matmul %372, %374, %cst_352 {dimension_numbers = #tpu.dot_dimension_numbers<[1], [0], [0], [1], [0, 0, 1, 1], [], []>} : vector<2x64xbf16>, vector<64x64xbf16>, vector<2x64xf32> -> vector<2x64xf32>
    %376 = vector.extract_strided_slice %375 {offsets = [0, 0], sizes = [2, 32], strides = [1, 1]} : vector<2x64xf32> to vector<2x32xf32>
    %c23_353 = arith.constant 23 : index
    %c0_354 = arith.constant 0 : index
    %c0_355 = arith.constant 0 : index
    %377 = vector.load %arg4[%c23_353, %c0_354, %c0_355] : memref<32x2x32xf32, #tpu.memory_space<vmem>>, vector<1x2x32xf32>
    %378 = vector.shape_cast %377 : vector<1x2x32xf32> to vector<2x32xf32>
    %379 = vector.shape_cast %376 : vector<2x32xf32> to vector<1x2x32xf32>
    tpu.vector_store %arg4[%c23_353, %c0_354, %c0_355], %379 {strides = array<i32>} : memref<32x2x32xf32, #tpu.memory_space<vmem>>, vector<1x2x32xf32>,
    %380 = vector.extract_strided_slice %375 {offsets = [0, 32], sizes = [2, 32], strides = [1, 1]} : vector<2x64xf32> to vector<2x32xf32>
    %c23_356 = arith.constant 23 : index
    %c0_357 = arith.constant 0 : index
    %c0_358 = arith.constant 0 : index
    %381 = vector.load %arg5[%c23_356, %c0_357, %c0_358] : memref<32x2x32xf32, #tpu.memory_space<vmem>>, vector<1x2x32xf32>
    %382 = vector.shape_cast %381 : vector<1x2x32xf32> to vector<2x32xf32>
    %383 = vector.shape_cast %380 : vector<2x32xf32> to vector<1x2x32xf32>
    tpu.vector_store %arg5[%c23_356, %c0_357, %c0_358], %383 {strides = array<i32>} : memref<32x2x32xf32, #tpu.memory_space<vmem>>, vector<1x2x32xf32>,
    %c24 = arith.constant 24 : index
    %c0_359 = arith.constant 0 : index
    %c0_360 = arith.constant 0 : index
    %384 = vector.load %arg1[%c24, %c0_359, %c0_360] : memref<32x2x32xbf16, #tpu.memory_space<vmem>>, vector<1x2x32xbf16>
    %385 = vector.shape_cast %384 : vector<1x2x32xbf16> to vector<2x32xbf16>
    %c24_361 = arith.constant 24 : index
    %c0_362 = arith.constant 0 : index
    %c0_363 = arith.constant 0 : index
    %386 = vector.load %arg2[%c24_361, %c0_362, %c0_363] : memref<32x2x32xbf16, #tpu.memory_space<vmem>>, vector<1x2x32xbf16>
    %387 = vector.shape_cast %386 : vector<1x2x32xbf16> to vector<2x32xbf16>
    %388 = tpu.concatenate %385, %387 in 1 : vector<2x32xbf16>, vector<2x32xbf16> -> vector<2x64xbf16>
    %c24_364 = arith.constant 24 : index
    %c0_365 = arith.constant 0 : index
    %c0_366 = arith.constant 0 : index
    %389 = vector.load %arg3[%c24_364, %c0_365, %c0_366] : memref<32x64x64xbf16, #tpu.memory_space<vmem>>, vector<1x64x64xbf16>
    %390 = vector.shape_cast %389 : vector<1x64x64xbf16> to vector<64x64xbf16>
    %cst_367 = arith.constant dense<0.000000e+00> : vector<2x64xf32>
    %391 = tpu.matmul %388, %390, %cst_367 {dimension_numbers = #tpu.dot_dimension_numbers<[1], [0], [0], [1], [0, 0, 1, 1], [], []>} : vector<2x64xbf16>, vector<64x64xbf16>, vector<2x64xf32> -> vector<2x64xf32>
    %392 = vector.extract_strided_slice %391 {offsets = [0, 0], sizes = [2, 32], strides = [1, 1]} : vector<2x64xf32> to vector<2x32xf32>
    %c24_368 = arith.constant 24 : index
    %c0_369 = arith.constant 0 : index
    %c0_370 = arith.constant 0 : index
    %393 = vector.load %arg4[%c24_368, %c0_369, %c0_370] : memref<32x2x32xf32, #tpu.memory_space<vmem>>, vector<1x2x32xf32>
    %394 = vector.shape_cast %393 : vector<1x2x32xf32> to vector<2x32xf32>
    %395 = vector.shape_cast %392 : vector<2x32xf32> to vector<1x2x32xf32>
    tpu.vector_store %arg4[%c24_368, %c0_369, %c0_370], %395 {strides = array<i32>} : memref<32x2x32xf32, #tpu.memory_space<vmem>>, vector<1x2x32xf32>,
    %396 = vector.extract_strided_slice %391 {offsets = [0, 32], sizes = [2, 32], strides = [1, 1]} : vector<2x64xf32> to vector<2x32xf32>
    %c24_371 = arith.constant 24 : index
    %c0_372 = arith.constant 0 : index
    %c0_373 = arith.constant 0 : index
    %397 = vector.load %arg5[%c24_371, %c0_372, %c0_373] : memref<32x2x32xf32, #tpu.memory_space<vmem>>, vector<1x2x32xf32>
    %398 = vector.shape_cast %397 : vector<1x2x32xf32> to vector<2x32xf32>
    %399 = vector.shape_cast %396 : vector<2x32xf32> to vector<1x2x32xf32>
    tpu.vector_store %arg5[%c24_371, %c0_372, %c0_373], %399 {strides = array<i32>} : memref<32x2x32xf32, #tpu.memory_space<vmem>>, vector<1x2x32xf32>,
    %c25 = arith.constant 25 : index
    %c0_374 = arith.constant 0 : index
    %c0_375 = arith.constant 0 : index
    %400 = vector.load %arg1[%c25, %c0_374, %c0_375] : memref<32x2x32xbf16, #tpu.memory_space<vmem>>, vector<1x2x32xbf16>
    %401 = vector.shape_cast %400 : vector<1x2x32xbf16> to vector<2x32xbf16>
    %c25_376 = arith.constant 25 : index
    %c0_377 = arith.constant 0 : index
    %c0_378 = arith.constant 0 : index
    %402 = vector.load %arg2[%c25_376, %c0_377, %c0_378] : memref<32x2x32xbf16, #tpu.memory_space<vmem>>, vector<1x2x32xbf16>
    %403 = vector.shape_cast %402 : vector<1x2x32xbf16> to vector<2x32xbf16>
    %404 = tpu.concatenate %401, %403 in 1 : vector<2x32xbf16>, vector<2x32xbf16> -> vector<2x64xbf16>
    %c25_379 = arith.constant 25 : index
    %c0_380 = arith.constant 0 : index
    %c0_381 = arith.constant 0 : index
    %405 = vector.load %arg3[%c25_379, %c0_380, %c0_381] : memref<32x64x64xbf16, #tpu.memory_space<vmem>>, vector<1x64x64xbf16>
    %406 = vector.shape_cast %405 : vector<1x64x64xbf16> to vector<64x64xbf16>
    %cst_382 = arith.constant dense<0.000000e+00> : vector<2x64xf32>
    %407 = tpu.matmul %404, %406, %cst_382 {dimension_numbers = #tpu.dot_dimension_numbers<[1], [0], [0], [1], [0, 0, 1, 1], [], []>} : vector<2x64xbf16>, vector<64x64xbf16>, vector<2x64xf32> -> vector<2x64xf32>
    %408 = vector.extract_strided_slice %407 {offsets = [0, 0], sizes = [2, 32], strides = [1, 1]} : vector<2x64xf32> to vector<2x32xf32>
    %c25_383 = arith.constant 25 : index
    %c0_384 = arith.constant 0 : index
    %c0_385 = arith.constant 0 : index
    %409 = vector.load %arg4[%c25_383, %c0_384, %c0_385] : memref<32x2x32xf32, #tpu.memory_space<vmem>>, vector<1x2x32xf32>
    %410 = vector.shape_cast %409 : vector<1x2x32xf32> to vector<2x32xf32>
    %411 = vector.shape_cast %408 : vector<2x32xf32> to vector<1x2x32xf32>
    tpu.vector_store %arg4[%c25_383, %c0_384, %c0_385], %411 {strides = array<i32>} : memref<32x2x32xf32, #tpu.memory_space<vmem>>, vector<1x2x32xf32>,
    %412 = vector.extract_strided_slice %407 {offsets = [0, 32], sizes = [2, 32], strides = [1, 1]} : vector<2x64xf32> to vector<2x32xf32>
    %c25_386 = arith.constant 25 : index
    %c0_387 = arith.constant 0 : index
    %c0_388 = arith.constant 0 : index
    %413 = vector.load %arg5[%c25_386, %c0_387, %c0_388] : memref<32x2x32xf32, #tpu.memory_space<vmem>>, vector<1x2x32xf32>
    %414 = vector.shape_cast %413 : vector<1x2x32xf32> to vector<2x32xf32>
    %415 = vector.shape_cast %412 : vector<2x32xf32> to vector<1x2x32xf32>
    tpu.vector_store %arg5[%c25_386, %c0_387, %c0_388], %415 {strides = array<i32>} : memref<32x2x32xf32, #tpu.memory_space<vmem>>, vector<1x2x32xf32>,
    %c26 = arith.constant 26 : index
    %c0_389 = arith.constant 0 : index
    %c0_390 = arith.constant 0 : index
    %416 = vector.load %arg1[%c26, %c0_389, %c0_390] : memref<32x2x32xbf16, #tpu.memory_space<vmem>>, vector<1x2x32xbf16>
    %417 = vector.shape_cast %416 : vector<1x2x32xbf16> to vector<2x32xbf16>
    %c26_391 = arith.constant 26 : index
    %c0_392 = arith.constant 0 : index
    %c0_393 = arith.constant 0 : index
    %418 = vector.load %arg2[%c26_391, %c0_392, %c0_393] : memref<32x2x32xbf16, #tpu.memory_space<vmem>>, vector<1x2x32xbf16>
    %419 = vector.shape_cast %418 : vector<1x2x32xbf16> to vector<2x32xbf16>
    %420 = tpu.concatenate %417, %419 in 1 : vector<2x32xbf16>, vector<2x32xbf16> -> vector<2x64xbf16>
    %c26_394 = arith.constant 26 : index
    %c0_395 = arith.constant 0 : index
    %c0_396 = arith.constant 0 : index
    %421 = vector.load %arg3[%c26_394, %c0_395, %c0_396] : memref<32x64x64xbf16, #tpu.memory_space<vmem>>, vector<1x64x64xbf16>
    %422 = vector.shape_cast %421 : vector<1x64x64xbf16> to vector<64x64xbf16>
    %cst_397 = arith.constant dense<0.000000e+00> : vector<2x64xf32>
    %423 = tpu.matmul %420, %422, %cst_397 {dimension_numbers = #tpu.dot_dimension_numbers<[1], [0], [0], [1], [0, 0, 1, 1], [], []>} : vector<2x64xbf16>, vector<64x64xbf16>, vector<2x64xf32> -> vector<2x64xf32>
    %424 = vector.extract_strided_slice %423 {offsets = [0, 0], sizes = [2, 32], strides = [1, 1]} : vector<2x64xf32> to vector<2x32xf32>
    %c26_398 = arith.constant 26 : index
    %c0_399 = arith.constant 0 : index
    %c0_400 = arith.constant 0 : index
    %425 = vector.load %arg4[%c26_398, %c0_399, %c0_400] : memref<32x2x32xf32, #tpu.memory_space<vmem>>, vector<1x2x32xf32>
    %426 = vector.shape_cast %425 : vector<1x2x32xf32> to vector<2x32xf32>
    %427 = vector.shape_cast %424 : vector<2x32xf32> to vector<1x2x32xf32>
    tpu.vector_store %arg4[%c26_398, %c0_399, %c0_400], %427 {strides = array<i32>} : memref<32x2x32xf32, #tpu.memory_space<vmem>>, vector<1x2x32xf32>,
    %428 = vector.extract_strided_slice %423 {offsets = [0, 32], sizes = [2, 32], strides = [1, 1]} : vector<2x64xf32> to vector<2x32xf32>
    %c26_401 = arith.constant 26 : index
    %c0_402 = arith.constant 0 : index
    %c0_403 = arith.constant 0 : index
    %429 = vector.load %arg5[%c26_401, %c0_402, %c0_403] : memref<32x2x32xf32, #tpu.memory_space<vmem>>, vector<1x2x32xf32>
    %430 = vector.shape_cast %429 : vector<1x2x32xf32> to vector<2x32xf32>
    %431 = vector.shape_cast %428 : vector<2x32xf32> to vector<1x2x32xf32>
    tpu.vector_store %arg5[%c26_401, %c0_402, %c0_403], %431 {strides = array<i32>} : memref<32x2x32xf32, #tpu.memory_space<vmem>>, vector<1x2x32xf32>,
    %c27 = arith.constant 27 : index
    %c0_404 = arith.constant 0 : index
    %c0_405 = arith.constant 0 : index
    %432 = vector.load %arg1[%c27, %c0_404, %c0_405] : memref<32x2x32xbf16, #tpu.memory_space<vmem>>, vector<1x2x32xbf16>
    %433 = vector.shape_cast %432 : vector<1x2x32xbf16> to vector<2x32xbf16>
    %c27_406 = arith.constant 27 : index
    %c0_407 = arith.constant 0 : index
    %c0_408 = arith.constant 0 : index
    %434 = vector.load %arg2[%c27_406, %c0_407, %c0_408] : memref<32x2x32xbf16, #tpu.memory_space<vmem>>, vector<1x2x32xbf16>
    %435 = vector.shape_cast %434 : vector<1x2x32xbf16> to vector<2x32xbf16>
    %436 = tpu.concatenate %433, %435 in 1 : vector<2x32xbf16>, vector<2x32xbf16> -> vector<2x64xbf16>
    %c27_409 = arith.constant 27 : index
    %c0_410 = arith.constant 0 : index
    %c0_411 = arith.constant 0 : index
    %437 = vector.load %arg3[%c27_409, %c0_410, %c0_411] : memref<32x64x64xbf16, #tpu.memory_space<vmem>>, vector<1x64x64xbf16>
    %438 = vector.shape_cast %437 : vector<1x64x64xbf16> to vector<64x64xbf16>
    %cst_412 = arith.constant dense<0.000000e+00> : vector<2x64xf32>
    %439 = tpu.matmul %436, %438, %cst_412 {dimension_numbers = #tpu.dot_dimension_numbers<[1], [0], [0], [1], [0, 0, 1, 1], [], []>} : vector<2x64xbf16>, vector<64x64xbf16>, vector<2x64xf32> -> vector<2x64xf32>
    %440 = vector.extract_strided_slice %439 {offsets = [0, 0], sizes = [2, 32], strides = [1, 1]} : vector<2x64xf32> to vector<2x32xf32>
    %c27_413 = arith.constant 27 : index
    %c0_414 = arith.constant 0 : index
    %c0_415 = arith.constant 0 : index
    %441 = vector.load %arg4[%c27_413, %c0_414, %c0_415] : memref<32x2x32xf32, #tpu.memory_space<vmem>>, vector<1x2x32xf32>
    %442 = vector.shape_cast %441 : vector<1x2x32xf32> to vector<2x32xf32>
    %443 = vector.shape_cast %440 : vector<2x32xf32> to vector<1x2x32xf32>
    tpu.vector_store %arg4[%c27_413, %c0_414, %c0_415], %443 {strides = array<i32>} : memref<32x2x32xf32, #tpu.memory_space<vmem>>, vector<1x2x32xf32>,
    %444 = vector.extract_strided_slice %439 {offsets = [0, 32], sizes = [2, 32], strides = [1, 1]} : vector<2x64xf32> to vector<2x32xf32>
    %c27_416 = arith.constant 27 : index
    %c0_417 = arith.constant 0 : index
    %c0_418 = arith.constant 0 : index
    %445 = vector.load %arg5[%c27_416, %c0_417, %c0_418] : memref<32x2x32xf32, #tpu.memory_space<vmem>>, vector<1x2x32xf32>
    %446 = vector.shape_cast %445 : vector<1x2x32xf32> to vector<2x32xf32>
    %447 = vector.shape_cast %444 : vector<2x32xf32> to vector<1x2x32xf32>
    tpu.vector_store %arg5[%c27_416, %c0_417, %c0_418], %447 {strides = array<i32>} : memref<32x2x32xf32, #tpu.memory_space<vmem>>, vector<1x2x32xf32>,
    %c28 = arith.constant 28 : index
    %c0_419 = arith.constant 0 : index
    %c0_420 = arith.constant 0 : index
    %448 = vector.load %arg1[%c28, %c0_419, %c0_420] : memref<32x2x32xbf16, #tpu.memory_space<vmem>>, vector<1x2x32xbf16>
    %449 = vector.shape_cast %448 : vector<1x2x32xbf16> to vector<2x32xbf16>
    %c28_421 = arith.constant 28 : index
    %c0_422 = arith.constant 0 : index
    %c0_423 = arith.constant 0 : index
    %450 = vector.load %arg2[%c28_421, %c0_422, %c0_423] : memref<32x2x32xbf16, #tpu.memory_space<vmem>>, vector<1x2x32xbf16>
    %451 = vector.shape_cast %450 : vector<1x2x32xbf16> to vector<2x32xbf16>
    %452 = tpu.concatenate %449, %451 in 1 : vector<2x32xbf16>, vector<2x32xbf16> -> vector<2x64xbf16>
    %c28_424 = arith.constant 28 : index
    %c0_425 = arith.constant 0 : index
    %c0_426 = arith.constant 0 : index
    %453 = vector.load %arg3[%c28_424, %c0_425, %c0_426] : memref<32x64x64xbf16, #tpu.memory_space<vmem>>, vector<1x64x64xbf16>
    %454 = vector.shape_cast %453 : vector<1x64x64xbf16> to vector<64x64xbf16>
    %cst_427 = arith.constant dense<0.000000e+00> : vector<2x64xf32>
    %455 = tpu.matmul %452, %454, %cst_427 {dimension_numbers = #tpu.dot_dimension_numbers<[1], [0], [0], [1], [0, 0, 1, 1], [], []>} : vector<2x64xbf16>, vector<64x64xbf16>, vector<2x64xf32> -> vector<2x64xf32>
    %456 = vector.extract_strided_slice %455 {offsets = [0, 0], sizes = [2, 32], strides = [1, 1]} : vector<2x64xf32> to vector<2x32xf32>
    %c28_428 = arith.constant 28 : index
    %c0_429 = arith.constant 0 : index
    %c0_430 = arith.constant 0 : index
    %457 = vector.load %arg4[%c28_428, %c0_429, %c0_430] : memref<32x2x32xf32, #tpu.memory_space<vmem>>, vector<1x2x32xf32>
    %458 = vector.shape_cast %457 : vector<1x2x32xf32> to vector<2x32xf32>
    %459 = vector.shape_cast %456 : vector<2x32xf32> to vector<1x2x32xf32>
    tpu.vector_store %arg4[%c28_428, %c0_429, %c0_430], %459 {strides = array<i32>} : memref<32x2x32xf32, #tpu.memory_space<vmem>>, vector<1x2x32xf32>,
    %460 = vector.extract_strided_slice %455 {offsets = [0, 32], sizes = [2, 32], strides = [1, 1]} : vector<2x64xf32> to vector<2x32xf32>
    %c28_431 = arith.constant 28 : index
    %c0_432 = arith.constant 0 : index
    %c0_433 = arith.constant 0 : index
    %461 = vector.load %arg5[%c28_431, %c0_432, %c0_433] : memref<32x2x32xf32, #tpu.memory_space<vmem>>, vector<1x2x32xf32>
    %462 = vector.shape_cast %461 : vector<1x2x32xf32> to vector<2x32xf32>
    %463 = vector.shape_cast %460 : vector<2x32xf32> to vector<1x2x32xf32>
    tpu.vector_store %arg5[%c28_431, %c0_432, %c0_433], %463 {strides = array<i32>} : memref<32x2x32xf32, #tpu.memory_space<vmem>>, vector<1x2x32xf32>,
    %c29 = arith.constant 29 : index
    %c0_434 = arith.constant 0 : index
    %c0_435 = arith.constant 0 : index
    %464 = vector.load %arg1[%c29, %c0_434, %c0_435] : memref<32x2x32xbf16, #tpu.memory_space<vmem>>, vector<1x2x32xbf16>
    %465 = vector.shape_cast %464 : vector<1x2x32xbf16> to vector<2x32xbf16>
    %c29_436 = arith.constant 29 : index
    %c0_437 = arith.constant 0 : index
    %c0_438 = arith.constant 0 : index
    %466 = vector.load %arg2[%c29_436, %c0_437, %c0_438] : memref<32x2x32xbf16, #tpu.memory_space<vmem>>, vector<1x2x32xbf16>
    %467 = vector.shape_cast %466 : vector<1x2x32xbf16> to vector<2x32xbf16>
    %468 = tpu.concatenate %465, %467 in 1 : vector<2x32xbf16>, vector<2x32xbf16> -> vector<2x64xbf16>
    %c29_439 = arith.constant 29 : index
    %c0_440 = arith.constant 0 : index
    %c0_441 = arith.constant 0 : index
    %469 = vector.load %arg3[%c29_439, %c0_440, %c0_441] : memref<32x64x64xbf16, #tpu.memory_space<vmem>>, vector<1x64x64xbf16>
    %470 = vector.shape_cast %469 : vector<1x64x64xbf16> to vector<64x64xbf16>
    %cst_442 = arith.constant dense<0.000000e+00> : vector<2x64xf32>
    %471 = tpu.matmul %468, %470, %cst_442 {dimension_numbers = #tpu.dot_dimension_numbers<[1], [0], [0], [1], [0, 0, 1, 1], [], []>} : vector<2x64xbf16>, vector<64x64xbf16>, vector<2x64xf32> -> vector<2x64xf32>
    %472 = vector.extract_strided_slice %471 {offsets = [0, 0], sizes = [2, 32], strides = [1, 1]} : vector<2x64xf32> to vector<2x32xf32>
    %c29_443 = arith.constant 29 : index
    %c0_444 = arith.constant 0 : index
    %c0_445 = arith.constant 0 : index
    %473 = vector.load %arg4[%c29_443, %c0_444, %c0_445] : memref<32x2x32xf32, #tpu.memory_space<vmem>>, vector<1x2x32xf32>
    %474 = vector.shape_cast %473 : vector<1x2x32xf32> to vector<2x32xf32>
    %475 = vector.shape_cast %472 : vector<2x32xf32> to vector<1x2x32xf32>
    tpu.vector_store %arg4[%c29_443, %c0_444, %c0_445], %475 {strides = array<i32>} : memref<32x2x32xf32, #tpu.memory_space<vmem>>, vector<1x2x32xf32>,
    %476 = vector.extract_strided_slice %471 {offsets = [0, 32], sizes = [2, 32], strides = [1, 1]} : vector<2x64xf32> to vector<2x32xf32>
    %c29_446 = arith.constant 29 : index
    %c0_447 = arith.constant 0 : index
    %c0_448 = arith.constant 0 : index
    %477 = vector.load %arg5[%c29_446, %c0_447, %c0_448] : memref<32x2x32xf32, #tpu.memory_space<vmem>>, vector<1x2x32xf32>
    %478 = vector.shape_cast %477 : vector<1x2x32xf32> to vector<2x32xf32>
    %479 = vector.shape_cast %476 : vector<2x32xf32> to vector<1x2x32xf32>
    tpu.vector_store %arg5[%c29_446, %c0_447, %c0_448], %479 {strides = array<i32>} : memref<32x2x32xf32, #tpu.memory_space<vmem>>, vector<1x2x32xf32>,
    %c30 = arith.constant 30 : index
    %c0_449 = arith.constant 0 : index
    %c0_450 = arith.constant 0 : index
    %480 = vector.load %arg1[%c30, %c0_449, %c0_450] : memref<32x2x32xbf16, #tpu.memory_space<vmem>>, vector<1x2x32xbf16>
    %481 = vector.shape_cast %480 : vector<1x2x32xbf16> to vector<2x32xbf16>
    %c30_451 = arith.constant 30 : index
    %c0_452 = arith.constant 0 : index
    %c0_453 = arith.constant 0 : index
    %482 = vector.load %arg2[%c30_451, %c0_452, %c0_453] : memref<32x2x32xbf16, #tpu.memory_space<vmem>>, vector<1x2x32xbf16>
    %483 = vector.shape_cast %482 : vector<1x2x32xbf16> to vector<2x32xbf16>
    %484 = tpu.concatenate %481, %483 in 1 : vector<2x32xbf16>, vector<2x32xbf16> -> vector<2x64xbf16>
    %c30_454 = arith.constant 30 : index
    %c0_455 = arith.constant 0 : index
    %c0_456 = arith.constant 0 : index
    %485 = vector.load %arg3[%c30_454, %c0_455, %c0_456] : memref<32x64x64xbf16, #tpu.memory_space<vmem>>, vector<1x64x64xbf16>
    %486 = vector.shape_cast %485 : vector<1x64x64xbf16> to vector<64x64xbf16>
    %cst_457 = arith.constant dense<0.000000e+00> : vector<2x64xf32>
    %487 = tpu.matmul %484, %486, %cst_457 {dimension_numbers = #tpu.dot_dimension_numbers<[1], [0], [0], [1], [0, 0, 1, 1], [], []>} : vector<2x64xbf16>, vector<64x64xbf16>, vector<2x64xf32> -> vector<2x64xf32>
    %488 = vector.extract_strided_slice %487 {offsets = [0, 0], sizes = [2, 32], strides = [1, 1]} : vector<2x64xf32> to vector<2x32xf32>
    %c30_458 = arith.constant 30 : index
    %c0_459 = arith.constant 0 : index
    %c0_460 = arith.constant 0 : index
    %489 = vector.load %arg4[%c30_458, %c0_459, %c0_460] : memref<32x2x32xf32, #tpu.memory_space<vmem>>, vector<1x2x32xf32>
    %490 = vector.shape_cast %489 : vector<1x2x32xf32> to vector<2x32xf32>
    %491 = vector.shape_cast %488 : vector<2x32xf32> to vector<1x2x32xf32>
    tpu.vector_store %arg4[%c30_458, %c0_459, %c0_460], %491 {strides = array<i32>} : memref<32x2x32xf32, #tpu.memory_space<vmem>>, vector<1x2x32xf32>,
    %492 = vector.extract_strided_slice %487 {offsets = [0, 32], sizes = [2, 32], strides = [1, 1]} : vector<2x64xf32> to vector<2x32xf32>
    %c30_461 = arith.constant 30 : index
    %c0_462 = arith.constant 0 : index
    %c0_463 = arith.constant 0 : index
    %493 = vector.load %arg5[%c30_461, %c0_462, %c0_463] : memref<32x2x32xf32, #tpu.memory_space<vmem>>, vector<1x2x32xf32>
    %494 = vector.shape_cast %493 : vector<1x2x32xf32> to vector<2x32xf32>
    %495 = vector.shape_cast %492 : vector<2x32xf32> to vector<1x2x32xf32>
    tpu.vector_store %arg5[%c30_461, %c0_462, %c0_463], %495 {strides = array<i32>} : memref<32x2x32xf32, #tpu.memory_space<vmem>>, vector<1x2x32xf32>,
    %c31 = arith.constant 31 : index
    %c0_464 = arith.constant 0 : index
    %c0_465 = arith.constant 0 : index
    %496 = vector.load %arg1[%c31, %c0_464, %c0_465] : memref<32x2x32xbf16, #tpu.memory_space<vmem>>, vector<1x2x32xbf16>
    %497 = vector.shape_cast %496 : vector<1x2x32xbf16> to vector<2x32xbf16>
    %c31_466 = arith.constant 31 : index
    %c0_467 = arith.constant 0 : index
    %c0_468 = arith.constant 0 : index
    %498 = vector.load %arg2[%c31_466, %c0_467, %c0_468] : memref<32x2x32xbf16, #tpu.memory_space<vmem>>, vector<1x2x32xbf16>
    %499 = vector.shape_cast %498 : vector<1x2x32xbf16> to vector<2x32xbf16>
    %500 = tpu.concatenate %497, %499 in 1 : vector<2x32xbf16>, vector<2x32xbf16> -> vector<2x64xbf16>
    %c31_469 = arith.constant 31 : index
    %c0_470 = arith.constant 0 : index
    %c0_471 = arith.constant 0 : index
    %501 = vector.load %arg3[%c31_469, %c0_470, %c0_471] : memref<32x64x64xbf16, #tpu.memory_space<vmem>>, vector<1x64x64xbf16>
    %502 = vector.shape_cast %501 : vector<1x64x64xbf16> to vector<64x64xbf16>
    %cst_472 = arith.constant dense<0.000000e+00> : vector<2x64xf32>
    %503 = tpu.matmul %500, %502, %cst_472 {dimension_numbers = #tpu.dot_dimension_numbers<[1], [0], [0], [1], [0, 0, 1, 1], [], []>} : vector<2x64xbf16>, vector<64x64xbf16>, vector<2x64xf32> -> vector<2x64xf32>
    %504 = vector.extract_strided_slice %503 {offsets = [0, 0], sizes = [2, 32], strides = [1, 1]} : vector<2x64xf32> to vector<2x32xf32>
    %c31_473 = arith.constant 31 : index
    %c0_474 = arith.constant 0 : index
    %c0_475 = arith.constant 0 : index
    %505 = vector.load %arg4[%c31_473, %c0_474, %c0_475] : memref<32x2x32xf32, #tpu.memory_space<vmem>>, vector<1x2x32xf32>
    %506 = vector.shape_cast %505 : vector<1x2x32xf32> to vector<2x32xf32>
    %507 = vector.shape_cast %504 : vector<2x32xf32> to vector<1x2x32xf32>
    tpu.vector_store %arg4[%c31_473, %c0_474, %c0_475], %507 {strides = array<i32>} : memref<32x2x32xf32, #tpu.memory_space<vmem>>, vector<1x2x32xf32>,
    %508 = vector.extract_strided_slice %503 {offsets = [0, 32], sizes = [2, 32], strides = [1, 1]} : vector<2x64xf32> to vector<2x32xf32>
    %c31_476 = arith.constant 31 : index
    %c0_477 = arith.constant 0 : index
    %c0_478 = arith.constant 0 : index
    %509 = vector.load %arg5[%c31_476, %c0_477, %c0_478] : memref<32x2x32xf32, #tpu.memory_space<vmem>>, vector<1x2x32xf32>
    %510 = vector.shape_cast %509 : vector<1x2x32xf32> to vector<2x32xf32>
    %511 = vector.shape_cast %508 : vector<2x32xf32> to vector<1x2x32xf32>
    tpu.vector_store %arg5[%c31_476, %c0_477, %c0_478], %511 {strides = array<i32>} : memref<32x2x32xf32, #tpu.memory_space<vmem>>, vector<1x2x32xf32>,
    return
  }
  func.func @transform_0(%arg0: i32) -> (i32, i32, i32) {
    %c0_i32 = arith.constant 0 : i32
    %c0_i32_0 = arith.constant 0 : i32
    %c0_i32_1 = arith.constant 0 : i32
    return %arg0, %c0_i32, %c0_i32_0 : i32, i32, i32
  }
  func.func @transform_1(%arg0: i32) -> (i32, i32, i32) {
    %c0_i32 = arith.constant 0 : i32
    %c0_i32_0 = arith.constant 0 : i32
    %c0_i32_1 = arith.constant 0 : i32
    return %arg0, %c0_i32, %c0_i32_0 : i32, i32, i32
  }
  func.func @transform_2(%arg0: i32) -> (i32, i32, i32) {
    %c0_i32 = arith.constant 0 : i32
    %c0_i32_0 = arith.constant 0 : i32
    %c0_i32_1 = arith.constant 0 : i32
    return %arg0, %c0_i32, %c0_i32_0 : i32, i32, i32
  }
  func.func @transform_3(%arg0: i32) -> (i32, i32, i32) {
    %c0_i32 = arith.constant 0 : i32
    %c0_i32_0 = arith.constant 0 : i32
    %c0_i32_1 = arith.constant 0 : i32
    return %arg0, %c0_i32, %c0_i32_0 : i32, i32, i32
  }
  func.func @transform_4(%arg0: i32) -> (i32, i32, i32) {
    %c0_i32 = arith.constant 0 : i32
    %c0_i32_0 = arith.constant 0 : i32
    %c0_i32_1 = arith.constant 0 : i32
    return %arg0, %c0_i32, %c0_i32_0 : i32, i32, i32
  }
}

module attributes {stable_mosaic.version = 11 : i64} {
  func.func @_conv_add_stats_kernel(%arg0: i32, %arg1: memref<32x128xf32, #tpu.memory_space<vmem>>, %arg2: memref<32x128xbf16, #tpu.memory_space<vmem>>, %arg3: memref<128x128xbf16, #tpu.memory_space<vmem>>, %arg4: memref<1x128xf32, #tpu.memory_space<vmem>>, %arg5: memref<32x128xf32, #tpu.memory_space<vmem>>, %arg6: memref<8x128xf32, #tpu.memory_space<vmem>>, %arg7: memref<8x128xf32, #tpu.memory_space<vmem>>) attributes {dimension_semantics = [#tpu.dimension_semantics<parallel>], iteration_bounds = array<i64: 4>, scalar_prefetch = 0 : i64, scratch_operands = 0 : i64, tpu.core_type = #tpu.core_type<tc>, window_params = [{transform_indices = @transform_0, window_bounds = array<i64: 32, 128>}, {transform_indices = @transform_1, window_bounds = array<i64: 32, 128>}, {pipeline_mode = #tpu.pipeline_mode<synchronous>, transform_indices = @transform_2, window_bounds = array<i64: 128, 128>}, {pipeline_mode = #tpu.pipeline_mode<synchronous>, transform_indices = @transform_3, window_bounds = array<i64: 1, 128>}, {transform_indices = @transform_4, window_bounds = array<i64: 32, 128>}, {transform_indices = @transform_5, window_bounds = array<i64: 8, 128>}, {transform_indices = @transform_6, window_bounds = array<i64: 8, 128>}]} {
    %c0 = arith.constant 0 : index
    %c0_0 = arith.constant 0 : index
    %0 = vector.load %arg2[%c0, %c0_0] : memref<32x128xbf16, #tpu.memory_space<vmem>>, vector<32x128xbf16>
    %c0_1 = arith.constant 0 : index
    %c0_2 = arith.constant 0 : index
    %1 = vector.load %arg3[%c0_1, %c0_2] : memref<128x128xbf16, #tpu.memory_space<vmem>>, vector<128x128xbf16>
    %cst = arith.constant dense<0.000000e+00> : vector<32x128xf32>
    %2 = tpu.matmul %0, %1, %cst {dimension_numbers = #tpu.dot_dimension_numbers<[1], [0], [0], [1], [0, 0, 1, 1], [], []>} : vector<32x128xbf16>, vector<128x128xbf16>, vector<32x128xf32> -> vector<32x128xf32>
    %c0_3 = arith.constant 0 : index
    %c0_4 = arith.constant 0 : index
    %3 = vector.load %arg1[%c0_3, %c0_4] : memref<32x128xf32, #tpu.memory_space<vmem>>, vector<32x128xf32>
    %4 = arith.addf %3, %2 : vector<32x128xf32>
    %c0_5 = arith.constant 0 : index
    %c0_6 = arith.constant 0 : index
    %5 = vector.load %arg4[%c0_5, %c0_6] : memref<1x128xf32, #tpu.memory_space<vmem>>, vector<1x128xf32>
    %6 = vector.broadcast %5 : vector<1x128xf32> to vector<32x128xf32>
    %7 = arith.addf %4, %6 : vector<32x128xf32>
    %c0_7 = arith.constant 0 : index
    %c0_8 = arith.constant 0 : index
    %8 = vector.load %arg5[%c0_7, %c0_8] : memref<32x128xf32, #tpu.memory_space<vmem>>, vector<32x128xf32>
    tpu.vector_store %arg5[%c0_7, %c0_8], %7 {strides = array<i32>} : memref<32x128xf32, #tpu.memory_space<vmem>>, vector<32x128xf32>,
    %9 = vector.shape_cast %7 : vector<32x128xf32> to vector<4x8x128xf32>
    %cst_9 = arith.constant dense<0.000000e+00> : vector<8x128xf32>
    %10 = vector.multi_reduction <add>, %9, %cst_9 [0] : vector<4x8x128xf32> to vector<8x128xf32>
    %c0_10 = arith.constant 0 : index
    %c0_11 = arith.constant 0 : index
    %11 = vector.load %arg6[%c0_10, %c0_11] : memref<8x128xf32, #tpu.memory_space<vmem>>, vector<8x128xf32>
    tpu.vector_store %arg6[%c0_10, %c0_11], %10 {strides = array<i32>} : memref<8x128xf32, #tpu.memory_space<vmem>>, vector<8x128xf32>,
    %12 = arith.mulf %9, %9 : vector<4x8x128xf32>
    %cst_12 = arith.constant dense<0.000000e+00> : vector<8x128xf32>
    %13 = vector.multi_reduction <add>, %12, %cst_12 [0] : vector<4x8x128xf32> to vector<8x128xf32>
    %c0_13 = arith.constant 0 : index
    %c0_14 = arith.constant 0 : index
    %14 = vector.load %arg7[%c0_13, %c0_14] : memref<8x128xf32, #tpu.memory_space<vmem>>, vector<8x128xf32>
    tpu.vector_store %arg7[%c0_13, %c0_14], %13 {strides = array<i32>} : memref<8x128xf32, #tpu.memory_space<vmem>>, vector<8x128xf32>,
    return
  }
  func.func @transform_0(%arg0: i32) -> (i32, i32) {
    %c0_i32 = arith.constant 0 : i32
    %c0_i32_0 = arith.constant 0 : i32
    return %arg0, %c0_i32 : i32, i32
  }
  func.func @transform_1(%arg0: i32) -> (i32, i32) {
    %c0_i32 = arith.constant 0 : i32
    %c0_i32_0 = arith.constant 0 : i32
    return %arg0, %c0_i32 : i32, i32
  }
  func.func @transform_2(%arg0: i32) -> (i32, i32) {
    %c0_i32 = arith.constant 0 : i32
    %c0_i32_0 = arith.constant 0 : i32
    %c0_i32_1 = arith.constant 0 : i32
    return %c0_i32, %c0_i32_0 : i32, i32
  }
  func.func @transform_3(%arg0: i32) -> (i32, i32) {
    %c0_i32 = arith.constant 0 : i32
    %c0_i32_0 = arith.constant 0 : i32
    %c0_i32_1 = arith.constant 0 : i32
    return %c0_i32, %c0_i32_0 : i32, i32
  }
  func.func @transform_4(%arg0: i32) -> (i32, i32) {
    %c0_i32 = arith.constant 0 : i32
    %c0_i32_0 = arith.constant 0 : i32
    return %arg0, %c0_i32 : i32, i32
  }
  func.func @transform_5(%arg0: i32) -> (i32, i32) {
    %c0_i32 = arith.constant 0 : i32
    %c0_i32_0 = arith.constant 0 : i32
    return %arg0, %c0_i32 : i32, i32
  }
  func.func @transform_6(%arg0: i32) -> (i32, i32) {
    %c0_i32 = arith.constant 0 : i32
    %c0_i32_0 = arith.constant 0 : i32
    return %arg0, %c0_i32 : i32, i32
  }
}

module attributes {stable_mosaic.version = 11 : i64} {
  func.func @_bn_apply_kernel(%arg0: i32, %arg1: memref<32x128xf32, #tpu.memory_space<vmem>>, %arg2: memref<1x128xf32, #tpu.memory_space<vmem>>, %arg3: memref<1x128xf32, #tpu.memory_space<vmem>>, %arg4: memref<32x128xf32, #tpu.memory_space<vmem>>, %arg5: memref<32x128xbf16, #tpu.memory_space<vmem>>) attributes {dimension_semantics = [#tpu.dimension_semantics<parallel>], iteration_bounds = array<i64: 4>, scalar_prefetch = 0 : i64, scratch_operands = 0 : i64, tpu.core_type = #tpu.core_type<tc>, window_params = [{transform_indices = @transform_0, window_bounds = array<i64: 32, 128>}, {pipeline_mode = #tpu.pipeline_mode<synchronous>, transform_indices = @transform_1, window_bounds = array<i64: 1, 128>}, {pipeline_mode = #tpu.pipeline_mode<synchronous>, transform_indices = @transform_2, window_bounds = array<i64: 1, 128>}, {transform_indices = @transform_3, window_bounds = array<i64: 32, 128>}, {transform_indices = @transform_4, window_bounds = array<i64: 32, 128>}]} {
    %c0 = arith.constant 0 : index
    %c0_0 = arith.constant 0 : index
    %0 = vector.load %arg1[%c0, %c0_0] : memref<32x128xf32, #tpu.memory_space<vmem>>, vector<32x128xf32>
    %c0_1 = arith.constant 0 : index
    %c0_2 = arith.constant 0 : index
    %1 = vector.load %arg2[%c0_1, %c0_2] : memref<1x128xf32, #tpu.memory_space<vmem>>, vector<1x128xf32>
    %2 = vector.broadcast %1 : vector<1x128xf32> to vector<32x128xf32>
    %3 = arith.mulf %0, %2 : vector<32x128xf32>
    %c0_3 = arith.constant 0 : index
    %c0_4 = arith.constant 0 : index
    %4 = vector.load %arg3[%c0_3, %c0_4] : memref<1x128xf32, #tpu.memory_space<vmem>>, vector<1x128xf32>
    %5 = vector.broadcast %4 : vector<1x128xf32> to vector<32x128xf32>
    %6 = arith.addf %3, %5 : vector<32x128xf32>
    %cst = arith.constant 0.000000e+00 : f32
    %7 = vector.broadcast %cst : f32 to vector<32x128xf32>
    %8 = arith.maximumf %6, %7 : vector<32x128xf32>
    %c0_5 = arith.constant 0 : index
    %c0_6 = arith.constant 0 : index
    %9 = vector.load %arg4[%c0_5, %c0_6] : memref<32x128xf32, #tpu.memory_space<vmem>>, vector<32x128xf32>
    tpu.vector_store %arg4[%c0_5, %c0_6], %8 {strides = array<i32>} : memref<32x128xf32, #tpu.memory_space<vmem>>, vector<32x128xf32>,
    %10 = arith.truncf %8 : vector<32x128xf32> to vector<32x128xbf16>
    %c0_7 = arith.constant 0 : index
    %c0_8 = arith.constant 0 : index
    %11 = vector.load %arg5[%c0_7, %c0_8] : memref<32x128xbf16, #tpu.memory_space<vmem>>, vector<32x128xbf16>
    tpu.vector_store %arg5[%c0_7, %c0_8], %10 {strides = array<i32>} : memref<32x128xbf16, #tpu.memory_space<vmem>>, vector<32x128xbf16>,
    return
  }
  func.func @transform_0(%arg0: i32) -> (i32, i32) {
    %c0_i32 = arith.constant 0 : i32
    %c0_i32_0 = arith.constant 0 : i32
    return %arg0, %c0_i32 : i32, i32
  }
  func.func @transform_1(%arg0: i32) -> (i32, i32) {
    %c0_i32 = arith.constant 0 : i32
    %c0_i32_0 = arith.constant 0 : i32
    %c0_i32_1 = arith.constant 0 : i32
    return %c0_i32, %c0_i32_0 : i32, i32
  }
  func.func @transform_2(%arg0: i32) -> (i32, i32) {
    %c0_i32 = arith.constant 0 : i32
    %c0_i32_0 = arith.constant 0 : i32
    %c0_i32_1 = arith.constant 0 : i32
    return %c0_i32, %c0_i32_0 : i32, i32
  }
  func.func @transform_3(%arg0: i32) -> (i32, i32) {
    %c0_i32 = arith.constant 0 : i32
    %c0_i32_0 = arith.constant 0 : i32
    return %arg0, %c0_i32 : i32, i32
  }
  func.func @transform_4(%arg0: i32) -> (i32, i32) {
    %c0_i32 = arith.constant 0 : i32
    %c0_i32_0 = arith.constant 0 : i32
    return %arg0, %c0_i32 : i32, i32
  }
}

module attributes {stable_mosaic.version = 11 : i64} {
  func.func @_bn_apply_kernel(%arg0: i32, %arg1: memref<32x128xf32, #tpu.memory_space<vmem>>, %arg2: memref<1x128xf32, #tpu.memory_space<vmem>>, %arg3: memref<1x128xf32, #tpu.memory_space<vmem>>, %arg4: memref<32x128xf32, #tpu.memory_space<vmem>>, %arg5: memref<32x128xbf16, #tpu.memory_space<vmem>>) attributes {dimension_semantics = [#tpu.dimension_semantics<parallel>], iteration_bounds = array<i64: 4>, scalar_prefetch = 0 : i64, scratch_operands = 0 : i64, tpu.core_type = #tpu.core_type<tc>, window_params = [{transform_indices = @transform_0, window_bounds = array<i64: 32, 128>}, {pipeline_mode = #tpu.pipeline_mode<synchronous>, transform_indices = @transform_1, window_bounds = array<i64: 1, 128>}, {pipeline_mode = #tpu.pipeline_mode<synchronous>, transform_indices = @transform_2, window_bounds = array<i64: 1, 128>}, {transform_indices = @transform_3, window_bounds = array<i64: 32, 128>}, {transform_indices = @transform_4, window_bounds = array<i64: 32, 128>}]} {
    %c0 = arith.constant 0 : index
    %c0_0 = arith.constant 0 : index
    %0 = vector.load %arg1[%c0, %c0_0] : memref<32x128xf32, #tpu.memory_space<vmem>>, vector<32x128xf32>
    %c0_1 = arith.constant 0 : index
    %c0_2 = arith.constant 0 : index
    %1 = vector.load %arg2[%c0_1, %c0_2] : memref<1x128xf32, #tpu.memory_space<vmem>>, vector<1x128xf32>
    %2 = vector.broadcast %1 : vector<1x128xf32> to vector<32x128xf32>
    %3 = arith.mulf %0, %2 : vector<32x128xf32>
    %c0_3 = arith.constant 0 : index
    %c0_4 = arith.constant 0 : index
    %4 = vector.load %arg3[%c0_3, %c0_4] : memref<1x128xf32, #tpu.memory_space<vmem>>, vector<1x128xf32>
    %5 = vector.broadcast %4 : vector<1x128xf32> to vector<32x128xf32>
    %6 = arith.addf %3, %5 : vector<32x128xf32>
    %c0_5 = arith.constant 0 : index
    %c0_6 = arith.constant 0 : index
    %7 = vector.load %arg4[%c0_5, %c0_6] : memref<32x128xf32, #tpu.memory_space<vmem>>, vector<32x128xf32>
    tpu.vector_store %arg4[%c0_5, %c0_6], %6 {strides = array<i32>} : memref<32x128xf32, #tpu.memory_space<vmem>>, vector<32x128xf32>,
    %8 = arith.truncf %6 : vector<32x128xf32> to vector<32x128xbf16>
    %c0_7 = arith.constant 0 : index
    %c0_8 = arith.constant 0 : index
    %9 = vector.load %arg5[%c0_7, %c0_8] : memref<32x128xbf16, #tpu.memory_space<vmem>>, vector<32x128xbf16>
    tpu.vector_store %arg5[%c0_7, %c0_8], %8 {strides = array<i32>} : memref<32x128xbf16, #tpu.memory_space<vmem>>, vector<32x128xbf16>,
    return
  }
  func.func @transform_0(%arg0: i32) -> (i32, i32) {
    %c0_i32 = arith.constant 0 : i32
    %c0_i32_0 = arith.constant 0 : i32
    return %arg0, %c0_i32 : i32, i32
  }
  func.func @transform_1(%arg0: i32) -> (i32, i32) {
    %c0_i32 = arith.constant 0 : i32
    %c0_i32_0 = arith.constant 0 : i32
    %c0_i32_1 = arith.constant 0 : i32
    return %c0_i32, %c0_i32_0 : i32, i32
  }
  func.func @transform_2(%arg0: i32) -> (i32, i32) {
    %c0_i32 = arith.constant 0 : i32
    %c0_i32_0 = arith.constant 0 : i32
    %c0_i32_1 = arith.constant 0 : i32
    return %c0_i32, %c0_i32_0 : i32, i32
  }
  func.func @transform_3(%arg0: i32) -> (i32, i32) {
    %c0_i32 = arith.constant 0 : i32
    %c0_i32_0 = arith.constant 0 : i32
    return %arg0, %c0_i32 : i32, i32
  }
  func.func @transform_4(%arg0: i32) -> (i32, i32) {
    %c0_i32 = arith.constant 0 : i32
    %c0_i32_0 = arith.constant 0 : i32
    return %arg0, %c0_i32 : i32, i32
  }
}

module attributes {stable_mosaic.version = 11 : i64} {
  func.func @_mlp_head_kernel(%arg0: i32, %arg1: memref<128x32xbf16, #tpu.memory_space<vmem>>, %arg2: memref<32x128xbf16, #tpu.memory_space<vmem>>, %arg3: memref<1x128xf32, #tpu.memory_space<vmem>>, %arg4: memref<128x128xbf16, #tpu.memory_space<vmem>>, %arg5: memref<1x128xf32, #tpu.memory_space<vmem>>, %arg6: memref<128x128xf32, #tpu.memory_space<vmem>>) attributes {dimension_semantics = [#tpu.dimension_semantics<parallel>], iteration_bounds = array<i64: 4>, scalar_prefetch = 0 : i64, scratch_operands = 0 : i64, tpu.core_type = #tpu.core_type<tc>, window_params = [{transform_indices = @transform_0, window_bounds = array<i64: 128, 32>}, {pipeline_mode = #tpu.pipeline_mode<synchronous>, transform_indices = @transform_1, window_bounds = array<i64: 32, 128>}, {pipeline_mode = #tpu.pipeline_mode<synchronous>, transform_indices = @transform_2, window_bounds = array<i64: 1, 128>}, {pipeline_mode = #tpu.pipeline_mode<synchronous>, transform_indices = @transform_3, window_bounds = array<i64: 128, 128>}, {pipeline_mode = #tpu.pipeline_mode<synchronous>, transform_indices = @transform_4, window_bounds = array<i64: 1, 128>}, {transform_indices = @transform_5, window_bounds = array<i64: 128, 128>}]} {
    %c0 = arith.constant 0 : index
    %c0_0 = arith.constant 0 : index
    %0 = vector.load %arg1[%c0, %c0_0] : memref<128x32xbf16, #tpu.memory_space<vmem>>, vector<128x32xbf16>
    %c0_1 = arith.constant 0 : index
    %c0_2 = arith.constant 0 : index
    %1 = vector.load %arg2[%c0_1, %c0_2] : memref<32x128xbf16, #tpu.memory_space<vmem>>, vector<32x128xbf16>
    %cst = arith.constant dense<0.000000e+00> : vector<128x128xf32>
    %2 = tpu.matmul %0, %1, %cst {dimension_numbers = #tpu.dot_dimension_numbers<[1], [0], [0], [1], [0, 0, 1, 1], [], []>} : vector<128x32xbf16>, vector<32x128xbf16>, vector<128x128xf32> -> vector<128x128xf32>
    %c0_3 = arith.constant 0 : index
    %c0_4 = arith.constant 0 : index
    %3 = vector.load %arg3[%c0_3, %c0_4] : memref<1x128xf32, #tpu.memory_space<vmem>>, vector<1x128xf32>
    %4 = vector.broadcast %3 : vector<1x128xf32> to vector<128x128xf32>
    %5 = arith.addf %2, %4 : vector<128x128xf32>
    %cst_5 = arith.constant 0.000000e+00 : f32
    %6 = vector.broadcast %cst_5 : f32 to vector<128x128xf32>
    %7 = arith.maximumf %5, %6 : vector<128x128xf32>
    %8 = arith.truncf %7 : vector<128x128xf32> to vector<128x128xbf16>
    %c0_6 = arith.constant 0 : index
    %c0_7 = arith.constant 0 : index
    %9 = vector.load %arg4[%c0_6, %c0_7] : memref<128x128xbf16, #tpu.memory_space<vmem>>, vector<128x128xbf16>
    %cst_8 = arith.constant dense<0.000000e+00> : vector<128x128xf32>
    %10 = tpu.matmul %8, %9, %cst_8 {dimension_numbers = #tpu.dot_dimension_numbers<[1], [0], [0], [1], [0, 0, 1, 1], [], []>} : vector<128x128xbf16>, vector<128x128xbf16>, vector<128x128xf32> -> vector<128x128xf32>
    %c0_9 = arith.constant 0 : index
    %c0_10 = arith.constant 0 : index
    %11 = vector.load %arg5[%c0_9, %c0_10] : memref<1x128xf32, #tpu.memory_space<vmem>>, vector<1x128xf32>
    %12 = vector.broadcast %11 : vector<1x128xf32> to vector<128x128xf32>
    %13 = arith.addf %10, %12 : vector<128x128xf32>
    %c0_11 = arith.constant 0 : index
    %c0_12 = arith.constant 0 : index
    %14 = vector.load %arg6[%c0_11, %c0_12] : memref<128x128xf32, #tpu.memory_space<vmem>>, vector<128x128xf32>
    tpu.vector_store %arg6[%c0_11, %c0_12], %13 {strides = array<i32>} : memref<128x128xf32, #tpu.memory_space<vmem>>, vector<128x128xf32>,
    return
  }
  func.func @transform_0(%arg0: i32) -> (i32, i32) {
    %c0_i32 = arith.constant 0 : i32
    %c0_i32_0 = arith.constant 0 : i32
    return %arg0, %c0_i32 : i32, i32
  }
  func.func @transform_1(%arg0: i32) -> (i32, i32) {
    %c0_i32 = arith.constant 0 : i32
    %c0_i32_0 = arith.constant 0 : i32
    %c0_i32_1 = arith.constant 0 : i32
    return %c0_i32, %c0_i32_0 : i32, i32
  }
  func.func @transform_2(%arg0: i32) -> (i32, i32) {
    %c0_i32 = arith.constant 0 : i32
    %c0_i32_0 = arith.constant 0 : i32
    %c0_i32_1 = arith.constant 0 : i32
    return %c0_i32, %c0_i32_0 : i32, i32
  }
  func.func @transform_3(%arg0: i32) -> (i32, i32) {
    %c0_i32 = arith.constant 0 : i32
    %c0_i32_0 = arith.constant 0 : i32
    %c0_i32_1 = arith.constant 0 : i32
    return %c0_i32, %c0_i32_0 : i32, i32
  }
  func.func @transform_4(%arg0: i32) -> (i32, i32) {
    %c0_i32 = arith.constant 0 : i32
    %c0_i32_0 = arith.constant 0 : i32
    %c0_i32_1 = arith.constant 0 : i32
    return %c0_i32, %c0_i32_0 : i32, i32
  }
  func.func @transform_5(%arg0: i32) -> (i32, i32) {
    %c0_i32 = arith.constant 0 : i32
    %c0_i32_0 = arith.constant 0 : i32
    return %arg0, %c0_i32 : i32, i32
  }
}

</mosaic_0001>

<llo_original>
// kernel: fno_forward.8
$region0: #{fno_forward.8}
  #allocation0 [shape = 'u32[]', space=smem, size = 0x4, offset = 0x4, fixed_abs, tag = 'smem constant byte address 0x4 - core index']
  #allocation1 [shape = 'u32[144,128]{1,0:T(1,128)}', space=vmem, size = 0x12000, scoped, tag = 'internal scratch']
  %s0 = inlined_call_operand.vmem [shape: f32[512,4], index: 0, kind: input, shape index: {}]
  %s1 = inlined_call_operand.hbm [shape: bf16[4,32], index: 1, kind: input, shape index: {}]
  %s2 = inlined_call_operand.hbm [shape: f32[1,32], index: 2, kind: input, shape index: {}]
  %s3 = inlined_call_operand.vmem [shape: f32[512,32], index: 3, kind: output, shape index: {0}]
  %s4 = inlined_call_operand.vmem [shape: bf16[512,32], index: 4, kind: output, shape index: {1}]
  %5 = xla_tuple %s3, %s4
  %s6 = sld [smem:[#allocation0]]
  $region61: #{fno_forward.8} parent=0
    _
  %s8 = ssub.s32 1, %s6
  %s9 = scalar_select 0, %s8, %s6
  $region1: #{fno_forward.8} parent=0
    #allocation2 [shape = 'u8[1024]{0}', space=vmem, size = 0x400, scoped, tag = 'input window, operand 1, single buffered']
    #allocation3 [shape = 's32[2]{0}', space=sflag, size = 0x8, scoped, tag = 'scoped memory for fno_forward.8']
    #allocation4 [shape = 'u8[512]{0}', space=vmem, size = 0x400, scoped, tag = 'input window, operand 2, single buffered']
    #allocation5 [shape = 's32[1]{0}', space=sflag, size = 0x4, scoped, tag = 'scoped memory for fno_forward.8']
    %10 = vsyncpa [#allocation3], 0
    %11 = vsyncpa [#allocation5], 0
    loop: start=0, step=1, limit=6
    $region2: #{fno_forward.8} parent=1 // loop_pre_header
      _
    $region3: #{fno_forward.8} parent=1 // loop_header
      %s13 = sphi 0, %s17
      %p14 = scmp.ge.s32.totalorder %s13, 6
      %s23 = sphi 0, %s25
      %s26 = sphi 0, %s23
      %s27 = sphi 0, %s26
      %s43 = sphi 0, %s27
      %s47 = sphi 0, %s47
      %s49 = sphi 0, %s47
      %s50 = sphi 0, %s49
      %s64 = sphi 0, %s50
      %s68 = sphi 0, %s68
      %s70 = sphi 0, %s68
      %s71 = sphi 0, %s70
      %s85 = sphi 0, %s71
      %s91 = sphi 0, %s93
      %s94 = sphi 0, %s91
      %s95 = sphi 0, %s94
      %s111 = sphi 0, %s95
      %s117 = sphi 0, %s119
      %s120 = sphi 0, %s117
      %s121 = sphi 0, %s120
      %s137 = sphi 0, %s121
    $region4: #{fno_forward.8} parent=1 // loop_header_branch
      %16 = sbr.rel (%p14) target = $region8
    $region5: #{fno_forward.8} parent=1 // loop_body
      %s18 = ssub.s32 %s13, 1
      %s19 = ssub.s32 %s13, 2
      %s20 = sadd.s32 %s13, 1
      %s21 = ssub.s32 %s13, %s20
      %p22 = scmp.eq.s32.totalorder %s21, 0
      %s24 = sadd.s32 %s23, 1
      %s25 = scalar_select %p22, %s23, %s24
      %p28 = pneg %p22
      %p29 = scmp.eq.s32.totalorder %s13, 3
      %p30 = por %p28, %p29
      %p31 = scmp.ne.s32.totalorder %s23, %s26
      %p32 = scmp.eq.s32.totalorder %s13, 0
      %p33 = por %p31, %p32
      %p34 = scmp.ne.s32.totalorder %s23, %s26
      %p35 = scmp.eq.s32.totalorder %s18, 3
      %p36 = por %p34, %p35
      %p37 = scmp.ne.s32.totalorder %s26, %s27
      %p38 = scmp.eq.s32.totalorder %s18, 0
      %p39 = por %p37, %p38
      %p40 = scmp.ne.s32.totalorder %s26, %s27
      %p41 = scmp.eq.s32.totalorder %s19, 3
      %p42 = por %p40, %p41
      %p44 = scmp.ne.s32.totalorder %s27, %s43
      %p45 = scmp.eq.s32.totalorder %s19, 0
      %p46 = por %p44, %p45
      %s48 = sadd.s32 %s47, 1
      %p51 = scmp.eq.s32.totalorder %s13, 3
      %p52 = scmp.ne.s32.totalorder %s47, %s49
      %p53 = scmp.eq.s32.totalorder %s13, 0
      %p54 = por %p52, %p53
      %p55 = scmp.ne.s32.totalorder %s47, %s49
      %p56 = scmp.eq.s32.totalorder %s18, 3
      %p57 = por %p55, %p56
      %p58 = scmp.ne.s32.totalorder %s49, %s50
      %p59 = scmp.eq.s32.totalorder %s18, 0
      %p60 = por %p58, %p59
      %p61 = scmp.ne.s32.totalorder %s49, %s50
      %p62 = scmp.eq.s32.totalorder %s19, 3
      %p63 = por %p61, %p62
      %p65 = scmp.ne.s32.totalorder %s50, %s64
      %p66 = scmp.eq.s32.totalorder %s19, 0
      %p67 = por %p65, %p66
      %s69 = sadd.s32 %s68, 1
      %p72 = scmp.eq.s32.totalorder %s13, 3
      %p73 = scmp.ne.s32.totalorder %s68, %s70
      %p74 = scmp.eq.s32.totalorder %s13, 0
      %p75 = por %p73, %p74
      %p76 = scmp.ne.s32.totalorder %s68, %s70
      %p77 = scmp.eq.s32.totalorder %s18, 3
      %p78 = por %p76, %p77
      %p79 = scmp.ne.s32.totalorder %s70, %s71
      %p80 = scmp.eq.s32.totalorder %s18, 0
      %p81 = por %p79, %p80
      %p82 = scmp.ne.s32.totalorder %s70, %s71
      %p83 = scmp.eq.s32.totalorder %s19, 3
      %p84 = por %p82, %p83
      %p86 = scmp.ne.s32.totalorder %s71, %s85
      %p87 = scmp.eq.s32.totalorder %s19, 0
      %p88 = por %p86, %p87
      %s89 = ssub.s32 %s13, %s20
      %p90 = scmp.eq.s32.totalorder %s89, 0
      %s92 = sadd.s32 %s91, 1
      %s93 = scalar_select %p90, %s91, %s92
      %p96 = pneg %p90
      %p97 = scmp.eq.s32.totalorder %s13, 3
      %p98 = por %p96, %p97
      %p99 = scmp.ne.s32.totalorder %s91, %s94
      %p100 = scmp.eq.s32.totalorder %s13, 0
      %p101 = por %p99, %p100
      %p102 = scmp.ne.s32.totalorder %s91, %s94
      %p103 = scmp.eq.s32.totalorder %s18, 3
      %p104 = por %p102, %p103
      %p105 = scmp.ne.s32.totalorder %s94, %s95
      %p106 = scmp.eq.s32.totalorder %s18, 0
      %p107 = por %p105, %p106
      %p108 = scmp.ne.s32.totalorder %s94, %s95
      %p109 = scmp.eq.s32.totalorder %s19, 3
      %p110 = por %p108, %p109
      %p112 = scmp.ne.s32.totalorder %s95, %s111
      %p113 = scmp.eq.s32.totalorder %s19, 0
      %p114 = por %p112, %p113
      %s115 = ssub.s32 %s13, %s20
      %p116 = scmp.eq.s32.totalorder %s115, 0
      %s118 = sadd.s32 %s117, 1
      %s119 = scalar_select %p116, %s117, %s118
      %p122 = pneg %p116
      %p123 = scmp.eq.s32.totalorder %s13, 3
      %p124 = por %p122, %p123
      %p125 = scmp.ne.s32.totalorder %s117, %s120
      %p126 = scmp.eq.s32.totalorder %s13, 0
      %p127 = por %p125, %p126
      %p128 = scmp.ne.s32.totalorder %s117, %s120
      %p129 = scmp.eq.s32.totalorder %s18, 3
      %p130 = por %p128, %p129
      %p131 = scmp.ne.s32.totalorder %s120, %s121
      %p132 = scmp.eq.s32.totalorder %s18, 0
      %p133 = por %p131, %p132
      %p134 = scmp.ne.s32.totalorder %s120, %s121
      %p135 = scmp.eq.s32.totalorder %s19, 3
      %p136 = por %p134, %p135
      %p138 = scmp.ne.s32.totalorder %s121, %s137
      %p139 = scmp.eq.s32.totalorder %s19, 0
      %p140 = por %p138, %p139
      %p141 = scmp.le.s32.totalorder 1, %s13
      %p142 = scmp.lt.s32.totalorder %s13, 5
      %p143 = pnand %p141, %p142
      %p144 = pneg %p143
      // Predicated region
      $region9: #{fno_forward.8} parent=5 // pred_check
        _
      $region10: #{fno_forward.8} parent=5 // pred_check_branch
        %146 = sbr.rel (%p143) target = $region12
      $region11: #{fno_forward.8} parent=5 // pred_region
        %s147 = ssub.s32 %s13, 1
        // Predicated region
        $region13: #{fno_forward.8} parent=11 // pred_check
          %p148 = pneg %p60
        $region14: #{fno_forward.8} parent=11 // pred_check_branch
          %150 = sbr.rel (%p148) target = $region16
        $region15: #{fno_forward.8} parent=11 // pred_region
          %s152 = ssub.s32 32, 32
          %153 = vsyncadd [#allocation3], %s152
          %s155 = sshll.u32 [#allocation2], 4
          %s156 = int_to_ptr.vmem [resolvable:$true] %s155
          %158 = dma.hbm_to_vmem [thread:$0]  %s1, 32, %s156, [#allocation3]
        $region16: #{fno_forward.8} parent=11 // pred_fallthru
          _
        // Predicated region
        $region17: #{fno_forward.8} parent=11 // pred_check
          %p159 = pneg %p81
        $region18: #{fno_forward.8} parent=11 // pred_check_branch
          %161 = sbr.rel (%p159) target = $region20
        $region19: #{fno_forward.8} parent=11 // pred_region
          %s163 = ssub.s32 16, 16
          %164 = vsyncadd [#allocation5], %s163
          %s166 = sshll.u32 [#allocation4], 4
          %s167 = int_to_ptr.vmem [resolvable:$true] %s166
          %169 = dma.hbm_to_vmem [thread:$0]  %s2, 16, %s167, [#allocation5]
        $region20: #{fno_forward.8} parent=11 // pred_fallthru
          _
      $region12: #{fno_forward.8} parent=5 // pred_fallthru
        _
      %p170 = scmp.lt.s32.totalorder %s13, 4
      // Predicated region
      $region21: #{fno_forward.8} parent=5 // pred_check
        %p171 = pneg %p170
      $region22: #{fno_forward.8} parent=5 // pred_check_branch
        %173 = sbr.rel (%p171) target = $region24
      $region23: #{fno_forward.8} parent=5 // pred_region
        // Predicated region
        $region25: #{fno_forward.8} parent=23 // pred_check
          %p174 = pneg %p33
        $region26: #{fno_forward.8} parent=23 // pred_check_branch
          %176 = sbr.rel (%p174) target = $region28
        $region27: #{fno_forward.8} parent=23 // pred_region
          %s177 = smul.u32 16, %s13
          %p178 = scmp.lt.s32.totalorder %s177, 63
          %s179 = scalar_select %p178, %s177, 63
          %s180 = smul.addr %s179, 8
          %s181 = scalar_lea.vmem %s0, %s180
          %s182 = smul.u32 16, %s13
        $region28: #{fno_forward.8} parent=23 // pred_fallthru
          _
      $region24: #{fno_forward.8} parent=5 // pred_fallthru
        _
      %p183 = scmp.le.s32.totalorder 1, %s13
      %p184 = scmp.lt.s32.totalorder %s13, 5
      %p185 = pnand %p183, %p184
      %p186 = pneg %p185
      // Predicated region
      $region29: #{fno_forward.8} parent=5 // pred_check
        _
      $region30: #{fno_forward.8} parent=5 // pred_check_branch
        %188 = sbr.rel (%p185) target = $region32
      $region31: #{fno_forward.8} parent=5 // pred_region
        %s189 = ssub.s32 %s13, 1
        // Predicated region
        $region33: #{fno_forward.8} parent=31 // pred_check
          %p190 = pneg %p60
        $region34: #{fno_forward.8} parent=31 // pred_check_branch
          %192 = sbr.rel (%p190) target = $region36
        $region35: #{fno_forward.8} parent=31 // pred_region
          %193 = dma.done [#allocation3], 32
        $region36: #{fno_forward.8} parent=31 // pred_fallthru
          _
        // Predicated region
        $region37: #{fno_forward.8} parent=31 // pred_check
          %p194 = pneg %p81
        $region38: #{fno_forward.8} parent=31 // pred_check_branch
          %196 = sbr.rel (%p194) target = $region40
        $region39: #{fno_forward.8} parent=31 // pred_region
          %197 = dma.done [#allocation5], 16
        $region40: #{fno_forward.8} parent=31 // pred_fallthru
          _
        %s198 = smul.u32 16, %s18
        %p199 = scmp.lt.s32.totalorder %s198, 63
        %s200 = scalar_select %p199, %s198, 63
        %s201 = smul.addr %s200, 8
        %s202 = scalar_lea.vmem %s0, %s201
        %p203 = pneg %p39
        %p204 = pneg %p36
        %p205 = pneg %p60
        %p206 = pneg %p57
        %p207 = pneg %p81
        %p208 = pneg %p78
        %p209 = pneg %p107
        %p210 = pneg %p104
        %s211 = smul.u32 16, %s18
        %p212 = scmp.lt.s32.totalorder %s211, 63
        %s213 = scalar_select %p212, %s211, 63
        %s214 = smul.addr %s213, 8
        %s215 = scalar_lea.vmem %s3, %s214
        %p216 = pneg %p133
        %p217 = pneg %p130
        %s218 = smul.u32 16, %s18
        %p219 = scmp.lt.s32.totalorder %s218, 63
        %s220 = scalar_select %p219, %s218, 63
        %s221 = smul.addr %s220, 4
        %s222 = scalar_lea.vmem %s4, %s221
        %s223 = smul.u32 16, %s18
        %p224 = scmp.lt.s32.totalorder %s223, 63
        %s225 = scalar_select %p224, %s223, 63
        %s226 = smul.addr %s225, 8
        %s227 = scalar_lea.vmem %s0, %s226
        %s228 = smul.u32 16, %s18
        %s229 = smul.u32 16, %s18
        %p230 = scmp.lt.s32.totalorder %s229, 63
        %s231 = scalar_select %p230, %s229, 63
        %s232 = smul.addr %s231, 8
        %s233 = scalar_lea.vmem %s3, %s232
        %s234 = smul.u32 16, %s18
        %s235 = smul.u32 16, %s18
        %p236 = scmp.lt.s32.totalorder %s235, 63
        %s237 = scalar_select %p236, %s235, 63
        %s238 = smul.addr %s237, 4
        %s239 = scalar_lea.vmem %s4, %s238
        %s240 = smul.u32 16, %s18
        %v242 = vld [vmem:[%s227] sm:$0xff]
        %v243 = vld [vmem:[%s227 + $0x8] sm:$0xff]
        %v244 = vld [vmem:[%s227 + $0x10] sm:$0xff]
        %v245 = vld [vmem:[%s227 + $0x18] sm:$0xff]
        %v246 = vld [vmem:[%s227 + $0x20] sm:$0xff]
        %v247 = vld [vmem:[%s227 + $0x28] sm:$0xff]
        %v248 = vld [vmem:[%s227 + $0x30] sm:$0xff]
        %v249 = vld [vmem:[%s227 + $0x38] sm:$0xff]
        %v250 = vld [vmem:[%s227 + $0x40] sm:$0xff]
        %v251 = vld [vmem:[%s227 + $0x48] sm:$0xff]
        %v252 = vld [vmem:[%s227 + $0x50] sm:$0xff]
        %v253 = vld [vmem:[%s227 + $0x58] sm:$0xff]
        %v254 = vld [vmem:[%s227 + $0x60] sm:$0xff]
        %v255 = vld [vmem:[%s227 + $0x68] sm:$0xff]
        %v256 = vld [vmem:[%s227 + $0x70] sm:$0xff]
        %v257 = vld [vmem:[%s227 + $0x78] sm:$0xff]
        %v258 = vpack.c.bf16 %v243, %v242
        %v259 = vpack.c.bf16 %v245, %v244
        %v260 = vpack.c.bf16 %v247, %v246
        %v261 = vpack.c.bf16 %v249, %v248
        %v262 = vpack.c.bf16 %v251, %v250
        %v263 = vpack.c.bf16 %v253, %v252
        %v264 = vpack.c.bf16 %v255, %v254
        %v265 = vpack.c.bf16 %v257, %v256
        %v266 = vld [vmem:[#allocation2] sm:$0x3]
        %v267 = vld [vmem:[#allocation4] sm:$0x1]
        %v269 = vlaneseq
        %v270 = vshrl.u32 %v269, 7
        %v271 = vsub.s32 0, %v270
        %v272 = vrot.slane %v267, %v271
        %vm274 = vcmask 31744
        %v276 = vsel %vm274, %v258, 0
        %v279 = vsel %vm274, %v259, 0
        %v282 = vsel %vm274, %v260, 0
        %v285 = vsel %vm274, %v261, 0
        %v288 = vsel %vm274, %v262, 0
        %v291 = vsel %vm274, %v263, 0
        %v294 = vsel %vm274, %v264, 0
        %v297 = vsel %vm274, %v265, 0
        %vm299 = vcmask 1041408
        %v301 = vsel %vm299, %v266, 0
        %303 = vmatprep.subr.bf16.mxu0 0
        %304 = vmatpush1.bf16.msra.mxu0 %v301
        %305 = vmatprep.subr.bf16.mxu0 0
        %306 = vmatpush1.bf16.msra.mxu0 0
        %307 = vmatprep.subr.bf16.mxu0 0
        %308 = vmatpush1.bf16.msra.mxu0 0
        %309 = vmatprep.subr.bf16.mxu0 0
        %310 = vmatpush1.bf16.msra.mxu0 0
        %311 = vmatprep.subr.bf16.mxu0 0
        %312 = vmatpush1.bf16.msra.mxu0 0
        %313 = vmatprep.subr.bf16.mxu0 0
        %314 = vmatpush1.bf16.msra.mxu0 0
        %315 = vmatprep.subr.bf16.mxu0 0
        %316 = vmatpush1.bf16.msra.mxu0 0
        %317 = vmatprep.subr.bf16.mxu0 0
        %318 = vmatpush1.bf16.msra.mxu0 0
        %319 = vmatprep.subr.bf16.mxu0 0
        %320 = vmatpush1.bf16.msra.mxu0 0
        %321 = vmatprep.subr.bf16.mxu0 0
        %322 = vmatpush1.bf16.msra.mxu0 0
        %323 = vmatprep.subr.bf16.mxu0 0
        %324 = vmatpush1.bf16.msra.mxu0 0
        %325 = vmatprep.subr.bf16.mxu0 0
        %326 = vmatpush1.bf16.msra.mxu0 0
        %327 = vmatprep.subr.bf16.mxu0 0
        %328 = vmatpush1.bf16.msra.mxu0 0
        %329 = vmatprep.subr.bf16.mxu0 0
        %330 = vmatpush1.bf16.msra.mxu0 0
        %331 = vmatprep.subr.bf16.mxu0 0
        %332 = vmatpush1.bf16.msra.mxu0 0
        %333 = vmatprep.subr.bf16.mxu0 0
        %334 = vmatpush1.bf16.msra.mxu0 0
        %335 = vmatprep.mubr.bf16.mxu0 0
        %336 = vmatmul.mubr.bf16.gmra.mrb[0].mxu0 %v276
        %v337 = vpop.f32.mrb[0].mxu0
        %v338 = vadd.f32 %v272, %v337
        %v339 = vpop.f32.mrb[0].mxu0
        %v340 = vpop.f32.mrb[0].mxu0
        %v341 = vadd.f32 %v272, %v340
        %v342 = vpop.f32.mrb[0].mxu0
        %343 = vmatprep.mubr.bf16.mxu0 0
        %344 = vmatmul.mubr.bf16.gmra.mrb[0].mxu0 %v279
        %v345 = vpop.f32.mrb[0].mxu0
        %v346 = vadd.f32 %v272, %v345
        %v347 = vpop.f32.mrb[0].mxu0
        %v348 = vpop.f32.mrb[0].mxu0
        %v349 = vadd.f32 %v272, %v348
        %v350 = vpop.f32.mrb[0].mxu0
        %351 = vmatprep.mubr.bf16.mxu0 0
        %352 = vmatmul.mubr.bf16.gmra.mrb[0].mxu0 %v282
        %v353 = vpop.f32.mrb[0].mxu0
        %v354 = vadd.f32 %v272, %v353
        %v355 = vpop.f32.mrb[0].mxu0
        %v356 = vpop.f32.mrb[0].mxu0
        %v357 = vadd.f32 %v272, %v356
        %v358 = vpop.f32.mrb[0].mxu0
        %359 = vmatprep.mubr.bf16.mxu0 0
        %360 = vmatmul.mubr.bf16.gmra.mrb[0].mxu0 %v285
        %v361 = vpop.f32.mrb[0].mxu0
        %v362 = vadd.f32 %v272, %v361
        %v363 = vpop.f32.mrb[0].mxu0
        %v364 = vpop.f32.mrb[0].mxu0
        %v365 = vadd.f32 %v272, %v364
        %v366 = vpop.f32.mrb[0].mxu0
        %367 = vmatprep.mubr.bf16.mxu0 0
        %368 = vmatmul.mubr.bf16.gmra.mrb[0].mxu0 %v288
        %v369 = vpop.f32.mrb[0].mxu0
        %v370 = vadd.f32 %v272, %v369
        %v371 = vpop.f32.mrb[0].mxu0
        %v372 = vpop.f32.mrb[0].mxu0
        %v373 = vadd.f32 %v272, %v372
        %v374 = vpop.f32.mrb[0].mxu0
        %375 = vmatprep.mubr.bf16.mxu0 0
        %376 = vmatmul.mubr.bf16.gmra.mrb[0].mxu0 %v291
        %v377 = vpop.f32.mrb[0].mxu0
        %v378 = vadd.f32 %v272, %v377
        %v379 = vpop.f32.mrb[0].mxu0
        %v380 = vpop.f32.mrb[0].mxu0
        %v381 = vadd.f32 %v272, %v380
        %v382 = vpop.f32.mrb[0].mxu0
        %383 = vmatprep.mubr.bf16.mxu0 0
        %384 = vmatmul.mubr.bf16.gmra.mrb[0].mxu0 %v294
        %v385 = vpop.f32.mrb[0].mxu0
        %v386 = vadd.f32 %v272, %v385
        %v387 = vpop.f32.mrb[0].mxu0
        %v388 = vpop.f32.mrb[0].mxu0
        %v389 = vadd.f32 %v272, %v388
        %v390 = vpop.f32.mrb[0].mxu0
        %391 = vmatprep.mubr.bf16.mxu0 0
        %392 = vmatmul.mubr.bf16.gmra.mrb[0].mxu0 %v297
        %v393 = vpop.f32.mrb[0].mxu0
        %v394 = vadd.f32 %v272, %v393
        %v395 = vpop.f32.mrb[0].mxu0
        %v396 = vpop.f32.mrb[0].mxu0
        %v397 = vadd.f32 %v272, %v396
        %v398 = vpop.f32.mrb[0].mxu0
        %399 = vdwg.mxu0
        %vm400 = vcmask 261120
        %401 = vst.msk [vmem:[%s233] sm:$0xff] %vm400, %v338
        %402 = vst.msk [vmem:[%s233 + $0x8] sm:$0xff] %vm400, %v341
        %403 = vst.msk [vmem:[%s233 + $0x10] sm:$0xff] %vm400, %v346
        %404 = vst.msk [vmem:[%s233 + $0x18] sm:$0xff] %vm400, %v349
        %405 = vst.msk [vmem:[%s233 + $0x20] sm:$0xff] %vm400, %v354
        %406 = vst.msk [vmem:[%s233 + $0x28] sm:$0xff] %vm400, %v357
        %407 = vst.msk [vmem:[%s233 + $0x30] sm:$0xff] %vm400, %v362
        %408 = vst.msk [vmem:[%s233 + $0x38] sm:$0xff] %vm400, %v365
        %409 = vst.msk [vmem:[%s233 + $0x40] sm:$0xff] %vm400, %v370
        %410 = vst.msk [vmem:[%s233 + $0x48] sm:$0xff] %vm400, %v373
        %411 = vst.msk [vmem:[%s233 + $0x50] sm:$0xff] %vm400, %v378
        %412 = vst.msk [vmem:[%s233 + $0x58] sm:$0xff] %vm400, %v381
        %413 = vst.msk [vmem:[%s233 + $0x60] sm:$0xff] %vm400, %v386
        %414 = vst.msk [vmem:[%s233 + $0x68] sm:$0xff] %vm400, %v389
        %415 = vst.msk [vmem:[%s233 + $0x70] sm:$0xff] %vm400, %v394
        %416 = vst.msk [vmem:[%s233 + $0x78] sm:$0xff] %vm400, %v397
        %v417 = vpack.c.bf16 %v341, %v338
        %v418 = vpack.c.bf16 %v349, %v346
        %v419 = vpack.c.bf16 %v357, %v354
        %v420 = vpack.c.bf16 %v365, %v362
        %v421 = vpack.c.bf16 %v373, %v370
        %v422 = vpack.c.bf16 %v381, %v378
        %v423 = vpack.c.bf16 %v389, %v386
        %v424 = vpack.c.bf16 %v397, %v394
        %v433 = vunpack.c.l.b16 %v417
        %v434 = vunpack.c.h.b16 %v417
        %v435 = vunpack.c.l.b16 %v418
        %v436 = vunpack.c.h.b16 %v418
        %v437 = vunpack.c.l.b16 %v419
        %v438 = vunpack.c.h.b16 %v419
        %v439 = vunpack.c.l.b16 %v420
        %v440 = vunpack.c.h.b16 %v420
        %v441 = vunpack.c.l.b16 %v421
        %v442 = vunpack.c.h.b16 %v421
        %v443 = vunpack.c.l.b16 %v422
        %v444 = vunpack.c.h.b16 %v422
        %v445 = vunpack.c.l.b16 %v423
        %v446 = vunpack.c.h.b16 %v423
        %v447 = vunpack.c.l.b16 %v424
        %v448 = vunpack.c.h.b16 %v424
        %v449 = vpack.c.b16 %v433, %v433
        %v450 = vpack.c.b16 %v434, %v434
        %v451 = vpack.c.b16 %v435, %v435
        %v452 = vpack.c.b16 %v436, %v436
        %v453 = vpack.c.b16 %v437, %v437
        %v454 = vpack.c.b16 %v438, %v438
        %v455 = vpack.c.b16 %v439, %v439
        %v456 = vpack.c.b16 %v440, %v440
        %v457 = vpack.c.b16 %v441, %v441
        %v458 = vpack.c.b16 %v442, %v442
        %v459 = vpack.c.b16 %v443, %v443
        %v460 = vpack.c.b16 %v444, %v444
        %v461 = vpack.c.b16 %v445, %v445
        %v462 = vpack.c.b16 %v446, %v446
        %v463 = vpack.c.b16 %v447, %v447
        %v464 = vpack.c.b16 %v448, %v448
        %vm481 = vcmask 257024
        %482 = vst.msk [vmem:[%s239] sm:$0xf] %vm481, %v449
        %483 = vst.msk [vmem:[%s239 + $0x4] sm:$0xf] %vm481, %v450
        %484 = vst.msk [vmem:[%s239 + $0x8] sm:$0xf] %vm481, %v451
        %485 = vst.msk [vmem:[%s239 + $0xc] sm:$0xf] %vm481, %v452
        %486 = vst.msk [vmem:[%s239 + $0x10] sm:$0xf] %vm481, %v453
        %487 = vst.msk [vmem:[%s239 + $0x14] sm:$0xf] %vm481, %v454
        %488 = vst.msk [vmem:[%s239 + $0x18] sm:$0xf] %vm481, %v455
        %489 = vst.msk [vmem:[%s239 + $0x1c] sm:$0xf] %vm481, %v456
        %490 = vst.msk [vmem:[%s239 + $0x20] sm:$0xf] %vm481, %v457
        %491 = vst.msk [vmem:[%s239 + $0x24] sm:$0xf] %vm481, %v458
        %492 = vst.msk [vmem:[%s239 + $0x28] sm:$0xf] %vm481, %v459
        %493 = vst.msk [vmem:[%s239 + $0x2c] sm:$0xf] %vm481, %v460
        %494 = vst.msk [vmem:[%s239 + $0x30] sm:$0xf] %vm481, %v461
        %495 = vst.msk [vmem:[%s239 + $0x34] sm:$0xf] %vm481, %v462
        %496 = vst.msk [vmem:[%s239 + $0x38] sm:$0xf] %vm481, %v463
        %497 = vst.msk [vmem:[%s239 + $0x3c] sm:$0xf] %vm481, %v464
        %s498 = smul.u32 16, %s18
        %p499 = scmp.lt.s32.totalorder %s498, 63
        %s500 = scalar_select %p499, %s498, 63
        %s501 = smul.addr %s500, 8
        %s502 = scalar_lea.vmem %s3, %s501
        %s503 = smul.u32 16, %s18
        %p504 = scmp.lt.s32.totalorder %s503, 63
        %s505 = scalar_select %p504, %s503, 63
        %s506 = smul.addr %s505, 4
        %s507 = scalar_lea.vmem %s4, %s506
        // Predicated region
        $region41: #{fno_forward.8} parent=31 // pred_check
          %p508 = pneg %p104
        $region42: #{fno_forward.8} parent=31 // pred_check_branch
          %510 = sbr.rel (%p508) target = $region44
        $region43: #{fno_forward.8} parent=31 // pred_region
          %s511 = smul.u32 16, %s18
        $region44: #{fno_forward.8} parent=31 // pred_fallthru
          _
        // Predicated region
        $region45: #{fno_forward.8} parent=31 // pred_check
          %p512 = pneg %p130
        $region46: #{fno_forward.8} parent=31 // pred_check_branch
          %514 = sbr.rel (%p512) target = $region48
        $region47: #{fno_forward.8} parent=31 // pred_region
          %s515 = smul.u32 16, %s18
        $region48: #{fno_forward.8} parent=31 // pred_fallthru
          _
      $region32: #{fno_forward.8} parent=5 // pred_fallthru
        _
      %p516 = scmp.le.s32.totalorder 2, %s13
      // Predicated region
      $region49: #{fno_forward.8} parent=5 // pred_check
        %p517 = pneg %p516
      $region50: #{fno_forward.8} parent=5 // pred_check_branch
        %519 = sbr.rel (%p517) target = $region52
      $region51: #{fno_forward.8} parent=5 // pred_region
        %s520 = ssub.s32 %s13, 2
        // Predicated region
        $region53: #{fno_forward.8} parent=51 // pred_check
          %p521 = pneg %p110
        $region54: #{fno_forward.8} parent=51 // pred_check_branch
          %523 = sbr.rel (%p521) target = $region56
        $region55: #{fno_forward.8} parent=51 // pred_region
          %s524 = smul.u32 16, %s19
          %p525 = scmp.lt.s32.totalorder %s524, 63
          %s526 = scalar_select %p525, %s524, 63
          %s527 = smul.addr %s526, 8
          %s528 = scalar_lea.vmem %s3, %s527
        $region56: #{fno_forward.8} parent=51 // pred_fallthru
          _
        // Predicated region
        $region57: #{fno_forward.8} parent=51 // pred_check
          %p529 = pneg %p136
        $region58: #{fno_forward.8} parent=51 // pred_check_branch
          %531 = sbr.rel (%p529) target = $region60
        $region59: #{fno_forward.8} parent=51 // pred_region
          %s532 = smul.u32 16, %s19
          %p533 = scmp.lt.s32.totalorder %s532, 63
          %s534 = scalar_select %p533, %s532, 63
          %s535 = smul.addr %s534, 4
          %s536 = scalar_lea.vmem %s4, %s535
        $region60: #{fno_forward.8} parent=51 // pred_fallthru
          _
      $region52: #{fno_forward.8} parent=5 // pred_fallthru
        _
    $region6: #{fno_forward.8} parent=1 // loop_footer
      %s17 = sadd.s32 1, %s13
    $region7: #{fno_forward.8} parent=1 // loop_footer_branch
      %12 = sbr.rel target = $region3
    $region8: #{fno_forward.8} parent=1 // loop_exit
      _
    %537 = vsyncpa [#allocation3], 1
    %s538 = scalar_lea.sflag [#allocation3], 1
    %539 = vsyncpa %s538, 1
    %540 = vsyncpa [#allocation5], 1

// kernel: reverse.4
$region0: #{reverse.4}
  #allocation0 [shape = 's32[1]{0}', space=sflag, size = 0x4, scoped, tag = 'scoped memory for reverse.4']
  %s0 = inlined_call_operand.vmem [shape: f32[2,32,16,7], index: 0, kind: input, shape index: {}]
  %s1 = inlined_call_operand.vmem [shape: f32[2,32,16,7], index: 1, kind: output, shape index: {}]
  %s2 = scalar_lea.vmem %s0, 96
  %v3 = vld [vmem:[%s2] sm:$0xff]
  %4 = vst [vmem:[%s1] sm:$0xff] %v3
  %s5 = scalar_lea.vmem %s0, 208
  %v6 = vld [vmem:[%s5] sm:$0xff]
  %s7 = scalar_lea.vmem %s1, 112
  %8 = vst [vmem:[%s7] sm:$0xff] %v6
  %s9 = scalar_lea.vmem %s0, 80
  %v10 = vld [vmem:[%s9] sm:$0xff]
  %s11 = scalar_lea.vmem %s1, 16
  %12 = vst [vmem:[%s11] sm:$0xff] %v10
  %s13 = scalar_lea.vmem %s0, 192
  %v14 = vld [vmem:[%s13] sm:$0xff]
  %s15 = scalar_lea.vmem %s1, 128
  %16 = vst [vmem:[%s15] sm:$0xff] %v14
  %s17 = scalar_lea.vmem %s0, 64
  %v18 = vld [vmem:[%s17] sm:$0xff]
  %s19 = scalar_lea.vmem %s1, 32
  %20 = vst [vmem:[%s19] sm:$0xff] %v18
  %s21 = scalar_lea.vmem %s0, 176
  %v22 = vld [vmem:[%s21] sm:$0xff]
  %s23 = scalar_lea.vmem %s1, 144
  %24 = vst [vmem:[%s23] sm:$0xff] %v22
  %s25 = scalar_lea.vmem %s0, 48
  %v26 = vld [vmem:[%s25] sm:$0xff]
  %s27 = scalar_lea.vmem %s1, 48
  %28 = vst [vmem:[%s27] sm:$0xff] %v26
  %s29 = scalar_lea.vmem %s0, 160
  %v30 = vld [vmem:[%s29] sm:$0xff]
  %s31 = scalar_lea.vmem %s1, 160
  %32 = vst [vmem:[%s31] sm:$0xff] %v30
  %s33 = scalar_lea.vmem %s0, 32
  %v34 = vld [vmem:[%s33] sm:$0xff]
  %s35 = scalar_lea.vmem %s1, 64
  %36 = vst [vmem:[%s35] sm:$0xff] %v34
  %s37 = scalar_lea.vmem %s0, 144
  %v38 = vld [vmem:[%s37] sm:$0xff]
  %s39 = scalar_lea.vmem %s1, 176
  %40 = vst [vmem:[%s39] sm:$0xff] %v38
  %s41 = scalar_lea.vmem %s0, 16
  %v42 = vld [vmem:[%s41] sm:$0xff]
  %s43 = scalar_lea.vmem %s1, 80
  %44 = vst [vmem:[%s43] sm:$0xff] %v42
  %s45 = scalar_lea.vmem %s0, 128
  %v46 = vld [vmem:[%s45] sm:$0xff]
  %s47 = scalar_lea.vmem %s1, 192
  %48 = vst [vmem:[%s47] sm:$0xff] %v46
  %v49 = vld [vmem:[%s0] sm:$0xff]
  %s50 = scalar_lea.vmem %s1, 96
  %51 = vst [vmem:[%s50] sm:$0xff] %v49
  %s52 = scalar_lea.vmem %s0, 112
  %v53 = vld [vmem:[%s52] sm:$0xff]
  %s54 = scalar_lea.vmem %s1, 208
  %55 = vst [vmem:[%s54] sm:$0xff] %v53
  %s56 = scalar_lea.vmem %s0, 104
  %v57 = vld [vmem:[%s56] sm:$0xff]
  %s58 = scalar_lea.vmem %s1, 8
  %59 = vst [vmem:[%s58] sm:$0xff] %v57
  %s60 = scalar_lea.vmem %s0, 216
  %v61 = vld [vmem:[%s60] sm:$0xff]
  %s62 = scalar_lea.vmem %s1, 120
  %63 = vst [vmem:[%s62] sm:$0xff] %v61
  %s64 = scalar_lea.vmem %s0, 88
  %v65 = vld [vmem:[%s64] sm:$0xff]
  %s66 = scalar_lea.vmem %s1, 24
  %67 = vst [vmem:[%s66] sm:$0xff] %v65
  %s68 = scalar_lea.vmem %s0, 200
  %v69 = vld [vmem:[%s68] sm:$0xff]
  %s70 = scalar_lea.vmem %s1, 136
  %71 = vst [vmem:[%s70] sm:$0xff] %v69
  %s72 = scalar_lea.vmem %s0, 72
  %v73 = vld [vmem:[%s72] sm:$0xff]
  %s74 = scalar_lea.vmem %s1, 40
  %75 = vst [vmem:[%s74] sm:$0xff] %v73
  %s76 = scalar_lea.vmem %s0, 184
  %v77 = vld [vmem:[%s76] sm:$0xff]
  %s78 = scalar_lea.vmem %s1, 152
  %79 = vst [vmem:[%s78] sm:$0xff] %v77
  %s80 = scalar_lea.vmem %s0, 56
  %v81 = vld [vmem:[%s80] sm:$0xff]
  %s82 = scalar_lea.vmem %s1, 56
  %83 = vst [vmem:[%s82] sm:$0xff] %v81
  %s84 = scalar_lea.vmem %s0, 168
  %v85 = vld [vmem:[%s84] sm:$0xff]
  %s86 = scalar_lea.vmem %s1, 168
  %87 = vst [vmem:[%s86] sm:$0xff] %v85
  %s88 = scalar_lea.vmem %s0, 40
  %v89 = vld [vmem:[%s88] sm:$0xff]
  %s90 = scalar_lea.vmem %s1, 72
  %91 = vst [vmem:[%s90] sm:$0xff] %v89
  %s92 = scalar_lea.vmem %s0, 152
  %v93 = vld [vmem:[%s92] sm:$0xff]
  %s94 = scalar_lea.vmem %s1, 184
  %95 = vst [vmem:[%s94] sm:$0xff] %v93
  %s96 = scalar_lea.vmem %s0, 24
  %v97 = vld [vmem:[%s96] sm:$0xff]
  %s98 = scalar_lea.vmem %s1, 88
  %99 = vst [vmem:[%s98] sm:$0xff] %v97
  %s100 = scalar_lea.vmem %s0, 136
  %v101 = vld [vmem:[%s100] sm:$0xff]
  %s102 = scalar_lea.vmem %s1, 200
  %103 = vst [vmem:[%s102] sm:$0xff] %v101
  %s104 = scalar_lea.vmem %s0, 8
  %v105 = vld [vmem:[%s104] sm:$0xff]
  %s106 = scalar_lea.vmem %s1, 104
  %107 = vst [vmem:[%s106] sm:$0xff] %v105
  %s108 = scalar_lea.vmem %s0, 120
  %v109 = vld [vmem:[%s108] sm:$0xff]
  %s110 = scalar_lea.vmem %s1, 216
  %111 = vst [vmem:[%s110] sm:$0xff] %v109

// kernel: fno_forward.9
$region0: #{fno_forward.9}
  #allocation0 [shape = 'u32[]', space=smem, size = 0x4, offset = 0x4, fixed_abs, tag = 'smem constant byte address 0x4 - core index']
  #allocation1 [shape = 'u32[144,128]{1,0:T(1,128)}', space=vmem, size = 0x12000, scoped, tag = 'internal scratch']
  %s0 = inlined_call_operand.vmem [shape: bf16[128,2,32], index: 0, kind: input, shape index: {}]
  %s1 = inlined_call_operand.vmem [shape: bf16[128,2,32], index: 1, kind: input, shape index: {}]
  %s2 = inlined_call_operand.vmem [shape: bf16[128,64,64], index: 2, kind: input, shape index: {}]
  %s3 = inlined_call_operand.vmem [shape: f32[128,2,32], index: 3, kind: output, shape index: {0}]
  %s4 = inlined_call_operand.vmem [shape: f32[128,2,32], index: 4, kind: output, shape index: {1}]
  %5 = xla_tuple %s3, %s4
  %s6 = sld [smem:[#allocation0]]
  $region53: #{fno_forward.9} parent=0
    _
  %s8 = ssub.s32 1, %s6
  %s9 = scalar_select 0, %s8, %s6
  loop: start=0, step=1, limit=6
  $region2: #{fno_forward.9} parent=0 // loop_pre_header
    _
  $region3: #{fno_forward.9} parent=0 // loop_header
    %s11 = sphi 0, %s15
    %p12 = scmp.ge.s32.totalorder %s11, 6
    %s21 = sphi 0, %s23
    %s24 = sphi 0, %s21
    %s25 = sphi 0, %s24
    %s41 = sphi 0, %s25
    %s47 = sphi 0, %s49
    %s50 = sphi 0, %s47
    %s51 = sphi 0, %s50
    %s67 = sphi 0, %s51
    %s73 = sphi 0, %s75
    %s76 = sphi 0, %s73
    %s77 = sphi 0, %s76
    %s93 = sphi 0, %s77
    %s99 = sphi 0, %s101
    %s102 = sphi 0, %s99
    %s103 = sphi 0, %s102
    %s119 = sphi 0, %s103
    %s125 = sphi 0, %s127
    %s128 = sphi 0, %s125
    %s129 = sphi 0, %s128
    %s145 = sphi 0, %s129
  $region4: #{fno_forward.9} parent=0 // loop_header_branch
    %14 = sbr.rel (%p12) target = $region8
  $region5: #{fno_forward.9} parent=0 // loop_body
    %s16 = ssub.s32 %s11, 1
    %s17 = ssub.s32 %s11, 2
    %s18 = sadd.s32 %s11, 1
    %s19 = ssub.s32 %s11, %s18
    %p20 = scmp.eq.s32.totalorder %s19, 0
    %s22 = sadd.s32 %s21, 1
    %s23 = scalar_select %p20, %s21, %s22
    %p26 = pneg %p20
    %p27 = scmp.eq.s32.totalorder %s11, 3
    %p28 = por %p26, %p27
    %p29 = scmp.ne.s32.totalorder %s21, %s24
    %p30 = scmp.eq.s32.totalorder %s11, 0
    %p31 = por %p29, %p30
    %p32 = scmp.ne.s32.totalorder %s21, %s24
    %p33 = scmp.eq.s32.totalorder %s16, 3
    %p34 = por %p32, %p33
    %p35 = scmp.ne.s32.totalorder %s24, %s25
    %p36 = scmp.eq.s32.totalorder %s16, 0
    %p37 = por %p35, %p36
    %p38 = scmp.ne.s32.totalorder %s24, %s25
    %p39 = scmp.eq.s32.totalorder %s17, 3
    %p40 = por %p38, %p39
    %p42 = scmp.ne.s32.totalorder %s25, %s41
    %p43 = scmp.eq.s32.totalorder %s17, 0
    %p44 = por %p42, %p43
    %s45 = ssub.s32 %s11, %s18
    %p46 = scmp.eq.s32.totalorder %s45, 0
    %s48 = sadd.s32 %s47, 1
    %s49 = scalar_select %p46, %s47, %s48
    %p52 = pneg %p46
    %p53 = scmp.eq.s32.totalorder %s11, 3
    %p54 = por %p52, %p53
    %p55 = scmp.ne.s32.totalorder %s47, %s50
    %p56 = scmp.eq.s32.totalorder %s11, 0
    %p57 = por %p55, %p56
    %p58 = scmp.ne.s32.totalorder %s47, %s50
    %p59 = scmp.eq.s32.totalorder %s16, 3
    %p60 = por %p58, %p59
    %p61 = scmp.ne.s32.totalorder %s50, %s51
    %p62 = scmp.eq.s32.totalorder %s16, 0
    %p63 = por %p61, %p62
    %p64 = scmp.ne.s32.totalorder %s50, %s51
    %p65 = scmp.eq.s32.totalorder %s17, 3
    %p66 = por %p64, %p65
    %p68 = scmp.ne.s32.totalorder %s51, %s67
    %p69 = scmp.eq.s32.totalorder %s17, 0
    %p70 = por %p68, %p69
    %s71 = ssub.s32 %s11, %s18
    %p72 = scmp.eq.s32.totalorder %s71, 0
    %s74 = sadd.s32 %s73, 1
    %s75 = scalar_select %p72, %s73, %s74
    %p78 = pneg %p72
    %p79 = scmp.eq.s32.totalorder %s11, 3
    %p80 = por %p78, %p79
    %p81 = scmp.ne.s32.totalorder %s73, %s76
    %p82 = scmp.eq.s32.totalorder %s11, 0
    %p83 = por %p81, %p82
    %p84 = scmp.ne.s32.totalorder %s73, %s76
    %p85 = scmp.eq.s32.totalorder %s16, 3
    %p86 = por %p84, %p85
    %p87 = scmp.ne.s32.totalorder %s76, %s77
    %p88 = scmp.eq.s32.totalorder %s16, 0
    %p89 = por %p87, %p88
    %p90 = scmp.ne.s32.totalorder %s76, %s77
    %p91 = scmp.eq.s32.totalorder %s17, 3
    %p92 = por %p90, %p91
    %p94 = scmp.ne.s32.totalorder %s77, %s93
    %p95 = scmp.eq.s32.totalorder %s17, 0
    %p96 = por %p94, %p95
    %s97 = ssub.s32 %s11, %s18
    %p98 = scmp.eq.s32.totalorder %s97, 0
    %s100 = sadd.s32 %s99, 1
    %s101 = scalar_select %p98, %s99, %s100
    %p104 = pneg %p98
    %p105 = scmp.eq.s32.totalorder %s11, 3
    %p106 = por %p104, %p105
    %p107 = scmp.ne.s32.totalorder %s99, %s102
    %p108 = scmp.eq.s32.totalorder %s11, 0
    %p109 = por %p107, %p108
    %p110 = scmp.ne.s32.totalorder %s99, %s102
    %p111 = scmp.eq.s32.totalorder %s16, 3
    %p112 = por %p110, %p111
    %p113 = scmp.ne.s32.totalorder %s102, %s103
    %p114 = scmp.eq.s32.totalorder %s16, 0
    %p115 = por %p113, %p114
    %p116 = scmp.ne.s32.totalorder %s102, %s103
    %p117 = scmp.eq.s32.totalorder %s17, 3
    %p118 = por %p116, %p117
    %p120 = scmp.ne.s32.totalorder %s103, %s119
    %p121 = scmp.eq.s32.totalorder %s17, 0
    %p122 = por %p120, %p121
    %s123 = ssub.s32 %s11, %s18
    %p124 = scmp.eq.s32.totalorder %s123, 0
    %s126 = sadd.s32 %s125, 1
    %s127 = scalar_select %p124, %s125, %s126
    %p130 = pneg %p124
    %p131 = scmp.eq.s32.totalorder %s11, 3
    %p132 = por %p130, %p131
    %p133 = scmp.ne.s32.totalorder %s125, %s128
    %p134 = scmp.eq.s32.totalorder %s11, 0
    %p135 = por %p133, %p134
    %p136 = scmp.ne.s32.totalorder %s125, %s128
    %p137 = scmp.eq.s32.totalorder %s16, 3
    %p138 = por %p136, %p137
    %p139 = scmp.ne.s32.totalorder %s128, %s129
    %p140 = scmp.eq.s32.totalorder %s16, 0
    %p141 = por %p139, %p140
    %p142 = scmp.ne.s32.totalorder %s128, %s129
    %p143 = scmp.eq.s32.totalorder %s17, 3
    %p144 = por %p142, %p143
    %p146 = scmp.ne.s32.totalorder %s129, %s145
    %p147 = scmp.eq.s32.totalorder %s17, 0
    %p148 = por %p146, %p147
    %p149 = scmp.le.s32.totalorder 1, %s11
    %p150 = scmp.lt.s32.totalorder %s11, 5
    %p151 = pnand %p149, %p150
    %p152 = pneg %p151
    // Predicated region
    $region9: #{fno_forward.9} parent=5 // pred_check
      _
    $region10: #{fno_forward.9} parent=5 // pred_check_branch
      %154 = sbr.rel (%p151) target = $region12
    $region11: #{fno_forward.9} parent=5 // pred_region
      %s155 = ssub.s32 %s11, 1
    $region12: #{fno_forward.9} parent=5 // pred_fallthru
      _
    %p156 = scmp.lt.s32.totalorder %s11, 4
    // Predicated region
    $region13: #{fno_forward.9} parent=5 // pred_check
      %p157 = pneg %p156
    $region14: #{fno_forward.9} parent=5 // pred_check_branch
      %159 = sbr.rel (%p157) target = $region16
    $region15: #{fno_forward.9} parent=5 // pred_region
      // Predicated region
      $region17: #{fno_forward.9} parent=15 // pred_check
        %p160 = pneg %p31
      $region18: #{fno_forward.9} parent=15 // pred_check_branch
        %162 = sbr.rel (%p160) target = $region20
      $region19: #{fno_forward.9} parent=15 // pred_region
        %s163 = smul.u32 32, %s11
        %p164 = scmp.lt.s32.totalorder %s163, 127
        %s165 = scalar_select %p164, %s163, 127
        %s166 = scalar_lea.vmem %s0, %s165
        %s167 = smul.u32 32, %s11
      $region20: #{fno_forward.9} parent=15 // pred_fallthru
        _
      // Predicated region
      $region21: #{fno_forward.9} parent=15 // pred_check
        %p168 = pneg %p57
      $region22: #{fno_forward.9} parent=15 // pred_check_branch
        %170 = sbr.rel (%p168) target = $region24
      $region23: #{fno_forward.9} parent=15 // pred_region
        %s171 = smul.u32 32, %s11
        %p172 = scmp.lt.s32.totalorder %s171, 127
        %s173 = scalar_select %p172, %s171, 127
        %s174 = scalar_lea.vmem %s1, %s173
        %s175 = smul.u32 32, %s11
      $region24: #{fno_forward.9} parent=15 // pred_fallthru
        _
      // Predicated region
      $region25: #{fno_forward.9} parent=15 // pred_check
        %p176 = pneg %p83
      $region26: #{fno_forward.9} parent=15 // pred_check_branch
        %178 = sbr.rel (%p176) target = $region28
      $region27: #{fno_forward.9} parent=15 // pred_region
        %s179 = smul.u32 32, %s11
        %p180 = scmp.lt.s32.totalorder %s179, 127
        %s181 = scalar_select %p180, %s179, 127
        %s182 = smul.addr %s181, 8
        %s183 = smul.addr %s182, 4
        %s184 = scalar_lea.vmem %s2, %s183
        %s185 = smul.u32 32, %s11
      $region28: #{fno_forward.9} parent=15 // pred_fallthru
        _
    $region16: #{fno_forward.9} parent=5 // pred_fallthru
      _
    %p186 = scmp.le.s32.totalorder 1, %s11
    %p187 = scmp.lt.s32.totalorder %s11, 5
    %p188 = pnand %p186, %p187
    %p189 = pneg %p188
    // Predicated region
    $region29: #{fno_forward.9} parent=5 // pred_check
      _
    $region30: #{fno_forward.9} parent=5 // pred_check_branch
      %191 = sbr.rel (%p188) target = $region32
    $region31: #{fno_forward.9} parent=5 // pred_region
      %s192 = ssub.s32 %s11, 1
      %s193 = smul.u32 32, %s16
      %p194 = scmp.lt.s32.totalorder %s193, 127
      %s195 = scalar_select %p194, %s193, 127
      %s196 = scalar_lea.vmem %s0, %s195
      %p197 = pneg %p37
      %p198 = pneg %p34
      %s199 = smul.u32 32, %s16
      %p200 = scmp.lt.s32.totalorder %s199, 127
      %s201 = scalar_select %p200, %s199, 127
      %s202 = scalar_lea.vmem %s1, %s201
      %p203 = pneg %p63
      %p204 = pneg %p60
      %s205 = smul.u32 32, %s16
      %p206 = scmp.lt.s32.totalorder %s205, 127
      %s207 = scalar_select %p206, %s205, 127
      %s208 = smul.addr %s207, 8
      %s209 = smul.addr %s208, 4
      %s210 = scalar_lea.vmem %s2, %s209
      %p211 = pneg %p89
      %p212 = pneg %p86
      %p213 = pneg %p115
      %p214 = pneg %p112
      %s215 = smul.u32 32, %s16
      %p216 = scmp.lt.s32.totalorder %s215, 127
      %s217 = scalar_select %p216, %s215, 127
      %s218 = smul.addr %s217, 2
      %s219 = scalar_lea.vmem %s3, %s218
      %p220 = pneg %p141
      %p221 = pneg %p138
      %s222 = smul.u32 32, %s16
      %p223 = scmp.lt.s32.totalorder %s222, 127
      %s224 = scalar_select %p223, %s222, 127
      %s225 = smul.addr %s224, 2
      %s226 = scalar_lea.vmem %s4, %s225
      %s227 = smul.u32 32, %s16
      %p228 = scmp.lt.s32.totalorder %s227, 127
      %s229 = scalar_select %p228, %s227, 127
      %s230 = scalar_lea.vmem %s0, %s229
      %s231 = smul.u32 32, %s16
      %s232 = smul.u32 32, %s16
      %p233 = scmp.lt.s32.totalorder %s232, 127
      %s234 = scalar_select %p233, %s232, 127
      %s235 = scalar_lea.vmem %s1, %s234
      %s236 = smul.u32 32, %s16
      %s237 = smul.u32 32, %s16
      %p238 = scmp.lt.s32.totalorder %s237, 127
      %s239 = scalar_select %p238, %s237, 127
      %s240 = smul.addr %s239, 8
      %s241 = smul.addr %s240, 4
      %s242 = scalar_lea.vmem %s2, %s241
      %s243 = smul.u32 32, %s16
      %s244 = smul.u32 32, %s16
      %p245 = scmp.lt.s32.totalorder %s244, 127
      %s246 = scalar_select %p245, %s244, 127
      %s247 = smul.addr %s246, 2
      %s248 = scalar_lea.vmem %s3, %s247
      %s249 = smul.u32 32, %s16
      %s250 = smul.u32 32, %s16
      %p251 = scmp.lt.s32.totalorder %s250, 127
      %s252 = scalar_select %p251, %s250, 127
      %s253 = smul.addr %s252, 2
      %s254 = scalar_lea.vmem %s4, %s253
      %s255 = smul.u32 32, %s16
      %v257 = vld [vmem:[%s230] sm:$0x1]
      %v258 = vld [vmem:[%s235] sm:$0x1]
      %v261 = vunpack.c.l.s4 1966171168
      %v262 = vunpack.c.0.s8 %v261
      %v263 = vlaneseq
      %v264 = vshrl.u32 %v263, 7
      %v265 = vsub.s32 %v262, %v264
      %v266 = vrot.slane %v258, %v265
      %v268 = vunpack.c.l.s4 1966171168
      %v269 = vunpack.c.0.s8 %v268
      %v270 = vlaneseq
      %v271 = vshrl.u32 %v270, 7
      %v272 = vsub.s32 %v269, %v271
      %v273 = vrot.slane %v266, %v272
      %274 = vrot.lane.b32.xlu0 %v273, 32
      %v275 = vpop.permute.xlu0 %274
      %vm276 = vcmask 261120
      %v279 = vsel %vm276, %v257, %v275
      %v280 = vld [vmem:[%s242] sm:$0xf]
      %v281 = vld [vmem:[%s242 + $0x4] sm:$0xf]
      %v282 = vld [vmem:[%s242 + $0x8] sm:$0xf]
      %v283 = vld [vmem:[%s242 + $0xc] sm:$0xf]
      %v284 = vld [vmem:[%s242 + $0x10] sm:$0xf]
      %v285 = vld [vmem:[%s242 + $0x14] sm:$0xf]
      %v286 = vld [vmem:[%s242 + $0x18] sm:$0xf]
      %v287 = vld [vmem:[%s242 + $0x1c] sm:$0xf]
      %v296 = vunpack.c.l.b16 %v280
      %v297 = vunpack.c.l.b16 %v281
      %v298 = vunpack.c.l.b16 %v282
      %v299 = vunpack.c.l.b16 %v283
      %v300 = vunpack.c.l.b16 %v284
      %v301 = vunpack.c.l.b16 %v285
      %v302 = vunpack.c.l.b16 %v286
      %v303 = vunpack.c.l.b16 %v287
      %v304 = vpack.c.b16 %v297, %v296
      %v305 = vpack.c.b16 %v299, %v298
      %v306 = vpack.c.b16 %v301, %v300
      %v307 = vpack.c.b16 %v303, %v302
      %vm312 = vcmask 523264
      %v313 = vsel %vm312, %v279, 0
      %315 = vmatprep.subr.bf16.mxu0 0
      %316 = vmatpush1.bf16.msra.mxu0 %v304
      %317 = vmatprep.subr.bf16.mxu0 0
      %318 = vmatpush1.bf16.msra.mxu0 %v305
      %319 = vmatprep.subr.bf16.mxu0 0
      %320 = vmatpush1.bf16.msra.mxu0 %v306
      %321 = vmatprep.subr.bf16.mxu0 0
      %322 = vmatpush1.bf16.msra.mxu0 %v307
      %323 = vmatprep.subr.bf16.mxu0 0
      %324 = vmatpush1.bf16.msra.mxu0 0
      %325 = vmatprep.subr.bf16.mxu0 0
      %326 = vmatpush1.bf16.msra.mxu0 0
      %327 = vmatprep.subr.bf16.mxu0 0
      %328 = vmatpush1.bf16.msra.mxu0 0
      %329 = vmatprep.subr.bf16.mxu0 0
      %330 = vmatpush1.bf16.msra.mxu0 0
      %331 = vmatprep.subr.bf16.mxu0 0
      %332 = vmatpush1.bf16.msra.mxu0 0
      %333 = vmatprep.subr.bf16.mxu0 0
      %334 = vmatpush1.bf16.msra.mxu0 0
      %335 = vmatprep.subr.bf16.mxu0 0
      %336 = vmatpush1.bf16.msra.mxu0 0
      %337 = vmatprep.subr.bf16.mxu0 0
      %338 = vmatpush1.bf16.msra.mxu0 0
      %339 = vmatprep.subr.bf16.mxu0 0
      %340 = vmatpush1.bf16.msra.mxu0 0
      %341 = vmatprep.subr.bf16.mxu0 0
      %342 = vmatpush1.bf16.msra.mxu0 0
      %343 = vmatprep.subr.bf16.mxu0 0
      %344 = vmatpush1.bf16.msra.mxu0 0
      %345 = vmatprep.subr.bf16.mxu0 0
      %346 = vmatpush1.bf16.msra.mxu0 0
      %347 = vmatprep.mubr.bf16.mxu0 0
      %348 = vmatmul.mubr.bf16.gmra.mrb[0].mxu0 %v313
      %v349 = vpop.f32.mrb[0].mxu0
      %v350 = vadd.f32 0.0, %v349
      %v351 = vpop.f32.mrb[0].mxu0
      %v352 = vpop.f32.mrb[0].mxu0
      %v353 = vpop.f32.mrb[0].mxu0
      %354 = vdwg.mxu0
      %vm355 = vcmask 254976
      %356 = vst.msk [vmem:[%s248] sm:$0x3] %vm355, %v350
      %358 = vrot.lane.b32.xlu0 %v350, 96
      %v359 = vpop.permute.xlu0 %358
      %361 = vst.msk [vmem:[%s254] sm:$0x3] %vm355, %v359
      %s362 = scalar_lea.vmem %s230, 1
      %v363 = vld [vmem:[%s362] sm:$0x1]
      %s364 = scalar_lea.vmem %s235, 1
      %v365 = vld [vmem:[%s364] sm:$0x1]
      %v368 = vunpack.c.l.s4 1966171168
      %v369 = vunpack.c.0.s8 %v368
      %v370 = vlaneseq
      %v371 = vshrl.u32 %v370, 7
      %v372 = vsub.s32 %v369, %v371
      %v373 = vrot.slane %v365, %v372
      %v375 = vunpack.c.l.s4 1966171168
      %v376 = vunpack.c.0.s8 %v375
      %v377 = vlaneseq
      %v378 = vshrl.u32 %v377, 7
      %v379 = vsub.s32 %v376, %v378
      %v380 = vrot.slane %v373, %v379
      %381 = vrot.lane.b32.xlu0 %v380, 32
      %v382 = vpop.permute.xlu0 %381
      %v385 = vsel %vm276, %v363, %v382
      %s386 = scalar_lea.vmem %s242, 32
      %v387 = vld [vmem:[%s386] sm:$0xf]
      %v388 = vld [vmem:[%s386 + $0x4] sm:$0xf]
      %v389 = vld [vmem:[%s386 + $0x8] sm:$0xf]
      %v390 = vld [vmem:[%s386 + $0xc] sm:$0xf]
      %v391 = vld [vmem:[%s386 + $0x10] sm:$0xf]
      %v392 = vld [vmem:[%s386 + $0x14] sm:$0xf]
      %v393 = vld [vmem:[%s386 + $0x18] sm:$0xf]
      %v394 = vld [vmem:[%s386 + $0x1c] sm:$0xf]
      %v403 = vunpack.c.l.b16 %v387
      %v404 = vunpack.c.l.b16 %v388
      %v405 = vunpack.c.l.b16 %v389
      %v406 = vunpack.c.l.b16 %v390
      %v407 = vunpack.c.l.b16 %v391
      %v408 = vunpack.c.l.b16 %v392
      %v409 = vunpack.c.l.b16 %v393
      %v410 = vunpack.c.l.b16 %v394
      %v411 = vpack.c.b16 %v404, %v403
      %v412 = vpack.c.b16 %v406, %v405
      %v413 = vpack.c.b16 %v408, %v407
      %v414 = vpack.c.b16 %v410, %v409
      %v419 = vsel %vm312, %v385, 0
      %421 = vmatprep.subr.bf16.mxu0 0
      %422 = vmatpush1.bf16.msra.mxu0 %v411
      %423 = vmatprep.subr.bf16.mxu0 0
      %424 = vmatpush1.bf16.msra.mxu0 %v412
      %425 = vmatprep.subr.bf16.mxu0 0
      %426 = vmatpush1.bf16.msra.mxu0 %v413
      %427 = vmatprep.subr.bf16.mxu0 0
      %428 = vmatpush1.bf16.msra.mxu0 %v414
      %429 = vmatprep.subr.bf16.mxu0 0
      %430 = vmatpush1.bf16.msra.mxu0 0
      %431 = vmatprep.subr.bf16.mxu0 0
      %432 = vmatpush1.bf16.msra.mxu0 0
      %433 = vmatprep.subr.bf16.mxu0 0
      %434 = vmatpush1.bf16.msra.mxu0 0
      %435 = vmatprep.subr.bf16.mxu0 0
      %436 = vmatpush1.bf16.msra.mxu0 0
      %437 = vmatprep.subr.bf16.mxu0 0
      %438 = vmatpush1.bf16.msra.mxu0 0
      %439 = vmatprep.subr.bf16.mxu0 0
      %440 = vmatpush1.bf16.msra.mxu0 0
      %441 = vmatprep.subr.bf16.mxu0 0
      %442 = vmatpush1.bf16.msra.mxu0 0
      %443 = vmatprep.subr.bf16.mxu0 0
      %444 = vmatpush1.bf16.msra.mxu0 0
      %445 = vmatprep.subr.bf16.mxu0 0
      %446 = vmatpush1.bf16.msra.mxu0 0
      %447 = vmatprep.subr.bf16.mxu0 0
      %448 = vmatpush1.bf16.msra.mxu0 0
      %449 = vmatprep.subr.bf16.mxu0 0
      %450 = vmatpush1.bf16.msra.mxu0 0
      %451 = vmatprep.subr.bf16.mxu0 0
      %452 = vmatpush1.bf16.msra.mxu0 0
      %453 = vmatprep.mubr.bf16.mxu0 0
      %454 = vmatmul.mubr.bf16.gmra.mrb[0].mxu0 %v419
      %v455 = vpop.f32.mrb[0].mxu0
      %v456 = vadd.f32 0.0, %v455
      %v457 = vpop.f32.mrb[0].mxu0
      %v458 = vpop.f32.mrb[0].mxu0
      %v459 = vpop.f32.mrb[0].mxu0
      %460 = vdwg.mxu0
      %s461 = scalar_lea.vmem %s248, 2
      %462 = vst.msk [vmem:[%s461] sm:$0x3] %vm355, %v456
      %464 = vrot.lane.b32.xlu0 %v456, 96
      %v465 = vpop.permute.xlu0 %464
      %s467 = scalar_lea.vmem %s254, 2
      %468 = vst.msk [vmem:[%s467] sm:$0x3] %vm355, %v465
      %s469 = scalar_lea.vmem %s230, 2
      %v470 = vld [vmem:[%s469] sm:$0x1]
      %s471 = scalar_lea.vmem %s235, 2
      %v472 = vld [vmem:[%s471] sm:$0x1]
      %v475 = vunpack.c.l.s4 1966171168
      %v476 = vunpack.c.0.s8 %v475
      %v477 = vlaneseq
      %v478 = vshrl.u32 %v477, 7
      %v479 = vsub.s32 %v476, %v478
      %v480 = vrot.slane %v472, %v479
      %v482 = vunpack.c.l.s4 1966171168
      %v483 = vunpack.c.0.s8 %v482
      %v484 = vlaneseq
      %v485 = vshrl.u32 %v484, 7
      %v486 = vsub.s32 %v483, %v485
      %v487 = vrot.slane %v480, %v486
      %488 = vrot.lane.b32.xlu0 %v487, 32
      %v489 = vpop.permute.xlu0 %488
      %v492 = vsel %vm276, %v470, %v489
      %s493 = scalar_lea.vmem %s242, 64
      %v494 = vld [vmem:[%s493] sm:$0xf]
      %v495 = vld [vmem:[%s493 + $0x4] sm:$0xf]
      %v496 = vld [vmem:[%s493 + $0x8] sm:$0xf]
      %v497 = vld [vmem:[%s493 + $0xc] sm:$0xf]
      %v498 = vld [vmem:[%s493 + $0x10] sm:$0xf]
      %v499 = vld [vmem:[%s493 + $0x14] sm:$0xf]
      %v500 = vld [vmem:[%s493 + $0x18] sm:$0xf]
      %v501 = vld [vmem:[%s493 + $0x1c] sm:$0xf]
      %v510 = vunpack.c.l.b16 %v494
      %v511 = vunpack.c.l.b16 %v495
      %v512 = vunpack.c.l.b16 %v496
      %v513 = vunpack.c.l.b16 %v497
      %v514 = vunpack.c.l.b16 %v498
      %v515 = vunpack.c.l.b16 %v499
      %v516 = vunpack.c.l.b16 %v500
      %v517 = vunpack.c.l.b16 %v501
      %v518 = vpack.c.b16 %v511, %v510
      %v519 = vpack.c.b16 %v513, %v512
      %v520 = vpack.c.b16 %v515, %v514
      %v521 = vpack.c.b16 %v517, %v516
      %v526 = vsel %vm312, %v492, 0
      %528 = vmatprep.subr.bf16.mxu0 0
      %529 = vmatpush1.bf16.msra.mxu0 %v518
      %530 = vmatprep.subr.bf16.mxu0 0
      %531 = vmatpush1.bf16.msra.mxu0 %v519
      %532 = vmatprep.subr.bf16.mxu0 0
      %533 = vmatpush1.bf16.msra.mxu0 %v520
      %534 = vmatprep.subr.bf16.mxu0 0
      %535 = vmatpush1.bf16.msra.mxu0 %v521
      %536 = vmatprep.subr.bf16.mxu0 0
      %537 = vmatpush1.bf16.msra.mxu0 0
      %538 = vmatprep.subr.bf16.mxu0 0
      %539 = vmatpush1.bf16.msra.mxu0 0
      %540 = vmatprep.subr.bf16.mxu0 0
      %541 = vmatpush1.bf16.msra.mxu0 0
      %542 = vmatprep.subr.bf16.mxu0 0
      %543 = vmatpush1.bf16.msra.mxu0 0
      %544 = vmatprep.subr.bf16.mxu0 0
      %545 = vmatpush1.bf16.msra.mxu0 0
      %546 = vmatprep.subr.bf16.mxu0 0
      %547 = vmatpush1.bf16.msra.mxu0 0
      %548 = vmatprep.subr.bf16.mxu0 0
      %549 = vmatpush1.bf16.msra.mxu0 0
      %550 = vmatprep.subr.bf16.mxu0 0
      %551 = vmatpush1.bf16.msra.mxu0 0
      %552 = vmatprep.subr.bf16.mxu0 0
      %553 = vmatpush1.bf16.msra.mxu0 0
      %554 = vmatprep.subr.bf16.mxu0 0
      %555 = vmatpush1.bf16.msra.mxu0 0
      %556 = vmatprep.subr.bf16.mxu0 0
      %557 = vmatpush1.bf16.msra.mxu0 0
      %558 = vmatprep.subr.bf16.mxu0 0
      %559 = vmatpush1.bf16.msra.mxu0 0
      %560 = vmatprep.mubr.bf16.mxu0 0
      %561 = vmatmul.mubr.bf16.gmra.mrb[0].mxu0 %v526
      %v562 = vpop.f32.mrb[0].mxu0
      %v563 = vadd.f32 0.0, %v562
      %v564 = vpop.f32.mrb[0].mxu0
      %v565 = vpop.f32.mrb[0].mxu0
      %v566 = vpop.f32.mrb[0].mxu0
      %567 = vdwg.mxu0
      %s568 = scalar_lea.vmem %s248, 4
      %569 = vst.msk [vmem:[%s568] sm:$0x3] %vm355, %v563
      %571 = vrot.lane.b32.xlu0 %v563, 96
      %v572 = vpop.permute.xlu0 %571
      %s574 = scalar_lea.vmem %s254, 4
      %575 = vst.msk [vmem:[%s574] sm:$0x3] %vm355, %v572
      %s576 = scalar_lea.vmem %s230, 3
      %v577 = vld [vmem:[%s576] sm:$0x1]
      %s578 = scalar_lea.vmem %s235, 3
      %v579 = vld [vmem:[%s578] sm:$0x1]
      %v582 = vunpack.c.l.s4 1966171168
      %v583 = vunpack.c.0.s8 %v582
      %v584 = vlaneseq
      %v585 = vshrl.u32 %v584, 7
      %v586 = vsub.s32 %v583, %v585
      %v587 = vrot.slane %v579, %v586
      %v589 = vunpack.c.l.s4 1966171168
      %v590 = vunpack.c.0.s8 %v589
      %v591 = vlaneseq
      %v592 = vshrl.u32 %v591, 7
      %v593 = vsub.s32 %v590, %v592
      %v594 = vrot.slane %v587, %v593
      %595 = vrot.lane.b32.xlu0 %v594, 32
      %v596 = vpop.permute.xlu0 %595
      %v599 = vsel %vm276, %v577, %v596
      %s600 = scalar_lea.vmem %s242, 96
      %v601 = vld [vmem:[%s600] sm:$0xf]
      %v602 = vld [vmem:[%s600 + $0x4] sm:$0xf]
      %v603 = vld [vmem:[%s600 + $0x8] sm:$0xf]
      %v604 = vld [vmem:[%s600 + $0xc] sm:$0xf]
      %v605 = vld [vmem:[%s600 + $0x10] sm:$0xf]
      %v606 = vld [vmem:[%s600 + $0x14] sm:$0xf]
      %v607 = vld [vmem:[%s600 + $0x18] sm:$0xf]
      %v608 = vld [vmem:[%s600 + $0x1c] sm:$0xf]
      %v617 = vunpack.c.l.b16 %v601
      %v618 = vunpack.c.l.b16 %v602
      %v619 = vunpack.c.l.b16 %v603
      %v620 = vunpack.c.l.b16 %v604
      %v621 = vunpack.c.l.b16 %v605
      %v622 = vunpack.c.l.b16 %v606
      %v623 = vunpack.c.l.b16 %v607
      %v624 = vunpack.c.l.b16 %v608
      %v625 = vpack.c.b16 %v618, %v617
      %v626 = vpack.c.b16 %v620, %v619
      %v627 = vpack.c.b16 %v622, %v621
      %v628 = vpack.c.b16 %v624, %v623
      %v633 = vsel %vm312, %v599, 0
      %635 = vmatprep.subr.bf16.mxu0 0
      %636 = vmatpush1.bf16.msra.mxu0 %v625
      %637 = vmatprep.subr.bf16.mxu0 0
      %638 = vmatpush1.bf16.msra.mxu0 %v626
      %639 = vmatprep.subr.bf16.mxu0 0
      %640 = vmatpush1.bf16.msra.mxu0 %v627
      %641 = vmatprep.subr.bf16.mxu0 0
      %642 = vmatpush1.bf16.msra.mxu0 %v628
      %643 = vmatprep.subr.bf16.mxu0 0
      %644 = vmatpush1.bf16.msra.mxu0 0
      %645 = vmatprep.subr.bf16.mxu0 0
      %646 = vmatpush1.bf16.msra.mxu0 0
      %647 = vmatprep.subr.bf16.mxu0 0
      %648 = vmatpush1.bf16.msra.mxu0 0
      %649 = vmatprep.subr.bf16.mxu0 0
      %650 = vmatpush1.bf16.msra.mxu0 0
      %651 = vmatprep.subr.bf16.mxu0 0
      %652 = vmatpush1.bf16.msra.mxu0 0
      %653 = vmatprep.subr.bf16.mxu0 0
      %654 = vmatpush1.bf16.msra.mxu0 0
      %655 = vmatprep.subr.bf16.mxu0 0
      %656 = vmatpush1.bf16.msra.mxu0 0
      %657 = vmatprep.subr.bf16.mxu0 0
      %658 = vmatpush1.bf16.msra.mxu0 0
      %659 = vmatprep.subr.bf16.mxu0 0
      %660 = vmatpush1.bf16.msra.mxu0 0
      %661 = vmatprep.subr.bf16.mxu0 0
      %662 = vmatpush1.bf16.msra.mxu0 0
      %663 = vmatprep.subr.bf16.mxu0 0
      %664 = vmatpush1.bf16.msra.mxu0 0
      %665 = vmatprep.subr.bf16.mxu0 0
      %666 = vmatpush1.bf16.msra.mxu0 0
      %667 = vmatprep.mubr.bf16.mxu0 0
      %668 = vmatmul.mubr.bf16.gmra.mrb[0].mxu0 %v633
      %v669 = vpop.f32.mrb[0].mxu0
      %v670 = vadd.f32 0.0, %v669
      %v671 = vpop.f32.mrb[0].mxu0
      %v672 = vpop.f32.mrb[0].mxu0
      %v673 = vpop.f32.mrb[0].mxu0
      %674 = vdwg.mxu0
      %s675 = scalar_lea.vmem %s248, 6
      %676 = vst.msk [vmem:[%s675] sm:$0x3] %vm355, %v670
      %678 = vrot.lane.b32.xlu0 %v670, 96
      %v679 = vpop.permute.xlu0 %678
      %s681 = scalar_lea.vmem %s254, 6
      %682 = vst.msk [vmem:[%s681] sm:$0x3] %vm355, %v679
      %s683 = scalar_lea.vmem %s230, 4
      %v684 = vld [vmem:[%s683] sm:$0x1]
      %s685 = scalar_lea.vmem %s235, 4
      %v686 = vld [vmem:[%s685] sm:$0x1]
      %v689 = vunpack.c.l.s4 1966171168
      %v690 = vunpack.c.0.s8 %v689
      %v691 = vlaneseq
      %v692 = vshrl.u32 %v691, 7
      %v693 = vsub.s32 %v690, %v692
      %v694 = vrot.slane %v686, %v693
      %v696 = vunpack.c.l.s4 1966171168
      %v697 = vunpack.c.0.s8 %v696
      %v698 = vlaneseq
      %v699 = vshrl.u32 %v698, 7
      %v700 = vsub.s32 %v697, %v699
      %v701 = vrot.slane %v694, %v700
      %702 = vrot.lane.b32.xlu0 %v701, 32
      %v703 = vpop.permute.xlu0 %702
      %v706 = vsel %vm276, %v684, %v703
      %s707 = scalar_lea.vmem %s242, 128
      %v708 = vld [vmem:[%s707] sm:$0xf]
      %v709 = vld [vmem:[%s707 + $0x4] sm:$0xf]
      %v710 = vld [vmem:[%s707 + $0x8] sm:$0xf]
      %v711 = vld [vmem:[%s707 + $0xc] sm:$0xf]
      %v712 = vld [vmem:[%s707 + $0x10] sm:$0xf]
      %v713 = vld [vmem:[%s707 + $0x14] sm:$0xf]
      %v714 = vld [vmem:[%s707 + $0x18] sm:$0xf]
      %v715 = vld [vmem:[%s707 + $0x1c] sm:$0xf]
      %v724 = vunpack.c.l.b16 %v708
      %v725 = vunpack.c.l.b16 %v709
      %v726 = vunpack.c.l.b16 %v710
      %v727 = vunpack.c.l.b16 %v711
      %v728 = vunpack.c.l.b16 %v712
      %v729 = vunpack.c.l.b16 %v713
      %v730 = vunpack.c.l.b16 %v714
      %v731 = vunpack.c.l.b16 %v715
      %v732 = vpack.c.b16 %v725, %v724
      %v733 = vpack.c.b16 %v727, %v726
      %v734 = vpack.c.b16 %v729, %v728
      %v735 = vpack.c.b16 %v731, %v730
      %v740 = vsel %vm312, %v706, 0
      %742 = vmatprep.subr.bf16.mxu0 0
      %743 = vmatpush1.bf16.msra.mxu0 %v732
      %744 = vmatprep.subr.bf16.mxu0 0
      %745 = vmatpush1.bf16.msra.mxu0 %v733
      %746 = vmatprep.subr.bf16.mxu0 0
      %747 = vmatpush1.bf16.msra.mxu0 %v734
      %748 = vmatprep.subr.bf16.mxu0 0
      %749 = vmatpush1.bf16.msra.mxu0 %v735
      %750 = vmatprep.subr.bf16.mxu0 0
      %751 = vmatpush1.bf16.msra.mxu0 0
      %752 = vmatprep.subr.bf16.mxu0 0
      %753 = vmatpush1.bf16.msra.mxu0 0
      %754 = vmatprep.subr.bf16.mxu0 0
      %755 = vmatpush1.bf16.msra.mxu0 0
      %756 = vmatprep.subr.bf16.mxu0 0
      %757 = vmatpush1.bf16.msra.mxu0 0
      %758 = vmatprep.subr.bf16.mxu0 0
      %759 = vmatpush1.bf16.msra.mxu0 0
      %760 = vmatprep.subr.bf16.mxu0 0
      %761 = vmatpush1.bf16.msra.mxu0 0
      %762 = vmatprep.subr.bf16.mxu0 0
      %763 = vmatpush1.bf16.msra.mxu0 0
      %764 = vmatprep.subr.bf16.mxu0 0
      %765 = vmatpush1.bf16.msra.mxu0 0
      %766 = vmatprep.subr.bf16.mxu0 0
      %767 = vmatpush1.bf16.msra.mxu0 0
      %768 = vmatprep.subr.bf16.mxu0 0
      %769 = vmatpush1.bf16.msra.mxu0 0
      %770 = vmatprep.subr.bf16.mxu0 0
      %771 = vmatpush1.bf16.msra.mxu0 0
      %772 = vmatprep.subr.bf16.mxu0 0
      %773 = vmatpush1.bf16.msra.mxu0 0
      %774 = vmatprep.mubr.bf16.mxu0 0
      %775 = vmatmul.mubr.bf16.gmra.mrb[0].mxu0 %v740
      %v776 = vpop.f32.mrb[0].mxu0
      %v777 = vadd.f32 0.0, %v776
      %v778 = vpop.f32.mrb[0].mxu0
      %v779 = vpop.f32.mrb[0].mxu0
      %v780 = vpop.f32.mrb[0].mxu0
      %781 = vdwg.mxu0
      %s782 = scalar_lea.vmem %s248, 8
      %783 = vst.msk [vmem:[%s782] sm:$0x3] %vm355, %v777
      %785 = vrot.lane.b32.xlu0 %v777, 96
      %v786 = vpop.permute.xlu0 %785
      %s788 = scalar_lea.vmem %s254, 8
      %789 = vst.msk [vmem:[%s788] sm:$0x3] %vm355, %v786
      %s790 = scalar_lea.vmem %s230, 5
      %v791 = vld [vmem:[%s790] sm:$0x1]
      %s792 = scalar_lea.vmem %s235, 5
      %v793 = vld [vmem:[%s792] sm:$0x1]
      %v796 = vunpack.c.l.s4 1966171168
      %v797 = vunpack.c.0.s8 %v796
      %v798 = vlaneseq
      %v799 = vshrl.u32 %v798, 7
      %v800 = vsub.s32 %v797, %v799
      %v801 = vrot.slane %v793, %v800
      %v803 = vunpack.c.l.s4 1966171168
      %v804 = vunpack.c.0.s8 %v803
      %v805 = vlaneseq
      %v806 = vshrl.u32 %v805, 7
      %v807 = vsub.s32 %v804, %v806
      %v808 = vrot.slane %v801, %v807
      %809 = vrot.lane.b32.xlu0 %v808, 32
      %v810 = vpop.permute.xlu0 %809
      %v813 = vsel %vm276, %v791, %v810
      %s814 = scalar_lea.vmem %s242, 160
      %v815 = vld [vmem:[%s814] sm:$0xf]
      %v816 = vld [vmem:[%s814 + $0x4] sm:$0xf]
      %v817 = vld [vmem:[%s814 + $0x8] sm:$0xf]
      %v818 = vld [vmem:[%s814 + $0xc] sm:$0xf]
      %v819 = vld [vmem:[%s814 + $0x10] sm:$0xf]
      %v820 = vld [vmem:[%s814 + $0x14] sm:$0xf]
      %v821 = vld [vmem:[%s814 + $0x18] sm:$0xf]
      %v822 = vld [vmem:[%s814 + $0x1c] sm:$0xf]
      %v831 = vunpack.c.l.b16 %v815
      %v832 = vunpack.c.l.b16 %v816
      %v833 = vunpack.c.l.b16 %v817
      %v834 = vunpack.c.l.b16 %v818
      %v835 = vunpack.c.l.b16 %v819
      %v836 = vunpack.c.l.b16 %v820
      %v837 = vunpack.c.l.b16 %v821
      %v838 = vunpack.c.l.b16 %v822
      %v839 = vpack.c.b16 %v832, %v831
      %v840 = vpack.c.b16 %v834, %v833
      %v841 = vpack.c.b16 %v836, %v835
      %v842 = vpack.c.b16 %v838, %v837
      %v847 = vsel %vm312, %v813, 0
      %849 = vmatprep.subr.bf16.mxu0 0
      %850 = vmatpush1.bf16.msra.mxu0 %v839
      %851 = vmatprep.subr.bf16.mxu0 0
      %852 = vmatpush1.bf16.msra.mxu0 %v840
      %853 = vmatprep.subr.bf16.mxu0 0
      %854 = vmatpush1.bf16.msra.mxu0 %v841
      %855 = vmatprep.subr.bf16.mxu0 0
      %856 = vmatpush1.bf16.msra.mxu0 %v842
      %857 = vmatprep.subr.bf16.mxu0 0
      %858 = vmatpush1.bf16.msra.mxu0 0
      %859 = vmatprep.subr.bf16.mxu0 0
      %860 = vmatpush1.bf16.msra.mxu0 0
      %861 = vmatprep.subr.bf16.mxu0 0
      %862 = vmatpush1.bf16.msra.mxu0 0
      %863 = vmatprep.subr.bf16.mxu0 0
      %864 = vmatpush1.bf16.msra.mxu0 0
      %865 = vmatprep.subr.bf16.mxu0 0
      %866 = vmatpush1.bf16.msra.mxu0 0
      %867 = vmatprep.subr.bf16.mxu0 0
      %868 = vmatpush1.bf16.msra.mxu0 0
      %869 = vmatprep.subr.bf16.mxu0 0
      %870 = vmatpush1.bf16.msra.mxu0 0
      %871 = vmatprep.subr.bf16.mxu0 0
      %872 = vmatpush1.bf16.msra.mxu0 0
      %873 = vmatprep.subr.bf16.mxu0 0
      %874 = vmatpush1.bf16.msra.mxu0 0
      %875 = vmatprep.subr.bf16.mxu0 0
      %876 = vmatpush1.bf16.msra.mxu0 0
      %877 = vmatprep.subr.bf16.mxu0 0
      %878 = vmatpush1.bf16.msra.mxu0 0
      %879 = vmatprep.subr.bf16.mxu0 0
      %880 = vmatpush1.bf16.msra.mxu0 0
      %881 = vmatprep.mubr.bf16.mxu0 0
      %882 = vmatmul.mubr.bf16.gmra.mrb[0].mxu0 %v847
      %v883 = vpop.f32.mrb[0].mxu0
      %v884 = vadd.f32 0.0, %v883
      %v885 = vpop.f32.mrb[0].mxu0
      %v886 = vpop.f32.mrb[0].mxu0
      %v887 = vpop.f32.mrb[0].mxu0
      %888 = vdwg.mxu0
      %s889 = scalar_lea.vmem %s248, 10
      %890 = vst.msk [vmem:[%s889] sm:$0x3] %vm355, %v884
      %892 = vrot.lane.b32.xlu0 %v884, 96
      %v893 = vpop.permute.xlu0 %892
      %s895 = scalar_lea.vmem %s254, 10
      %896 = vst.msk [vmem:[%s895] sm:$0x3] %vm355, %v893
      %s897 = scalar_lea.vmem %s230, 6
      %v898 = vld [vmem:[%s897] sm:$0x1]
      %s899 = scalar_lea.vmem %s235, 6
      %v900 = vld [vmem:[%s899] sm:$0x1]
      %v903 = vunpack.c.l.s4 1966171168
      %v904 = vunpack.c.0.s8 %v903
      %v905 = vlaneseq
      %v906 = vshrl.u32 %v905, 7
      %v907 = vsub.s32 %v904, %v906
      %v908 = vrot.slane %v900, %v907
      %v910 = vunpack.c.l.s4 1966171168
      %v911 = vunpack.c.0.s8 %v910
      %v912 = vlaneseq
      %v913 = vshrl.u32 %v912, 7
      %v914 = vsub.s32 %v911, %v913
      %v915 = vrot.slane %v908, %v914
      %916 = vrot.lane.b32.xlu0 %v915, 32
      %v917 = vpop.permute.xlu0 %916
      %v920 = vsel %vm276, %v898, %v917
      %s921 = scalar_lea.vmem %s242, 192
      %v922 = vld [vmem:[%s921] sm:$0xf]
      %v923 = vld [vmem:[%s921 + $0x4] sm:$0xf]
      %v924 = vld [vmem:[%s921 + $0x8] sm:$0xf]
      %v925 = vld [vmem:[%s921 + $0xc] sm:$0xf]
      %v926 = vld [vmem:[%s921 + $0x10] sm:$0xf]
      %v927 = vld [vmem:[%s921 + $0x14] sm:$0xf]
      %v928 = vld [vmem:[%s921 + $0x18] sm:$0xf]
      %v929 = vld [vmem:[%s921 + $0x1c] sm:$0xf]
      %v938 = vunpack.c.l.b16 %v922
      %v939 = vunpack.c.l.b16 %v923
      %v940 = vunpack.c.l.b16 %v924
      %v941 = vunpack.c.l.b16 %v925
      %v942 = vunpack.c.l.b16 %v926
      %v943 = vunpack.c.l.b16 %v927
      %v944 = vunpack.c.l.b16 %v928
      %v945 = vunpack.c.l.b16 %v929
      %v946 = vpack.c.b16 %v939, %v938
      %v947 = vpack.c.b16 %v941, %v940
      %v948 = vpack.c.b16 %v943, %v942
      %v949 = vpack.c.b16 %v945, %v944
      %v954 = vsel %vm312, %v920, 0
      %956 = vmatprep.subr.bf16.mxu0 0
      %957 = vmatpush1.bf16.msra.mxu0 %v946
      %958 = vmatprep.subr.bf16.mxu0 0
      %959 = vmatpush1.bf16.msra.mxu0 %v947
      %960 = vmatprep.subr.bf16.mxu0 0
      %961 = vmatpush1.bf16.msra.mxu0 %v948
      %962 = vmatprep.subr.bf16.mxu0 0
      %963 = vmatpush1.bf16.msra.mxu0 %v949
      %964 = vmatprep.subr.bf16.mxu0 0
      %965 = vmatpush1.bf16.msra.mxu0 0
      %966 = vmatprep.subr.bf16.mxu0 0
      %967 = vmatpush1.bf16.msra.mxu0 0
      %968 = vmatprep.subr.bf16.mxu0 0
      %969 = vmatpush1.bf16.msra.mxu0 0
      %970 = vmatprep.subr.bf16.mxu0 0
      %971 = vmatpush1.bf16.msra.mxu0 0
      %972 = vmatprep.subr.bf16.mxu0 0
      %973 = vmatpush1.bf16.msra.mxu0 0
      %974 = vmatprep.subr.bf16.mxu0 0
      %975 = vmatpush1.bf16.msra.mxu0 0
      %976 = vmatprep.subr.bf16.mxu0 0
      %977 = vmatpush1.bf16.msra.mxu0 0
      %978 = vmatprep.subr.bf16.mxu0 0
      %979 = vmatpush1.bf16.msra.mxu0 0
      %980 = vmatprep.subr.bf16.mxu0 0
      %981 = vmatpush1.bf16.msra.mxu0 0
      %982 = vmatprep.subr.bf16.mxu0 0
      %983 = vmatpush1.bf16.msra.mxu0 0
      %984 = vmatprep.subr.bf16.mxu0 0
      %985 = vmatpush1.bf16.msra.mxu0 0
      %986 = vmatprep.subr.bf16.mxu0 0
      %987 = vmatpush1.bf16.msra.mxu0 0
      %988 = vmatprep.mubr.bf16.mxu0 0
      %989 = vmatmul.mubr.bf16.gmra.mrb[0].mxu0 %v954
      %v990 = vpop.f32.mrb[0].mxu0
      %v991 = vadd.f32 0.0, %v990
      %v992 = vpop.f32.mrb[0].mxu0
      %v993 = vpop.f32.mrb[0].mxu0
      %v994 = vpop.f32.mrb[0].mxu0
      %995 = vdwg.mxu0
      %s996 = scalar_lea.vmem %s248, 12
      %997 = vst.msk [vmem:[%s996] sm:$0x3] %vm355, %v991
      %999 = vrot.lane.b32.xlu0 %v991, 96
      %v1000 = vpop.permute.xlu0 %999
      %s1002 = scalar_lea.vmem %s254, 12
      %1003 = vst.msk [vmem:[%s1002] sm:$0x3] %vm355, %v1000
      %s1004 = scalar_lea.vmem %s230, 7
      %v1005 = vld [vmem:[%s1004] sm:$0x1]
      %s1006 = scalar_lea.vmem %s235, 7
      %v1007 = vld [vmem:[%s1006] sm:$0x1]
      %v1010 = vunpack.c.l.s4 1966171168
      %v1011 = vunpack.c.0.s8 %v1010
      %v1012 = vlaneseq
      %v1013 = vshrl.u32 %v1012, 7
      %v1014 = vsub.s32 %v1011, %v1013
      %v1015 = vrot.slane %v1007, %v1014
      %v1017 = vunpack.c.l.s4 1966171168
      %v1018 = vunpack.c.0.s8 %v1017
      %v1019 = vlaneseq
      %v1020 = vshrl.u32 %v1019, 7
      %v1021 = vsub.s32 %v1018, %v1020
      %v1022 = vrot.slane %v1015, %v1021
      %1023 = vrot.lane.b32.xlu0 %v1022, 32
      %v1024 = vpop.permute.xlu0 %1023
      %v1027 = vsel %vm276, %v1005, %v1024
      %s1028 = scalar_lea.vmem %s242, 224
      %v1029 = vld [vmem:[%s1028] sm:$0xf]
      %v1030 = vld [vmem:[%s1028 + $0x4] sm:$0xf]
      %v1031 = vld [vmem:[%s1028 + $0x8] sm:$0xf]
      %v1032 = vld [vmem:[%s1028 + $0xc] sm:$0xf]
      %v1033 = vld [vmem:[%s1028 + $0x10] sm:$0xf]
      %v1034 = vld [vmem:[%s1028 + $0x14] sm:$0xf]
      %v1035 = vld [vmem:[%s1028 + $0x18] sm:$0xf]
      %v1036 = vld [vmem:[%s1028 + $0x1c] sm:$0xf]
      %v1045 = vunpack.c.l.b16 %v1029
      %v1046 = vunpack.c.l.b16 %v1030
      %v1047 = vunpack.c.l.b16 %v1031
      %v1048 = vunpack.c.l.b16 %v1032
      %v1049 = vunpack.c.l.b16 %v1033
      %v1050 = vunpack.c.l.b16 %v1034
      %v1051 = vunpack.c.l.b16 %v1035
      %v1052 = vunpack.c.l.b16 %v1036
      %v1053 = vpack.c.b16 %v1046, %v1045
      %v1054 = vpack.c.b16 %v1048, %v1047
      %v1055 = vpack.c.b16 %v1050, %v1049
      %v1056 = vpack.c.b16 %v1052, %v1051
      %v1061 = vsel %vm312, %v1027, 0
      %1063 = vmatprep.subr.bf16.mxu0 0
      %1064 = vmatpush1.bf16.msra.mxu0 %v1053
      %1065 = vmatprep.subr.bf16.mxu0 0
      %1066 = vmatpush1.bf16.msra.mxu0 %v1054
      %1067 = vmatprep.subr.bf16.mxu0 0
      %1068 = vmatpush1.bf16.msra.mxu0 %v1055
      %1069 = vmatprep.subr.bf16.mxu0 0
      %1070 = vmatpush1.bf16.msra.mxu0 %v1056
      %1071 = vmatprep.subr.bf16.mxu0 0
      %1072 = vmatpush1.bf16.msra.mxu0 0
      %1073 = vmatprep.subr.bf16.mxu0 0
      %1074 = vmatpush1.bf16.msra.mxu0 0
      %1075 = vmatprep.subr.bf16.mxu0 0
      %1076 = vmatpush1.bf16.msra.mxu0 0
      %1077 = vmatprep.subr.bf16.mxu0 0
      %1078 = vmatpush1.bf16.msra.mxu0 0
      %1079 = vmatprep.subr.bf16.mxu0 0
      %1080 = vmatpush1.bf16.msra.mxu0 0
      %1081 = vmatprep.subr.bf16.mxu0 0
      %1082 = vmatpush1.bf16.msra.mxu0 0
      %1083 = vmatprep.subr.bf16.mxu0 0
      %1084 = vmatpush1.bf16.msra.mxu0 0
      %1085 = vmatprep.subr.bf16.mxu0 0
      %1086 = vmatpush1.bf16.msra.mxu0 0
      %1087 = vmatprep.subr.bf16.mxu0 0
      %1088 = vmatpush1.bf16.msra.mxu0 0
      %1089 = vmatprep.subr.bf16.mxu0 0
      %1090 = vmatpush1.bf16.msra.mxu0 0
      %1091 = vmatprep.subr.bf16.mxu0 0
      %1092 = vmatpush1.bf16.msra.mxu0 0
      %1093 = vmatprep.subr.bf16.mxu0 0
      %1094 = vmatpush1.bf16.msra.mxu0 0
      %1095 = vmatprep.mubr.bf16.mxu0 0
      %1096 = vmatmul.mubr.bf16.gmra.mrb[0].mxu0 %v1061
      %v1097 = vpop.f32.mrb[0].mxu0
      %v1098 = vadd.f32 0.0, %v1097
      %v1099 = vpop.f32.mrb[0].mxu0
      %v1100 = vpop.f32.mrb[0].mxu0
      %v1101 = vpop.f32.mrb[0].mxu0
      %1102 = vdwg.mxu0
      %s1103 = scalar_lea.vmem %s248, 14
      %1104 = vst.msk [vmem:[%s1103] sm:$0x3] %vm355, %v1098
      %1106 = vrot.lane.b32.xlu0 %v1098, 96
      %v1107 = vpop.permute.xlu0 %1106
      %s1109 = scalar_lea.vmem %s254, 14
      %1110 = vst.msk [vmem:[%s1109] sm:$0x3] %vm355, %v1107
      %s1111 = scalar_lea.vmem %s230, 8
      %v1112 = vld [vmem:[%s1111] sm:$0x1]
      %s1113 = scalar_lea.vmem %s235, 8
      %v1114 = vld [vmem:[%s1113] sm:$0x1]
      %v1117 = vunpack.c.l.s4 1966171168
      %v1118 = vunpack.c.0.s8 %v1117
      %v1119 = vlaneseq
      %v1120 = vshrl.u32 %v1119, 7
      %v1121 = vsub.s32 %v1118, %v1120
      %v1122 = vrot.slane %v1114, %v1121
      %v1124 = vunpack.c.l.s4 1966171168
      %v1125 = vunpack.c.0.s8 %v1124
      %v1126 = vlaneseq
      %v1127 = vshrl.u32 %v1126, 7
      %v1128 = vsub.s32 %v1125, %v1127
      %v1129 = vrot.slane %v1122, %v1128
      %1130 = vrot.lane.b32.xlu0 %v1129, 32
      %v1131 = vpop.permute.xlu0 %1130
      %v1134 = vsel %vm276, %v1112, %v1131
      %s1135 = scalar_lea.vmem %s242, 256
      %v1136 = vld [vmem:[%s1135] sm:$0xf]
      %v1137 = vld [vmem:[%s1135 + $0x4] sm:$0xf]
      %v1138 = vld [vmem:[%s1135 + $0x8] sm:$0xf]
      %v1139 = vld [vmem:[%s1135 + $0xc] sm:$0xf]
      %v1140 = vld [vmem:[%s1135 + $0x10] sm:$0xf]
      %v1141 = vld [vmem:[%s1135 + $0x14] sm:$0xf]
      %v1142 = vld [vmem:[%s1135 + $0x18] sm:$0xf]
      %v1143 = vld [vmem:[%s1135 + $0x1c] sm:$0xf]
      %v1152 = vunpack.c.l.b16 %v1136
      %v1153 = vunpack.c.l.b16 %v1137
      %v1154 = vunpack.c.l.b16 %v1138
      %v1155 = vunpack.c.l.b16 %v1139
      %v1156 = vunpack.c.l.b16 %v1140
      %v1157 = vunpack.c.l.b16 %v1141
      %v1158 = vunpack.c.l.b16 %v1142
      %v1159 = vunpack.c.l.b16 %v1143
      %v1160 = vpack.c.b16 %v1153, %v1152
      %v1161 = vpack.c.b16 %v1155, %v1154
      %v1162 = vpack.c.b16 %v1157, %v1156
      %v1163 = vpack.c.b16 %v1159, %v1158
      %v1168 = vsel %vm312, %v1134, 0
      %1170 = vmatprep.subr.bf16.mxu0 0
      %1171 = vmatpush1.bf16.msra.mxu0 %v1160
      %1172 = vmatprep.subr.bf16.mxu0 0
      %1173 = vmatpush1.bf16.msra.mxu0 %v1161
      %1174 = vmatprep.subr.bf16.mxu0 0
      %1175 = vmatpush1.bf16.msra.mxu0 %v1162
      %1176 = vmatprep.subr.bf16.mxu0 0
      %1177 = vmatpush1.bf16.msra.mxu0 %v1163
      %1178 = vmatprep.subr.bf16.mxu0 0
      %1179 = vmatpush1.bf16.msra.mxu0 0
      %1180 = vmatprep.subr.bf16.mxu0 0
      %1181 = vmatpush1.bf16.msra.mxu0 0
      %1182 = vmatprep.subr.bf16.mxu0 0
      %1183 = vmatpush1.bf16.msra.mxu0 0
      %1184 = vmatprep.subr.bf16.mxu0 0
      %1185 = vmatpush1.bf16.msra.mxu0 0
      %1186 = vmatprep.subr.bf16.mxu0 0
      %1187 = vmatpush1.bf16.msra.mxu0 0
      %1188 = vmatprep.subr.bf16.mxu0 0
      %1189 = vmatpush1.bf16.msra.mxu0 0
      %1190 = vmatprep.subr.bf16.mxu0 0
      %1191 = vmatpush1.bf16.msra.mxu0 0
      %1192 = vmatprep.subr.bf16.mxu0 0
      %1193 = vmatpush1.bf16.msra.mxu0 0
      %1194 = vmatprep.subr.bf16.mxu0 0
      %1195 = vmatpush1.bf16.msra.mxu0 0
      %1196 = vmatprep.subr.bf16.mxu0 0
      %1197 = vmatpush1.bf16.msra.mxu0 0
      %1198 = vmatprep.subr.bf16.mxu0 0
      %1199 = vmatpush1.bf16.msra.mxu0 0
      %1200 = vmatprep.subr.bf16.mxu0 0
      %1201 = vmatpush1.bf16.msra.mxu0 0
      %1202 = vmatprep.mubr.bf16.mxu0 0
      %1203 = vmatmul.mubr.bf16.gmra.mrb[0].mxu0 %v1168
      %v1204 = vpop.f32.mrb[0].mxu0
      %v1205 = vadd.f32 0.0, %v1204
      %v1206 = vpop.f32.mrb[0].mxu0
      %v1207 = vpop.f32.mrb[0].mxu0
      %v1208 = vpop.f32.mrb[0].mxu0
      %1209 = vdwg.mxu0
      %s1210 = scalar_lea.vmem %s248, 16
      %1211 = vst.msk [vmem:[%s1210] sm:$0x3] %vm355, %v1205
      %1213 = vrot.lane.b32.xlu0 %v1205, 96
      %v1214 = vpop.permute.xlu0 %1213
      %s1216 = scalar_lea.vmem %s254, 16
      %1217 = vst.msk [vmem:[%s1216] sm:$0x3] %vm355, %v1214
      %s1218 = scalar_lea.vmem %s230, 9
      %v1219 = vld [vmem:[%s1218] sm:$0x1]
      %s1220 = scalar_lea.vmem %s235, 9
      %v1221 = vld [vmem:[%s1220] sm:$0x1]
      %v1224 = vunpack.c.l.s4 1966171168
      %v1225 = vunpack.c.0.s8 %v1224
      %v1226 = vlaneseq
      %v1227 = vshrl.u32 %v1226, 7
      %v1228 = vsub.s32 %v1225, %v1227
      %v1229 = vrot.slane %v1221, %v1228
      %v1231 = vunpack.c.l.s4 1966171168
      %v1232 = vunpack.c.0.s8 %v1231
      %v1233 = vlaneseq
      %v1234 = vshrl.u32 %v1233, 7
      %v1235 = vsub.s32 %v1232, %v1234
      %v1236 = vrot.slane %v1229, %v1235
      %1237 = vrot.lane.b32.xlu0 %v1236, 32
      %v1238 = vpop.permute.xlu0 %1237
      %v1241 = vsel %vm276, %v1219, %v1238
      %s1242 = scalar_lea.vmem %s242, 288
      %v1243 = vld [vmem:[%s1242] sm:$0xf]
      %v1244 = vld [vmem:[%s1242 + $0x4] sm:$0xf]
      %v1245 = vld [vmem:[%s1242 + $0x8] sm:$0xf]
      %v1246 = vld [vmem:[%s1242 + $0xc] sm:$0xf]
      %v1247 = vld [vmem:[%s1242 + $0x10] sm:$0xf]
      %v1248 = vld [vmem:[%s1242 + $0x14] sm:$0xf]
      %v1249 = vld [vmem:[%s1242 + $0x18] sm:$0xf]
      %v1250 = vld [vmem:[%s1242 + $0x1c] sm:$0xf]
      %v1259 = vunpack.c.l.b16 %v1243
      %v1260 = vunpack.c.l.b16 %v1244
      %v1261 = vunpack.c.l.b16 %v1245
      %v1262 = vunpack.c.l.b16 %v1246
      %v1263 = vunpack.c.l.b16 %v1247
      %v1264 = vunpack.c.l.b16 %v1248
      %v1265 = vunpack.c.l.b16 %v1249
      %v1266 = vunpack.c.l.b16 %v1250
      %v1267 = vpack.c.b16 %v1260, %v1259
      %v1268 = vpack.c.b16 %v1262, %v1261
      %v1269 = vpack.c.b16 %v1264, %v1263
      %v1270 = vpack.c.b16 %v1266, %v1265
      %v1275 = vsel %vm312, %v1241, 0
      %1277 = vmatprep.subr.bf16.mxu0 0
      %1278 = vmatpush1.bf16.msra.mxu0 %v1267
      %1279 = vmatprep.subr.bf16.mxu0 0
      %1280 = vmatpush1.bf16.msra.mxu0 %v1268
      %1281 = vmatprep.subr.bf16.mxu0 0
      %1282 = vmatpush1.bf16.msra.mxu0 %v1269
      %1283 = vmatprep.subr.bf16.mxu0 0
      %1284 = vmatpush1.bf16.msra.mxu0 %v1270
      %1285 = vmatprep.subr.bf16.mxu0 0
      %1286 = vmatpush1.bf16.msra.mxu0 0
      %1287 = vmatprep.subr.bf16.mxu0 0
      %1288 = vmatpush1.bf16.msra.mxu0 0
      %1289 = vmatprep.subr.bf16.mxu0 0
      %1290 = vmatpush1.bf16.msra.mxu0 0
      %1291 = vmatprep.subr.bf16.mxu0 0
      %1292 = vmatpush1.bf16.msra.mxu0 0
      %1293 = vmatprep.subr.bf16.mxu0 0
      %1294 = vmatpush1.bf16.msra.mxu0 0
      %1295 = vmatprep.subr.bf16.mxu0 0
      %1296 = vmatpush1.bf16.msra.mxu0 0
      %1297 = vmatprep.subr.bf16.mxu0 0
      %1298 = vmatpush1.bf16.msra.mxu0 0
      %1299 = vmatprep.subr.bf16.mxu0 0
      %1300 = vmatpush1.bf16.msra.mxu0 0
      %1301 = vmatprep.subr.bf16.mxu0 0
      %1302 = vmatpush1.bf16.msra.mxu0 0
      %1303 = vmatprep.subr.bf16.mxu0 0
      %1304 = vmatpush1.bf16.msra.mxu0 0
      %1305 = vmatprep.subr.bf16.mxu0 0
      %1306 = vmatpush1.bf16.msra.mxu0 0
      %1307 = vmatprep.subr.bf16.mxu0 0
      %1308 = vmatpush1.bf16.msra.mxu0 0
      %1309 = vmatprep.mubr.bf16.mxu0 0
      %1310 = vmatmul.mubr.bf16.gmra.mrb[0].mxu0 %v1275
      %v1311 = vpop.f32.mrb[0].mxu0
      %v1312 = vadd.f32 0.0, %v1311
      %v1313 = vpop.f32.mrb[0].mxu0
      %v1314 = vpop.f32.mrb[0].mxu0
      %v1315 = vpop.f32.mrb[0].mxu0
      %1316 = vdwg.mxu0
      %s1317 = scalar_lea.vmem %s248, 18
      %1318 = vst.msk [vmem:[%s1317] sm:$0x3] %vm355, %v1312
      %1320 = vrot.lane.b32.xlu0 %v1312, 96
      %v1321 = vpop.permute.xlu0 %1320
      %s1323 = scalar_lea.vmem %s254, 18
      %1324 = vst.msk [vmem:[%s1323] sm:$0x3] %vm355, %v1321
      %s1325 = scalar_lea.vmem %s230, 10
      %v1326 = vld [vmem:[%s1325] sm:$0x1]
      %s1327 = scalar_lea.vmem %s235, 10
      %v1328 = vld [vmem:[%s1327] sm:$0x1]
      %v1331 = vunpack.c.l.s4 1966171168
      %v1332 = vunpack.c.0.s8 %v1331
      %v1333 = vlaneseq
      %v1334 = vshrl.u32 %v1333, 7
      %v1335 = vsub.s32 %v1332, %v1334
      %v1336 = vrot.slane %v1328, %v1335
      %v1338 = vunpack.c.l.s4 1966171168
      %v1339 = vunpack.c.0.s8 %v1338
      %v1340 = vlaneseq
      %v1341 = vshrl.u32 %v1340, 7
      %v1342 = vsub.s32 %v1339, %v1341
      %v1343 = vrot.slane %v1336, %v1342
      %1344 = vrot.lane.b32.xlu0 %v1343, 32
      %v1345 = vpop.permute.xlu0 %1344
      %v1348 = vsel %vm276, %v1326, %v1345
      %s1349 = scalar_lea.vmem %s242, 320
      %v1350 = vld [vmem:[%s1349] sm:$0xf]
      %v1351 = vld [vmem:[%s1349 + $0x4] sm:$0xf]
      %v1352 = vld [vmem:[%s1349 + $0x8] sm:$0xf]
      %v1353 = vld [vmem:[%s1349 + $0xc] sm:$0xf]
      %v1354 = vld [vmem:[%s1349 + $0x10] sm:$0xf]
      %v1355 = vld [vmem:[%s1349 + $0x14] sm:$0xf]
      %v1356 = vld [vmem:[%s1349 + $0x18] sm:$0xf]
      %v1357 = vld [vmem:[%s1349 + $0x1c] sm:$0xf]
      %v1366 = vunpack.c.l.b16 %v1350
      %v1367 = vunpack.c.l.b16 %v1351
      %v1368 = vunpack.c.l.b16 %v1352
      %v1369 = vunpack.c.l.b16 %v1353
      %v1370 = vunpack.c.l.b16 %v1354
      %v1371 = vunpack.c.l.b16 %v1355
      %v1372 = vunpack.c.l.b16 %v1356
      %v1373 = vunpack.c.l.b16 %v1357
      %v1374 = vpack.c.b16 %v1367, %v1366
      %v1375 = vpack.c.b16 %v1369, %v1368
      %v1376 = vpack.c.b16 %v1371, %v1370
      %v1377 = vpack.c.b16 %v1373, %v1372
      %v1382 = vsel %vm312, %v1348, 0
      %1384 = vmatprep.subr.bf16.mxu0 0
      %1385 = vmatpush1.bf16.msra.mxu0 %v1374
      %1386 = vmatprep.subr.bf16.mxu0 0
      %1387 = vmatpush1.bf16.msra.mxu0 %v1375
      %1388 = vmatprep.subr.bf16.mxu0 0
      %1389 = vmatpush1.bf16.msra.mxu0 %v1376
      %1390 = vmatprep.subr.bf16.mxu0 0
      %1391 = vmatpush1.bf16.msra.mxu0 %v1377
      %1392 = vmatprep.subr.bf16.mxu0 0
      %1393 = vmatpush1.bf16.msra.mxu0 0
      %1394 = vmatprep.subr.bf16.mxu0 0
      %1395 = vmatpush1.bf16.msra.mxu0 0
      %1396 = vmatprep.subr.bf16.mxu0 0
      %1397 = vmatpush1.bf16.msra.mxu0 0
      %1398 = vmatprep.subr.bf16.mxu0 0
      %1399 = vmatpush1.bf16.msra.mxu0 0
      %1400 = vmatprep.subr.bf16.mxu0 0
      %1401 = vmatpush1.bf16.msra.mxu0 0
      %1402 = vmatprep.subr.bf16.mxu0 0
      %1403 = vmatpush1.bf16.msra.mxu0 0
      %1404 = vmatprep.subr.bf16.mxu0 0
      %1405 = vmatpush1.bf16.msra.mxu0 0
      %1406 = vmatprep.subr.bf16.mxu0 0
      %1407 = vmatpush1.bf16.msra.mxu0 0
      %1408 = vmatprep.subr.bf16.mxu0 0
      %1409 = vmatpush1.bf16.msra.mxu0 0
      %1410 = vmatprep.subr.bf16.mxu0 0
      %1411 = vmatpush1.bf16.msra.mxu0 0
      %1412 = vmatprep.subr.bf16.mxu0 0
      %1413 = vmatpush1.bf16.msra.mxu0 0
      %1414 = vmatprep.subr.bf16.mxu0 0
      %1415 = vmatpush1.bf16.msra.mxu0 0
      %1416 = vmatprep.mubr.bf16.mxu0 0
      %1417 = vmatmul.mubr.bf16.gmra.mrb[0].mxu0 %v1382
      %v1418 = vpop.f32.mrb[0].mxu0
      %v1419 = vadd.f32 0.0, %v1418
      %v1420 = vpop.f32.mrb[0].mxu0
      %v1421 = vpop.f32.mrb[0].mxu0
      %v1422 = vpop.f32.mrb[0].mxu0
      %1423 = vdwg.mxu0
      %s1424 = scalar_lea.vmem %s248, 20
      %1425 = vst.msk [vmem:[%s1424] sm:$0x3] %vm355, %v1419
      %1427 = vrot.lane.b32.xlu0 %v1419, 96
      %v1428 = vpop.permute.xlu0 %1427
      %s1430 = scalar_lea.vmem %s254, 20
      %1431 = vst.msk [vmem:[%s1430] sm:$0x3] %vm355, %v1428
      %s1432 = scalar_lea.vmem %s230, 11
      %v1433 = vld [vmem:[%s1432] sm:$0x1]
      %s1434 = scalar_lea.vmem %s235, 11
      %v1435 = vld [vmem:[%s1434] sm:$0x1]
      %v1438 = vunpack.c.l.s4 1966171168
      %v1439 = vunpack.c.0.s8 %v1438
      %v1440 = vlaneseq
      %v1441 = vshrl.u32 %v1440, 7
      %v1442 = vsub.s32 %v1439, %v1441
      %v1443 = vrot.slane %v1435, %v1442
      %v1445 = vunpack.c.l.s4 1966171168
      %v1446 = vunpack.c.0.s8 %v1445
      %v1447 = vlaneseq
      %v1448 = vshrl.u32 %v1447, 7
      %v1449 = vsub.s32 %v1446, %v1448
      %v1450 = vrot.slane %v1443, %v1449
      %1451 = vrot.lane.b32.xlu0 %v1450, 32
      %v1452 = vpop.permute.xlu0 %1451
      %v1455 = vsel %vm276, %v1433, %v1452
      %s1456 = scalar_lea.vmem %s242, 352
      %v1457 = vld [vmem:[%s1456] sm:$0xf]
      %v1458 = vld [vmem:[%s1456 + $0x4] sm:$0xf]
      %v1459 = vld [vmem:[%s1456 + $0x8] sm:$0xf]
      %v1460 = vld [vmem:[%s1456 + $0xc] sm:$0xf]
      %v1461 = vld [vmem:[%s1456 + $0x10] sm:$0xf]
      %v1462 = vld [vmem:[%s1456 + $0x14] sm:$0xf]
      %v1463 = vld [vmem:[%s1456 + $0x18] sm:$0xf]
      %v1464 = vld [vmem:[%s1456 + $0x1c] sm:$0xf]
      %v1473 = vunpack.c.l.b16 %v1457
      %v1474 = vunpack.c.l.b16 %v1458
      %v1475 = vunpack.c.l.b16 %v1459
      %v1476 = vunpack.c.l.b16 %v1460
      %v1477 = vunpack.c.l.b16 %v1461
      %v1478 = vunpack.c.l.b16 %v1462
      %v1479 = vunpack.c.l.b16 %v1463
      %v1480 = vunpack.c.l.b16 %v1464
      %v1481 = vpack.c.b16 %v1474, %v1473
      %v1482 = vpack.c.b16 %v1476, %v1475
      %v1483 = vpack.c.b16 %v1478, %v1477
      %v1484 = vpack.c.b16 %v1480, %v1479
      %v1489 = vsel %vm312, %v1455, 0
      %1491 = vmatprep.subr.bf16.mxu0 0
      %1492 = vmatpush1.bf16.msra.mxu0 %v1481
      %1493 = vmatprep.subr.bf16.mxu0 0
      %1494 = vmatpush1.bf16.msra.mxu0 %v1482
      %1495 = vmatprep.subr.bf16.mxu0 0
      %1496 = vmatpush1.bf16.msra.mxu0 %v1483
      %1497 = vmatprep.subr.bf16.mxu0 0
      %1498 = vmatpush1.bf16.msra.mxu0 %v1484
      %1499 = vmatprep.subr.bf16.mxu0 0
      %1500 = vmatpush1.bf16.msra.mxu0 0
      %1501 = vmatprep.subr.bf16.mxu0 0
      %1502 = vmatpush1.bf16.msra.mxu0 0
      %1503 = vmatprep.subr.bf16.mxu0 0
      %1504 = vmatpush1.bf16.msra.mxu0 0
      %1505 = vmatprep.subr.bf16.mxu0 0
      %1506 = vmatpush1.bf16.msra.mxu0 0
      %1507 = vmatprep.subr.bf16.mxu0 0
      %1508 = vmatpush1.bf16.msra.mxu0 0
      %1509 = vmatprep.subr.bf16.mxu0 0
      %1510 = vmatpush1.bf16.msra.mxu0 0
      %1511 = vmatprep.subr.bf16.mxu0 0
      %1512 = vmatpush1.bf16.msra.mxu0 0
      %1513 = vmatprep.subr.bf16.mxu0 0
      %1514 = vmatpush1.bf16.msra.mxu0 0
      %1515 = vmatprep.subr.bf16.mxu0 0
      %1516 = vmatpush1.bf16.msra.mxu0 0
      %1517 = vmatprep.subr.bf16.mxu0 0
      %1518 = vmatpush1.bf16.msra.mxu0 0
      %1519 = vmatprep.subr.bf16.mxu0 0
      %1520 = vmatpush1.bf16.msra.mxu0 0
      %1521 = vmatprep.subr.bf16.mxu0 0
      %1522 = vmatpush1.bf16.msra.mxu0 0
      %1523 = vmatprep.mubr.bf16.mxu0 0
      %1524 = vmatmul.mubr.bf16.gmra.mrb[0].mxu0 %v1489
      %v1525 = vpop.f32.mrb[0].mxu0
      %v1526 = vadd.f32 0.0, %v1525
      %v1527 = vpop.f32.mrb[0].mxu0
      %v1528 = vpop.f32.mrb[0].mxu0
      %v1529 = vpop.f32.mrb[0].mxu0
      %1530 = vdwg.mxu0
      %s1531 = scalar_lea.vmem %s248, 22
      %1532 = vst.msk [vmem:[%s1531] sm:$0x3] %vm355, %v1526
      %1534 = vrot.lane.b32.xlu0 %v1526, 96
      %v1535 = vpop.permute.xlu0 %1534
      %s1537 = scalar_lea.vmem %s254, 22
      %1538 = vst.msk [vmem:[%s1537] sm:$0x3] %vm355, %v1535
      %s1539 = scalar_lea.vmem %s230, 12
      %v1540 = vld [vmem:[%s1539] sm:$0x1]
      %s1541 = scalar_lea.vmem %s235, 12
      %v1542 = vld [vmem:[%s1541] sm:$0x1]
      %v1545 = vunpack.c.l.s4 1966171168
      %v1546 = vunpack.c.0.s8 %v1545
      %v1547 = vlaneseq
      %v1548 = vshrl.u32 %v1547, 7
      %v1549 = vsub.s32 %v1546, %v1548
      %v1550 = vrot.slane %v1542, %v1549
      %v1552 = vunpack.c.l.s4 1966171168
      %v1553 = vunpack.c.0.s8 %v1552
      %v1554 = vlaneseq
      %v1555 = vshrl.u32 %v1554, 7
      %v1556 = vsub.s32 %v1553, %v1555
      %v1557 = vrot.slane %v1550, %v1556
      %1558 = vrot.lane.b32.xlu0 %v1557, 32
      %v1559 = vpop.permute.xlu0 %1558
      %v1562 = vsel %vm276, %v1540, %v1559
      %s1563 = scalar_lea.vmem %s242, 384
      %v1564 = vld [vmem:[%s1563] sm:$0xf]
      %v1565 = vld [vmem:[%s1563 + $0x4] sm:$0xf]
      %v1566 = vld [vmem:[%s1563 + $0x8] sm:$0xf]
      %v1567 = vld [vmem:[%s1563 + $0xc] sm:$0xf]
      %v1568 = vld [vmem:[%s1563 + $0x10] sm:$0xf]
      %v1569 = vld [vmem:[%s1563 + $0x14] sm:$0xf]
      %v1570 = vld [vmem:[%s1563 + $0x18] sm:$0xf]
      %v1571 = vld [vmem:[%s1563 + $0x1c] sm:$0xf]
      %v1580 = vunpack.c.l.b16 %v1564
      %v1581 = vunpack.c.l.b16 %v1565
      %v1582 = vunpack.c.l.b16 %v1566
      %v1583 = vunpack.c.l.b16 %v1567
      %v1584 = vunpack.c.l.b16 %v1568
      %v1585 = vunpack.c.l.b16 %v1569
      %v1586 = vunpack.c.l.b16 %v1570
      %v1587 = vunpack.c.l.b16 %v1571
      %v1588 = vpack.c.b16 %v1581, %v1580
      %v1589 = vpack.c.b16 %v1583, %v1582
      %v1590 = vpack.c.b16 %v1585, %v1584
      %v1591 = vpack.c.b16 %v1587, %v1586
      %v1596 = vsel %vm312, %v1562, 0
      %1598 = vmatprep.subr.bf16.mxu0 0
      %1599 = vmatpush1.bf16.msra.mxu0 %v1588
      %1600 = vmatprep.subr.bf16.mxu0 0
      %1601 = vmatpush1.bf16.msra.mxu0 %v1589
      %1602 = vmatprep.subr.bf16.mxu0 0
      %1603 = vmatpush1.bf16.msra.mxu0 %v1590
      %1604 = vmatprep.subr.bf16.mxu0 0
      %1605 = vmatpush1.bf16.msra.mxu0 %v1591
      %1606 = vmatprep.subr.bf16.mxu0 0
      %1607 = vmatpush1.bf16.msra.mxu0 0
      %1608 = vmatprep.subr.bf16.mxu0 0
      %1609 = vmatpush1.bf16.msra.mxu0 0
      %1610 = vmatprep.subr.bf16.mxu0 0
      %1611 = vmatpush1.bf16.msra.mxu0 0
      %1612 = vmatprep.subr.bf16.mxu0 0
      %1613 = vmatpush1.bf16.msra.mxu0 0
      %1614 = vmatprep.subr.bf16.mxu0 0
      %1615 = vmatpush1.bf16.msra.mxu0 0
      %1616 = vmatprep.subr.bf16.mxu0 0
      %1617 = vmatpush1.bf16.msra.mxu0 0
      %1618 = vmatprep.subr.bf16.mxu0 0
      %1619 = vmatpush1.bf16.msra.mxu0 0
      %1620 = vmatprep.subr.bf16.mxu0 0
      %1621 = vmatpush1.bf16.msra.mxu0 0
      %1622 = vmatprep.subr.bf16.mxu0 0
      %1623 = vmatpush1.bf16.msra.mxu0 0
      %1624 = vmatprep.subr.bf16.mxu0 0
      %1625 = vmatpush1.bf16.msra.mxu0 0
      %1626 = vmatprep.subr.bf16.mxu0 0
      %1627 = vmatpush1.bf16.msra.mxu0 0
      %1628 = vmatprep.subr.bf16.mxu0 0
      %1629 = vmatpush1.bf16.msra.mxu0 0
      %1630 = vmatprep.mubr.bf16.mxu0 0
      %1631 = vmatmul.mubr.bf16.gmra.mrb[0].mxu0 %v1596
      %v1632 = vpop.f32.mrb[0].mxu0
      %v1633 = vadd.f32 0.0, %v1632
      %v1634 = vpop.f32.mrb[0].mxu0
      %v1635 = vpop.f32.mrb[0].mxu0
      %v1636 = vpop.f32.mrb[0].mxu0
      %1637 = vdwg.mxu0
      %s1638 = scalar_lea.vmem %s248, 24
      %1639 = vst.msk [vmem:[%s1638] sm:$0x3] %vm355, %v1633
      %1641 = vrot.lane.b32.xlu0 %v1633, 96
      %v1642 = vpop.permute.xlu0 %1641
      %s1644 = scalar_lea.vmem %s254, 24
      %1645 = vst.msk [vmem:[%s1644] sm:$0x3] %vm355, %v1642
      %s1646 = scalar_lea.vmem %s230, 13
      %v1647 = vld [vmem:[%s1646] sm:$0x1]
      %s1648 = scalar_lea.vmem %s235, 13
      %v1649 = vld [vmem:[%s1648] sm:$0x1]
      %v1652 = vunpack.c.l.s4 1966171168
      %v1653 = vunpack.c.0.s8 %v1652
      %v1654 = vlaneseq
      %v1655 = vshrl.u32 %v1654, 7
      %v1656 = vsub.s32 %v1653, %v1655
      %v1657 = vrot.slane %v1649, %v1656
      %v1659 = vunpack.c.l.s4 1966171168
      %v1660 = vunpack.c.0.s8 %v1659
      %v1661 = vlaneseq
      %v1662 = vshrl.u32 %v1661, 7
      %v1663 = vsub.s32 %v1660, %v1662
      %v1664 = vrot.slane %v1657, %v1663
      %1665 = vrot.lane.b32.xlu0 %v1664, 32
      %v1666 = vpop.permute.xlu0 %1665
      %v1669 = vsel %vm276, %v1647, %v1666
      %s1670 = scalar_lea.vmem %s242, 416
      %v1671 = vld [vmem:[%s1670] sm:$0xf]
      %v1672 = vld [vmem:[%s1670 + $0x4] sm:$0xf]
      %v1673 = vld [vmem:[%s1670 + $0x8] sm:$0xf]
      %v1674 = vld [vmem:[%s1670 + $0xc] sm:$0xf]
      %v1675 = vld [vmem:[%s1670 + $0x10] sm:$0xf]
      %v1676 = vld [vmem:[%s1670 + $0x14] sm:$0xf]
      %v1677 = vld [vmem:[%s1670 + $0x18] sm:$0xf]
      %v1678 = vld [vmem:[%s1670 + $0x1c] sm:$0xf]
      %v1687 = vunpack.c.l.b16 %v1671
      %v1688 = vunpack.c.l.b16 %v1672
      %v1689 = vunpack.c.l.b16 %v1673
      %v1690 = vunpack.c.l.b16 %v1674
      %v1691 = vunpack.c.l.b16 %v1675
      %v1692 = vunpack.c.l.b16 %v1676
      %v1693 = vunpack.c.l.b16 %v1677
      %v1694 = vunpack.c.l.b16 %v1678
      %v1695 = vpack.c.b16 %v1688, %v1687
      %v1696 = vpack.c.b16 %v1690, %v1689
      %v1697 = vpack.c.b16 %v1692, %v1691
      %v1698 = vpack.c.b16 %v1694, %v1693
      %v1703 = vsel %vm312, %v1669, 0
      %1705 = vmatprep.subr.bf16.mxu0 0
      %1706 = vmatpush1.bf16.msra.mxu0 %v1695
      %1707 = vmatprep.subr.bf16.mxu0 0
      %1708 = vmatpush1.bf16.msra.mxu0 %v1696
      %1709 = vmatprep.subr.bf16.mxu0 0
      %1710 = vmatpush1.bf16.msra.mxu0 %v1697
      %1711 = vmatprep.subr.bf16.mxu0 0
      %1712 = vmatpush1.bf16.msra.mxu0 %v1698
      %1713 = vmatprep.subr.bf16.mxu0 0
      %1714 = vmatpush1.bf16.msra.mxu0 0
      %1715 = vmatprep.subr.bf16.mxu0 0
      %1716 = vmatpush1.bf16.msra.mxu0 0
      %1717 = vmatprep.subr.bf16.mxu0 0
      %1718 = vmatpush1.bf16.msra.mxu0 0
      %1719 = vmatprep.subr.bf16.mxu0 0
      %1720 = vmatpush1.bf16.msra.mxu0 0
      %1721 = vmatprep.subr.bf16.mxu0 0
      %1722 = vmatpush1.bf16.msra.mxu0 0
      %1723 = vmatprep.subr.bf16.mxu0 0
      %1724 = vmatpush1.bf16.msra.mxu0 0
      %1725 = vmatprep.subr.bf16.mxu0 0
      %1726 = vmatpush1.bf16.msra.mxu0 0
      %1727 = vmatprep.subr.bf16.mxu0 0
      %1728 = vmatpush1.bf16.msra.mxu0 0
      %1729 = vmatprep.subr.bf16.mxu0 0
      %1730 = vmatpush1.bf16.msra.mxu0 0
      %1731 = vmatprep.subr.bf16.mxu0 0
      %1732 = vmatpush1.bf16.msra.mxu0 0
      %1733 = vmatprep.subr.bf16.mxu0 0
      %1734 = vmatpush1.bf16.msra.mxu0 0
      %1735 = vmatprep.subr.bf16.mxu0 0
      %1736 = vmatpush1.bf16.msra.mxu0 0
      %1737 = vmatprep.mubr.bf16.mxu0 0
      %1738 = vmatmul.mubr.bf16.gmra.mrb[0].mxu0 %v1703
      %v1739 = vpop.f32.mrb[0].mxu0
      %v1740 = vadd.f32 0.0, %v1739
      %v1741 = vpop.f32.mrb[0].mxu0
      %v1742 = vpop.f32.mrb[0].mxu0
      %v1743 = vpop.f32.mrb[0].mxu0
      %1744 = vdwg.mxu0
      %s1745 = scalar_lea.vmem %s248, 26
      %1746 = vst.msk [vmem:[%s1745] sm:$0x3] %vm355, %v1740
      %1748 = vrot.lane.b32.xlu0 %v1740, 96
      %v1749 = vpop.permute.xlu0 %1748
      %s1751 = scalar_lea.vmem %s254, 26
      %1752 = vst.msk [vmem:[%s1751] sm:$0x3] %vm355, %v1749
      %s1753 = scalar_lea.vmem %s230, 14
      %v1754 = vld [vmem:[%s1753] sm:$0x1]
      %s1755 = scalar_lea.vmem %s235, 14
      %v1756 = vld [vmem:[%s1755] sm:$0x1]
      %v1759 = vunpack.c.l.s4 1966171168
      %v1760 = vunpack.c.0.s8 %v1759
      %v1761 = vlaneseq
      %v1762 = vshrl.u32 %v1761, 7
      %v1763 = vsub.s32 %v1760, %v1762
      %v1764 = vrot.slane %v1756, %v1763
      %v1766 = vunpack.c.l.s4 1966171168
      %v1767 = vunpack.c.0.s8 %v1766
      %v1768 = vlaneseq
      %v1769 = vshrl.u32 %v1768, 7
      %v1770 = vsub.s32 %v1767, %v1769
      %v1771 = vrot.slane %v1764, %v1770
      %1772 = vrot.lane.b32.xlu0 %v1771, 32
      %v1773 = vpop.permute.xlu0 %1772
      %v1776 = vsel %vm276, %v1754, %v1773
      %s1777 = scalar_lea.vmem %s242, 448
      %v1778 = vld [vmem:[%s1777] sm:$0xf]
      %v1779 = vld [vmem:[%s1777 + $0x4] sm:$0xf]
      %v1780 = vld [vmem:[%s1777 + $0x8] sm:$0xf]
      %v1781 = vld [vmem:[%s1777 + $0xc] sm:$0xf]
      %v1782 = vld [vmem:[%s1777 + $0x10] sm:$0xf]
      %v1783 = vld [vmem:[%s1777 + $0x14] sm:$0xf]
      %v1784 = vld [vmem:[%s1777 + $0x18] sm:$0xf]
      %v1785 = vld [vmem:[%s1777 + $0x1c] sm:$0xf]
      %v1794 = vunpack.c.l.b16 %v1778
      %v1795 = vunpack.c.l.b16 %v1779
      %v1796 = vunpack.c.l.b16 %v1780
      %v1797 = vunpack.c.l.b16 %v1781
      %v1798 = vunpack.c.l.b16 %v1782
      %v1799 = vunpack.c.l.b16 %v1783
      %v1800 = vunpack.c.l.b16 %v1784
      %v1801 = vunpack.c.l.b16 %v1785
      %v1802 = vpack.c.b16 %v1795, %v1794
      %v1803 = vpack.c.b16 %v1797, %v1796
      %v1804 = vpack.c.b16 %v1799, %v1798
      %v1805 = vpack.c.b16 %v1801, %v1800
      %v1810 = vsel %vm312, %v1776, 0
      %1812 = vmatprep.subr.bf16.mxu0 0
      %1813 = vmatpush1.bf16.msra.mxu0 %v1802
      %1814 = vmatprep.subr.bf16.mxu0 0
      %1815 = vmatpush1.bf16.msra.mxu0 %v1803
      %1816 = vmatprep.subr.bf16.mxu0 0
      %1817 = vmatpush1.bf16.msra.mxu0 %v1804
      %1818 = vmatprep.subr.bf16.mxu0 0
      %1819 = vmatpush1.bf16.msra.mxu0 %v1805
      %1820 = vmatprep.subr.bf16.mxu0 0
      %1821 = vmatpush1.bf16.msra.mxu0 0
      %1822 = vmatprep.subr.bf16.mxu0 0
      %1823 = vmatpush1.bf16.msra.mxu0 0
      %1824 = vmatprep.subr.bf16.mxu0 0
      %1825 = vmatpush1.bf16.msra.mxu0 0
      %1826 = vmatprep.subr.bf16.mxu0 0
      %1827 = vmatpush1.bf16.msra.mxu0 0
      %1828 = vmatprep.subr.bf16.mxu0 0
      %1829 = vmatpush1.bf16.msra.mxu0 0
      %1830 = vmatprep.subr.bf16.mxu0 0
      %1831 = vmatpush1.bf16.msra.mxu0 0
      %1832 = vmatprep.subr.bf16.mxu0 0
      %1833 = vmatpush1.bf16.msra.mxu0 0
      %1834 = vmatprep.subr.bf16.mxu0 0
      %1835 = vmatpush1.bf16.msra.mxu0 0
      %1836 = vmatprep.subr.bf16.mxu0 0
      %1837 = vmatpush1.bf16.msra.mxu0 0
      %1838 = vmatprep.subr.bf16.mxu0 0
      %1839 = vmatpush1.bf16.msra.mxu0 0
      %1840 = vmatprep.subr.bf16.mxu0 0
      %1841 = vmatpush1.bf16.msra.mxu0 0
      %1842 = vmatprep.subr.bf16.mxu0 0
      %1843 = vmatpush1.bf16.msra.mxu0 0
      %1844 = vmatprep.mubr.bf16.mxu0 0
      %1845 = vmatmul.mubr.bf16.gmra.mrb[0].mxu0 %v1810
      %v1846 = vpop.f32.mrb[0].mxu0
      %v1847 = vadd.f32 0.0, %v1846
      %v1848 = vpop.f32.mrb[0].mxu0
      %v1849 = vpop.f32.mrb[0].mxu0
      %v1850 = vpop.f32.mrb[0].mxu0
      %1851 = vdwg.mxu0
      %s1852 = scalar_lea.vmem %s248, 28
      %1853 = vst.msk [vmem:[%s1852] sm:$0x3] %vm355, %v1847
      %1855 = vrot.lane.b32.xlu0 %v1847, 96
      %v1856 = vpop.permute.xlu0 %1855
      %s1858 = scalar_lea.vmem %s254, 28
      %1859 = vst.msk [vmem:[%s1858] sm:$0x3] %vm355, %v1856
      %s1860 = scalar_lea.vmem %s230, 15
      %v1861 = vld [vmem:[%s1860] sm:$0x1]
      %s1862 = scalar_lea.vmem %s235, 15
      %v1863 = vld [vmem:[%s1862] sm:$0x1]
      %v1866 = vunpack.c.l.s4 1966171168
      %v1867 = vunpack.c.0.s8 %v1866
      %v1868 = vlaneseq
      %v1869 = vshrl.u32 %v1868, 7
      %v1870 = vsub.s32 %v1867, %v1869
      %v1871 = vrot.slane %v1863, %v1870
      %v1873 = vunpack.c.l.s4 1966171168
      %v1874 = vunpack.c.0.s8 %v1873
      %v1875 = vlaneseq
      %v1876 = vshrl.u32 %v1875, 7
      %v1877 = vsub.s32 %v1874, %v1876
      %v1878 = vrot.slane %v1871, %v1877
      %1879 = vrot.lane.b32.xlu0 %v1878, 32
      %v1880 = vpop.permute.xlu0 %1879
      %v1883 = vsel %vm276, %v1861, %v1880
      %s1884 = scalar_lea.vmem %s242, 480
      %v1885 = vld [vmem:[%s1884] sm:$0xf]
      %v1886 = vld [vmem:[%s1884 + $0x4] sm:$0xf]
      %v1887 = vld [vmem:[%s1884 + $0x8] sm:$0xf]
      %v1888 = vld [vmem:[%s1884 + $0xc] sm:$0xf]
      %v1889 = vld [vmem:[%s1884 + $0x10] sm:$0xf]
      %v1890 = vld [vmem:[%s1884 + $0x14] sm:$0xf]
      %v1891 = vld [vmem:[%s1884 + $0x18] sm:$0xf]
      %v1892 = vld [vmem:[%s1884 + $0x1c] sm:$0xf]
      %v1901 = vunpack.c.l.b16 %v1885
      %v1902 = vunpack.c.l.b16 %v1886
      %v1903 = vunpack.c.l.b16 %v1887
      %v1904 = vunpack.c.l.b16 %v1888
      %v1905 = vunpack.c.l.b16 %v1889
      %v1906 = vunpack.c.l.b16 %v1890
      %v1907 = vunpack.c.l.b16 %v1891
      %v1908 = vunpack.c.l.b16 %v1892
      %v1909 = vpack.c.b16 %v1902, %v1901
      %v1910 = vpack.c.b16 %v1904, %v1903
      %v1911 = vpack.c.b16 %v1906, %v1905
      %v1912 = vpack.c.b16 %v1908, %v1907
      %v1917 = vsel %vm312, %v1883, 0
      %1919 = vmatprep.subr.bf16.mxu0 0
      %1920 = vmatpush1.bf16.msra.mxu0 %v1909
      %1921 = vmatprep.subr.bf16.mxu0 0
      %1922 = vmatpush1.bf16.msra.mxu0 %v1910
      %1923 = vmatprep.subr.bf16.mxu0 0
      %1924 = vmatpush1.bf16.msra.mxu0 %v1911
      %1925 = vmatprep.subr.bf16.mxu0 0
      %1926 = vmatpush1.bf16.msra.mxu0 %v1912
      %1927 = vmatprep.subr.bf16.mxu0 0
      %1928 = vmatpush1.bf16.msra.mxu0 0
      %1929 = vmatprep.subr.bf16.mxu0 0
      %1930 = vmatpush1.bf16.msra.mxu0 0
      %1931 = vmatprep.subr.bf16.mxu0 0
      %1932 = vmatpush1.bf16.msra.mxu0 0
      %1933 = vmatprep.subr.bf16.mxu0 0
      %1934 = vmatpush1.bf16.msra.mxu0 0
      %1935 = vmatprep.subr.bf16.mxu0 0
      %1936 = vmatpush1.bf16.msra.mxu0 0
      %1937 = vmatprep.subr.bf16.mxu0 0
      %1938 = vmatpush1.bf16.msra.mxu0 0
      %1939 = vmatprep.subr.bf16.mxu0 0
      %1940 = vmatpush1.bf16.msra.mxu0 0
      %1941 = vmatprep.subr.bf16.mxu0 0
      %1942 = vmatpush1.bf16.msra.mxu0 0
      %1943 = vmatprep.subr.bf16.mxu0 0
      %1944 = vmatpush1.bf16.msra.mxu0 0
      %1945 = vmatprep.subr.bf16.mxu0 0
      %1946 = vmatpush1.bf16.msra.mxu0 0
      %1947 = vmatprep.subr.bf16.mxu0 0
      %1948 = vmatpush1.bf16.msra.mxu0 0
      %1949 = vmatprep.subr.bf16.mxu0 0
      %1950 = vmatpush1.bf16.msra.mxu0 0
      %1951 = vmatprep.mubr.bf16.mxu0 0
      %1952 = vmatmul.mubr.bf16.gmra.mrb[0].mxu0 %v1917
      %v1953 = vpop.f32.mrb[0].mxu0
      %v1954 = vadd.f32 0.0, %v1953
      %v1955 = vpop.f32.mrb[0].mxu0
      %v1956 = vpop.f32.mrb[0].mxu0
      %v1957 = vpop.f32.mrb[0].mxu0
      %1958 = vdwg.mxu0
      %s1959 = scalar_lea.vmem %s248, 30
      %1960 = vst.msk [vmem:[%s1959] sm:$0x3] %vm355, %v1954
      %1962 = vrot.lane.b32.xlu0 %v1954, 96
      %v1963 = vpop.permute.xlu0 %1962
      %s1965 = scalar_lea.vmem %s254, 30
      %1966 = vst.msk [vmem:[%s1965] sm:$0x3] %vm355, %v1963
      %s1967 = scalar_lea.vmem %s230, 16
      %v1968 = vld [vmem:[%s1967] sm:$0x1]
      %s1969 = scalar_lea.vmem %s235, 16
      %v1970 = vld [vmem:[%s1969] sm:$0x1]
      %v1973 = vunpack.c.l.s4 1966171168
      %v1974 = vunpack.c.0.s8 %v1973
      %v1975 = vlaneseq
      %v1976 = vshrl.u32 %v1975, 7
      %v1977 = vsub.s32 %v1974, %v1976
      %v1978 = vrot.slane %v1970, %v1977
      %v1980 = vunpack.c.l.s4 1966171168
      %v1981 = vunpack.c.0.s8 %v1980
      %v1982 = vlaneseq
      %v1983 = vshrl.u32 %v1982, 7
      %v1984 = vsub.s32 %v1981, %v1983
      %v1985 = vrot.slane %v1978, %v1984
      %1986 = vrot.lane.b32.xlu0 %v1985, 32
      %v1987 = vpop.permute.xlu0 %1986
      %v1990 = vsel %vm276, %v1968, %v1987
      %s1991 = scalar_lea.vmem %s242, 512
      %v1992 = vld [vmem:[%s1991] sm:$0xf]
      %v1993 = vld [vmem:[%s1991 + $0x4] sm:$0xf]
      %v1994 = vld [vmem:[%s1991 + $0x8] sm:$0xf]
      %v1995 = vld [vmem:[%s1991 + $0xc] sm:$0xf]
      %v1996 = vld [vmem:[%s1991 + $0x10] sm:$0xf]
      %v1997 = vld [vmem:[%s1991 + $0x14] sm:$0xf]
      %v1998 = vld [vmem:[%s1991 + $0x18] sm:$0xf]
      %v1999 = vld [vmem:[%s1991 + $0x1c] sm:$0xf]
      %v2008 = vunpack.c.l.b16 %v1992
      %v2009 = vunpack.c.l.b16 %v1993
      %v2010 = vunpack.c.l.b16 %v1994
      %v2011 = vunpack.c.l.b16 %v1995
      %v2012 = vunpack.c.l.b16 %v1996
      %v2013 = vunpack.c.l.b16 %v1997
      %v2014 = vunpack.c.l.b16 %v1998
      %v2015 = vunpack.c.l.b16 %v1999
      %v2016 = vpack.c.b16 %v2009, %v2008
      %v2017 = vpack.c.b16 %v2011, %v2010
      %v2018 = vpack.c.b16 %v2013, %v2012
      %v2019 = vpack.c.b16 %v2015, %v2014
      %v2024 = vsel %vm312, %v1990, 0
      %2026 = vmatprep.subr.bf16.mxu0 0
      %2027 = vmatpush1.bf16.msra.mxu0 %v2016
      %2028 = vmatprep.subr.bf16.mxu0 0
      %2029 = vmatpush1.bf16.msra.mxu0 %v2017
      %2030 = vmatprep.subr.bf16.mxu0 0
      %2031 = vmatpush1.bf16.msra.mxu0 %v2018
      %2032 = vmatprep.subr.bf16.mxu0 0
      %2033 = vmatpush1.bf16.msra.mxu0 %v2019
      %2034 = vmatprep.subr.bf16.mxu0 0
      %2035 = vmatpush1.bf16.msra.mxu0 0
      %2036 = vmatprep.subr.bf16.mxu0 0
      %2037 = vmatpush1.bf16.msra.mxu0 0
      %2038 = vmatprep.subr.bf16.mxu0 0
      %2039 = vmatpush1.bf16.msra.mxu0 0
      %2040 = vmatprep.subr.bf16.mxu0 0
      %2041 = vmatpush1.bf16.msra.mxu0 0
      %2042 = vmatprep.subr.bf16.mxu0 0
      %2043 = vmatpush1.bf16.msra.mxu0 0
      %2044 = vmatprep.subr.bf16.mxu0 0
      %2045 = vmatpush1.bf16.msra.mxu0 0
      %2046 = vmatprep.subr.bf16.mxu0 0
      %2047 = vmatpush1.bf16.msra.mxu0 0
      %2048 = vmatprep.subr.bf16.mxu0 0
      %2049 = vmatpush1.bf16.msra.mxu0 0
      %2050 = vmatprep.subr.bf16.mxu0 0
      %2051 = vmatpush1.bf16.msra.mxu0 0
      %2052 = vmatprep.subr.bf16.mxu0 0
      %2053 = vmatpush1.bf16.msra.mxu0 0
      %2054 = vmatprep.subr.bf16.mxu0 0
      %2055 = vmatpush1.bf16.msra.mxu0 0
      %2056 = vmatprep.subr.bf16.mxu0 0
      %2057 = vmatpush1.bf16.msra.mxu0 0
      %2058 = vmatprep.mubr.bf16.mxu0 0
      %2059 = vmatmul.mubr.bf16.gmra.mrb[0].mxu0 %v2024
      %v2060 = vpop.f32.mrb[0].mxu0
      %v2061 = vadd.f32 0.0, %v2060
      %v2062 = vpop.f32.mrb[0].mxu0
      %v2063 = vpop.f32.mrb[0].mxu0
      %v2064 = vpop.f32.mrb[0].mxu0
      %2065 = vdwg.mxu0
      %s2066 = scalar_lea.vmem %s248, 32
      %2067 = vst.msk [vmem:[%s2066] sm:$0x3] %vm355, %v2061
      %2069 = vrot.lane.b32.xlu0 %v2061, 96
      %v2070 = vpop.permute.xlu0 %2069
      %s2072 = scalar_lea.vmem %s254, 32
      %2073 = vst.msk [vmem:[%s2072] sm:$0x3] %vm355, %v2070
      %s2074 = scalar_lea.vmem %s230, 17
      %v2075 = vld [vmem:[%s2074] sm:$0x1]
      %s2076 = scalar_lea.vmem %s235, 17
      %v2077 = vld [vmem:[%s2076] sm:$0x1]
      %v2080 = vunpack.c.l.s4 1966171168
      %v2081 = vunpack.c.0.s8 %v2080
      %v2082 = vlaneseq
      %v2083 = vshrl.u32 %v2082, 7
      %v2084 = vsub.s32 %v2081, %v2083
      %v2085 = vrot.slane %v2077, %v2084
      %v2087 = vunpack.c.l.s4 1966171168
      %v2088 = vunpack.c.0.s8 %v2087
      %v2089 = vlaneseq
      %v2090 = vshrl.u32 %v2089, 7
      %v2091 = vsub.s32 %v2088, %v2090
      %v2092 = vrot.slane %v2085, %v2091
      %2093 = vrot.lane.b32.xlu0 %v2092, 32
      %v2094 = vpop.permute.xlu0 %2093
      %v2097 = vsel %vm276, %v2075, %v2094
      %s2098 = scalar_lea.vmem %s242, 544
      %v2099 = vld [vmem:[%s2098] sm:$0xf]
      %v2100 = vld [vmem:[%s2098 + $0x4] sm:$0xf]
      %v2101 = vld [vmem:[%s2098 + $0x8] sm:$0xf]
      %v2102 = vld [vmem:[%s2098 + $0xc] sm:$0xf]
      %v2103 = vld [vmem:[%s2098 + $0x10] sm:$0xf]
      %v2104 = vld [vmem:[%s2098 + $0x14] sm:$0xf]
      %v2105 = vld [vmem:[%s2098 + $0x18] sm:$0xf]
      %v2106 = vld [vmem:[%s2098 + $0x1c] sm:$0xf]
      %v2115 = vunpack.c.l.b16 %v2099
      %v2116 = vunpack.c.l.b16 %v2100
      %v2117 = vunpack.c.l.b16 %v2101
      %v2118 = vunpack.c.l.b16 %v2102
      %v2119 = vunpack.c.l.b16 %v2103
      %v2120 = vunpack.c.l.b16 %v2104
      %v2121 = vunpack.c.l.b16 %v2105
      %v2122 = vunpack.c.l.b16 %v2106
      %v2123 = vpack.c.b16 %v2116, %v2115
      %v2124 = vpack.c.b16 %v2118, %v2117
      %v2125 = vpack.c.b16 %v2120, %v2119
      %v2126 = vpack.c.b16 %v2122, %v2121
      %v2131 = vsel %vm312, %v2097, 0
      %2133 = vmatprep.subr.bf16.mxu0 0
      %2134 = vmatpush1.bf16.msra.mxu0 %v2123
      %2135 = vmatprep.subr.bf16.mxu0 0
      %2136 = vmatpush1.bf16.msra.mxu0 %v2124
      %2137 = vmatprep.subr.bf16.mxu0 0
      %2138 = vmatpush1.bf16.msra.mxu0 %v2125
      %2139 = vmatprep.subr.bf16.mxu0 0
      %2140 = vmatpush1.bf16.msra.mxu0 %v2126
      %2141 = vmatprep.subr.bf16.mxu0 0
      %2142 = vmatpush1.bf16.msra.mxu0 0
      %2143 = vmatprep.subr.bf16.mxu0 0
      %2144 = vmatpush1.bf16.msra.mxu0 0
      %2145 = vmatprep.subr.bf16.mxu0 0
      %2146 = vmatpush1.bf16.msra.mxu0 0
      %2147 = vmatprep.subr.bf16.mxu0 0
      %2148 = vmatpush1.bf16.msra.mxu0 0
      %2149 = vmatprep.subr.bf16.mxu0 0
      %2150 = vmatpush1.bf16.msra.mxu0 0
      %2151 = vmatprep.subr.bf16.mxu0 0
      %2152 = vmatpush1.bf16.msra.mxu0 0
      %2153 = vmatprep.subr.bf16.mxu0 0
      %2154 = vmatpush1.bf16.msra.mxu0 0
      %2155 = vmatprep.subr.bf16.mxu0 0
      %2156 = vmatpush1.bf16.msra.mxu0 0
      %2157 = vmatprep.subr.bf16.mxu0 0
      %2158 = vmatpush1.bf16.msra.mxu0 0
      %2159 = vmatprep.subr.bf16.mxu0 0
      %2160 = vmatpush1.bf16.msra.mxu0 0
      %2161 = vmatprep.subr.bf16.mxu0 0
      %2162 = vmatpush1.bf16.msra.mxu0 0
      %2163 = vmatprep.subr.bf16.mxu0 0
      %2164 = vmatpush1.bf16.msra.mxu0 0
      %2165 = vmatprep.mubr.bf16.mxu0 0
      %2166 = vmatmul.mubr.bf16.gmra.mrb[0].mxu0 %v2131
      %v2167 = vpop.f32.mrb[0].mxu0
      %v2168 = vadd.f32 0.0, %v2167
      %v2169 = vpop.f32.mrb[0].mxu0
      %v2170 = vpop.f32.mrb[0].mxu0
      %v2171 = vpop.f32.mrb[0].mxu0
      %2172 = vdwg.mxu0
      %s2173 = scalar_lea.vmem %s248, 34
      %2174 = vst.msk [vmem:[%s2173] sm:$0x3] %vm355, %v2168
      %2176 = vrot.lane.b32.xlu0 %v2168, 96
      %v2177 = vpop.permute.xlu0 %2176
      %s2179 = scalar_lea.vmem %s254, 34
      %2180 = vst.msk [vmem:[%s2179] sm:$0x3] %vm355, %v2177
      %s2181 = scalar_lea.vmem %s230, 18
      %v2182 = vld [vmem:[%s2181] sm:$0x1]
      %s2183 = scalar_lea.vmem %s235, 18
      %v2184 = vld [vmem:[%s2183] sm:$0x1]
      %v2187 = vunpack.c.l.s4 1966171168
      %v2188 = vunpack.c.0.s8 %v2187
      %v2189 = vlaneseq
      %v2190 = vshrl.u32 %v2189, 7
      %v2191 = vsub.s32 %v2188, %v2190
      %v2192 = vrot.slane %v2184, %v2191
      %v2194 = vunpack.c.l.s4 1966171168
      %v2195 = vunpack.c.0.s8 %v2194
      %v2196 = vlaneseq
      %v2197 = vshrl.u32 %v2196, 7
      %v2198 = vsub.s32 %v2195, %v2197
      %v2199 = vrot.slane %v2192, %v2198
      %2200 = vrot.lane.b32.xlu0 %v2199, 32
      %v2201 = vpop.permute.xlu0 %2200
      %v2204 = vsel %vm276, %v2182, %v2201
      %s2205 = scalar_lea.vmem %s242, 576
      %v2206 = vld [vmem:[%s2205] sm:$0xf]
      %v2207 = vld [vmem:[%s2205 + $0x4] sm:$0xf]
      %v2208 = vld [vmem:[%s2205 + $0x8] sm:$0xf]
      %v2209 = vld [vmem:[%s2205 + $0xc] sm:$0xf]
      %v2210 = vld [vmem:[%s2205 + $0x10] sm:$0xf]
      %v2211 = vld [vmem:[%s2205 + $0x14] sm:$0xf]
      %v2212 = vld [vmem:[%s2205 + $0x18] sm:$0xf]
      %v2213 = vld [vmem:[%s2205 + $0x1c] sm:$0xf]
      %v2222 = vunpack.c.l.b16 %v2206
      %v2223 = vunpack.c.l.b16 %v2207
      %v2224 = vunpack.c.l.b16 %v2208
      %v2225 = vunpack.c.l.b16 %v2209
      %v2226 = vunpack.c.l.b16 %v2210
      %v2227 = vunpack.c.l.b16 %v2211
      %v2228 = vunpack.c.l.b16 %v2212
      %v2229 = vunpack.c.l.b16 %v2213
      %v2230 = vpack.c.b16 %v2223, %v2222
      %v2231 = vpack.c.b16 %v2225, %v2224
      %v2232 = vpack.c.b16 %v2227, %v2226
      %v2233 = vpack.c.b16 %v2229, %v2228
      %v2238 = vsel %vm312, %v2204, 0
      %2240 = vmatprep.subr.bf16.mxu0 0
      %2241 = vmatpush1.bf16.msra.mxu0 %v2230
      %2242 = vmatprep.subr.bf16.mxu0 0
      %2243 = vmatpush1.bf16.msra.mxu0 %v2231
      %2244 = vmatprep.subr.bf16.mxu0 0
      %2245 = vmatpush1.bf16.msra.mxu0 %v2232
      %2246 = vmatprep.subr.bf16.mxu0 0
      %2247 = vmatpush1.bf16.msra.mxu0 %v2233
      %2248 = vmatprep.subr.bf16.mxu0 0
      %2249 = vmatpush1.bf16.msra.mxu0 0
      %2250 = vmatprep.subr.bf16.mxu0 0
      %2251 = vmatpush1.bf16.msra.mxu0 0
      %2252 = vmatprep.subr.bf16.mxu0 0
      %2253 = vmatpush1.bf16.msra.mxu0 0
      %2254 = vmatprep.subr.bf16.mxu0 0
      %2255 = vmatpush1.bf16.msra.mxu0 0
      %2256 = vmatprep.subr.bf16.mxu0 0
      %2257 = vmatpush1.bf16.msra.mxu0 0
      %2258 = vmatprep.subr.bf16.mxu0 0
      %2259 = vmatpush1.bf16.msra.mxu0 0
      %2260 = vmatprep.subr.bf16.mxu0 0
      %2261 = vmatpush1.bf16.msra.mxu0 0
      %2262 = vmatprep.subr.bf16.mxu0 0
      %2263 = vmatpush1.bf16.msra.mxu0 0
      %2264 = vmatprep.subr.bf16.mxu0 0
      %2265 = vmatpush1.bf16.msra.mxu0 0
      %2266 = vmatprep.subr.bf16.mxu0 0
      %2267 = vmatpush1.bf16.msra.mxu0 0
      %2268 = vmatprep.subr.bf16.mxu0 0
      %2269 = vmatpush1.bf16.msra.mxu0 0
      %2270 = vmatprep.subr.bf16.mxu0 0
      %2271 = vmatpush1.bf16.msra.mxu0 0
      %2272 = vmatprep.mubr.bf16.mxu0 0
      %2273 = vmatmul.mubr.bf16.gmra.mrb[0].mxu0 %v2238
      %v2274 = vpop.f32.mrb[0].mxu0
      %v2275 = vadd.f32 0.0, %v2274
      %v2276 = vpop.f32.mrb[0].mxu0
      %v2277 = vpop.f32.mrb[0].mxu0
      %v2278 = vpop.f32.mrb[0].mxu0
      %2279 = vdwg.mxu0
      %s2280 = scalar_lea.vmem %s248, 36
      %2281 = vst.msk [vmem:[%s2280] sm:$0x3] %vm355, %v2275
      %2283 = vrot.lane.b32.xlu0 %v2275, 96
      %v2284 = vpop.permute.xlu0 %2283
      %s2286 = scalar_lea.vmem %s254, 36
      %2287 = vst.msk [vmem:[%s2286] sm:$0x3] %vm355, %v2284
      %s2288 = scalar_lea.vmem %s230, 19
      %v2289 = vld [vmem:[%s2288] sm:$0x1]
      %s2290 = scalar_lea.vmem %s235, 19
      %v2291 = vld [vmem:[%s2290] sm:$0x1]
      %v2294 = vunpack.c.l.s4 1966171168
      %v2295 = vunpack.c.0.s8 %v2294
      %v2296 = vlaneseq
      %v2297 = vshrl.u32 %v2296, 7
      %v2298 = vsub.s32 %v2295, %v2297
      %v2299 = vrot.slane %v2291, %v2298
      %v2301 = vunpack.c.l.s4 1966171168
      %v2302 = vunpack.c.0.s8 %v2301
      %v2303 = vlaneseq
      %v2304 = vshrl.u32 %v2303, 7
      %v2305 = vsub.s32 %v2302, %v2304
      %v2306 = vrot.slane %v2299, %v2305
      %2307 = vrot.lane.b32.xlu0 %v2306, 32
      %v2308 = vpop.permute.xlu0 %2307
      %v2311 = vsel %vm276, %v2289, %v2308
      %s2312 = scalar_lea.vmem %s242, 608
      %v2313 = vld [vmem:[%s2312] sm:$0xf]
      %v2314 = vld [vmem:[%s2312 + $0x4] sm:$0xf]
      %v2315 = vld [vmem:[%s2312 + $0x8] sm:$0xf]
      %v2316 = vld [vmem:[%s2312 + $0xc] sm:$0xf]
      %v2317 = vld [vmem:[%s2312 + $0x10] sm:$0xf]
      %v2318 = vld [vmem:[%s2312 + $0x14] sm:$0xf]
      %v2319 = vld [vmem:[%s2312 + $0x18] sm:$0xf]
      %v2320 = vld [vmem:[%s2312 + $0x1c] sm:$0xf]
      %v2329 = vunpack.c.l.b16 %v2313
      %v2330 = vunpack.c.l.b16 %v2314
      %v2331 = vunpack.c.l.b16 %v2315
      %v2332 = vunpack.c.l.b16 %v2316
      %v2333 = vunpack.c.l.b16 %v2317
      %v2334 = vunpack.c.l.b16 %v2318
      %v2335 = vunpack.c.l.b16 %v2319
      %v2336 = vunpack.c.l.b16 %v2320
      %v2337 = vpack.c.b16 %v2330, %v2329
      %v2338 = vpack.c.b16 %v2332, %v2331
      %v2339 = vpack.c.b16 %v2334, %v2333
      %v2340 = vpack.c.b16 %v2336, %v2335
      %v2345 = vsel %vm312, %v2311, 0
      %2347 = vmatprep.subr.bf16.mxu0 0
      %2348 = vmatpush1.bf16.msra.mxu0 %v2337
      %2349 = vmatprep.subr.bf16.mxu0 0
      %2350 = vmatpush1.bf16.msra.mxu0 %v2338
      %2351 = vmatprep.subr.bf16.mxu0 0
      %2352 = vmatpush1.bf16.msra.mxu0 %v2339
      %2353 = vmatprep.subr.bf16.mxu0 0
      %2354 = vmatpush1.bf16.msra.mxu0 %v2340
      %2355 = vmatprep.subr.bf16.mxu0 0
      %2356 = vmatpush1.bf16.msra.mxu0 0
      %2357 = vmatprep.subr.bf16.mxu0 0
      %2358 = vmatpush1.bf16.msra.mxu0 0
      %2359 = vmatprep.subr.bf16.mxu0 0
      %2360 = vmatpush1.bf16.msra.mxu0 0
      %2361 = vmatprep.subr.bf16.mxu0 0
      %2362 = vmatpush1.bf16.msra.mxu0 0
      %2363 = vmatprep.subr.bf16.mxu0 0
      %2364 = vmatpush1.bf16.msra.mxu0 0
      %2365 = vmatprep.subr.bf16.mxu0 0
      %2366 = vmatpush1.bf16.msra.mxu0 0
      %2367 = vmatprep.subr.bf16.mxu0 0
      %2368 = vmatpush1.bf16.msra.mxu0 0
      %2369 = vmatprep.subr.bf16.mxu0 0
      %2370 = vmatpush1.bf16.msra.mxu0 0
      %2371 = vmatprep.subr.bf16.mxu0 0
      %2372 = vmatpush1.bf16.msra.mxu0 0
      %2373 = vmatprep.subr.bf16.mxu0 0
      %2374 = vmatpush1.bf16.msra.mxu0 0
      %2375 = vmatprep.subr.bf16.mxu0 0
      %2376 = vmatpush1.bf16.msra.mxu0 0
      %2377 = vmatprep.subr.bf16.mxu0 0
      %2378 = vmatpush1.bf16.msra.mxu0 0
      %2379 = vmatprep.mubr.bf16.mxu0 0
      %2380 = vmatmul.mubr.bf16.gmra.mrb[0].mxu0 %v2345
      %v2381 = vpop.f32.mrb[0].mxu0
      %v2382 = vadd.f32 0.0, %v2381
      %v2383 = vpop.f32.mrb[0].mxu0
      %v2384 = vpop.f32.mrb[0].mxu0
      %v2385 = vpop.f32.mrb[0].mxu0
      %2386 = vdwg.mxu0
      %s2387 = scalar_lea.vmem %s248, 38
      %2388 = vst.msk [vmem:[%s2387] sm:$0x3] %vm355, %v2382
      %2390 = vrot.lane.b32.xlu0 %v2382, 96
      %v2391 = vpop.permute.xlu0 %2390
      %s2393 = scalar_lea.vmem %s254, 38
      %2394 = vst.msk [vmem:[%s2393] sm:$0x3] %vm355, %v2391
      %s2395 = scalar_lea.vmem %s230, 20
      %v2396 = vld [vmem:[%s2395] sm:$0x1]
      %s2397 = scalar_lea.vmem %s235, 20
      %v2398 = vld [vmem:[%s2397] sm:$0x1]
      %v2401 = vunpack.c.l.s4 1966171168
      %v2402 = vunpack.c.0.s8 %v2401
      %v2403 = vlaneseq
      %v2404 = vshrl.u32 %v2403, 7
      %v2405 = vsub.s32 %v2402, %v2404
      %v2406 = vrot.slane %v2398, %v2405
      %v2408 = vunpack.c.l.s4 1966171168
      %v2409 = vunpack.c.0.s8 %v2408
      %v2410 = vlaneseq
      %v2411 = vshrl.u32 %v2410, 7
      %v2412 = vsub.s32 %v2409, %v2411
      %v2413 = vrot.slane %v2406, %v2412
      %2414 = vrot.lane.b32.xlu0 %v2413, 32
      %v2415 = vpop.permute.xlu0 %2414
      %v2418 = vsel %vm276, %v2396, %v2415
      %s2419 = scalar_lea.vmem %s242, 640
      %v2420 = vld [vmem:[%s2419] sm:$0xf]
      %v2421 = vld [vmem:[%s2419 + $0x4] sm:$0xf]
      %v2422 = vld [vmem:[%s2419 + $0x8] sm:$0xf]
      %v2423 = vld [vmem:[%s2419 + $0xc] sm:$0xf]
      %v2424 = vld [vmem:[%s2419 + $0x10] sm:$0xf]
      %v2425 = vld [vmem:[%s2419 + $0x14] sm:$0xf]
      %v2426 = vld [vmem:[%s2419 + $0x18] sm:$0xf]
      %v2427 = vld [vmem:[%s2419 + $0x1c] sm:$0xf]
      %v2436 = vunpack.c.l.b16 %v2420
      %v2437 = vunpack.c.l.b16 %v2421
      %v2438 = vunpack.c.l.b16 %v2422
      %v2439 = vunpack.c.l.b16 %v2423
      %v2440 = vunpack.c.l.b16 %v2424
      %v2441 = vunpack.c.l.b16 %v2425
      %v2442 = vunpack.c.l.b16 %v2426
      %v2443 = vunpack.c.l.b16 %v2427
      %v2444 = vpack.c.b16 %v2437, %v2436
      %v2445 = vpack.c.b16 %v2439, %v2438
      %v2446 = vpack.c.b16 %v2441, %v2440
      %v2447 = vpack.c.b16 %v2443, %v2442
      %v2452 = vsel %vm312, %v2418, 0
      %2454 = vmatprep.subr.bf16.mxu0 0
      %2455 = vmatpush1.bf16.msra.mxu0 %v2444
      %2456 = vmatprep.subr.bf16.mxu0 0
      %2457 = vmatpush1.bf16.msra.mxu0 %v2445
      %2458 = vmatprep.subr.bf16.mxu0 0
      %2459 = vmatpush1.bf16.msra.mxu0 %v2446
      %2460 = vmatprep.subr.bf16.mxu0 0
      %2461 = vmatpush1.bf16.msra.mxu0 %v2447
      %2462 = vmatprep.subr.bf16.mxu0 0
      %2463 = vmatpush1.bf16.msra.mxu0 0
      %2464 = vmatprep.subr.bf16.mxu0 0
      %2465 = vmatpush1.bf16.msra.mxu0 0
      %2466 = vmatprep.subr.bf16.mxu0 0
      %2467 = vmatpush1.bf16.msra.mxu0 0
      %2468 = vmatprep.subr.bf16.mxu0 0
      %2469 = vmatpush1.bf16.msra.mxu0 0
      %2470 = vmatprep.subr.bf16.mxu0 0
      %2471 = vmatpush1.bf16.msra.mxu0 0
      %2472 = vmatprep.subr.bf16.mxu0 0
      %2473 = vmatpush1.bf16.msra.mxu0 0
      %2474 = vmatprep.subr.bf16.mxu0 0
      %2475 = vmatpush1.bf16.msra.mxu0 0
      %2476 = vmatprep.subr.bf16.mxu0 0
      %2477 = vmatpush1.bf16.msra.mxu0 0
      %2478 = vmatprep.subr.bf16.mxu0 0
      %2479 = vmatpush1.bf16.msra.mxu0 0
      %2480 = vmatprep.subr.bf16.mxu0 0
      %2481 = vmatpush1.bf16.msra.mxu0 0
      %2482 = vmatprep.subr.bf16.mxu0 0
      %2483 = vmatpush1.bf16.msra.mxu0 0
      %2484 = vmatprep.subr.bf16.mxu0 0
      %2485 = vmatpush1.bf16.msra.mxu0 0
      %2486 = vmatprep.mubr.bf16.mxu0 0
      %2487 = vmatmul.mubr.bf16.gmra.mrb[0].mxu0 %v2452
      %v2488 = vpop.f32.mrb[0].mxu0
      %v2489 = vadd.f32 0.0, %v2488
      %v2490 = vpop.f32.mrb[0].mxu0
      %v2491 = vpop.f32.mrb[0].mxu0
      %v2492 = vpop.f32.mrb[0].mxu0
      %2493 = vdwg.mxu0
      %s2494 = scalar_lea.vmem %s248, 40
      %2495 = vst.msk [vmem:[%s2494] sm:$0x3] %vm355, %v2489
      %2497 = vrot.lane.b32.xlu0 %v2489, 96
      %v2498 = vpop.permute.xlu0 %2497
      %s2500 = scalar_lea.vmem %s254, 40
      %2501 = vst.msk [vmem:[%s2500] sm:$0x3] %vm355, %v2498
      %s2502 = scalar_lea.vmem %s230, 21
      %v2503 = vld [vmem:[%s2502] sm:$0x1]
      %s2504 = scalar_lea.vmem %s235, 21
      %v2505 = vld [vmem:[%s2504] sm:$0x1]
      %v2508 = vunpack.c.l.s4 1966171168
      %v2509 = vunpack.c.0.s8 %v2508
      %v2510 = vlaneseq
      %v2511 = vshrl.u32 %v2510, 7
      %v2512 = vsub.s32 %v2509, %v2511
      %v2513 = vrot.slane %v2505, %v2512
      %v2515 = vunpack.c.l.s4 1966171168
      %v2516 = vunpack.c.0.s8 %v2515
      %v2517 = vlaneseq
      %v2518 = vshrl.u32 %v2517, 7
      %v2519 = vsub.s32 %v2516, %v2518
      %v2520 = vrot.slane %v2513, %v2519
      %2521 = vrot.lane.b32.xlu0 %v2520, 32
      %v2522 = vpop.permute.xlu0 %2521
      %v2525 = vsel %vm276, %v2503, %v2522
      %s2526 = scalar_lea.vmem %s242, 672
      %v2527 = vld [vmem:[%s2526] sm:$0xf]
      %v2528 = vld [vmem:[%s2526 + $0x4] sm:$0xf]
      %v2529 = vld [vmem:[%s2526 + $0x8] sm:$0xf]
      %v2530 = vld [vmem:[%s2526 + $0xc] sm:$0xf]
      %v2531 = vld [vmem:[%s2526 + $0x10] sm:$0xf]
      %v2532 = vld [vmem:[%s2526 + $0x14] sm:$0xf]
      %v2533 = vld [vmem:[%s2526 + $0x18] sm:$0xf]
      %v2534 = vld [vmem:[%s2526 + $0x1c] sm:$0xf]
      %v2543 = vunpack.c.l.b16 %v2527
      %v2544 = vunpack.c.l.b16 %v2528
      %v2545 = vunpack.c.l.b16 %v2529
      %v2546 = vunpack.c.l.b16 %v2530
      %v2547 = vunpack.c.l.b16 %v2531
      %v2548 = vunpack.c.l.b16 %v2532
      %v2549 = vunpack.c.l.b16 %v2533
      %v2550 = vunpack.c.l.b16 %v2534
      %v2551 = vpack.c.b16 %v2544, %v2543
      %v2552 = vpack.c.b16 %v2546, %v2545
      %v2553 = vpack.c.b16 %v2548, %v2547
      %v2554 = vpack.c.b16 %v2550, %v2549
      %v2559 = vsel %vm312, %v2525, 0
      %2561 = vmatprep.subr.bf16.mxu0 0
      %2562 = vmatpush1.bf16.msra.mxu0 %v2551
      %2563 = vmatprep.subr.bf16.mxu0 0
      %2564 = vmatpush1.bf16.msra.mxu0 %v2552
      %2565 = vmatprep.subr.bf16.mxu0 0
      %2566 = vmatpush1.bf16.msra.mxu0 %v2553
      %2567 = vmatprep.subr.bf16.mxu0 0
      %2568 = vmatpush1.bf16.msra.mxu0 %v2554
      %2569 = vmatprep.subr.bf16.mxu0 0
      %2570 = vmatpush1.bf16.msra.mxu0 0
      %2571 = vmatprep.subr.bf16.mxu0 0
      %2572 = vmatpush1.bf16.msra.mxu0 0
      %2573 = vmatprep.subr.bf16.mxu0 0
      %2574 = vmatpush1.bf16.msra.mxu0 0
      %2575 = vmatprep.subr.bf16.mxu0 0
      %2576 = vmatpush1.bf16.msra.mxu0 0
      %2577 = vmatprep.subr.bf16.mxu0 0
      %2578 = vmatpush1.bf16.msra.mxu0 0
      %2579 = vmatprep.subr.bf16.mxu0 0
      %2580 = vmatpush1.bf16.msra.mxu0 0
      %2581 = vmatprep.subr.bf16.mxu0 0
      %2582 = vmatpush1.bf16.msra.mxu0 0
      %2583 = vmatprep.subr.bf16.mxu0 0
      %2584 = vmatpush1.bf16.msra.mxu0 0
      %2585 = vmatprep.subr.bf16.mxu0 0
      %2586 = vmatpush1.bf16.msra.mxu0 0
      %2587 = vmatprep.subr.bf16.mxu0 0
      %2588 = vmatpush1.bf16.msra.mxu0 0
      %2589 = vmatprep.subr.bf16.mxu0 0
      %2590 = vmatpush1.bf16.msra.mxu0 0
      %2591 = vmatprep.subr.bf16.mxu0 0
      %2592 = vmatpush1.bf16.msra.mxu0 0
      %2593 = vmatprep.mubr.bf16.mxu0 0
      %2594 = vmatmul.mubr.bf16.gmra.mrb[0].mxu0 %v2559
      %v2595 = vpop.f32.mrb[0].mxu0
      %v2596 = vadd.f32 0.0, %v2595
      %v2597 = vpop.f32.mrb[0].mxu0
      %v2598 = vpop.f32.mrb[0].mxu0
      %v2599 = vpop.f32.mrb[0].mxu0
      %2600 = vdwg.mxu0
      %s2601 = scalar_lea.vmem %s248, 42
      %2602 = vst.msk [vmem:[%s2601] sm:$0x3] %vm355, %v2596
      %2604 = vrot.lane.b32.xlu0 %v2596, 96
      %v2605 = vpop.permute.xlu0 %2604
      %s2607 = scalar_lea.vmem %s254, 42
      %2608 = vst.msk [vmem:[%s2607] sm:$0x3] %vm355, %v2605
      %s2609 = scalar_lea.vmem %s230, 22
      %v2610 = vld [vmem:[%s2609] sm:$0x1]
      %s2611 = scalar_lea.vmem %s235, 22
      %v2612 = vld [vmem:[%s2611] sm:$0x1]
      %v2615 = vunpack.c.l.s4 1966171168
      %v2616 = vunpack.c.0.s8 %v2615
      %v2617 = vlaneseq
      %v2618 = vshrl.u32 %v2617, 7
      %v2619 = vsub.s32 %v2616, %v2618
      %v2620 = vrot.slane %v2612, %v2619
      %v2622 = vunpack.c.l.s4 1966171168
      %v2623 = vunpack.c.0.s8 %v2622
      %v2624 = vlaneseq
      %v2625 = vshrl.u32 %v2624, 7
      %v2626 = vsub.s32 %v2623, %v2625
      %v2627 = vrot.slane %v2620, %v2626
      %2628 = vrot.lane.b32.xlu0 %v2627, 32
      %v2629 = vpop.permute.xlu0 %2628
      %v2632 = vsel %vm276, %v2610, %v2629
      %s2633 = scalar_lea.vmem %s242, 704
      %v2634 = vld [vmem:[%s2633] sm:$0xf]
      %v2635 = vld [vmem:[%s2633 + $0x4] sm:$0xf]
      %v2636 = vld [vmem:[%s2633 + $0x8] sm:$0xf]
      %v2637 = vld [vmem:[%s2633 + $0xc] sm:$0xf]
      %v2638 = vld [vmem:[%s2633 + $0x10] sm:$0xf]
      %v2639 = vld [vmem:[%s2633 + $0x14] sm:$0xf]
      %v2640 = vld [vmem:[%s2633 + $0x18] sm:$0xf]
      %v2641 = vld [vmem:[%s2633 + $0x1c] sm:$0xf]
      %v2650 = vunpack.c.l.b16 %v2634
      %v2651 = vunpack.c.l.b16 %v2635
      %v2652 = vunpack.c.l.b16 %v2636
      %v2653 = vunpack.c.l.b16 %v2637
      %v2654 = vunpack.c.l.b16 %v2638
      %v2655 = vunpack.c.l.b16 %v2639
      %v2656 = vunpack.c.l.b16 %v2640
      %v2657 = vunpack.c.l.b16 %v2641
      %v2658 = vpack.c.b16 %v2651, %v2650
      %v2659 = vpack.c.b16 %v2653, %v2652
      %v2660 = vpack.c.b16 %v2655, %v2654
      %v2661 = vpack.c.b16 %v2657, %v2656
      %v2666 = vsel %vm312, %v2632, 0
      %2668 = vmatprep.subr.bf16.mxu0 0
      %2669 = vmatpush1.bf16.msra.mxu0 %v2658
      %2670 = vmatprep.subr.bf16.mxu0 0
      %2671 = vmatpush1.bf16.msra.mxu0 %v2659
      %2672 = vmatprep.subr.bf16.mxu0 0
      %2673 = vmatpush1.bf16.msra.mxu0 %v2660
      %2674 = vmatprep.subr.bf16.mxu0 0
      %2675 = vmatpush1.bf16.msra.mxu0 %v2661
      %2676 = vmatprep.subr.bf16.mxu0 0
      %2677 = vmatpush1.bf16.msra.mxu0 0
      %2678 = vmatprep.subr.bf16.mxu0 0
      %2679 = vmatpush1.bf16.msra.mxu0 0
      %2680 = vmatprep.subr.bf16.mxu0 0
      %2681 = vmatpush1.bf16.msra.mxu0 0
      %2682 = vmatprep.subr.bf16.mxu0 0
      %2683 = vmatpush1.bf16.msra.mxu0 0
      %2684 = vmatprep.subr.bf16.mxu0 0
      %2685 = vmatpush1.bf16.msra.mxu0 0
      %2686 = vmatprep.subr.bf16.mxu0 0
      %2687 = vmatpush1.bf16.msra.mxu0 0
      %2688 = vmatprep.subr.bf16.mxu0 0
      %2689 = vmatpush1.bf16.msra.mxu0 0
      %2690 = vmatprep.subr.bf16.mxu0 0
      %2691 = vmatpush1.bf16.msra.mxu0 0
      %2692 = vmatprep.subr.bf16.mxu0 0
      %2693 = vmatpush1.bf16.msra.mxu0 0
      %2694 = vmatprep.subr.bf16.mxu0 0
      %2695 = vmatpush1.bf16.msra.mxu0 0
      %2696 = vmatprep.subr.bf16.mxu0 0
      %2697 = vmatpush1.bf16.msra.mxu0 0
      %2698 = vmatprep.subr.bf16.mxu0 0
      %2699 = vmatpush1.bf16.msra.mxu0 0
      %2700 = vmatprep.mubr.bf16.mxu0 0
      %2701 = vmatmul.mubr.bf16.gmra.mrb[0].mxu0 %v2666
      %v2702 = vpop.f32.mrb[0].mxu0
      %v2703 = vadd.f32 0.0, %v2702
      %v2704 = vpop.f32.mrb[0].mxu0
      %v2705 = vpop.f32.mrb[0].mxu0
      %v2706 = vpop.f32.mrb[0].mxu0
      %2707 = vdwg.mxu0
      %s2708 = scalar_lea.vmem %s248, 44
      %2709 = vst.msk [vmem:[%s2708] sm:$0x3] %vm355, %v2703
      %2711 = vrot.lane.b32.xlu0 %v2703, 96
      %v2712 = vpop.permute.xlu0 %2711
      %s2714 = scalar_lea.vmem %s254, 44
      %2715 = vst.msk [vmem:[%s2714] sm:$0x3] %vm355, %v2712
      %s2716 = scalar_lea.vmem %s230, 23
      %v2717 = vld [vmem:[%s2716] sm:$0x1]
      %s2718 = scalar_lea.vmem %s235, 23
      %v2719 = vld [vmem:[%s2718] sm:$0x1]
      %v2722 = vunpack.c.l.s4 1966171168
      %v2723 = vunpack.c.0.s8 %v2722
      %v2724 = vlaneseq
      %v2725 = vshrl.u32 %v2724, 7
      %v2726 = vsub.s32 %v2723, %v2725
      %v2727 = vrot.slane %v2719, %v2726
      %v2729 = vunpack.c.l.s4 1966171168
      %v2730 = vunpack.c.0.s8 %v2729
      %v2731 = vlaneseq
      %v2732 = vshrl.u32 %v2731, 7
      %v2733 = vsub.s32 %v2730, %v2732
      %v2734 = vrot.slane %v2727, %v2733
      %2735 = vrot.lane.b32.xlu0 %v2734, 32
      %v2736 = vpop.permute.xlu0 %2735
      %v2739 = vsel %vm276, %v2717, %v2736
      %s2740 = scalar_lea.vmem %s242, 736
      %v2741 = vld [vmem:[%s2740] sm:$0xf]
      %v2742 = vld [vmem:[%s2740 + $0x4] sm:$0xf]
      %v2743 = vld [vmem:[%s2740 + $0x8] sm:$0xf]
      %v2744 = vld [vmem:[%s2740 + $0xc] sm:$0xf]
      %v2745 = vld [vmem:[%s2740 + $0x10] sm:$0xf]
      %v2746 = vld [vmem:[%s2740 + $0x14] sm:$0xf]
      %v2747 = vld [vmem:[%s2740 + $0x18] sm:$0xf]
      %v2748 = vld [vmem:[%s2740 + $0x1c] sm:$0xf]
      %v2757 = vunpack.c.l.b16 %v2741
      %v2758 = vunpack.c.l.b16 %v2742
      %v2759 = vunpack.c.l.b16 %v2743
      %v2760 = vunpack.c.l.b16 %v2744
      %v2761 = vunpack.c.l.b16 %v2745
      %v2762 = vunpack.c.l.b16 %v2746
      %v2763 = vunpack.c.l.b16 %v2747
      %v2764 = vunpack.c.l.b16 %v2748
      %v2765 = vpack.c.b16 %v2758, %v2757
      %v2766 = vpack.c.b16 %v2760, %v2759
      %v2767 = vpack.c.b16 %v2762, %v2761
      %v2768 = vpack.c.b16 %v2764, %v2763
      %v2773 = vsel %vm312, %v2739, 0
      %2775 = vmatprep.subr.bf16.mxu0 0
      %2776 = vmatpush1.bf16.msra.mxu0 %v2765
      %2777 = vmatprep.subr.bf16.mxu0 0
      %2778 = vmatpush1.bf16.msra.mxu0 %v2766
      %2779 = vmatprep.subr.bf16.mxu0 0
      %2780 = vmatpush1.bf16.msra.mxu0 %v2767
      %2781 = vmatprep.subr.bf16.mxu0 0
      %2782 = vmatpush1.bf16.msra.mxu0 %v2768
      %2783 = vmatprep.subr.bf16.mxu0 0
      %2784 = vmatpush1.bf16.msra.mxu0 0
      %2785 = vmatprep.subr.bf16.mxu0 0
      %2786 = vmatpush1.bf16.msra.mxu0 0
      %2787 = vmatprep.subr.bf16.mxu0 0
      %2788 = vmatpush1.bf16.msra.mxu0 0
      %2789 = vmatprep.subr.bf16.mxu0 0
      %2790 = vmatpush1.bf16.msra.mxu0 0
      %2791 = vmatprep.subr.bf16.mxu0 0
      %2792 = vmatpush1.bf16.msra.mxu0 0
      %2793 = vmatprep.subr.bf16.mxu0 0
      %2794 = vmatpush1.bf16.msra.mxu0 0
      %2795 = vmatprep.subr.bf16.mxu0 0
      %2796 = vmatpush1.bf16.msra.mxu0 0
      %2797 = vmatprep.subr.bf16.mxu0 0
      %2798 = vmatpush1.bf16.msra.mxu0 0
      %2799 = vmatprep.subr.bf16.mxu0 0
      %2800 = vmatpush1.bf16.msra.mxu0 0
      %2801 = vmatprep.subr.bf16.mxu0 0
      %2802 = vmatpush1.bf16.msra.mxu0 0
      %2803 = vmatprep.subr.bf16.mxu0 0
      %2804 = vmatpush1.bf16.msra.mxu0 0
      %2805 = vmatprep.subr.bf16.mxu0 0
      %2806 = vmatpush1.bf16.msra.mxu0 0
      %2807 = vmatprep.mubr.bf16.mxu0 0
      %2808 = vmatmul.mubr.bf16.gmra.mrb[0].mxu0 %v2773
      %v2809 = vpop.f32.mrb[0].mxu0
      %v2810 = vadd.f32 0.0, %v2809
      %v2811 = vpop.f32.mrb[0].mxu0
      %v2812 = vpop.f32.mrb[0].mxu0
      %v2813 = vpop.f32.mrb[0].mxu0
      %2814 = vdwg.mxu0
      %s2815 = scalar_lea.vmem %s248, 46
      %2816 = vst.msk [vmem:[%s2815] sm:$0x3] %vm355, %v2810
      %2818 = vrot.lane.b32.xlu0 %v2810, 96
      %v2819 = vpop.permute.xlu0 %2818
      %s2821 = scalar_lea.vmem %s254, 46
      %2822 = vst.msk [vmem:[%s2821] sm:$0x3] %vm355, %v2819
      %s2823 = scalar_lea.vmem %s230, 24
      %v2824 = vld [vmem:[%s2823] sm:$0x1]
      %s2825 = scalar_lea.vmem %s235, 24
      %v2826 = vld [vmem:[%s2825] sm:$0x1]
      %v2829 = vunpack.c.l.s4 1966171168
      %v2830 = vunpack.c.0.s8 %v2829
      %v2831 = vlaneseq
      %v2832 = vshrl.u32 %v2831, 7
      %v2833 = vsub.s32 %v2830, %v2832
      %v2834 = vrot.slane %v2826, %v2833
      %v2836 = vunpack.c.l.s4 1966171168
      %v2837 = vunpack.c.0.s8 %v2836
      %v2838 = vlaneseq
      %v2839 = vshrl.u32 %v2838, 7
      %v2840 = vsub.s32 %v2837, %v2839
      %v2841 = vrot.slane %v2834, %v2840
      %2842 = vrot.lane.b32.xlu0 %v2841, 32
      %v2843 = vpop.permute.xlu0 %2842
      %v2846 = vsel %vm276, %v2824, %v2843
      %s2847 = scalar_lea.vmem %s242, 768
      %v2848 = vld [vmem:[%s2847] sm:$0xf]
      %v2849 = vld [vmem:[%s2847 + $0x4] sm:$0xf]
      %v2850 = vld [vmem:[%s2847 + $0x8] sm:$0xf]
      %v2851 = vld [vmem:[%s2847 + $0xc] sm:$0xf]
      %v2852 = vld [vmem:[%s2847 + $0x10] sm:$0xf]
      %v2853 = vld [vmem:[%s2847 + $0x14] sm:$0xf]
      %v2854 = vld [vmem:[%s2847 + $0x18] sm:$0xf]
      %v2855 = vld [vmem:[%s2847 + $0x1c] sm:$0xf]
      %v2864 = vunpack.c.l.b16 %v2848
      %v2865 = vunpack.c.l.b16 %v2849
      %v2866 = vunpack.c.l.b16 %v2850
      %v2867 = vunpack.c.l.b16 %v2851
      %v2868 = vunpack.c.l.b16 %v2852
      %v2869 = vunpack.c.l.b16 %v2853
      %v2870 = vunpack.c.l.b16 %v2854
      %v2871 = vunpack.c.l.b16 %v2855
      %v2872 = vpack.c.b16 %v2865, %v2864
      %v2873 = vpack.c.b16 %v2867, %v2866
      %v2874 = vpack.c.b16 %v2869, %v2868
      %v2875 = vpack.c.b16 %v2871, %v2870
      %v2880 = vsel %vm312, %v2846, 0
      %2882 = vmatprep.subr.bf16.mxu0 0
      %2883 = vmatpush1.bf16.msra.mxu0 %v2872
      %2884 = vmatprep.subr.bf16.mxu0 0
      %2885 = vmatpush1.bf16.msra.mxu0 %v2873
      %2886 = vmatprep.subr.bf16.mxu0 0
      %2887 = vmatpush1.bf16.msra.mxu0 %v2874
      %2888 = vmatprep.subr.bf16.mxu0 0
      %2889 = vmatpush1.bf16.msra.mxu0 %v2875
      %2890 = vmatprep.subr.bf16.mxu0 0
      %2891 = vmatpush1.bf16.msra.mxu0 0
      %2892 = vmatprep.subr.bf16.mxu0 0
      %2893 = vmatpush1.bf16.msra.mxu0 0
      %2894 = vmatprep.subr.bf16.mxu0 0
      %2895 = vmatpush1.bf16.msra.mxu0 0
      %2896 = vmatprep.subr.bf16.mxu0 0
      %2897 = vmatpush1.bf16.msra.mxu0 0
      %2898 = vmatprep.subr.bf16.mxu0 0
      %2899 = vmatpush1.bf16.msra.mxu0 0
      %2900 = vmatprep.subr.bf16.mxu0 0
      %2901 = vmatpush1.bf16.msra.mxu0 0
      %2902 = vmatprep.subr.bf16.mxu0 0
      %2903 = vmatpush1.bf16.msra.mxu0 0
      %2904 = vmatprep.subr.bf16.mxu0 0
      %2905 = vmatpush1.bf16.msra.mxu0 0
      %2906 = vmatprep.subr.bf16.mxu0 0
      %2907 = vmatpush1.bf16.msra.mxu0 0
      %2908 = vmatprep.subr.bf16.mxu0 0
      %2909 = vmatpush1.bf16.msra.mxu0 0
      %2910 = vmatprep.subr.bf16.mxu0 0
      %2911 = vmatpush1.bf16.msra.mxu0 0
      %2912 = vmatprep.subr.bf16.mxu0 0
      %2913 = vmatpush1.bf16.msra.mxu0 0
      %2914 = vmatprep.mubr.bf16.mxu0 0
      %2915 = vmatmul.mubr.bf16.gmra.mrb[0].mxu0 %v2880
      %v2916 = vpop.f32.mrb[0].mxu0
      %v2917 = vadd.f32 0.0, %v2916
      %v2918 = vpop.f32.mrb[0].mxu0
      %v2919 = vpop.f32.mrb[0].mxu0
      %v2920 = vpop.f32.mrb[0].mxu0
      %2921 = vdwg.mxu0
      %s2922 = scalar_lea.vmem %s248, 48
      %2923 = vst.msk [vmem:[%s2922] sm:$0x3] %vm355, %v2917
      %2925 = vrot.lane.b32.xlu0 %v2917, 96
      %v2926 = vpop.permute.xlu0 %2925
      %s2928 = scalar_lea.vmem %s254, 48
      %2929 = vst.msk [vmem:[%s2928] sm:$0x3] %vm355, %v2926
      %s2930 = scalar_lea.vmem %s230, 25
      %v2931 = vld [vmem:[%s2930] sm:$0x1]
      %s2932 = scalar_lea.vmem %s235, 25
      %v2933 = vld [vmem:[%s2932] sm:$0x1]
      %v2936 = vunpack.c.l.s4 1966171168
      %v2937 = vunpack.c.0.s8 %v2936
      %v2938 = vlaneseq
      %v2939 = vshrl.u32 %v2938, 7
      %v2940 = vsub.s32 %v2937, %v2939
      %v2941 = vrot.slane %v2933, %v2940
      %v2943 = vunpack.c.l.s4 1966171168
      %v2944 = vunpack.c.0.s8 %v2943
      %v2945 = vlaneseq
      %v2946 = vshrl.u32 %v2945, 7
      %v2947 = vsub.s32 %v2944, %v2946
      %v2948 = vrot.slane %v2941, %v2947
      %2949 = vrot.lane.b32.xlu0 %v2948, 32
      %v2950 = vpop.permute.xlu0 %2949
      %v2953 = vsel %vm276, %v2931, %v2950
      %s2954 = scalar_lea.vmem %s242, 800
      %v2955 = vld [vmem:[%s2954] sm:$0xf]
      %v2956 = vld [vmem:[%s2954 + $0x4] sm:$0xf]
      %v2957 = vld [vmem:[%s2954 + $0x8] sm:$0xf]
      %v2958 = vld [vmem:[%s2954 + $0xc] sm:$0xf]
      %v2959 = vld [vmem:[%s2954 + $0x10] sm:$0xf]
      %v2960 = vld [vmem:[%s2954 + $0x14] sm:$0xf]
      %v2961 = vld [vmem:[%s2954 + $0x18] sm:$0xf]
      %v2962 = vld [vmem:[%s2954 + $0x1c] sm:$0xf]
      %v2971 = vunpack.c.l.b16 %v2955
      %v2972 = vunpack.c.l.b16 %v2956
      %v2973 = vunpack.c.l.b16 %v2957
      %v2974 = vunpack.c.l.b16 %v2958
      %v2975 = vunpack.c.l.b16 %v2959
      %v2976 = vunpack.c.l.b16 %v2960
      %v2977 = vunpack.c.l.b16 %v2961
      %v2978 = vunpack.c.l.b16 %v2962
      %v2979 = vpack.c.b16 %v2972, %v2971
      %v2980 = vpack.c.b16 %v2974, %v2973
      %v2981 = vpack.c.b16 %v2976, %v2975
      %v2982 = vpack.c.b16 %v2978, %v2977
      %v2987 = vsel %vm312, %v2953, 0
      %2989 = vmatprep.subr.bf16.mxu0 0
      %2990 = vmatpush1.bf16.msra.mxu0 %v2979
      %2991 = vmatprep.subr.bf16.mxu0 0
      %2992 = vmatpush1.bf16.msra.mxu0 %v2980
      %2993 = vmatprep.subr.bf16.mxu0 0
      %2994 = vmatpush1.bf16.msra.mxu0 %v2981
      %2995 = vmatprep.subr.bf16.mxu0 0
      %2996 = vmatpush1.bf16.msra.mxu0 %v2982
      %2997 = vmatprep.subr.bf16.mxu0 0
      %2998 = vmatpush1.bf16.msra.mxu0 0
      %2999 = vmatprep.subr.bf16.mxu0 0
      %3000 = vmatpush1.bf16.msra.mxu0 0
      %3001 = vmatprep.subr.bf16.mxu0 0
      %3002 = vmatpush1.bf16.msra.mxu0 0
      %3003 = vmatprep.subr.bf16.mxu0 0
      %3004 = vmatpush1.bf16.msra.mxu0 0
      %3005 = vmatprep.subr.bf16.mxu0 0
      %3006 = vmatpush1.bf16.msra.mxu0 0
      %3007 = vmatprep.subr.bf16.mxu0 0
      %3008 = vmatpush1.bf16.msra.mxu0 0
      %3009 = vmatprep.subr.bf16.mxu0 0
      %3010 = vmatpush1.bf16.msra.mxu0 0
      %3011 = vmatprep.subr.bf16.mxu0 0
      %3012 = vmatpush1.bf16.msra.mxu0 0
      %3013 = vmatprep.subr.bf16.mxu0 0
      %3014 = vmatpush1.bf16.msra.mxu0 0
      %3015 = vmatprep.subr.bf16.mxu0 0
      %3016 = vmatpush1.bf16.msra.mxu0 0
      %3017 = vmatprep.subr.bf16.mxu0 0
      %3018 = vmatpush1.bf16.msra.mxu0 0
      %3019 = vmatprep.subr.bf16.mxu0 0
      %3020 = vmatpush1.bf16.msra.mxu0 0
      %3021 = vmatprep.mubr.bf16.mxu0 0
      %3022 = vmatmul.mubr.bf16.gmra.mrb[0].mxu0 %v2987
      %v3023 = vpop.f32.mrb[0].mxu0
      %v3024 = vadd.f32 0.0, %v3023
      %v3025 = vpop.f32.mrb[0].mxu0
      %v3026 = vpop.f32.mrb[0].mxu0
      %v3027 = vpop.f32.mrb[0].mxu0
      %3028 = vdwg.mxu0
      %s3029 = scalar_lea.vmem %s248, 50
      %3030 = vst.msk [vmem:[%s3029] sm:$0x3] %vm355, %v3024
      %3032 = vrot.lane.b32.xlu0 %v3024, 96
      %v3033 = vpop.permute.xlu0 %3032
      %s3035 = scalar_lea.vmem %s254, 50
      %3036 = vst.msk [vmem:[%s3035] sm:$0x3] %vm355, %v3033
      %s3037 = scalar_lea.vmem %s230, 26
      %v3038 = vld [vmem:[%s3037] sm:$0x1]
      %s3039 = scalar_lea.vmem %s235, 26
      %v3040 = vld [vmem:[%s3039] sm:$0x1]
      %v3043 = vunpack.c.l.s4 1966171168
      %v3044 = vunpack.c.0.s8 %v3043
      %v3045 = vlaneseq
      %v3046 = vshrl.u32 %v3045, 7
      %v3047 = vsub.s32 %v3044, %v3046
      %v3048 = vrot.slane %v3040, %v3047
      %v3050 = vunpack.c.l.s4 1966171168
      %v3051 = vunpack.c.0.s8 %v3050
      %v3052 = vlaneseq
      %v3053 = vshrl.u32 %v3052, 7
      %v3054 = vsub.s32 %v3051, %v3053
      %v3055 = vrot.slane %v3048, %v3054
      %3056 = vrot.lane.b32.xlu0 %v3055, 32
      %v3057 = vpop.permute.xlu0 %3056
      %v3060 = vsel %vm276, %v3038, %v3057
      %s3061 = scalar_lea.vmem %s242, 832
      %v3062 = vld [vmem:[%s3061] sm:$0xf]
      %v3063 = vld [vmem:[%s3061 + $0x4] sm:$0xf]
      %v3064 = vld [vmem:[%s3061 + $0x8] sm:$0xf]
      %v3065 = vld [vmem:[%s3061 + $0xc] sm:$0xf]
      %v3066 = vld [vmem:[%s3061 + $0x10] sm:$0xf]
      %v3067 = vld [vmem:[%s3061 + $0x14] sm:$0xf]
      %v3068 = vld [vmem:[%s3061 + $0x18] sm:$0xf]
      %v3069 = vld [vmem:[%s3061 + $0x1c] sm:$0xf]
      %v3078 = vunpack.c.l.b16 %v3062
      %v3079 = vunpack.c.l.b16 %v3063
      %v3080 = vunpack.c.l.b16 %v3064
      %v3081 = vunpack.c.l.b16 %v3065
      %v3082 = vunpack.c.l.b16 %v3066
      %v3083 = vunpack.c.l.b16 %v3067
      %v3084 = vunpack.c.l.b16 %v3068
      %v3085 = vunpack.c.l.b16 %v3069
      %v3086 = vpack.c.b16 %v3079, %v3078
      %v3087 = vpack.c.b16 %v3081, %v3080
      %v3088 = vpack.c.b16 %v3083, %v3082
      %v3089 = vpack.c.b16 %v3085, %v3084
      %v3094 = vsel %vm312, %v3060, 0
      %3096 = vmatprep.subr.bf16.mxu0 0
      %3097 = vmatpush1.bf16.msra.mxu0 %v3086
      %3098 = vmatprep.subr.bf16.mxu0 0
      %3099 = vmatpush1.bf16.msra.mxu0 %v3087
      %3100 = vmatprep.subr.bf16.mxu0 0
      %3101 = vmatpush1.bf16.msra.mxu0 %v3088
      %3102 = vmatprep.subr.bf16.mxu0 0
      %3103 = vmatpush1.bf16.msra.mxu0 %v3089
      %3104 = vmatprep.subr.bf16.mxu0 0
      %3105 = vmatpush1.bf16.msra.mxu0 0
      %3106 = vmatprep.subr.bf16.mxu0 0
      %3107 = vmatpush1.bf16.msra.mxu0 0
      %3108 = vmatprep.subr.bf16.mxu0 0
      %3109 = vmatpush1.bf16.msra.mxu0 0
      %3110 = vmatprep.subr.bf16.mxu0 0
      %3111 = vmatpush1.bf16.msra.mxu0 0
      %3112 = vmatprep.subr.bf16.mxu0 0
      %3113 = vmatpush1.bf16.msra.mxu0 0
      %3114 = vmatprep.subr.bf16.mxu0 0
      %3115 = vmatpush1.bf16.msra.mxu0 0
      %3116 = vmatprep.subr.bf16.mxu0 0
      %3117 = vmatpush1.bf16.msra.mxu0 0
      %3118 = vmatprep.subr.bf16.mxu0 0
      %3119 = vmatpush1.bf16.msra.mxu0 0
      %3120 = vmatprep.subr.bf16.mxu0 0
      %3121 = vmatpush1.bf16.msra.mxu0 0
      %3122 = vmatprep.subr.bf16.mxu0 0
      %3123 = vmatpush1.bf16.msra.mxu0 0
      %3124 = vmatprep.subr.bf16.mxu0 0
      %3125 = vmatpush1.bf16.msra.mxu0 0
      %3126 = vmatprep.subr.bf16.mxu0 0
      %3127 = vmatpush1.bf16.msra.mxu0 0
      %3128 = vmatprep.mubr.bf16.mxu0 0
      %3129 = vmatmul.mubr.bf16.gmra.mrb[0].mxu0 %v3094
      %v3130 = vpop.f32.mrb[0].mxu0
      %v3131 = vadd.f32 0.0, %v3130
      %v3132 = vpop.f32.mrb[0].mxu0
      %v3133 = vpop.f32.mrb[0].mxu0
      %v3134 = vpop.f32.mrb[0].mxu0
      %3135 = vdwg.mxu0
      %s3136 = scalar_lea.vmem %s248, 52
      %3137 = vst.msk [vmem:[%s3136] sm:$0x3] %vm355, %v3131
      %3139 = vrot.lane.b32.xlu0 %v3131, 96
      %v3140 = vpop.permute.xlu0 %3139
      %s3142 = scalar_lea.vmem %s254, 52
      %3143 = vst.msk [vmem:[%s3142] sm:$0x3] %vm355, %v3140
      %s3144 = scalar_lea.vmem %s230, 27
      %v3145 = vld [vmem:[%s3144] sm:$0x1]
      %s3146 = scalar_lea.vmem %s235, 27
      %v3147 = vld [vmem:[%s3146] sm:$0x1]
      %v3150 = vunpack.c.l.s4 1966171168
      %v3151 = vunpack.c.0.s8 %v3150
      %v3152 = vlaneseq
      %v3153 = vshrl.u32 %v3152, 7
      %v3154 = vsub.s32 %v3151, %v3153
      %v3155 = vrot.slane %v3147, %v3154
      %v3157 = vunpack.c.l.s4 1966171168
      %v3158 = vunpack.c.0.s8 %v3157
      %v3159 = vlaneseq
      %v3160 = vshrl.u32 %v3159, 7
      %v3161 = vsub.s32 %v3158, %v3160
      %v3162 = vrot.slane %v3155, %v3161
      %3163 = vrot.lane.b32.xlu0 %v3162, 32
      %v3164 = vpop.permute.xlu0 %3163
      %v3167 = vsel %vm276, %v3145, %v3164
      %s3168 = scalar_lea.vmem %s242, 864
      %v3169 = vld [vmem:[%s3168] sm:$0xf]
      %v3170 = vld [vmem:[%s3168 + $0x4] sm:$0xf]
      %v3171 = vld [vmem:[%s3168 + $0x8] sm:$0xf]
      %v3172 = vld [vmem:[%s3168 + $0xc] sm:$0xf]
      %v3173 = vld [vmem:[%s3168 + $0x10] sm:$0xf]
      %v3174 = vld [vmem:[%s3168 + $0x14] sm:$0xf]
      %v3175 = vld [vmem:[%s3168 + $0x18] sm:$0xf]
      %v3176 = vld [vmem:[%s3168 + $0x1c] sm:$0xf]
      %v3185 = vunpack.c.l.b16 %v3169
      %v3186 = vunpack.c.l.b16 %v3170
      %v3187 = vunpack.c.l.b16 %v3171
      %v3188 = vunpack.c.l.b16 %v3172
      %v3189 = vunpack.c.l.b16 %v3173
      %v3190 = vunpack.c.l.b16 %v3174
      %v3191 = vunpack.c.l.b16 %v3175
      %v3192 = vunpack.c.l.b16 %v3176
      %v3193 = vpack.c.b16 %v3186, %v3185
      %v3194 = vpack.c.b16 %v3188, %v3187
      %v3195 = vpack.c.b16 %v3190, %v3189
      %v3196 = vpack.c.b16 %v3192, %v3191
      %v3201 = vsel %vm312, %v3167, 0
      %3203 = vmatprep.subr.bf16.mxu0 0
      %3204 = vmatpush1.bf16.msra.mxu0 %v3193
      %3205 = vmatprep.subr.bf16.mxu0 0
      %3206 = vmatpush1.bf16.msra.mxu0 %v3194
      %3207 = vmatprep.subr.bf16.mxu0 0
      %3208 = vmatpush1.bf16.msra.mxu0 %v3195
      %3209 = vmatprep.subr.bf16.mxu0 0
      %3210 = vmatpush1.bf16.msra.mxu0 %v3196
      %3211 = vmatprep.subr.bf16.mxu0 0
      %3212 = vmatpush1.bf16.msra.mxu0 0
      %3213 = vmatprep.subr.bf16.mxu0 0
      %3214 = vmatpush1.bf16.msra.mxu0 0
      %3215 = vmatprep.subr.bf16.mxu0 0
      %3216 = vmatpush1.bf16.msra.mxu0 0
      %3217 = vmatprep.subr.bf16.mxu0 0
      %3218 = vmatpush1.bf16.msra.mxu0 0
      %3219 = vmatprep.subr.bf16.mxu0 0
      %3220 = vmatpush1.bf16.msra.mxu0 0
      %3221 = vmatprep.subr.bf16.mxu0 0
      %3222 = vmatpush1.bf16.msra.mxu0 0
      %3223 = vmatprep.subr.bf16.mxu0 0
      %3224 = vmatpush1.bf16.msra.mxu0 0
      %3225 = vmatprep.subr.bf16.mxu0 0
      %3226 = vmatpush1.bf16.msra.mxu0 0
      %3227 = vmatprep.subr.bf16.mxu0 0
      %3228 = vmatpush1.bf16.msra.mxu0 0
      %3229 = vmatprep.subr.bf16.mxu0 0
      %3230 = vmatpush1.bf16.msra.mxu0 0
      %3231 = vmatprep.subr.bf16.mxu0 0
      %3232 = vmatpush1.bf16.msra.mxu0 0
      %3233 = vmatprep.subr.bf16.mxu0 0
      %3234 = vmatpush1.bf16.msra.mxu0 0
      %3235 = vmatprep.mubr.bf16.mxu0 0
      %3236 = vmatmul.mubr.bf16.gmra.mrb[0].mxu0 %v3201
      %v3237 = vpop.f32.mrb[0].mxu0
      %v3238 = vadd.f32 0.0, %v3237
      %v3239 = vpop.f32.mrb[0].mxu0
      %v3240 = vpop.f32.mrb[0].mxu0
      %v3241 = vpop.f32.mrb[0].mxu0
      %3242 = vdwg.mxu0
      %s3243 = scalar_lea.vmem %s248, 54
      %3244 = vst.msk [vmem:[%s3243] sm:$0x3] %vm355, %v3238
      %3246 = vrot.lane.b32.xlu0 %v3238, 96
      %v3247 = vpop.permute.xlu0 %3246
      %s3249 = scalar_lea.vmem %s254, 54
      %3250 = vst.msk [vmem:[%s3249] sm:$0x3] %vm355, %v3247
      %s3251 = scalar_lea.vmem %s230, 28
      %v3252 = vld [vmem:[%s3251] sm:$0x1]
      %s3253 = scalar_lea.vmem %s235, 28
      %v3254 = vld [vmem:[%s3253] sm:$0x1]
      %v3257 = vunpack.c.l.s4 1966171168
      %v3258 = vunpack.c.0.s8 %v3257
      %v3259 = vlaneseq
      %v3260 = vshrl.u32 %v3259, 7
      %v3261 = vsub.s32 %v3258, %v3260
      %v3262 = vrot.slane %v3254, %v3261
      %v3264 = vunpack.c.l.s4 1966171168
      %v3265 = vunpack.c.0.s8 %v3264
      %v3266 = vlaneseq
      %v3267 = vshrl.u32 %v3266, 7
      %v3268 = vsub.s32 %v3265, %v3267
      %v3269 = vrot.slane %v3262, %v3268
      %3270 = vrot.lane.b32.xlu0 %v3269, 32
      %v3271 = vpop.permute.xlu0 %3270
      %v3274 = vsel %vm276, %v3252, %v3271
      %s3275 = scalar_lea.vmem %s242, 896
      %v3276 = vld [vmem:[%s3275] sm:$0xf]
      %v3277 = vld [vmem:[%s3275 + $0x4] sm:$0xf]
      %v3278 = vld [vmem:[%s3275 + $0x8] sm:$0xf]
      %v3279 = vld [vmem:[%s3275 + $0xc] sm:$0xf]
      %v3280 = vld [vmem:[%s3275 + $0x10] sm:$0xf]
      %v3281 = vld [vmem:[%s3275 + $0x14] sm:$0xf]
      %v3282 = vld [vmem:[%s3275 + $0x18] sm:$0xf]
      %v3283 = vld [vmem:[%s3275 + $0x1c] sm:$0xf]
      %v3292 = vunpack.c.l.b16 %v3276
      %v3293 = vunpack.c.l.b16 %v3277
      %v3294 = vunpack.c.l.b16 %v3278
      %v3295 = vunpack.c.l.b16 %v3279
      %v3296 = vunpack.c.l.b16 %v3280
      %v3297 = vunpack.c.l.b16 %v3281
      %v3298 = vunpack.c.l.b16 %v3282
      %v3299 = vunpack.c.l.b16 %v3283
      %v3300 = vpack.c.b16 %v3293, %v3292
      %v3301 = vpack.c.b16 %v3295, %v3294
      %v3302 = vpack.c.b16 %v3297, %v3296
      %v3303 = vpack.c.b16 %v3299, %v3298
      %v3308 = vsel %vm312, %v3274, 0
      %3310 = vmatprep.subr.bf16.mxu0 0
      %3311 = vmatpush1.bf16.msra.mxu0 %v3300
      %3312 = vmatprep.subr.bf16.mxu0 0
      %3313 = vmatpush1.bf16.msra.mxu0 %v3301
      %3314 = vmatprep.subr.bf16.mxu0 0
      %3315 = vmatpush1.bf16.msra.mxu0 %v3302
      %3316 = vmatprep.subr.bf16.mxu0 0
      %3317 = vmatpush1.bf16.msra.mxu0 %v3303
      %3318 = vmatprep.subr.bf16.mxu0 0
      %3319 = vmatpush1.bf16.msra.mxu0 0
      %3320 = vmatprep.subr.bf16.mxu0 0
      %3321 = vmatpush1.bf16.msra.mxu0 0
      %3322 = vmatprep.subr.bf16.mxu0 0
      %3323 = vmatpush1.bf16.msra.mxu0 0
      %3324 = vmatprep.subr.bf16.mxu0 0
      %3325 = vmatpush1.bf16.msra.mxu0 0
      %3326 = vmatprep.subr.bf16.mxu0 0
      %3327 = vmatpush1.bf16.msra.mxu0 0
      %3328 = vmatprep.subr.bf16.mxu0 0
      %3329 = vmatpush1.bf16.msra.mxu0 0
      %3330 = vmatprep.subr.bf16.mxu0 0
      %3331 = vmatpush1.bf16.msra.mxu0 0
      %3332 = vmatprep.subr.bf16.mxu0 0
      %3333 = vmatpush1.bf16.msra.mxu0 0
      %3334 = vmatprep.subr.bf16.mxu0 0
      %3335 = vmatpush1.bf16.msra.mxu0 0
      %3336 = vmatprep.subr.bf16.mxu0 0
      %3337 = vmatpush1.bf16.msra.mxu0 0
      %3338 = vmatprep.subr.bf16.mxu0 0
      %3339 = vmatpush1.bf16.msra.mxu0 0
      %3340 = vmatprep.subr.bf16.mxu0 0
      %3341 = vmatpush1.bf16.msra.mxu0 0
      %3342 = vmatprep.mubr.bf16.mxu0 0
      %3343 = vmatmul.mubr.bf16.gmra.mrb[0].mxu0 %v3308
      %v3344 = vpop.f32.mrb[0].mxu0
      %v3345 = vadd.f32 0.0, %v3344
      %v3346 = vpop.f32.mrb[0].mxu0
      %v3347 = vpop.f32.mrb[0].mxu0
      %v3348 = vpop.f32.mrb[0].mxu0
      %3349 = vdwg.mxu0
      %s3350 = scalar_lea.vmem %s248, 56
      %3351 = vst.msk [vmem:[%s3350] sm:$0x3] %vm355, %v3345
      %3353 = vrot.lane.b32.xlu0 %v3345, 96
      %v3354 = vpop.permute.xlu0 %3353
      %s3356 = scalar_lea.vmem %s254, 56
      %3357 = vst.msk [vmem:[%s3356] sm:$0x3] %vm355, %v3354
      %s3358 = scalar_lea.vmem %s230, 29
      %v3359 = vld [vmem:[%s3358] sm:$0x1]
      %s3360 = scalar_lea.vmem %s235, 29
      %v3361 = vld [vmem:[%s3360] sm:$0x1]
      %v3364 = vunpack.c.l.s4 1966171168
      %v3365 = vunpack.c.0.s8 %v3364
      %v3366 = vlaneseq
      %v3367 = vshrl.u32 %v3366, 7
      %v3368 = vsub.s32 %v3365, %v3367
      %v3369 = vrot.slane %v3361, %v3368
      %v3371 = vunpack.c.l.s4 1966171168
      %v3372 = vunpack.c.0.s8 %v3371
      %v3373 = vlaneseq
      %v3374 = vshrl.u32 %v3373, 7
      %v3375 = vsub.s32 %v3372, %v3374
      %v3376 = vrot.slane %v3369, %v3375
      %3377 = vrot.lane.b32.xlu0 %v3376, 32
      %v3378 = vpop.permute.xlu0 %3377
      %v3381 = vsel %vm276, %v3359, %v3378
      %s3382 = scalar_lea.vmem %s242, 928
      %v3383 = vld [vmem:[%s3382] sm:$0xf]
      %v3384 = vld [vmem:[%s3382 + $0x4] sm:$0xf]
      %v3385 = vld [vmem:[%s3382 + $0x8] sm:$0xf]
      %v3386 = vld [vmem:[%s3382 + $0xc] sm:$0xf]
      %v3387 = vld [vmem:[%s3382 + $0x10] sm:$0xf]
      %v3388 = vld [vmem:[%s3382 + $0x14] sm:$0xf]
      %v3389 = vld [vmem:[%s3382 + $0x18] sm:$0xf]
      %v3390 = vld [vmem:[%s3382 + $0x1c] sm:$0xf]
      %v3399 = vunpack.c.l.b16 %v3383
      %v3400 = vunpack.c.l.b16 %v3384
      %v3401 = vunpack.c.l.b16 %v3385
      %v3402 = vunpack.c.l.b16 %v3386
      %v3403 = vunpack.c.l.b16 %v3387
      %v3404 = vunpack.c.l.b16 %v3388
      %v3405 = vunpack.c.l.b16 %v3389
      %v3406 = vunpack.c.l.b16 %v3390
      %v3407 = vpack.c.b16 %v3400, %v3399
      %v3408 = vpack.c.b16 %v3402, %v3401
      %v3409 = vpack.c.b16 %v3404, %v3403
      %v3410 = vpack.c.b16 %v3406, %v3405
      %v3415 = vsel %vm312, %v3381, 0
      %3417 = vmatprep.subr.bf16.mxu0 0
      %3418 = vmatpush1.bf16.msra.mxu0 %v3407
      %3419 = vmatprep.subr.bf16.mxu0 0
      %3420 = vmatpush1.bf16.msra.mxu0 %v3408
      %3421 = vmatprep.subr.bf16.mxu0 0
      %3422 = vmatpush1.bf16.msra.mxu0 %v3409
      %3423 = vmatprep.subr.bf16.mxu0 0
      %3424 = vmatpush1.bf16.msra.mxu0 %v3410
      %3425 = vmatprep.subr.bf16.mxu0 0
      %3426 = vmatpush1.bf16.msra.mxu0 0
      %3427 = vmatprep.subr.bf16.mxu0 0
      %3428 = vmatpush1.bf16.msra.mxu0 0
      %3429 = vmatprep.subr.bf16.mxu0 0
      %3430 = vmatpush1.bf16.msra.mxu0 0
      %3431 = vmatprep.subr.bf16.mxu0 0
      %3432 = vmatpush1.bf16.msra.mxu0 0
      %3433 = vmatprep.subr.bf16.mxu0 0
      %3434 = vmatpush1.bf16.msra.mxu0 0
      %3435 = vmatprep.subr.bf16.mxu0 0
      %3436 = vmatpush1.bf16.msra.mxu0 0
      %3437 = vmatprep.subr.bf16.mxu0 0
      %3438 = vmatpush1.bf16.msra.mxu0 0
      %3439 = vmatprep.subr.bf16.mxu0 0
      %3440 = vmatpush1.bf16.msra.mxu0 0
      %3441 = vmatprep.subr.bf16.mxu0 0
      %3442 = vmatpush1.bf16.msra.mxu0 0
      %3443 = vmatprep.subr.bf16.mxu0 0
      %3444 = vmatpush1.bf16.msra.mxu0 0
      %3445 = vmatprep.subr.bf16.mxu0 0
      %3446 = vmatpush1.bf16.msra.mxu0 0
      %3447 = vmatprep.subr.bf16.mxu0 0
      %3448 = vmatpush1.bf16.msra.mxu0 0
      %3449 = vmatprep.mubr.bf16.mxu0 0
      %3450 = vmatmul.mubr.bf16.gmra.mrb[0].mxu0 %v3415
      %v3451 = vpop.f32.mrb[0].mxu0
      %v3452 = vadd.f32 0.0, %v3451
      %v3453 = vpop.f32.mrb[0].mxu0
      %v3454 = vpop.f32.mrb[0].mxu0
      %v3455 = vpop.f32.mrb[0].mxu0
      %3456 = vdwg.mxu0
      %s3457 = scalar_lea.vmem %s248, 58
      %3458 = vst.msk [vmem:[%s3457] sm:$0x3] %vm355, %v3452
      %3460 = vrot.lane.b32.xlu0 %v3452, 96
      %v3461 = vpop.permute.xlu0 %3460
      %s3463 = scalar_lea.vmem %s254, 58
      %3464 = vst.msk [vmem:[%s3463] sm:$0x3] %vm355, %v3461
      %s3465 = scalar_lea.vmem %s230, 30
      %v3466 = vld [vmem:[%s3465] sm:$0x1]
      %s3467 = scalar_lea.vmem %s235, 30
      %v3468 = vld [vmem:[%s3467] sm:$0x1]
      %v3471 = vunpack.c.l.s4 1966171168
      %v3472 = vunpack.c.0.s8 %v3471
      %v3473 = vlaneseq
      %v3474 = vshrl.u32 %v3473, 7
      %v3475 = vsub.s32 %v3472, %v3474
      %v3476 = vrot.slane %v3468, %v3475
      %v3478 = vunpack.c.l.s4 1966171168
      %v3479 = vunpack.c.0.s8 %v3478
      %v3480 = vlaneseq
      %v3481 = vshrl.u32 %v3480, 7
      %v3482 = vsub.s32 %v3479, %v3481
      %v3483 = vrot.slane %v3476, %v3482
      %3484 = vrot.lane.b32.xlu0 %v3483, 32
      %v3485 = vpop.permute.xlu0 %3484
      %v3488 = vsel %vm276, %v3466, %v3485
      %s3489 = scalar_lea.vmem %s242, 960
      %v3490 = vld [vmem:[%s3489] sm:$0xf]
      %v3491 = vld [vmem:[%s3489 + $0x4] sm:$0xf]
      %v3492 = vld [vmem:[%s3489 + $0x8] sm:$0xf]
      %v3493 = vld [vmem:[%s3489 + $0xc] sm:$0xf]
      %v3494 = vld [vmem:[%s3489 + $0x10] sm:$0xf]
      %v3495 = vld [vmem:[%s3489 + $0x14] sm:$0xf]
      %v3496 = vld [vmem:[%s3489 + $0x18] sm:$0xf]
      %v3497 = vld [vmem:[%s3489 + $0x1c] sm:$0xf]
      %v3506 = vunpack.c.l.b16 %v3490
      %v3507 = vunpack.c.l.b16 %v3491
      %v3508 = vunpack.c.l.b16 %v3492
      %v3509 = vunpack.c.l.b16 %v3493
      %v3510 = vunpack.c.l.b16 %v3494
      %v3511 = vunpack.c.l.b16 %v3495
      %v3512 = vunpack.c.l.b16 %v3496
      %v3513 = vunpack.c.l.b16 %v3497
      %v3514 = vpack.c.b16 %v3507, %v3506
      %v3515 = vpack.c.b16 %v3509, %v3508
      %v3516 = vpack.c.b16 %v3511, %v3510
      %v3517 = vpack.c.b16 %v3513, %v3512
      %v3522 = vsel %vm312, %v3488, 0
      %3524 = vmatprep.subr.bf16.mxu0 0
      %3525 = vmatpush1.bf16.msra.mxu0 %v3514
      %3526 = vmatprep.subr.bf16.mxu0 0
      %3527 = vmatpush1.bf16.msra.mxu0 %v3515
      %3528 = vmatprep.subr.bf16.mxu0 0
      %3529 = vmatpush1.bf16.msra.mxu0 %v3516
      %3530 = vmatprep.subr.bf16.mxu0 0
      %3531 = vmatpush1.bf16.msra.mxu0 %v3517
      %3532 = vmatprep.subr.bf16.mxu0 0
      %3533 = vmatpush1.bf16.msra.mxu0 0
      %3534 = vmatprep.subr.bf16.mxu0 0
      %3535 = vmatpush1.bf16.msra.mxu0 0
      %3536 = vmatprep.subr.bf16.mxu0 0
      %3537 = vmatpush1.bf16.msra.mxu0 0
      %3538 = vmatprep.subr.bf16.mxu0 0
      %3539 = vmatpush1.bf16.msra.mxu0 0
      %3540 = vmatprep.subr.bf16.mxu0 0
      %3541 = vmatpush1.bf16.msra.mxu0 0
      %3542 = vmatprep.subr.bf16.mxu0 0
      %3543 = vmatpush1.bf16.msra.mxu0 0
      %3544 = vmatprep.subr.bf16.mxu0 0
      %3545 = vmatpush1.bf16.msra.mxu0 0
      %3546 = vmatprep.subr.bf16.mxu0 0
      %3547 = vmatpush1.bf16.msra.mxu0 0
      %3548 = vmatprep.subr.bf16.mxu0 0
      %3549 = vmatpush1.bf16.msra.mxu0 0
      %3550 = vmatprep.subr.bf16.mxu0 0
      %3551 = vmatpush1.bf16.msra.mxu0 0
      %3552 = vmatprep.subr.bf16.mxu0 0
      %3553 = vmatpush1.bf16.msra.mxu0 0
      %3554 = vmatprep.subr.bf16.mxu0 0
      %3555 = vmatpush1.bf16.msra.mxu0 0
      %3556 = vmatprep.mubr.bf16.mxu0 0
      %3557 = vmatmul.mubr.bf16.gmra.mrb[0].mxu0 %v3522
      %v3558 = vpop.f32.mrb[0].mxu0
      %v3559 = vadd.f32 0.0, %v3558
      %v3560 = vpop.f32.mrb[0].mxu0
      %v3561 = vpop.f32.mrb[0].mxu0
      %v3562 = vpop.f32.mrb[0].mxu0
      %3563 = vdwg.mxu0
      %s3564 = scalar_lea.vmem %s248, 60
      %3565 = vst.msk [vmem:[%s3564] sm:$0x3] %vm355, %v3559
      %3567 = vrot.lane.b32.xlu0 %v3559, 96
      %v3568 = vpop.permute.xlu0 %3567
      %s3570 = scalar_lea.vmem %s254, 60
      %3571 = vst.msk [vmem:[%s3570] sm:$0x3] %vm355, %v3568
      %s3572 = scalar_lea.vmem %s230, 31
      %v3573 = vld [vmem:[%s3572] sm:$0x1]
      %s3574 = scalar_lea.vmem %s235, 31
      %v3575 = vld [vmem:[%s3574] sm:$0x1]
      %v3578 = vunpack.c.l.s4 1966171168
      %v3579 = vunpack.c.0.s8 %v3578
      %v3580 = vlaneseq
      %v3581 = vshrl.u32 %v3580, 7
      %v3582 = vsub.s32 %v3579, %v3581
      %v3583 = vrot.slane %v3575, %v3582
      %v3585 = vunpack.c.l.s4 1966171168
      %v3586 = vunpack.c.0.s8 %v3585
      %v3587 = vlaneseq
      %v3588 = vshrl.u32 %v3587, 7
      %v3589 = vsub.s32 %v3586, %v3588
      %v3590 = vrot.slane %v3583, %v3589
      %3591 = vrot.lane.b32.xlu0 %v3590, 32
      %v3592 = vpop.permute.xlu0 %3591
      %v3595 = vsel %vm276, %v3573, %v3592
      %s3596 = scalar_lea.vmem %s242, 992
      %v3597 = vld [vmem:[%s3596] sm:$0xf]
      %v3598 = vld [vmem:[%s3596 + $0x4] sm:$0xf]
      %v3599 = vld [vmem:[%s3596 + $0x8] sm:$0xf]
      %v3600 = vld [vmem:[%s3596 + $0xc] sm:$0xf]
      %v3601 = vld [vmem:[%s3596 + $0x10] sm:$0xf]
      %v3602 = vld [vmem:[%s3596 + $0x14] sm:$0xf]
      %v3603 = vld [vmem:[%s3596 + $0x18] sm:$0xf]
      %v3604 = vld [vmem:[%s3596 + $0x1c] sm:$0xf]
      %v3613 = vunpack.c.l.b16 %v3597
      %v3614 = vunpack.c.l.b16 %v3598
      %v3615 = vunpack.c.l.b16 %v3599
      %v3616 = vunpack.c.l.b16 %v3600
      %v3617 = vunpack.c.l.b16 %v3601
      %v3618 = vunpack.c.l.b16 %v3602
      %v3619 = vunpack.c.l.b16 %v3603
      %v3620 = vunpack.c.l.b16 %v3604
      %v3621 = vpack.c.b16 %v3614, %v3613
      %v3622 = vpack.c.b16 %v3616, %v3615
      %v3623 = vpack.c.b16 %v3618, %v3617
      %v3624 = vpack.c.b16 %v3620, %v3619
      %v3629 = vsel %vm312, %v3595, 0
      %3631 = vmatprep.subr.bf16.mxu0 0
      %3632 = vmatpush1.bf16.msra.mxu0 %v3621
      %3633 = vmatprep.subr.bf16.mxu0 0
      %3634 = vmatpush1.bf16.msra.mxu0 %v3622
      %3635 = vmatprep.subr.bf16.mxu0 0
      %3636 = vmatpush1.bf16.msra.mxu0 %v3623
      %3637 = vmatprep.subr.bf16.mxu0 0
      %3638 = vmatpush1.bf16.msra.mxu0 %v3624
      %3639 = vmatprep.subr.bf16.mxu0 0
      %3640 = vmatpush1.bf16.msra.mxu0 0
      %3641 = vmatprep.subr.bf16.mxu0 0
      %3642 = vmatpush1.bf16.msra.mxu0 0
      %3643 = vmatprep.subr.bf16.mxu0 0
      %3644 = vmatpush1.bf16.msra.mxu0 0
      %3645 = vmatprep.subr.bf16.mxu0 0
      %3646 = vmatpush1.bf16.msra.mxu0 0
      %3647 = vmatprep.subr.bf16.mxu0 0
      %3648 = vmatpush1.bf16.msra.mxu0 0
      %3649 = vmatprep.subr.bf16.mxu0 0
      %3650 = vmatpush1.bf16.msra.mxu0 0
      %3651 = vmatprep.subr.bf16.mxu0 0
      %3652 = vmatpush1.bf16.msra.mxu0 0
      %3653 = vmatprep.subr.bf16.mxu0 0
      %3654 = vmatpush1.bf16.msra.mxu0 0
      %3655 = vmatprep.subr.bf16.mxu0 0
      %3656 = vmatpush1.bf16.msra.mxu0 0
      %3657 = vmatprep.subr.bf16.mxu0 0
      %3658 = vmatpush1.bf16.msra.mxu0 0
      %3659 = vmatprep.subr.bf16.mxu0 0
      %3660 = vmatpush1.bf16.msra.mxu0 0
      %3661 = vmatprep.subr.bf16.mxu0 0
      %3662 = vmatpush1.bf16.msra.mxu0 0
      %3663 = vmatprep.mubr.bf16.mxu0 0
      %3664 = vmatmul.mubr.bf16.gmra.mrb[0].mxu0 %v3629
      %v3665 = vpop.f32.mrb[0].mxu0
      %v3666 = vadd.f32 0.0, %v3665
      %v3667 = vpop.f32.mrb[0].mxu0
      %v3668 = vpop.f32.mrb[0].mxu0
      %v3669 = vpop.f32.mrb[0].mxu0
      %3670 = vdwg.mxu0
      %s3671 = scalar_lea.vmem %s248, 62
      %3672 = vst.msk [vmem:[%s3671] sm:$0x3] %vm355, %v3666
      %3674 = vrot.lane.b32.xlu0 %v3666, 96
      %v3675 = vpop.permute.xlu0 %3674
      %s3677 = scalar_lea.vmem %s254, 62
      %3678 = vst.msk [vmem:[%s3677] sm:$0x3] %vm355, %v3675
      %s3679 = smul.u32 32, %s16
      %p3680 = scmp.lt.s32.totalorder %s3679, 127
      %s3681 = scalar_select %p3680, %s3679, 127
      %s3682 = smul.addr %s3681, 2
      %s3683 = scalar_lea.vmem %s3, %s3682
      %s3684 = smul.u32 32, %s16
      %p3685 = scmp.lt.s32.totalorder %s3684, 127
      %s3686 = scalar_select %p3685, %s3684, 127
      %s3687 = smul.addr %s3686, 2
      %s3688 = scalar_lea.vmem %s4, %s3687
      // Predicated region
      $region33: #{fno_forward.9} parent=31 // pred_check
        %p3689 = pneg %p112
      $region34: #{fno_forward.9} parent=31 // pred_check_branch
        %3691 = sbr.rel (%p3689) target = $region36
      $region35: #{fno_forward.9} parent=31 // pred_region
        %s3692 = smul.u32 32, %s16
      $region36: #{fno_forward.9} parent=31 // pred_fallthru
        _
      // Predicated region
      $region37: #{fno_forward.9} parent=31 // pred_check
        %p3693 = pneg %p138
      $region38: #{fno_forward.9} parent=31 // pred_check_branch
        %3695 = sbr.rel (%p3693) target = $region40
      $region39: #{fno_forward.9} parent=31 // pred_region
        %s3696 = smul.u32 32, %s16
      $region40: #{fno_forward.9} parent=31 // pred_fallthru
        _
    $region32: #{fno_forward.9} parent=5 // pred_fallthru
      _
    %p3697 = scmp.le.s32.totalorder 2, %s11
    // Predicated region
    $region41: #{fno_forward.9} parent=5 // pred_check
      %p3698 = pneg %p3697
    $region42: #{fno_forward.9} parent=5 // pred_check_branch
      %3700 = sbr.rel (%p3698) target = $region44
    $region43: #{fno_forward.9} parent=5 // pred_region
      %s3701 = ssub.s32 %s11, 2
      // Predicated region
      $region45: #{fno_forward.9} parent=43 // pred_check
        %p3702 = pneg %p118
      $region46: #{fno_forward.9} parent=43 // pred_check_branch
        %3704 = sbr.rel (%p3702) target = $region48
      $region47: #{fno_forward.9} parent=43 // pred_region
        %s3705 = smul.u32 32, %s17
        %p3706 = scmp.lt.s32.totalorder %s3705, 127
        %s3707 = scalar_select %p3706, %s3705, 127
        %s3708 = smul.addr %s3707, 2
        %s3709 = scalar_lea.vmem %s3, %s3708
      $region48: #{fno_forward.9} parent=43 // pred_fallthru
        _
      // Predicated region
      $region49: #{fno_forward.9} parent=43 // pred_check
        %p3710 = pneg %p144
      $region50: #{fno_forward.9} parent=43 // pred_check_branch
        %3712 = sbr.rel (%p3710) target = $region52
      $region51: #{fno_forward.9} parent=43 // pred_region
        %s3713 = smul.u32 32, %s17
        %p3714 = scmp.lt.s32.totalorder %s3713, 127
        %s3715 = scalar_select %p3714, %s3713, 127
        %s3716 = smul.addr %s3715, 2
        %s3717 = scalar_lea.vmem %s4, %s3716
      $region52: #{fno_forward.9} parent=43 // pred_fallthru
        _
    $region44: #{fno_forward.9} parent=5 // pred_fallthru
      _
  $region6: #{fno_forward.9} parent=0 // loop_footer
    %s15 = sadd.s32 1, %s11
  $region7: #{fno_forward.9} parent=0 // loop_footer_branch
    %10 = sbr.rel target = $region3
  $region8: #{fno_forward.9} parent=0 // loop_exit
    _

// kernel: fno_forward.10
$region0: #{fno_forward.10}
  #allocation0 [shape = 'u32[]', space=smem, size = 0x4, offset = 0x4, fixed_abs, tag = 'smem constant byte address 0x4 - core index']
  #allocation1 [shape = 'u32[144,128]{1,0:T(1,128)}', space=vmem, size = 0x12000, scoped, tag = 'internal scratch']
  %s0 = inlined_call_operand.vmem [shape: f32[128,128], index: 0, kind: input, shape index: {}]
  %s1 = inlined_call_operand.vmem [shape: bf16[128,128], index: 1, kind: input, shape index: {}]
  %s2 = inlined_call_operand.vmem [shape: bf16[128,128], index: 2, kind: input, shape index: {}]
  %s3 = inlined_call_operand.vmem [shape: f32[1,128], index: 3, kind: input, shape index: {}]
  %s4 = inlined_call_operand.vmem [shape: f32[128,128], index: 4, kind: output, shape index: {0}]
  %s5 = inlined_call_operand.vmem [shape: f32[32,128], index: 5, kind: output, shape index: {1}]
  %s6 = inlined_call_operand.vmem [shape: f32[32,128], index: 6, kind: output, shape index: {2}]
  %7 = xla_tuple %s4, %s5, %s6
  %s8 = sld [smem:[#allocation0]]
  $region65: #{fno_forward.10} parent=0
    _
  %s10 = ssub.s32 1, %s8
  %s11 = scalar_select 0, %s10, %s8
  loop: start=0, step=1, limit=6
  $region2: #{fno_forward.10} parent=0 // loop_pre_header
    _
  $region3: #{fno_forward.10} parent=0 // loop_header
    %s13 = sphi 0, %s17
    %p14 = scmp.ge.s32.totalorder %s13, 6
    %s23 = sphi 0, %s25
    %s26 = sphi 0, %s23
    %s27 = sphi 0, %s26
    %s43 = sphi 0, %s27
    %s49 = sphi 0, %s51
    %s52 = sphi 0, %s49
    %s53 = sphi 0, %s52
    %s69 = sphi 0, %s53
    %s73 = sphi 0, %s73
    %s75 = sphi 0, %s73
    %s76 = sphi 0, %s75
    %s90 = sphi 0, %s76
    %s94 = sphi 0, %s94
    %s96 = sphi 0, %s94
    %s97 = sphi 0, %s96
    %s111 = sphi 0, %s97
    %s117 = sphi 0, %s119
    %s120 = sphi 0, %s117
    %s121 = sphi 0, %s120
    %s137 = sphi 0, %s121
    %s143 = sphi 0, %s145
    %s146 = sphi 0, %s143
    %s147 = sphi 0, %s146
    %s163 = sphi 0, %s147
    %s169 = sphi 0, %s171
    %s172 = sphi 0, %s169
    %s173 = sphi 0, %s172
    %s189 = sphi 0, %s173
  $region4: #{fno_forward.10} parent=0 // loop_header_branch
    %16 = sbr.rel (%p14) target = $region8
  $region5: #{fno_forward.10} parent=0 // loop_body
    %s18 = ssub.s32 %s13, 1
    %s19 = ssub.s32 %s13, 2
    %s20 = sadd.s32 %s13, 1
    %s21 = ssub.s32 %s13, %s20
    %p22 = scmp.eq.s32.totalorder %s21, 0
    %s24 = sadd.s32 %s23, 1
    %s25 = scalar_select %p22, %s23, %s24
    %p28 = pneg %p22
    %p29 = scmp.eq.s32.totalorder %s13, 3
    %p30 = por %p28, %p29
    %p31 = scmp.ne.s32.totalorder %s23, %s26
    %p32 = scmp.eq.s32.totalorder %s13, 0
    %p33 = por %p31, %p32
    %p34 = scmp.ne.s32.totalorder %s23, %s26
    %p35 = scmp.eq.s32.totalorder %s18, 3
    %p36 = por %p34, %p35
    %p37 = scmp.ne.s32.totalorder %s26, %s27
    %p38 = scmp.eq.s32.totalorder %s18, 0
    %p39 = por %p37, %p38
    %p40 = scmp.ne.s32.totalorder %s26, %s27
    %p41 = scmp.eq.s32.totalorder %s19, 3
    %p42 = por %p40, %p41
    %p44 = scmp.ne.s32.totalorder %s27, %s43
    %p45 = scmp.eq.s32.totalorder %s19, 0
    %p46 = por %p44, %p45
    %s47 = ssub.s32 %s13, %s20
    %p48 = scmp.eq.s32.totalorder %s47, 0
    %s50 = sadd.s32 %s49, 1
    %s51 = scalar_select %p48, %s49, %s50
    %p54 = pneg %p48
    %p55 = scmp.eq.s32.totalorder %s13, 3
    %p56 = por %p54, %p55
    %p57 = scmp.ne.s32.totalorder %s49, %s52
    %p58 = scmp.eq.s32.totalorder %s13, 0
    %p59 = por %p57, %p58
    %p60 = scmp.ne.s32.totalorder %s49, %s52
    %p61 = scmp.eq.s32.totalorder %s18, 3
    %p62 = por %p60, %p61
    %p63 = scmp.ne.s32.totalorder %s52, %s53
    %p64 = scmp.eq.s32.totalorder %s18, 0
    %p65 = por %p63, %p64
    %p66 = scmp.ne.s32.totalorder %s52, %s53
    %p67 = scmp.eq.s32.totalorder %s19, 3
    %p68 = por %p66, %p67
    %p70 = scmp.ne.s32.totalorder %s53, %s69
    %p71 = scmp.eq.s32.totalorder %s19, 0
    %p72 = por %p70, %p71
    %s74 = sadd.s32 %s73, 1
    %p77 = scmp.eq.s32.totalorder %s13, 3
    %p78 = scmp.ne.s32.totalorder %s73, %s75
    %p79 = scmp.eq.s32.totalorder %s13, 0
    %p80 = por %p78, %p79
    %p81 = scmp.ne.s32.totalorder %s73, %s75
    %p82 = scmp.eq.s32.totalorder %s18, 3
    %p83 = por %p81, %p82
    %p84 = scmp.ne.s32.totalorder %s75, %s76
    %p85 = scmp.eq.s32.totalorder %s18, 0
    %p86 = por %p84, %p85
    %p87 = scmp.ne.s32.totalorder %s75, %s76
    %p88 = scmp.eq.s32.totalorder %s19, 3
    %p89 = por %p87, %p88
    %p91 = scmp.ne.s32.totalorder %s76, %s90
    %p92 = scmp.eq.s32.totalorder %s19, 0
    %p93 = por %p91, %p92
    %s95 = sadd.s32 %s94, 1
    %p98 = scmp.eq.s32.totalorder %s13, 3
    %p99 = scmp.ne.s32.totalorder %s94, %s96
    %p100 = scmp.eq.s32.totalorder %s13, 0
    %p101 = por %p99, %p100
    %p102 = scmp.ne.s32.totalorder %s94, %s96
    %p103 = scmp.eq.s32.totalorder %s18, 3
    %p104 = por %p102, %p103
    %p105 = scmp.ne.s32.totalorder %s96, %s97
    %p106 = scmp.eq.s32.totalorder %s18, 0
    %p107 = por %p105, %p106
    %p108 = scmp.ne.s32.totalorder %s96, %s97
    %p109 = scmp.eq.s32.totalorder %s19, 3
    %p110 = por %p108, %p109
    %p112 = scmp.ne.s32.totalorder %s97, %s111
    %p113 = scmp.eq.s32.totalorder %s19, 0
    %p114 = por %p112, %p113
    %s115 = ssub.s32 %s13, %s20
    %p116 = scmp.eq.s32.totalorder %s115, 0
    %s118 = sadd.s32 %s117, 1
    %s119 = scalar_select %p116, %s117, %s118
    %p122 = pneg %p116
    %p123 = scmp.eq.s32.totalorder %s13, 3
    %p124 = por %p122, %p123
    %p125 = scmp.ne.s32.totalorder %s117, %s120
    %p126 = scmp.eq.s32.totalorder %s13, 0
    %p127 = por %p125, %p126
    %p128 = scmp.ne.s32.totalorder %s117, %s120
    %p129 = scmp.eq.s32.totalorder %s18, 3
    %p130 = por %p128, %p129
    %p131 = scmp.ne.s32.totalorder %s120, %s121
    %p132 = scmp.eq.s32.totalorder %s18, 0
    %p133 = por %p131, %p132
    %p134 = scmp.ne.s32.totalorder %s120, %s121
    %p135 = scmp.eq.s32.totalorder %s19, 3
    %p136 = por %p134, %p135
    %p138 = scmp.ne.s32.totalorder %s121, %s137
    %p139 = scmp.eq.s32.totalorder %s19, 0
    %p140 = por %p138, %p139
    %s141 = ssub.s32 %s13, %s20
    %p142 = scmp.eq.s32.totalorder %s141, 0
    %s144 = sadd.s32 %s143, 1
    %s145 = scalar_select %p142, %s143, %s144
    %p148 = pneg %p142
    %p149 = scmp.eq.s32.totalorder %s13, 3
    %p150 = por %p148, %p149
    %p151 = scmp.ne.s32.totalorder %s143, %s146
    %p152 = scmp.eq.s32.totalorder %s13, 0
    %p153 = por %p151, %p152
    %p154 = scmp.ne.s32.totalorder %s143, %s146
    %p155 = scmp.eq.s32.totalorder %s18, 3
    %p156 = por %p154, %p155
    %p157 = scmp.ne.s32.totalorder %s146, %s147
    %p158 = scmp.eq.s32.totalorder %s18, 0
    %p159 = por %p157, %p158
    %p160 = scmp.ne.s32.totalorder %s146, %s147
    %p161 = scmp.eq.s32.totalorder %s19, 3
    %p162 = por %p160, %p161
    %p164 = scmp.ne.s32.totalorder %s147, %s163
    %p165 = scmp.eq.s32.totalorder %s19, 0
    %p166 = por %p164, %p165
    %s167 = ssub.s32 %s13, %s20
    %p168 = scmp.eq.s32.totalorder %s167, 0
    %s170 = sadd.s32 %s169, 1
    %s171 = scalar_select %p168, %s169, %s170
    %p174 = pneg %p168
    %p175 = scmp.eq.s32.totalorder %s13, 3
    %p176 = por %p174, %p175
    %p177 = scmp.ne.s32.totalorder %s169, %s172
    %p178 = scmp.eq.s32.totalorder %s13, 0
    %p179 = por %p177, %p178
    %p180 = scmp.ne.s32.totalorder %s169, %s172
    %p181 = scmp.eq.s32.totalorder %s18, 3
    %p182 = por %p180, %p181
    %p183 = scmp.ne.s32.totalorder %s172, %s173
    %p184 = scmp.eq.s32.totalorder %s18, 0
    %p185 = por %p183, %p184
    %p186 = scmp.ne.s32.totalorder %s172, %s173
    %p187 = scmp.eq.s32.totalorder %s19, 3
    %p188 = por %p186, %p187
    %p190 = scmp.ne.s32.totalorder %s173, %s189
    %p191 = scmp.eq.s32.totalorder %s19, 0
    %p192 = por %p190, %p191
    %p193 = scmp.le.s32.totalorder 1, %s13
    %p194 = scmp.lt.s32.totalorder %s13, 5
    %p195 = pnand %p193, %p194
    %p196 = pneg %p195
    // Predicated region
    $region9: #{fno_forward.10} parent=5 // pred_check
      _
    $region10: #{fno_forward.10} parent=5 // pred_check_branch
      %198 = sbr.rel (%p195) target = $region12
    $region11: #{fno_forward.10} parent=5 // pred_region
      %s199 = ssub.s32 %s13, 1
      // Predicated region
      $region13: #{fno_forward.10} parent=11 // pred_check
        %p200 = pneg %p86
      $region14: #{fno_forward.10} parent=11 // pred_check_branch
        %202 = sbr.rel (%p200) target = $region16
      $region15: #{fno_forward.10} parent=11 // pred_region
        _
      $region16: #{fno_forward.10} parent=11 // pred_fallthru
        _
      // Predicated region
      $region17: #{fno_forward.10} parent=11 // pred_check
        %p203 = pneg %p107
      $region18: #{fno_forward.10} parent=11 // pred_check_branch
        %205 = sbr.rel (%p203) target = $region20
      $region19: #{fno_forward.10} parent=11 // pred_region
        _
      $region20: #{fno_forward.10} parent=11 // pred_fallthru
        _
    $region12: #{fno_forward.10} parent=5 // pred_fallthru
      _
    %p206 = scmp.lt.s32.totalorder %s13, 4
    // Predicated region
    $region21: #{fno_forward.10} parent=5 // pred_check
      %p207 = pneg %p206
    $region22: #{fno_forward.10} parent=5 // pred_check_branch
      %209 = sbr.rel (%p207) target = $region24
    $region23: #{fno_forward.10} parent=5 // pred_region
      // Predicated region
      $region25: #{fno_forward.10} parent=23 // pred_check
        %p210 = pneg %p33
      $region26: #{fno_forward.10} parent=23 // pred_check_branch
        %212 = sbr.rel (%p210) target = $region28
      $region27: #{fno_forward.10} parent=23 // pred_region
        %s213 = smul.u32 4, %s13
        %p214 = scmp.lt.s32.totalorder %s213, 15
        %s215 = scalar_select %p214, %s213, 15
        %s216 = smul.addr %s215, 8
        %s217 = scalar_lea.vmem %s0, %s216
        %s218 = smul.u32 4, %s13
      $region28: #{fno_forward.10} parent=23 // pred_fallthru
        _
      // Predicated region
      $region29: #{fno_forward.10} parent=23 // pred_check
        %p219 = pneg %p59
      $region30: #{fno_forward.10} parent=23 // pred_check_branch
        %221 = sbr.rel (%p219) target = $region32
      $region31: #{fno_forward.10} parent=23 // pred_region
        %s222 = smul.u32 4, %s13
        %p223 = scmp.lt.s32.totalorder %s222, 15
        %s224 = scalar_select %p223, %s222, 15
        %s225 = smul.addr %s224, 4
        %s226 = scalar_lea.vmem %s1, %s225
        %s227 = smul.u32 4, %s13
      $region32: #{fno_forward.10} parent=23 // pred_fallthru
        _
    $region24: #{fno_forward.10} parent=5 // pred_fallthru
      _
    %p228 = scmp.le.s32.totalorder 1, %s13
    %p229 = scmp.lt.s32.totalorder %s13, 5
    %p230 = pnand %p228, %p229
    %p231 = pneg %p230
    // Predicated region
    $region33: #{fno_forward.10} parent=5 // pred_check
      _
    $region34: #{fno_forward.10} parent=5 // pred_check_branch
      %233 = sbr.rel (%p230) target = $region36
    $region35: #{fno_forward.10} parent=5 // pred_region
      %s234 = ssub.s32 %s13, 1
      %s235 = smul.u32 4, %s18
      %p236 = scmp.lt.s32.totalorder %s235, 15
      %s237 = scalar_select %p236, %s235, 15
      %s238 = smul.addr %s237, 8
      %s239 = scalar_lea.vmem %s0, %s238
      %p240 = pneg %p39
      %p241 = pneg %p36
      %s242 = smul.u32 4, %s18
      %p243 = scmp.lt.s32.totalorder %s242, 15
      %s244 = scalar_select %p243, %s242, 15
      %s245 = smul.addr %s244, 4
      %s246 = scalar_lea.vmem %s1, %s245
      %p247 = pneg %p65
      %p248 = pneg %p62
      %p249 = pneg %p86
      %p250 = pneg %p83
      %p251 = pneg %p107
      %p252 = pneg %p104
      %p253 = pneg %p133
      %p254 = pneg %p130
      %s255 = smul.u32 4, %s18
      %p256 = scmp.lt.s32.totalorder %s255, 15
      %s257 = scalar_select %p256, %s255, 15
      %s258 = smul.addr %s257, 8
      %s259 = scalar_lea.vmem %s4, %s258
      %p260 = pneg %p159
      %p261 = pneg %p156
      %p262 = scmp.lt.s32.totalorder %s18, 3
      %s263 = scalar_select %p262, %s18, 3
      %s264 = smul.addr %s263, 8
      %s265 = scalar_lea.vmem %s5, %s264
      %p266 = pneg %p185
      %p267 = pneg %p182
      %p268 = scmp.lt.s32.totalorder %s18, 3
      %s269 = scalar_select %p268, %s18, 3
      %s270 = smul.addr %s269, 8
      %s271 = scalar_lea.vmem %s6, %s270
      %s272 = smul.u32 4, %s18
      %p273 = scmp.lt.s32.totalorder %s272, 15
      %s274 = scalar_select %p273, %s272, 15
      %s275 = smul.addr %s274, 8
      %s276 = scalar_lea.vmem %s0, %s275
      %s277 = smul.u32 4, %s18
      %s278 = smul.u32 4, %s18
      %p279 = scmp.lt.s32.totalorder %s278, 15
      %s280 = scalar_select %p279, %s278, 15
      %s281 = smul.addr %s280, 4
      %s282 = scalar_lea.vmem %s1, %s281
      %s283 = smul.u32 4, %s18
      %s284 = smul.u32 4, %s18
      %p285 = scmp.lt.s32.totalorder %s284, 15
      %s286 = scalar_select %p285, %s284, 15
      %s287 = smul.addr %s286, 8
      %s288 = scalar_lea.vmem %s4, %s287
      %s289 = smul.u32 4, %s18
      %p290 = scmp.lt.s32.totalorder %s18, 3
      %s291 = scalar_select %p290, %s18, 3
      %s292 = smul.addr %s291, 8
      %s293 = scalar_lea.vmem %s5, %s292
      %p294 = scmp.lt.s32.totalorder %s18, 3
      %s295 = scalar_select %p294, %s18, 3
      %s296 = smul.addr %s295, 8
      %s297 = scalar_lea.vmem %s6, %s296
      %v299 = vld [vmem:[%s282] sm:$0xf]
      %v300 = vld [vmem:[%s282 + $0x4] sm:$0xf]
      %v301 = vld [vmem:[%s282 + $0x8] sm:$0xf]
      %v302 = vld [vmem:[%s282 + $0xc] sm:$0xf]
      %v303 = vld [vmem:[%s2] sm:$0xf]
      %v304 = vld [vmem:[%s2 + $0x4] sm:$0xf]
      %v305 = vld [vmem:[%s2 + $0x8] sm:$0xf]
      %v306 = vld [vmem:[%s2 + $0xc] sm:$0xf]
      %v307 = vld [vmem:[%s2 + $0x10] sm:$0xf]
      %v308 = vld [vmem:[%s2 + $0x14] sm:$0xf]
      %v309 = vld [vmem:[%s2 + $0x18] sm:$0xf]
      %v310 = vld [vmem:[%s2 + $0x1c] sm:$0xf]
      %v311 = vld [vmem:[%s2 + $0x20] sm:$0xf]
      %v312 = vld [vmem:[%s2 + $0x24] sm:$0xf]
      %v313 = vld [vmem:[%s2 + $0x28] sm:$0xf]
      %v314 = vld [vmem:[%s2 + $0x2c] sm:$0xf]
      %v315 = vld [vmem:[%s2 + $0x30] sm:$0xf]
      %v316 = vld [vmem:[%s2 + $0x34] sm:$0xf]
      %v317 = vld [vmem:[%s2 + $0x38] sm:$0xf]
      %v318 = vld [vmem:[%s2 + $0x3c] sm:$0xf]
      %v323 = vunpack.c.l.b16 %v299
      %v324 = vunpack.c.l.b16 %v300
      %v325 = vunpack.c.l.b16 %v301
      %v326 = vunpack.c.l.b16 %v302
      %v327 = vpack.c.b16 %v324, %v323
      %v328 = vpack.c.b16 %v326, %v325
      %v347 = vunpack.c.l.b16 %v303
      %v348 = vunpack.c.l.b16 %v304
      %v349 = vunpack.c.l.b16 %v305
      %v350 = vunpack.c.l.b16 %v306
      %v351 = vunpack.c.l.b16 %v307
      %v352 = vunpack.c.l.b16 %v308
      %v353 = vunpack.c.l.b16 %v309
      %v354 = vunpack.c.l.b16 %v310
      %v355 = vunpack.c.l.b16 %v311
      %v356 = vunpack.c.l.b16 %v312
      %v357 = vunpack.c.l.b16 %v313
      %v358 = vunpack.c.l.b16 %v314
      %v359 = vunpack.c.l.b16 %v315
      %v360 = vunpack.c.l.b16 %v316
      %v361 = vunpack.c.l.b16 %v317
      %v362 = vunpack.c.l.b16 %v318
      %v363 = vpack.c.b16 %v348, %v347
      %v364 = vpack.c.b16 %v350, %v349
      %v365 = vpack.c.b16 %v352, %v351
      %v366 = vpack.c.b16 %v354, %v353
      %v367 = vpack.c.b16 %v356, %v355
      %v368 = vpack.c.b16 %v358, %v357
      %v369 = vpack.c.b16 %v360, %v359
      %v370 = vpack.c.b16 %v362, %v361
      %379 = vmatprep.subr.bf16.mxu0 0
      %380 = vmatpush1.bf16.msra.mxu0 %v363
      %381 = vmatprep.subr.bf16.mxu0 0
      %382 = vmatpush1.bf16.msra.mxu0 %v364
      %383 = vmatprep.subr.bf16.mxu0 0
      %384 = vmatpush1.bf16.msra.mxu0 %v365
      %385 = vmatprep.subr.bf16.mxu0 0
      %386 = vmatpush1.bf16.msra.mxu0 %v366
      %387 = vmatprep.subr.bf16.mxu0 0
      %388 = vmatpush1.bf16.msra.mxu0 %v367
      %389 = vmatprep.subr.bf16.mxu0 0
      %390 = vmatpush1.bf16.msra.mxu0 %v368
      %391 = vmatprep.subr.bf16.mxu0 0
      %392 = vmatpush1.bf16.msra.mxu0 %v369
      %393 = vmatprep.subr.bf16.mxu0 0
      %394 = vmatpush1.bf16.msra.mxu0 %v370
      %395 = vmatprep.subr.bf16.mxu0 0
      %396 = vmatpush1.bf16.msra.mxu0 0
      %397 = vmatprep.subr.bf16.mxu0 0
      %398 = vmatpush1.bf16.msra.mxu0 0
      %399 = vmatprep.subr.bf16.mxu0 0
      %400 = vmatpush1.bf16.msra.mxu0 0
      %401 = vmatprep.subr.bf16.mxu0 0
      %402 = vmatpush1.bf16.msra.mxu0 0
      %403 = vmatprep.subr.bf16.mxu0 0
      %404 = vmatpush1.bf16.msra.mxu0 0
      %405 = vmatprep.subr.bf16.mxu0 0
      %406 = vmatpush1.bf16.msra.mxu0 0
      %407 = vmatprep.subr.bf16.mxu0 0
      %408 = vmatpush1.bf16.msra.mxu0 0
      %409 = vmatprep.subr.bf16.mxu0 0
      %410 = vmatpush1.bf16.msra.mxu0 0
      %411 = vmatprep.mubr.bf16.mxu0 0
      %412 = vmatmul.mubr.bf16.gmra.mrb[0].mxu0 %v327
      %v413 = vpop.f32.mrb[0].mxu0
      %v414 = vadd.f32 0.0, %v413
      %v415 = vpop.f32.mrb[0].mxu0
      %v416 = vpop.f32.mrb[0].mxu0
      %v417 = vadd.f32 0.0, %v416
      %v418 = vpop.f32.mrb[0].mxu0
      %419 = vmatprep.mubr.bf16.mxu0 0
      %420 = vmatmul.mubr.bf16.gmra.mrb[0].mxu0 %v328
      %v421 = vpop.f32.mrb[0].mxu0
      %v422 = vadd.f32 0.0, %v421
      %v423 = vpop.f32.mrb[0].mxu0
      %v424 = vpop.f32.mrb[0].mxu0
      %v425 = vadd.f32 0.0, %v424
      %v426 = vpop.f32.mrb[0].mxu0
      %427 = vdwg.mxu0
      %v428 = vld [vmem:[%s276] sm:$0xff]
      %v429 = vld [vmem:[%s276 + $0x8] sm:$0xff]
      %v430 = vld [vmem:[%s276 + $0x10] sm:$0xff]
      %v431 = vld [vmem:[%s276 + $0x18] sm:$0xff]
      %v432 = vadd.f32 %v428, %v414
      %v433 = vadd.f32 %v429, %v417
      %v434 = vadd.f32 %v430, %v422
      %v435 = vadd.f32 %v431, %v425
      %v436 = vld [vmem:[%s3] sm:$0x1]
      %v438 = vlaneseq
      %v439 = vshrl.u32 %v438, 7
      %v440 = vsub.s32 0, %v439
      %v441 = vrot.slane %v436, %v440
      %v443 = vadd.f32 %v432, %v441
      %v444 = vadd.f32 %v433, %v441
      %v445 = vadd.f32 %v434, %v441
      %v446 = vadd.f32 %v435, %v441
      %447 = vst [vmem:[%s288] sm:$0xff] %v443
      %448 = vst [vmem:[%s288 + $0x8] sm:$0xff] %v444
      %449 = vst [vmem:[%s288 + $0x10] sm:$0xff] %v445
      %450 = vst [vmem:[%s288 + $0x18] sm:$0xff] %v446
      %v451 = vadd.f32 %v443, %v444
      %v452 = vadd.f32 %v451, %v445
      %v453 = vadd.f32 %v452, %v446
      %454 = vst [vmem:[%s293] sm:$0xff] %v453
      %v455 = vmul.f32 %v443, %v443
      %v456 = vmul.f32 %v444, %v444
      %v457 = vmul.f32 %v445, %v445
      %v458 = vmul.f32 %v446, %v446
      %v459 = vadd.f32 %v455, %v456
      %v460 = vadd.f32 %v459, %v457
      %v461 = vadd.f32 %v460, %v458
      %462 = vst [vmem:[%s297] sm:$0xff] %v461
      %s463 = smul.u32 4, %s18
      %p464 = scmp.lt.s32.totalorder %s463, 15
      %s465 = scalar_select %p464, %s463, 15
      %s466 = smul.addr %s465, 8
      %s467 = scalar_lea.vmem %s4, %s466
      %p468 = scmp.lt.s32.totalorder %s18, 3
      %s469 = scalar_select %p468, %s18, 3
      %s470 = smul.addr %s469, 8
      %s471 = scalar_lea.vmem %s5, %s470
      %p472 = scmp.lt.s32.totalorder %s18, 3
      %s473 = scalar_select %p472, %s18, 3
      %s474 = smul.addr %s473, 8
      %s475 = scalar_lea.vmem %s6, %s474
      // Predicated region
      $region37: #{fno_forward.10} parent=35 // pred_check
        %p476 = pneg %p130
      $region38: #{fno_forward.10} parent=35 // pred_check_branch
        %478 = sbr.rel (%p476) target = $region40
      $region39: #{fno_forward.10} parent=35 // pred_region
        %s479 = smul.u32 4, %s18
      $region40: #{fno_forward.10} parent=35 // pred_fallthru
        _
      // Predicated region
      $region41: #{fno_forward.10} parent=35 // pred_check
        %p480 = pneg %p156
      $region42: #{fno_forward.10} parent=35 // pred_check_branch
        %482 = sbr.rel (%p480) target = $region44
      $region43: #{fno_forward.10} parent=35 // pred_region
        _
      $region44: #{fno_forward.10} parent=35 // pred_fallthru
        _
      // Predicated region
      $region45: #{fno_forward.10} parent=35 // pred_check
        %p483 = pneg %p182
      $region46: #{fno_forward.10} parent=35 // pred_check_branch
        %485 = sbr.rel (%p483) target = $region48
      $region47: #{fno_forward.10} parent=35 // pred_region
        _
      $region48: #{fno_forward.10} parent=35 // pred_fallthru
        _
    $region36: #{fno_forward.10} parent=5 // pred_fallthru
      _
    %p486 = scmp.le.s32.totalorder 2, %s13
    // Predicated region
    $region49: #{fno_forward.10} parent=5 // pred_check
      %p487 = pneg %p486
    $region50: #{fno_forward.10} parent=5 // pred_check_branch
      %489 = sbr.rel (%p487) target = $region52
    $region51: #{fno_forward.10} parent=5 // pred_region
      %s490 = ssub.s32 %s13, 2
      // Predicated region
      $region53: #{fno_forward.10} parent=51 // pred_check
        %p491 = pneg %p136
      $region54: #{fno_forward.10} parent=51 // pred_check_branch
        %493 = sbr.rel (%p491) target = $region56
      $region55: #{fno_forward.10} parent=51 // pred_region
        %s494 = smul.u32 4, %s19
        %p495 = scmp.lt.s32.totalorder %s494, 15
        %s496 = scalar_select %p495, %s494, 15
        %s497 = smul.addr %s496, 8
        %s498 = scalar_lea.vmem %s4, %s497
      $region56: #{fno_forward.10} parent=51 // pred_fallthru
        _
      // Predicated region
      $region57: #{fno_forward.10} parent=51 // pred_check
        %p499 = pneg %p162
      $region58: #{fno_forward.10} parent=51 // pred_check_branch
        %501 = sbr.rel (%p499) target = $region60
      $region59: #{fno_forward.10} parent=51 // pred_region
        %p502 = scmp.lt.s32.totalorder %s19, 3
        %s503 = scalar_select %p502, %s19, 3
        %s504 = smul.addr %s503, 8
        %s505 = scalar_lea.vmem %s5, %s504
      $region60: #{fno_forward.10} parent=51 // pred_fallthru
        _
      // Predicated region
      $region61: #{fno_forward.10} parent=51 // pred_check
        %p506 = pneg %p188
      $region62: #{fno_forward.10} parent=51 // pred_check_branch
        %508 = sbr.rel (%p506) target = $region64
      $region63: #{fno_forward.10} parent=51 // pred_region
        %p509 = scmp.lt.s32.totalorder %s19, 3
        %s510 = scalar_select %p509, %s19, 3
        %s511 = smul.addr %s510, 8
        %s512 = scalar_lea.vmem %s6, %s511
      $region64: #{fno_forward.10} parent=51 // pred_fallthru
        _
    $region52: #{fno_forward.10} parent=5 // pred_fallthru
      _
  $region6: #{fno_forward.10} parent=0 // loop_footer
    %s17 = sadd.s32 1, %s13
  $region7: #{fno_forward.10} parent=0 // loop_footer_branch
    %12 = sbr.rel target = $region3
  $region8: #{fno_forward.10} parent=0 // loop_exit
    _

// kernel: tile.28
$region0: #{tile.28}
  #allocation0 [shape = 's32[1]{0}', space=sflag, size = 0x4, scoped, tag = 'scoped memory for tile.28']
  %s0 = inlined_call_operand.vmem [shape: f32[32], index: 0, kind: input, shape index: {}]
  %s1 = inlined_call_operand.vmem [shape: f32[4,32], index: 1, kind: output, shape index: {}]
  // Predicated region
  $region2: #{tile.28} parent=0 // pred_check
    _
  $region3: #{tile.28} parent=0 // pred_check_branch
    %3 = sbr.rel (0) target = $region5
  $region4: #{tile.28} parent=0 // pred_region
    _
  $region5: #{tile.28} parent=0 // pred_fallthru
    _
  %v4 = vld [vmem:[%s0] ss:$0 sm:$0xff]
  %5 = vst [vmem:[%s1] sm:$0xf] %v4

// kernel: tile.29
$region0: #{tile.29}
  %s0 = inlined_call_operand.vmem [shape: f32[4,32], index: 0, kind: input, shape index: {}]
  %s1 = inlined_call_operand.vmem [shape: f32[1,128], index: 1, kind: output, shape index: {}]
  $region1: #{tile.29} parent=0
    #allocation0 [shape = 'u8[4096]{0}', space=vmem, size = 0x1000, scoped, tag = 'scoped mem for output reshape']
    #allocation1 [shape = 'u8[4096]{0}', space=vmem, size = 0x1000, scoped, tag = 'scoped mem for input reshape']
    %s3 = sshllo.u32 0, 4
    %v4 = vld [vmem:[%s0] sm:%s3]
    %5 = vst [vmem:[#allocation1] sm:%s3] %v4
    %v6 = vld [vmem:[#allocation1] sm:$0x1]
    %vm7 = vcmask 261120
    %8 = vst.msk [vmem:[#allocation0] sm:$0x1] %vm7, %v6
    %s9 = scalar_lea.vmem [#allocation1], 3
    %v10 = vld [vmem:[%s9] sm:$0x1]
    %11 = vrot.lane.b32.xlu0 %v10, 96
    %v12 = vpop.permute.xlu0 %11
    %vm13 = vcmask 1048320
    %14 = vst.msk [vmem:[#allocation0] sm:$0x1] %vm13, %v12
    %s15 = scalar_lea.vmem [#allocation1], 2
    %v16 = vld [vmem:[%s15] sm:$0x1]
    %17 = vrot.lane.b32.xlu0 %v16, 64
    %v18 = vpop.permute.xlu0 %17
    %vm19 = vcmask 785920
    %20 = vst.msk [vmem:[#allocation0] sm:$0x1] %vm19, %v18
    %s21 = scalar_lea.vmem [#allocation1], 1
    %v22 = vld [vmem:[%s21] sm:$0x1]
    %23 = vrot.lane.b32.xlu0 %v22, 32
    %v24 = vpop.permute.xlu0 %23
    %vm25 = vcmask 523520
    %26 = vst.msk [vmem:[#allocation0] sm:$0x1] %vm25, %v24
    %s28 = sshllo.u32 0, 1
    %v30 = vld [vmem:[#allocation0] sm:%s28]
    %s31 = sshllo.u32 0, 1
    %32 = vst [vmem:[%s1] sm:%s31] %v30

// kernel: fno_forward.11
$region0: #{fno_forward.11}
  #allocation0 [shape = 'u32[]', space=smem, size = 0x4, offset = 0x4, fixed_abs, tag = 'smem constant byte address 0x4 - core index']
  #allocation1 [shape = 'u32[144,128]{1,0:T(1,128)}', space=vmem, size = 0x12000, scoped, tag = 'internal scratch']
  %s0 = inlined_call_operand.vmem [shape: f32[128,128], index: 0, kind: input, shape index: {}]
  %s1 = inlined_call_operand.vmem [shape: f32[1,128], index: 1, kind: input, shape index: {}]
  %s2 = inlined_call_operand.vmem [shape: f32[1,128], index: 2, kind: input, shape index: {}]
  %s3 = inlined_call_operand.vmem [shape: f32[128,128], index: 3, kind: output, shape index: {0}]
  %s4 = inlined_call_operand.vmem [shape: bf16[128,128], index: 4, kind: output, shape index: {1}]
  %5 = xla_tuple %s3, %s4
  %s6 = sld [smem:[#allocation0]]
  $region53: #{fno_forward.11} parent=0
    _
  %s8 = ssub.s32 1, %s6
  %s9 = scalar_select 0, %s8, %s6
  loop: start=0, step=1, limit=6
  $region2: #{fno_forward.11} parent=0 // loop_pre_header
    _
  $region3: #{fno_forward.11} parent=0 // loop_header
    %s11 = sphi 0, %s15
    %p12 = scmp.ge.s32.totalorder %s11, 6
    %s21 = sphi 0, %s23
    %s24 = sphi 0, %s21
    %s25 = sphi 0, %s24
    %s41 = sphi 0, %s25
    %s45 = sphi 0, %s45
    %s47 = sphi 0, %s45
    %s48 = sphi 0, %s47
    %s62 = sphi 0, %s48
    %s66 = sphi 0, %s66
    %s68 = sphi 0, %s66
    %s69 = sphi 0, %s68
    %s83 = sphi 0, %s69
    %s89 = sphi 0, %s91
    %s92 = sphi 0, %s89
    %s93 = sphi 0, %s92
    %s109 = sphi 0, %s93
    %s115 = sphi 0, %s117
    %s118 = sphi 0, %s115
    %s119 = sphi 0, %s118
    %s135 = sphi 0, %s119
  $region4: #{fno_forward.11} parent=0 // loop_header_branch
    %14 = sbr.rel (%p12) target = $region8
  $region5: #{fno_forward.11} parent=0 // loop_body
    %s16 = ssub.s32 %s11, 1
    %s17 = ssub.s32 %s11, 2
    %s18 = sadd.s32 %s11, 1
    %s19 = ssub.s32 %s11, %s18
    %p20 = scmp.eq.s32.totalorder %s19, 0
    %s22 = sadd.s32 %s21, 1
    %s23 = scalar_select %p20, %s21, %s22
    %p26 = pneg %p20
    %p27 = scmp.eq.s32.totalorder %s11, 3
    %p28 = por %p26, %p27
    %p29 = scmp.ne.s32.totalorder %s21, %s24
    %p30 = scmp.eq.s32.totalorder %s11, 0
    %p31 = por %p29, %p30
    %p32 = scmp.ne.s32.totalorder %s21, %s24
    %p33 = scmp.eq.s32.totalorder %s16, 3
    %p34 = por %p32, %p33
    %p35 = scmp.ne.s32.totalorder %s24, %s25
    %p36 = scmp.eq.s32.totalorder %s16, 0
    %p37 = por %p35, %p36
    %p38 = scmp.ne.s32.totalorder %s24, %s25
    %p39 = scmp.eq.s32.totalorder %s17, 3
    %p40 = por %p38, %p39
    %p42 = scmp.ne.s32.totalorder %s25, %s41
    %p43 = scmp.eq.s32.totalorder %s17, 0
    %p44 = por %p42, %p43
    %s46 = sadd.s32 %s45, 1
    %p49 = scmp.eq.s32.totalorder %s11, 3
    %p50 = scmp.ne.s32.totalorder %s45, %s47
    %p51 = scmp.eq.s32.totalorder %s11, 0
    %p52 = por %p50, %p51
    %p53 = scmp.ne.s32.totalorder %s45, %s47
    %p54 = scmp.eq.s32.totalorder %s16, 3
    %p55 = por %p53, %p54
    %p56 = scmp.ne.s32.totalorder %s47, %s48
    %p57 = scmp.eq.s32.totalorder %s16, 0
    %p58 = por %p56, %p57
    %p59 = scmp.ne.s32.totalorder %s47, %s48
    %p60 = scmp.eq.s32.totalorder %s17, 3
    %p61 = por %p59, %p60
    %p63 = scmp.ne.s32.totalorder %s48, %s62
    %p64 = scmp.eq.s32.totalorder %s17, 0
    %p65 = por %p63, %p64
    %s67 = sadd.s32 %s66, 1
    %p70 = scmp.eq.s32.totalorder %s11, 3
    %p71 = scmp.ne.s32.totalorder %s66, %s68
    %p72 = scmp.eq.s32.totalorder %s11, 0
    %p73 = por %p71, %p72
    %p74 = scmp.ne.s32.totalorder %s66, %s68
    %p75 = scmp.eq.s32.totalorder %s16, 3
    %p76 = por %p74, %p75
    %p77 = scmp.ne.s32.totalorder %s68, %s69
    %p78 = scmp.eq.s32.totalorder %s16, 0
    %p79 = por %p77, %p78
    %p80 = scmp.ne.s32.totalorder %s68, %s69
    %p81 = scmp.eq.s32.totalorder %s17, 3
    %p82 = por %p80, %p81
    %p84 = scmp.ne.s32.totalorder %s69, %s83
    %p85 = scmp.eq.s32.totalorder %s17, 0
    %p86 = por %p84, %p85
    %s87 = ssub.s32 %s11, %s18
    %p88 = scmp.eq.s32.totalorder %s87, 0
    %s90 = sadd.s32 %s89, 1
    %s91 = scalar_select %p88, %s89, %s90
    %p94 = pneg %p88
    %p95 = scmp.eq.s32.totalorder %s11, 3
    %p96 = por %p94, %p95
    %p97 = scmp.ne.s32.totalorder %s89, %s92
    %p98 = scmp.eq.s32.totalorder %s11, 0
    %p99 = por %p97, %p98
    %p100 = scmp.ne.s32.totalorder %s89, %s92
    %p101 = scmp.eq.s32.totalorder %s16, 3
    %p102 = por %p100, %p101
    %p103 = scmp.ne.s32.totalorder %s92, %s93
    %p104 = scmp.eq.s32.totalorder %s16, 0
    %p105 = por %p103, %p104
    %p106 = scmp.ne.s32.totalorder %s92, %s93
    %p107 = scmp.eq.s32.totalorder %s17, 3
    %p108 = por %p106, %p107
    %p110 = scmp.ne.s32.totalorder %s93, %s109
    %p111 = scmp.eq.s32.totalorder %s17, 0
    %p112 = por %p110, %p111
    %s113 = ssub.s32 %s11, %s18
    %p114 = scmp.eq.s32.totalorder %s113, 0
    %s116 = sadd.s32 %s115, 1
    %s117 = scalar_select %p114, %s115, %s116
    %p120 = pneg %p114
    %p121 = scmp.eq.s32.totalorder %s11, 3
    %p122 = por %p120, %p121
    %p123 = scmp.ne.s32.totalorder %s115, %s118
    %p124 = scmp.eq.s32.totalorder %s11, 0
    %p125 = por %p123, %p124
    %p126 = scmp.ne.s32.totalorder %s115, %s118
    %p127 = scmp.eq.s32.totalorder %s16, 3
    %p128 = por %p126, %p127
    %p129 = scmp.ne.s32.totalorder %s118, %s119
    %p130 = scmp.eq.s32.totalorder %s16, 0
    %p131 = por %p129, %p130
    %p132 = scmp.ne.s32.totalorder %s118, %s119
    %p133 = scmp.eq.s32.totalorder %s17, 3
    %p134 = por %p132, %p133
    %p136 = scmp.ne.s32.totalorder %s119, %s135
    %p137 = scmp.eq.s32.totalorder %s17, 0
    %p138 = por %p136, %p137
    %p139 = scmp.le.s32.totalorder 1, %s11
    %p140 = scmp.lt.s32.totalorder %s11, 5
    %p141 = pnand %p139, %p140
    %p142 = pneg %p141
    // Predicated region
    $region9: #{fno_forward.11} parent=5 // pred_check
      _
    $region10: #{fno_forward.11} parent=5 // pred_check_branch
      %144 = sbr.rel (%p141) target = $region12
    $region11: #{fno_forward.11} parent=5 // pred_region
      %s145 = ssub.s32 %s11, 1
      // Predicated region
      $region13: #{fno_forward.11} parent=11 // pred_check
        %p146 = pneg %p58
      $region14: #{fno_forward.11} parent=11 // pred_check_branch
        %148 = sbr.rel (%p146) target = $region16
      $region15: #{fno_forward.11} parent=11 // pred_region
        _
      $region16: #{fno_forward.11} parent=11 // pred_fallthru
        _
      // Predicated region
      $region17: #{fno_forward.11} parent=11 // pred_check
        %p149 = pneg %p79
      $region18: #{fno_forward.11} parent=11 // pred_check_branch
        %151 = sbr.rel (%p149) target = $region20
      $region19: #{fno_forward.11} parent=11 // pred_region
        _
      $region20: #{fno_forward.11} parent=11 // pred_fallthru
        _
    $region12: #{fno_forward.11} parent=5 // pred_fallthru
      _
    %p152 = scmp.lt.s32.totalorder %s11, 4
    // Predicated region
    $region21: #{fno_forward.11} parent=5 // pred_check
      %p153 = pneg %p152
    $region22: #{fno_forward.11} parent=5 // pred_check_branch
      %155 = sbr.rel (%p153) target = $region24
    $region23: #{fno_forward.11} parent=5 // pred_region
      // Predicated region
      $region25: #{fno_forward.11} parent=23 // pred_check
        %p156 = pneg %p31
      $region26: #{fno_forward.11} parent=23 // pred_check_branch
        %158 = sbr.rel (%p156) target = $region28
      $region27: #{fno_forward.11} parent=23 // pred_region
        %s159 = smul.u32 4, %s11
        %p160 = scmp.lt.s32.totalorder %s159, 15
        %s161 = scalar_select %p160, %s159, 15
        %s162 = smul.addr %s161, 8
        %s163 = scalar_lea.vmem %s0, %s162
        %s164 = smul.u32 4, %s11
      $region28: #{fno_forward.11} parent=23 // pred_fallthru
        _
    $region24: #{fno_forward.11} parent=5 // pred_fallthru
      _
    %p165 = scmp.le.s32.totalorder 1, %s11
    %p166 = scmp.lt.s32.totalorder %s11, 5
    %p167 = pnand %p165, %p166
    %p168 = pneg %p167
    // Predicated region
    $region29: #{fno_forward.11} parent=5 // pred_check
      _
    $region30: #{fno_forward.11} parent=5 // pred_check_branch
      %170 = sbr.rel (%p167) target = $region32
    $region31: #{fno_forward.11} parent=5 // pred_region
      %s171 = ssub.s32 %s11, 1
      %s172 = smul.u32 4, %s16
      %p173 = scmp.lt.s32.totalorder %s172, 15
      %s174 = scalar_select %p173, %s172, 15
      %s175 = smul.addr %s174, 8
      %s176 = scalar_lea.vmem %s0, %s175
      %p177 = pneg %p37
      %p178 = pneg %p34
      %p179 = pneg %p58
      %p180 = pneg %p55
      %p181 = pneg %p79
      %p182 = pneg %p76
      %p183 = pneg %p105
      %p184 = pneg %p102
      %s185 = smul.u32 4, %s16
      %p186 = scmp.lt.s32.totalorder %s185, 15
      %s187 = scalar_select %p186, %s185, 15
      %s188 = smul.addr %s187, 8
      %s189 = scalar_lea.vmem %s3, %s188
      %p190 = pneg %p131
      %p191 = pneg %p128
      %s192 = smul.u32 4, %s16
      %p193 = scmp.lt.s32.totalorder %s192, 15
      %s194 = scalar_select %p193, %s192, 15
      %s195 = smul.addr %s194, 4
      %s196 = scalar_lea.vmem %s4, %s195
      %s197 = smul.u32 4, %s16
      %p198 = scmp.lt.s32.totalorder %s197, 15
      %s199 = scalar_select %p198, %s197, 15
      %s200 = smul.addr %s199, 8
      %s201 = scalar_lea.vmem %s0, %s200
      %s202 = smul.u32 4, %s16
      %s203 = smul.u32 4, %s16
      %p204 = scmp.lt.s32.totalorder %s203, 15
      %s205 = scalar_select %p204, %s203, 15
      %s206 = smul.addr %s205, 8
      %s207 = scalar_lea.vmem %s3, %s206
      %s208 = smul.u32 4, %s16
      %s209 = smul.u32 4, %s16
      %p210 = scmp.lt.s32.totalorder %s209, 15
      %s211 = scalar_select %p210, %s209, 15
      %s212 = smul.addr %s211, 4
      %s213 = scalar_lea.vmem %s4, %s212
      %s214 = smul.u32 4, %s16
      %v215 = vld [vmem:[%s201] sm:$0xff]
      %v216 = vld [vmem:[%s201 + $0x8] sm:$0xff]
      %v217 = vld [vmem:[%s201 + $0x10] sm:$0xff]
      %v218 = vld [vmem:[%s201 + $0x18] sm:$0xff]
      %v219 = vld [vmem:[%s1] sm:$0x1]
      %v221 = vlaneseq
      %v222 = vshrl.u32 %v221, 7
      %v223 = vsub.s32 0, %v222
      %v224 = vrot.slane %v219, %v223
      %v226 = vmul.f32 %v215, %v224
      %v227 = vmul.f32 %v216, %v224
      %v228 = vmul.f32 %v217, %v224
      %v229 = vmul.f32 %v218, %v224
      %v230 = vld [vmem:[%s2] sm:$0x1]
      %v232 = vlaneseq
      %v233 = vshrl.u32 %v232, 7
      %v234 = vsub.s32 0, %v233
      %v235 = vrot.slane %v230, %v234
      %v237 = vadd.f32 %v226, %v235
      %v238 = vadd.f32 %v227, %v235
      %v239 = vadd.f32 %v228, %v235
      %v240 = vadd.f32 %v229, %v235
      %v241 = vmax.f32 %v237, 0.0
      %v242 = vmax.f32 %v238, 0.0
      %v243 = vmax.f32 %v239, 0.0
      %v244 = vmax.f32 %v240, 0.0
      %245 = vst [vmem:[%s207] sm:$0xff] %v241
      %246 = vst [vmem:[%s207 + $0x8] sm:$0xff] %v242
      %247 = vst [vmem:[%s207 + $0x10] sm:$0xff] %v243
      %248 = vst [vmem:[%s207 + $0x18] sm:$0xff] %v244
      %v249 = vpack.c.bf16 %v242, %v241
      %v250 = vpack.c.bf16 %v244, %v243
      %v253 = vunpack.c.l.b16 %v249
      %v254 = vunpack.c.h.b16 %v249
      %v255 = vunpack.c.l.b16 %v250
      %v256 = vunpack.c.h.b16 %v250
      %v257 = vpack.c.b16 %v253, %v253
      %v258 = vpack.c.b16 %v254, %v254
      %v259 = vpack.c.b16 %v255, %v255
      %v260 = vpack.c.b16 %v256, %v256
      %265 = vst [vmem:[%s213] sm:$0xf] %v257
      %266 = vst [vmem:[%s213 + $0x4] sm:$0xf] %v258
      %267 = vst [vmem:[%s213 + $0x8] sm:$0xf] %v259
      %268 = vst [vmem:[%s213 + $0xc] sm:$0xf] %v260
      %s269 = smul.u32 4, %s16
      %p270 = scmp.lt.s32.totalorder %s269, 15
      %s271 = scalar_select %p270, %s269, 15
      %s272 = smul.addr %s271, 8
      %s273 = scalar_lea.vmem %s3, %s272
      %s274 = smul.u32 4, %s16
      %p275 = scmp.lt.s32.totalorder %s274, 15
      %s276 = scalar_select %p275, %s274, 15
      %s277 = smul.addr %s276, 4
      %s278 = scalar_lea.vmem %s4, %s277
      // Predicated region
      $region33: #{fno_forward.11} parent=31 // pred_check
        %p279 = pneg %p102
      $region34: #{fno_forward.11} parent=31 // pred_check_branch
        %281 = sbr.rel (%p279) target = $region36
      $region35: #{fno_forward.11} parent=31 // pred_region
        %s282 = smul.u32 4, %s16
      $region36: #{fno_forward.11} parent=31 // pred_fallthru
        _
      // Predicated region
      $region37: #{fno_forward.11} parent=31 // pred_check
        %p283 = pneg %p128
      $region38: #{fno_forward.11} parent=31 // pred_check_branch
        %285 = sbr.rel (%p283) target = $region40
      $region39: #{fno_forward.11} parent=31 // pred_region
        %s286 = smul.u32 4, %s16
      $region40: #{fno_forward.11} parent=31 // pred_fallthru
        _
    $region32: #{fno_forward.11} parent=5 // pred_fallthru
      _
    %p287 = scmp.le.s32.totalorder 2, %s11
    // Predicated region
    $region41: #{fno_forward.11} parent=5 // pred_check
      %p288 = pneg %p287
    $region42: #{fno_forward.11} parent=5 // pred_check_branch
      %290 = sbr.rel (%p288) target = $region44
    $region43: #{fno_forward.11} parent=5 // pred_region
      %s291 = ssub.s32 %s11, 2
      // Predicated region
      $region45: #{fno_forward.11} parent=43 // pred_check
        %p292 = pneg %p108
      $region46: #{fno_forward.11} parent=43 // pred_check_branch
        %294 = sbr.rel (%p292) target = $region48
      $region47: #{fno_forward.11} parent=43 // pred_region
        %s295 = smul.u32 4, %s17
        %p296 = scmp.lt.s32.totalorder %s295, 15
        %s297 = scalar_select %p296, %s295, 15
        %s298 = smul.addr %s297, 8
        %s299 = scalar_lea.vmem %s3, %s298
      $region48: #{fno_forward.11} parent=43 // pred_fallthru
        _
      // Predicated region
      $region49: #{fno_forward.11} parent=43 // pred_check
        %p300 = pneg %p134
      $region50: #{fno_forward.11} parent=43 // pred_check_branch
        %302 = sbr.rel (%p300) target = $region52
      $region51: #{fno_forward.11} parent=43 // pred_region
        %s303 = smul.u32 4, %s17
        %p304 = scmp.lt.s32.totalorder %s303, 15
        %s305 = scalar_select %p304, %s303, 15
        %s306 = smul.addr %s305, 4
        %s307 = scalar_lea.vmem %s4, %s306
      $region52: #{fno_forward.11} parent=43 // pred_fallthru
        _
    $region44: #{fno_forward.11} parent=5 // pred_fallthru
      _
  $region6: #{fno_forward.11} parent=0 // loop_footer
    %s15 = sadd.s32 1, %s11
  $region7: #{fno_forward.11} parent=0 // loop_footer_branch
    %10 = sbr.rel target = $region3
  $region8: #{fno_forward.11} parent=0 // loop_exit
    _

// kernel: fno_forward.14
$region0: #{fno_forward.14}
  #allocation0 [shape = 'u32[]', space=smem, size = 0x4, offset = 0x4, fixed_abs, tag = 'smem constant byte address 0x4 - core index']
  #allocation1 [shape = 'u32[144,128]{1,0:T(1,128)}', space=vmem, size = 0x12000, scoped, tag = 'internal scratch']
  %s0 = inlined_call_operand.vmem [shape: f32[128,128], index: 0, kind: input, shape index: {}]
  %s1 = inlined_call_operand.vmem [shape: f32[1,128], index: 1, kind: input, shape index: {}]
  %s2 = inlined_call_operand.vmem [shape: f32[1,128], index: 2, kind: input, shape index: {}]
  %s3 = inlined_call_operand.hbm [shape: f32[128,128], index: 3, kind: output, shape index: {0}]
  %s4 = inlined_call_operand.vmem [shape: bf16[128,128], index: 4, kind: output, shape index: {1}]
  %5 = xla_tuple %s3, %s4
  %s6 = sld [smem:[#allocation0]]
  $region53: #{fno_forward.14} parent=0
    _
  %s8 = ssub.s32 1, %s6
  %s9 = scalar_select 0, %s8, %s6
  $region1: #{fno_forward.14} parent=0
    #allocation2 [shape = 'u8[32768]{0}', space=vmem, size = 0x8000, scoped, tag = 'output window, operand 0']
    #allocation3 [shape = 's32[2]{0}', space=sflag, size = 0x8, scoped, tag = 'scoped memory for fno_forward.14']
    %10 = vsyncpa [#allocation3], 0
    %s11 = scalar_lea.sflag [#allocation3], 1
    %12 = vsyncpa %s11, 0
    loop: start=0, step=1, limit=6
    $region2: #{fno_forward.14} parent=1 // loop_pre_header
      _
    $region3: #{fno_forward.14} parent=1 // loop_header
      %s14 = sphi 0, %s18
      %p15 = scmp.ge.s32.totalorder %s14, 6
      %s24 = sphi 0, %s26
      %s27 = sphi 0, %s24
      %s28 = sphi 0, %s27
      %s44 = sphi 0, %s28
      %s48 = sphi 0, %s48
      %s50 = sphi 0, %s48
      %s51 = sphi 0, %s50
      %s65 = sphi 0, %s51
      %s69 = sphi 0, %s69
      %s71 = sphi 0, %s69
      %s72 = sphi 0, %s71
      %s86 = sphi 0, %s72
      %s92 = sphi 0, %s94
      %s95 = sphi 0, %s92
      %s96 = sphi 0, %s95
      %s112 = sphi 0, %s96
      %s118 = sphi 0, %s120
      %s121 = sphi 0, %s118
      %s122 = sphi 0, %s121
      %s138 = sphi 0, %s122
    $region4: #{fno_forward.14} parent=1 // loop_header_branch
      %17 = sbr.rel (%p15) target = $region8
    $region5: #{fno_forward.14} parent=1 // loop_body
      %s19 = ssub.s32 %s14, 1
      %s20 = ssub.s32 %s14, 2
      %s21 = sadd.s32 %s14, 1
      %s22 = ssub.s32 %s14, %s21
      %p23 = scmp.eq.s32.totalorder %s22, 0
      %s25 = sadd.s32 %s24, 1
      %s26 = scalar_select %p23, %s24, %s25
      %p29 = pneg %p23
      %p30 = scmp.eq.s32.totalorder %s14, 3
      %p31 = por %p29, %p30
      %p32 = scmp.ne.s32.totalorder %s24, %s27
      %p33 = scmp.eq.s32.totalorder %s14, 0
      %p34 = por %p32, %p33
      %p35 = scmp.ne.s32.totalorder %s24, %s27
      %p36 = scmp.eq.s32.totalorder %s19, 3
      %p37 = por %p35, %p36
      %p38 = scmp.ne.s32.totalorder %s27, %s28
      %p39 = scmp.eq.s32.totalorder %s19, 0
      %p40 = por %p38, %p39
      %p41 = scmp.ne.s32.totalorder %s27, %s28
      %p42 = scmp.eq.s32.totalorder %s20, 3
      %p43 = por %p41, %p42
      %p45 = scmp.ne.s32.totalorder %s28, %s44
      %p46 = scmp.eq.s32.totalorder %s20, 0
      %p47 = por %p45, %p46
      %s49 = sadd.s32 %s48, 1
      %p52 = scmp.eq.s32.totalorder %s14, 3
      %p53 = scmp.ne.s32.totalorder %s48, %s50
      %p54 = scmp.eq.s32.totalorder %s14, 0
      %p55 = por %p53, %p54
      %p56 = scmp.ne.s32.totalorder %s48, %s50
      %p57 = scmp.eq.s32.totalorder %s19, 3
      %p58 = por %p56, %p57
      %p59 = scmp.ne.s32.totalorder %s50, %s51
      %p60 = scmp.eq.s32.totalorder %s19, 0
      %p61 = por %p59, %p60
      %p62 = scmp.ne.s32.totalorder %s50, %s51
      %p63 = scmp.eq.s32.totalorder %s20, 3
      %p64 = por %p62, %p63
      %p66 = scmp.ne.s32.totalorder %s51, %s65
      %p67 = scmp.eq.s32.totalorder %s20, 0
      %p68 = por %p66, %p67
      %s70 = sadd.s32 %s69, 1
      %p73 = scmp.eq.s32.totalorder %s14, 3
      %p74 = scmp.ne.s32.totalorder %s69, %s71
      %p75 = scmp.eq.s32.totalorder %s14, 0
      %p76 = por %p74, %p75
      %p77 = scmp.ne.s32.totalorder %s69, %s71
      %p78 = scmp.eq.s32.totalorder %s19, 3
      %p79 = por %p77, %p78
      %p80 = scmp.ne.s32.totalorder %s71, %s72
      %p81 = scmp.eq.s32.totalorder %s19, 0
      %p82 = por %p80, %p81
      %p83 = scmp.ne.s32.totalorder %s71, %s72
      %p84 = scmp.eq.s32.totalorder %s20, 3
      %p85 = por %p83, %p84
      %p87 = scmp.ne.s32.totalorder %s72, %s86
      %p88 = scmp.eq.s32.totalorder %s20, 0
      %p89 = por %p87, %p88
      %s90 = ssub.s32 %s14, %s21
      %p91 = scmp.eq.s32.totalorder %s90, 0
      %s93 = sadd.s32 %s92, 1
      %s94 = scalar_select %p91, %s92, %s93
      %p97 = pneg %p91
      %p98 = scmp.eq.s32.totalorder %s14, 3
      %p99 = por %p97, %p98
      %p100 = scmp.ne.s32.totalorder %s92, %s95
      %p101 = scmp.eq.s32.totalorder %s14, 0
      %p102 = por %p100, %p101
      %p103 = scmp.ne.s32.totalorder %s92, %s95
      %p104 = scmp.eq.s32.totalorder %s19, 3
      %p105 = por %p103, %p104
      %p106 = scmp.ne.s32.totalorder %s95, %s96
      %p107 = scmp.eq.s32.totalorder %s19, 0
      %p108 = por %p106, %p107
      %p109 = scmp.ne.s32.totalorder %s95, %s96
      %p110 = scmp.eq.s32.totalorder %s20, 3
      %p111 = por %p109, %p110
      %p113 = scmp.ne.s32.totalorder %s96, %s112
      %p114 = scmp.eq.s32.totalorder %s20, 0
      %p115 = por %p113, %p114
      %s116 = ssub.s32 %s14, %s21
      %p117 = scmp.eq.s32.totalorder %s116, 0
      %s119 = sadd.s32 %s118, 1
      %s120 = scalar_select %p117, %s118, %s119
      %p123 = pneg %p117
      %p124 = scmp.eq.s32.totalorder %s14, 3
      %p125 = por %p123, %p124
      %p126 = scmp.ne.s32.totalorder %s118, %s121
      %p127 = scmp.eq.s32.totalorder %s14, 0
      %p128 = por %p126, %p127
      %p129 = scmp.ne.s32.totalorder %s118, %s121
      %p130 = scmp.eq.s32.totalorder %s19, 3
      %p131 = por %p129, %p130
      %p132 = scmp.ne.s32.totalorder %s121, %s122
      %p133 = scmp.eq.s32.totalorder %s19, 0
      %p134 = por %p132, %p133
      %p135 = scmp.ne.s32.totalorder %s121, %s122
      %p136 = scmp.eq.s32.totalorder %s20, 3
      %p137 = por %p135, %p136
      %p139 = scmp.ne.s32.totalorder %s122, %s138
      %p140 = scmp.eq.s32.totalorder %s20, 0
      %p141 = por %p139, %p140
      %p142 = scmp.le.s32.totalorder 1, %s14
      %p143 = scmp.lt.s32.totalorder %s14, 5
      %p144 = pnand %p142, %p143
      %p145 = pneg %p144
      // Predicated region
      $region9: #{fno_forward.14} parent=5 // pred_check
        _
      $region10: #{fno_forward.14} parent=5 // pred_check_branch
        %147 = sbr.rel (%p144) target = $region12
      $region11: #{fno_forward.14} parent=5 // pred_region
        %s148 = ssub.s32 %s14, 1
        // Predicated region
        $region13: #{fno_forward.14} parent=11 // pred_check
          %p149 = pneg %p61
        $region14: #{fno_forward.14} parent=11 // pred_check_branch
          %151 = sbr.rel (%p149) target = $region16
        $region15: #{fno_forward.14} parent=11 // pred_region
          _
        $region16: #{fno_forward.14} parent=11 // pred_fallthru
          _
        // Predicated region
        $region17: #{fno_forward.14} parent=11 // pred_check
          %p152 = pneg %p82
        $region18: #{fno_forward.14} parent=11 // pred_check_branch
          %154 = sbr.rel (%p152) target = $region20
        $region19: #{fno_forward.14} parent=11 // pred_region
          _
        $region20: #{fno_forward.14} parent=11 // pred_fallthru
          _
      $region12: #{fno_forward.14} parent=5 // pred_fallthru
        _
      %p155 = scmp.lt.s32.totalorder %s14, 4
      // Predicated region
      $region21: #{fno_forward.14} parent=5 // pred_check
        %p156 = pneg %p155
      $region22: #{fno_forward.14} parent=5 // pred_check_branch
        %158 = sbr.rel (%p156) target = $region24
      $region23: #{fno_forward.14} parent=5 // pred_region
        // Predicated region
        $region25: #{fno_forward.14} parent=23 // pred_check
          %p159 = pneg %p34
        $region26: #{fno_forward.14} parent=23 // pred_check_branch
          %161 = sbr.rel (%p159) target = $region28
        $region27: #{fno_forward.14} parent=23 // pred_region
          %s162 = smul.u32 4, %s14
          %p163 = scmp.lt.s32.totalorder %s162, 15
          %s164 = scalar_select %p163, %s162, 15
          %s165 = smul.addr %s164, 8
          %s166 = scalar_lea.vmem %s0, %s165
          %s167 = smul.u32 4, %s14
        $region28: #{fno_forward.14} parent=23 // pred_fallthru
          _
      $region24: #{fno_forward.14} parent=5 // pred_fallthru
        _
      %p168 = scmp.le.s32.totalorder 1, %s14
      %p169 = scmp.lt.s32.totalorder %s14, 5
      %p170 = pnand %p168, %p169
      %p171 = pneg %p170
      // Predicated region
      $region29: #{fno_forward.14} parent=5 // pred_check
        _
      $region30: #{fno_forward.14} parent=5 // pred_check_branch
        %173 = sbr.rel (%p170) target = $region32
      $region31: #{fno_forward.14} parent=5 // pred_region
        %s174 = ssub.s32 %s14, 1
        %s175 = smul.u32 4, %s19
        %p176 = scmp.lt.s32.totalorder %s175, 15
        %s177 = scalar_select %p176, %s175, 15
        %s178 = smul.addr %s177, 8
        %s179 = scalar_lea.vmem %s0, %s178
        %p180 = pneg %p40
        %p181 = pneg %p37
        %p182 = pneg %p61
        %p183 = pneg %p58
        %p184 = pneg %p82
        %p185 = pneg %p79
        %p186 = pneg %p108
        %p187 = pneg %p105
        %s188 = sand.u32 %s95, 1
        %s189 = scalar_lea.sflag [#allocation3], %s188
        %s190 = sand.u32 %s95, 1
        %s191 = smul.addr %s190, 32
        %s192 = scalar_lea.vmem [#allocation2], %s191
        %p193 = pneg %p134
        %p194 = pneg %p131
        %s195 = smul.u32 4, %s19
        %p196 = scmp.lt.s32.totalorder %s195, 15
        %s197 = scalar_select %p196, %s195, 15
        %s198 = smul.addr %s197, 4
        %s199 = scalar_lea.vmem %s4, %s198
        %s200 = smul.u32 4, %s19
        %p201 = scmp.lt.s32.totalorder %s200, 15
        %s202 = scalar_select %p201, %s200, 15
        %s203 = smul.addr %s202, 8
        %s204 = scalar_lea.vmem %s0, %s203
        %s205 = smul.u32 4, %s19
        %s206 = smul.u32 4, %s19
        %s207 = smul.u32 4, %s19
        %p208 = scmp.lt.s32.totalorder %s207, 15
        %s209 = scalar_select %p208, %s207, 15
        %s210 = smul.addr %s209, 4
        %s211 = scalar_lea.vmem %s4, %s210
        %s212 = smul.u32 4, %s19
        %v213 = vld [vmem:[%s204] sm:$0xff]
        %v214 = vld [vmem:[%s204 + $0x8] sm:$0xff]
        %v215 = vld [vmem:[%s204 + $0x10] sm:$0xff]
        %v216 = vld [vmem:[%s204 + $0x18] sm:$0xff]
        %v217 = vld [vmem:[%s1] sm:$0x1]
        %v219 = vlaneseq
        %v220 = vshrl.u32 %v219, 7
        %v221 = vsub.s32 0, %v220
        %v222 = vrot.slane %v217, %v221
        %v224 = vmul.f32 %v213, %v222
        %v225 = vmul.f32 %v214, %v222
        %v226 = vmul.f32 %v215, %v222
        %v227 = vmul.f32 %v216, %v222
        %v228 = vld [vmem:[%s2] sm:$0x1]
        %v230 = vlaneseq
        %v231 = vshrl.u32 %v230, 7
        %v232 = vsub.s32 0, %v231
        %v233 = vrot.slane %v228, %v232
        %v235 = vadd.f32 %v224, %v233
        %v236 = vadd.f32 %v225, %v233
        %v237 = vadd.f32 %v226, %v233
        %v238 = vadd.f32 %v227, %v233
        %239 = vst [vmem:[%s192] sm:$0xff] %v235
        %240 = vst [vmem:[%s192 + $0x8] sm:$0xff] %v236
        %241 = vst [vmem:[%s192 + $0x10] sm:$0xff] %v237
        %242 = vst [vmem:[%s192 + $0x18] sm:$0xff] %v238
        %v243 = vpack.c.bf16 %v236, %v235
        %v244 = vpack.c.bf16 %v238, %v237
        %v247 = vunpack.c.l.b16 %v243
        %v248 = vunpack.c.h.b16 %v243
        %v249 = vunpack.c.l.b16 %v244
        %v250 = vunpack.c.h.b16 %v244
        %v251 = vpack.c.b16 %v247, %v247
        %v252 = vpack.c.b16 %v248, %v248
        %v253 = vpack.c.b16 %v249, %v249
        %v254 = vpack.c.b16 %v250, %v250
        %259 = vst [vmem:[%s211] sm:$0xf] %v251
        %260 = vst [vmem:[%s211 + $0x4] sm:$0xf] %v252
        %261 = vst [vmem:[%s211 + $0x8] sm:$0xf] %v253
        %262 = vst [vmem:[%s211 + $0xc] sm:$0xf] %v254
        %s263 = sand.u32 %s95, 1
        %s264 = scalar_lea.sflag [#allocation3], %s263
        %s265 = sand.u32 %s95, 1
        %s266 = smul.addr %s265, 32
        %s267 = scalar_lea.vmem [#allocation2], %s266
        %s268 = smul.u32 4, %s19
        %p269 = scmp.lt.s32.totalorder %s268, 15
        %s270 = scalar_select %p269, %s268, 15
        %s271 = smul.addr %s270, 4
        %s272 = scalar_lea.vmem %s4, %s271
        // Predicated region
        $region33: #{fno_forward.14} parent=31 // pred_check
          %p273 = pneg %p105
        $region34: #{fno_forward.14} parent=31 // pred_check_branch
          %275 = sbr.rel (%p273) target = $region36
        $region35: #{fno_forward.14} parent=31 // pred_region
          %s276 = smul.u32 4, %s19
          %s278 = ssub.s32 512, 512
          %279 = vsyncadd %s264, %s278
          %s280 = smul.addr %s276, 128
          %s281 = scalar_lea.hbm %s3, %s280
          %s282 = sshll.u32 %s267, 4
          %s283 = int_to_ptr.vmem [resolvable:$true] %s282
          %288 = dma.vmem_to_hbm [thread:$0]  %s283, 512, %s281, %s264, 128, 128, 8
        $region36: #{fno_forward.14} parent=31 // pred_fallthru
          _
        // Predicated region
        $region37: #{fno_forward.14} parent=31 // pred_check
          %p289 = pneg %p131
        $region38: #{fno_forward.14} parent=31 // pred_check_branch
          %291 = sbr.rel (%p289) target = $region40
        $region39: #{fno_forward.14} parent=31 // pred_region
          %s292 = smul.u32 4, %s19
        $region40: #{fno_forward.14} parent=31 // pred_fallthru
          _
      $region32: #{fno_forward.14} parent=5 // pred_fallthru
        _
      %p293 = scmp.le.s32.totalorder 2, %s14
      // Predicated region
      $region41: #{fno_forward.14} parent=5 // pred_check
        %p294 = pneg %p293
      $region42: #{fno_forward.14} parent=5 // pred_check_branch
        %296 = sbr.rel (%p294) target = $region44
      $region43: #{fno_forward.14} parent=5 // pred_region
        %s297 = ssub.s32 %s14, 2
        // Predicated region
        $region45: #{fno_forward.14} parent=43 // pred_check
          %p298 = pneg %p111
        $region46: #{fno_forward.14} parent=43 // pred_check_branch
          %300 = sbr.rel (%p298) target = $region48
        $region47: #{fno_forward.14} parent=43 // pred_region
          %s301 = sand.u32 %s96, 1
          %s302 = scalar_lea.sflag [#allocation3], %s301
          %s303 = sand.u32 %s96, 1
          %s304 = smul.addr %s303, 32
          %s305 = scalar_lea.vmem [#allocation2], %s304
          %306 = dma.done %s302, 512
        $region48: #{fno_forward.14} parent=43 // pred_fallthru
          _
        // Predicated region
        $region49: #{fno_forward.14} parent=43 // pred_check
          %p307 = pneg %p137
        $region50: #{fno_forward.14} parent=43 // pred_check_branch
          %309 = sbr.rel (%p307) target = $region52
        $region51: #{fno_forward.14} parent=43 // pred_region
          %s310 = smul.u32 4, %s20
          %p311 = scmp.lt.s32.totalorder %s310, 15
          %s312 = scalar_select %p311, %s310, 15
          %s313 = smul.addr %s312, 4
          %s314 = scalar_lea.vmem %s4, %s313
        $region52: #{fno_forward.14} parent=43 // pred_fallthru
          _
      $region44: #{fno_forward.14} parent=5 // pred_fallthru
        _
    $region6: #{fno_forward.14} parent=1 // loop_footer
      %s18 = sadd.s32 1, %s14
    $region7: #{fno_forward.14} parent=1 // loop_footer_branch
      %13 = sbr.rel target = $region3
    $region8: #{fno_forward.14} parent=1 // loop_exit
      _
    %315 = vsyncpa [#allocation3], 1
    %s316 = scalar_lea.sflag [#allocation3], 1
    %317 = vsyncpa %s316, 1

// kernel: fno_forward.15
$region0: #{fno_forward.15}
  #allocation0 [shape = 'u32[]', space=smem, size = 0x4, offset = 0x4, fixed_abs, tag = 'smem constant byte address 0x4 - core index']
  #allocation1 [shape = 'u32[144,128]{1,0:T(1,128)}', space=vmem, size = 0x12000, scoped, tag = 'internal scratch']
  %s0 = inlined_call_operand.vmem [shape: bf16[512,32], index: 0, kind: input, shape index: {}]
  %s1 = inlined_call_operand.vmem [shape: bf16[32,128], index: 1, kind: input, shape index: {}]
  %s2 = inlined_call_operand.vmem [shape: f32[1,128], index: 2, kind: input, shape index: {}]
  %s3 = inlined_call_operand.vmem [shape: bf16[128,128], index: 3, kind: input, shape index: {}]
  %s4 = inlined_call_operand.vmem [shape: f32[1,128], index: 4, kind: input, shape index: {}]
  %s5 = inlined_call_operand.vmem [shape: f32[512,128], index: 5, kind: output, shape index: {}]
  %s6 = sld [smem:[#allocation0]]
  $region53: #{fno_forward.15} parent=0
    _
  %s8 = ssub.s32 1, %s6
  %s9 = scalar_select 0, %s8, %s6
  loop: start=0, step=1, limit=6
  $region2: #{fno_forward.15} parent=0 // loop_pre_header
    _
  $region3: #{fno_forward.15} parent=0 // loop_header
    %s11 = sphi 0, %s15
    %p12 = scmp.ge.s32.totalorder %s11, 6
    %s21 = sphi 0, %s23
    %s24 = sphi 0, %s21
    %s25 = sphi 0, %s24
    %s41 = sphi 0, %s25
    %s45 = sphi 0, %s45
    %s47 = sphi 0, %s45
    %s48 = sphi 0, %s47
    %s62 = sphi 0, %s48
    %s66 = sphi 0, %s66
    %s68 = sphi 0, %s66
    %s69 = sphi 0, %s68
    %s83 = sphi 0, %s69
    %s87 = sphi 0, %s87
    %s89 = sphi 0, %s87
    %s90 = sphi 0, %s89
    %s104 = sphi 0, %s90
    %s108 = sphi 0, %s108
    %s110 = sphi 0, %s108
    %s111 = sphi 0, %s110
    %s125 = sphi 0, %s111
    %s131 = sphi 0, %s133
    %s134 = sphi 0, %s131
    %s135 = sphi 0, %s134
    %s151 = sphi 0, %s135
  $region4: #{fno_forward.15} parent=0 // loop_header_branch
    %14 = sbr.rel (%p12) target = $region8
  $region5: #{fno_forward.15} parent=0 // loop_body
    %s16 = ssub.s32 %s11, 1
    %s17 = ssub.s32 %s11, 2
    %s18 = sadd.s32 %s11, 1
    %s19 = ssub.s32 %s11, %s18
    %p20 = scmp.eq.s32.totalorder %s19, 0
    %s22 = sadd.s32 %s21, 1
    %s23 = scalar_select %p20, %s21, %s22
    %p26 = pneg %p20
    %p27 = scmp.eq.s32.totalorder %s11, 3
    %p28 = por %p26, %p27
    %p29 = scmp.ne.s32.totalorder %s21, %s24
    %p30 = scmp.eq.s32.totalorder %s11, 0
    %p31 = por %p29, %p30
    %p32 = scmp.ne.s32.totalorder %s21, %s24
    %p33 = scmp.eq.s32.totalorder %s16, 3
    %p34 = por %p32, %p33
    %p35 = scmp.ne.s32.totalorder %s24, %s25
    %p36 = scmp.eq.s32.totalorder %s16, 0
    %p37 = por %p35, %p36
    %p38 = scmp.ne.s32.totalorder %s24, %s25
    %p39 = scmp.eq.s32.totalorder %s17, 3
    %p40 = por %p38, %p39
    %p42 = scmp.ne.s32.totalorder %s25, %s41
    %p43 = scmp.eq.s32.totalorder %s17, 0
    %p44 = por %p42, %p43
    %s46 = sadd.s32 %s45, 1
    %p49 = scmp.eq.s32.totalorder %s11, 3
    %p50 = scmp.ne.s32.totalorder %s45, %s47
    %p51 = scmp.eq.s32.totalorder %s11, 0
    %p52 = por %p50, %p51
    %p53 = scmp.ne.s32.totalorder %s45, %s47
    %p54 = scmp.eq.s32.totalorder %s16, 3
    %p55 = por %p53, %p54
    %p56 = scmp.ne.s32.totalorder %s47, %s48
    %p57 = scmp.eq.s32.totalorder %s16, 0
    %p58 = por %p56, %p57
    %p59 = scmp.ne.s32.totalorder %s47, %s48
    %p60 = scmp.eq.s32.totalorder %s17, 3
    %p61 = por %p59, %p60
    %p63 = scmp.ne.s32.totalorder %s48, %s62
    %p64 = scmp.eq.s32.totalorder %s17, 0
    %p65 = por %p63, %p64
    %s67 = sadd.s32 %s66, 1
    %p70 = scmp.eq.s32.totalorder %s11, 3
    %p71 = scmp.ne.s32.totalorder %s66, %s68
    %p72 = scmp.eq.s32.totalorder %s11, 0
    %p73 = por %p71, %p72
    %p74 = scmp.ne.s32.totalorder %s66, %s68
    %p75 = scmp.eq.s32.totalorder %s16, 3
    %p76 = por %p74, %p75
    %p77 = scmp.ne.s32.totalorder %s68, %s69
    %p78 = scmp.eq.s32.totalorder %s16, 0
    %p79 = por %p77, %p78
    %p80 = scmp.ne.s32.totalorder %s68, %s69
    %p81 = scmp.eq.s32.totalorder %s17, 3
    %p82 = por %p80, %p81
    %p84 = scmp.ne.s32.totalorder %s69, %s83
    %p85 = scmp.eq.s32.totalorder %s17, 0
    %p86 = por %p84, %p85
    %s88 = sadd.s32 %s87, 1
    %p91 = scmp.eq.s32.totalorder %s11, 3
    %p92 = scmp.ne.s32.totalorder %s87, %s89
    %p93 = scmp.eq.s32.totalorder %s11, 0
    %p94 = por %p92, %p93
    %p95 = scmp.ne.s32.totalorder %s87, %s89
    %p96 = scmp.eq.s32.totalorder %s16, 3
    %p97 = por %p95, %p96
    %p98 = scmp.ne.s32.totalorder %s89, %s90
    %p99 = scmp.eq.s32.totalorder %s16, 0
    %p100 = por %p98, %p99
    %p101 = scmp.ne.s32.totalorder %s89, %s90
    %p102 = scmp.eq.s32.totalorder %s17, 3
    %p103 = por %p101, %p102
    %p105 = scmp.ne.s32.totalorder %s90, %s104
    %p106 = scmp.eq.s32.totalorder %s17, 0
    %p107 = por %p105, %p106
    %s109 = sadd.s32 %s108, 1
    %p112 = scmp.eq.s32.totalorder %s11, 3
    %p113 = scmp.ne.s32.totalorder %s108, %s110
    %p114 = scmp.eq.s32.totalorder %s11, 0
    %p115 = por %p113, %p114
    %p116 = scmp.ne.s32.totalorder %s108, %s110
    %p117 = scmp.eq.s32.totalorder %s16, 3
    %p118 = por %p116, %p117
    %p119 = scmp.ne.s32.totalorder %s110, %s111
    %p120 = scmp.eq.s32.totalorder %s16, 0
    %p121 = por %p119, %p120
    %p122 = scmp.ne.s32.totalorder %s110, %s111
    %p123 = scmp.eq.s32.totalorder %s17, 3
    %p124 = por %p122, %p123
    %p126 = scmp.ne.s32.totalorder %s111, %s125
    %p127 = scmp.eq.s32.totalorder %s17, 0
    %p128 = por %p126, %p127
    %s129 = ssub.s32 %s11, %s18
    %p130 = scmp.eq.s32.totalorder %s129, 0
    %s132 = sadd.s32 %s131, 1
    %s133 = scalar_select %p130, %s131, %s132
    %p136 = pneg %p130
    %p137 = scmp.eq.s32.totalorder %s11, 3
    %p138 = por %p136, %p137
    %p139 = scmp.ne.s32.totalorder %s131, %s134
    %p140 = scmp.eq.s32.totalorder %s11, 0
    %p141 = por %p139, %p140
    %p142 = scmp.ne.s32.totalorder %s131, %s134
    %p143 = scmp.eq.s32.totalorder %s16, 3
    %p144 = por %p142, %p143
    %p145 = scmp.ne.s32.totalorder %s134, %s135
    %p146 = scmp.eq.s32.totalorder %s16, 0
    %p147 = por %p145, %p146
    %p148 = scmp.ne.s32.totalorder %s134, %s135
    %p149 = scmp.eq.s32.totalorder %s17, 3
    %p150 = por %p148, %p149
    %p152 = scmp.ne.s32.totalorder %s135, %s151
    %p153 = scmp.eq.s32.totalorder %s17, 0
    %p154 = por %p152, %p153
    %p155 = scmp.le.s32.totalorder 1, %s11
    %p156 = scmp.lt.s32.totalorder %s11, 5
    %p157 = pnand %p155, %p156
    %p158 = pneg %p157
    // Predicated region
    $region9: #{fno_forward.15} parent=5 // pred_check
      _
    $region10: #{fno_forward.15} parent=5 // pred_check_branch
      %160 = sbr.rel (%p157) target = $region12
    $region11: #{fno_forward.15} parent=5 // pred_region
      %s161 = ssub.s32 %s11, 1
      // Predicated region
      $region13: #{fno_forward.15} parent=11 // pred_check
        %p162 = pneg %p58
      $region14: #{fno_forward.15} parent=11 // pred_check_branch
        %164 = sbr.rel (%p162) target = $region16
      $region15: #{fno_forward.15} parent=11 // pred_region
        _
      $region16: #{fno_forward.15} parent=11 // pred_fallthru
        _
      // Predicated region
      $region17: #{fno_forward.15} parent=11 // pred_check
        %p165 = pneg %p79
      $region18: #{fno_forward.15} parent=11 // pred_check_branch
        %167 = sbr.rel (%p165) target = $region20
      $region19: #{fno_forward.15} parent=11 // pred_region
        _
      $region20: #{fno_forward.15} parent=11 // pred_fallthru
        _
      // Predicated region
      $region21: #{fno_forward.15} parent=11 // pred_check
        %p168 = pneg %p100
      $region22: #{fno_forward.15} parent=11 // pred_check_branch
        %170 = sbr.rel (%p168) target = $region24
      $region23: #{fno_forward.15} parent=11 // pred_region
        _
      $region24: #{fno_forward.15} parent=11 // pred_fallthru
        _
      // Predicated region
      $region25: #{fno_forward.15} parent=11 // pred_check
        %p171 = pneg %p121
      $region26: #{fno_forward.15} parent=11 // pred_check_branch
        %173 = sbr.rel (%p171) target = $region28
      $region27: #{fno_forward.15} parent=11 // pred_region
        _
      $region28: #{fno_forward.15} parent=11 // pred_fallthru
        _
    $region12: #{fno_forward.15} parent=5 // pred_fallthru
      _
    %p174 = scmp.lt.s32.totalorder %s11, 4
    // Predicated region
    $region29: #{fno_forward.15} parent=5 // pred_check
      %p175 = pneg %p174
    $region30: #{fno_forward.15} parent=5 // pred_check_branch
      %177 = sbr.rel (%p175) target = $region32
    $region31: #{fno_forward.15} parent=5 // pred_region
      // Predicated region
      $region33: #{fno_forward.15} parent=31 // pred_check
        %p178 = pneg %p31
      $region34: #{fno_forward.15} parent=31 // pred_check_branch
        %180 = sbr.rel (%p178) target = $region36
      $region35: #{fno_forward.15} parent=31 // pred_region
        %s181 = smul.u32 16, %s11
        %p182 = scmp.lt.s32.totalorder %s181, 63
        %s183 = scalar_select %p182, %s181, 63
        %s184 = smul.addr %s183, 4
        %s185 = scalar_lea.vmem %s0, %s184
        %s186 = smul.u32 16, %s11
      $region36: #{fno_forward.15} parent=31 // pred_fallthru
        _
    $region32: #{fno_forward.15} parent=5 // pred_fallthru
      _
    %p187 = scmp.le.s32.totalorder 1, %s11
    %p188 = scmp.lt.s32.totalorder %s11, 5
    %p189 = pnand %p187, %p188
    %p190 = pneg %p189
    // Predicated region
    $region37: #{fno_forward.15} parent=5 // pred_check
      _
    $region38: #{fno_forward.15} parent=5 // pred_check_branch
      %192 = sbr.rel (%p189) target = $region40
    $region39: #{fno_forward.15} parent=5 // pred_region
      %s193 = ssub.s32 %s11, 1
      %s194 = smul.u32 16, %s16
      %p195 = scmp.lt.s32.totalorder %s194, 63
      %s196 = scalar_select %p195, %s194, 63
      %s197 = smul.addr %s196, 4
      %s198 = scalar_lea.vmem %s0, %s197
      %p199 = pneg %p37
      %p200 = pneg %p34
      %p201 = pneg %p58
      %p202 = pneg %p55
      %p203 = pneg %p79
      %p204 = pneg %p76
      %p205 = pneg %p100
      %p206 = pneg %p97
      %p207 = pneg %p121
      %p208 = pneg %p118
      %p209 = pneg %p147
      %p210 = pneg %p144
      %s211 = smul.u32 16, %s16
      %p212 = scmp.lt.s32.totalorder %s211, 63
      %s213 = scalar_select %p212, %s211, 63
      %s214 = smul.addr %s213, 8
      %s215 = scalar_lea.vmem %s5, %s214
      %s216 = smul.u32 16, %s16
      %p217 = scmp.lt.s32.totalorder %s216, 63
      %s218 = scalar_select %p217, %s216, 63
      %s219 = smul.addr %s218, 4
      %s220 = scalar_lea.vmem %s0, %s219
      %s221 = smul.u32 16, %s16
      %s222 = smul.u32 16, %s16
      %p223 = scmp.lt.s32.totalorder %s222, 63
      %s224 = scalar_select %p223, %s222, 63
      %s225 = smul.addr %s224, 8
      %s226 = scalar_lea.vmem %s5, %s225
      %s227 = smul.u32 16, %s16
      %v229 = vld [vmem:[%s220] sm:$0xf]
      %v230 = vld [vmem:[%s220 + $0x4] sm:$0xf]
      %v231 = vld [vmem:[%s220 + $0x8] sm:$0xf]
      %v232 = vld [vmem:[%s220 + $0xc] sm:$0xf]
      %v233 = vld [vmem:[%s220 + $0x10] sm:$0xf]
      %v234 = vld [vmem:[%s220 + $0x14] sm:$0xf]
      %v235 = vld [vmem:[%s220 + $0x18] sm:$0xf]
      %v236 = vld [vmem:[%s220 + $0x1c] sm:$0xf]
      %v237 = vld [vmem:[%s220 + $0x20] sm:$0xf]
      %v238 = vld [vmem:[%s220 + $0x24] sm:$0xf]
      %v239 = vld [vmem:[%s220 + $0x28] sm:$0xf]
      %v240 = vld [vmem:[%s220 + $0x2c] sm:$0xf]
      %v241 = vld [vmem:[%s220 + $0x30] sm:$0xf]
      %v242 = vld [vmem:[%s220 + $0x34] sm:$0xf]
      %v243 = vld [vmem:[%s220 + $0x38] sm:$0xf]
      %v244 = vld [vmem:[%s220 + $0x3c] sm:$0xf]
      %v245 = vld [vmem:[%s1] sm:$0xf]
      %v246 = vld [vmem:[%s1 + $0x4] sm:$0xf]
      %v247 = vld [vmem:[%s1 + $0x8] sm:$0xf]
      %v248 = vld [vmem:[%s1 + $0xc] sm:$0xf]
      %v249 = vld [vmem:[%s2] sm:$0x1]
      %v251 = vlaneseq
      %v252 = vshrl.u32 %v251, 7
      %v253 = vsub.s32 0, %v252
      %v254 = vrot.slane %v249, %v253
      %v272 = vunpack.c.l.b16 %v229
      %v273 = vunpack.c.l.b16 %v230
      %v274 = vunpack.c.l.b16 %v231
      %v275 = vunpack.c.l.b16 %v232
      %v276 = vunpack.c.l.b16 %v233
      %v277 = vunpack.c.l.b16 %v234
      %v278 = vunpack.c.l.b16 %v235
      %v279 = vunpack.c.l.b16 %v236
      %v280 = vunpack.c.l.b16 %v237
      %v281 = vunpack.c.l.b16 %v238
      %v282 = vunpack.c.l.b16 %v239
      %v283 = vunpack.c.l.b16 %v240
      %v284 = vunpack.c.l.b16 %v241
      %v285 = vunpack.c.l.b16 %v242
      %v286 = vunpack.c.l.b16 %v243
      %v287 = vunpack.c.l.b16 %v244
      %v288 = vpack.c.b16 %v273, %v272
      %v289 = vpack.c.b16 %v275, %v274
      %v290 = vpack.c.b16 %v277, %v276
      %v291 = vpack.c.b16 %v279, %v278
      %v292 = vpack.c.b16 %v281, %v280
      %v293 = vpack.c.b16 %v283, %v282
      %v294 = vpack.c.b16 %v285, %v284
      %v295 = vpack.c.b16 %v287, %v286
      %v300 = vunpack.c.l.b16 %v245
      %v301 = vunpack.c.l.b16 %v246
      %v302 = vunpack.c.l.b16 %v247
      %v303 = vunpack.c.l.b16 %v248
      %v304 = vpack.c.b16 %v301, %v300
      %v305 = vpack.c.b16 %v303, %v302
      %vm308 = vcmask 261120
      %v310 = vsel %vm308, %v288, 0
      %v313 = vsel %vm308, %v289, 0
      %v316 = vsel %vm308, %v290, 0
      %v319 = vsel %vm308, %v291, 0
      %v322 = vsel %vm308, %v292, 0
      %v325 = vsel %vm308, %v293, 0
      %v328 = vsel %vm308, %v294, 0
      %v331 = vsel %vm308, %v295, 0
      %333 = vmatprep.subr.bf16.mxu0 0
      %334 = vmatpush1.bf16.msra.mxu0 %v304
      %335 = vmatprep.subr.bf16.mxu0 0
      %336 = vmatpush1.bf16.msra.mxu0 %v305
      %337 = vmatprep.subr.bf16.mxu0 0
      %338 = vmatpush1.bf16.msra.mxu0 0
      %339 = vmatprep.subr.bf16.mxu0 0
      %340 = vmatpush1.bf16.msra.mxu0 0
      %341 = vmatprep.subr.bf16.mxu0 0
      %342 = vmatpush1.bf16.msra.mxu0 0
      %343 = vmatprep.subr.bf16.mxu0 0
      %344 = vmatpush1.bf16.msra.mxu0 0
      %345 = vmatprep.subr.bf16.mxu0 0
      %346 = vmatpush1.bf16.msra.mxu0 0
      %347 = vmatprep.subr.bf16.mxu0 0
      %348 = vmatpush1.bf16.msra.mxu0 0
      %349 = vmatprep.subr.bf16.mxu0 0
      %350 = vmatpush1.bf16.msra.mxu0 0
      %351 = vmatprep.subr.bf16.mxu0 0
      %352 = vmatpush1.bf16.msra.mxu0 0
      %353 = vmatprep.subr.bf16.mxu0 0
      %354 = vmatpush1.bf16.msra.mxu0 0
      %355 = vmatprep.subr.bf16.mxu0 0
      %356 = vmatpush1.bf16.msra.mxu0 0
      %357 = vmatprep.subr.bf16.mxu0 0
      %358 = vmatpush1.bf16.msra.mxu0 0
      %359 = vmatprep.subr.bf16.mxu0 0
      %360 = vmatpush1.bf16.msra.mxu0 0
      %361 = vmatprep.subr.bf16.mxu0 0
      %362 = vmatpush1.bf16.msra.mxu0 0
      %363 = vmatprep.subr.bf16.mxu0 0
      %364 = vmatpush1.bf16.msra.mxu0 0
      %365 = vmatprep.mubr.bf16.mxu0 0
      %366 = vmatmul.mubr.bf16.gmra.mrb[0].mxu0 %v310
      %v367 = vpop.f32.mrb[0].mxu0
      %v368 = vadd.f32 %v254, %v367
      %v369 = vpop.f32.mrb[0].mxu0
      %v370 = vpop.f32.mrb[0].mxu0
      %v371 = vadd.f32 %v254, %v370
      %v372 = vpop.f32.mrb[0].mxu0
      %373 = vmatprep.mubr.bf16.mxu0 0
      %374 = vmatmul.mubr.bf16.gmra.mrb[0].mxu0 %v313
      %v375 = vpop.f32.mrb[0].mxu0
      %v376 = vadd.f32 %v254, %v375
      %v377 = vpop.f32.mrb[0].mxu0
      %v378 = vpop.f32.mrb[0].mxu0
      %v379 = vadd.f32 %v254, %v378
      %v380 = vpop.f32.mrb[0].mxu0
      %381 = vmatprep.mubr.bf16.mxu0 0
      %382 = vmatmul.mubr.bf16.gmra.mrb[0].mxu0 %v316
      %v383 = vpop.f32.mrb[0].mxu0
      %v384 = vadd.f32 %v254, %v383
      %v385 = vpop.f32.mrb[0].mxu0
      %v386 = vpop.f32.mrb[0].mxu0
      %v387 = vadd.f32 %v254, %v386
      %v388 = vpop.f32.mrb[0].mxu0
      %389 = vmatprep.mubr.bf16.mxu0 0
      %390 = vmatmul.mubr.bf16.gmra.mrb[0].mxu0 %v319
      %v391 = vpop.f32.mrb[0].mxu0
      %v392 = vadd.f32 %v254, %v391
      %v393 = vpop.f32.mrb[0].mxu0
      %v394 = vpop.f32.mrb[0].mxu0
      %v395 = vadd.f32 %v254, %v394
      %v396 = vpop.f32.mrb[0].mxu0
      %397 = vmatprep.mubr.bf16.mxu0 0
      %398 = vmatmul.mubr.bf16.gmra.mrb[0].mxu0 %v322
      %v399 = vpop.f32.mrb[0].mxu0
      %v400 = vadd.f32 %v254, %v399
      %v401 = vpop.f32.mrb[0].mxu0
      %v402 = vpop.f32.mrb[0].mxu0
      %v403 = vadd.f32 %v254, %v402
      %v404 = vpop.f32.mrb[0].mxu0
      %405 = vmatprep.mubr.bf16.mxu0 0
      %406 = vmatmul.mubr.bf16.gmra.mrb[0].mxu0 %v325
      %v407 = vpop.f32.mrb[0].mxu0
      %v408 = vadd.f32 %v254, %v407
      %v409 = vpop.f32.mrb[0].mxu0
      %v410 = vpop.f32.mrb[0].mxu0
      %v411 = vadd.f32 %v254, %v410
      %v412 = vpop.f32.mrb[0].mxu0
      %413 = vmatprep.mubr.bf16.mxu0 0
      %414 = vmatmul.mubr.bf16.gmra.mrb[0].mxu0 %v328
      %v415 = vpop.f32.mrb[0].mxu0
      %v416 = vadd.f32 %v254, %v415
      %v417 = vpop.f32.mrb[0].mxu0
      %v418 = vpop.f32.mrb[0].mxu0
      %v419 = vadd.f32 %v254, %v418
      %v420 = vpop.f32.mrb[0].mxu0
      %421 = vmatprep.mubr.bf16.mxu0 0
      %422 = vmatmul.mubr.bf16.gmra.mrb[0].mxu0 %v331
      %v423 = vpop.f32.mrb[0].mxu0
      %v424 = vadd.f32 %v254, %v423
      %v425 = vpop.f32.mrb[0].mxu0
      %v426 = vpop.f32.mrb[0].mxu0
      %v427 = vadd.f32 %v254, %v426
      %v428 = vpop.f32.mrb[0].mxu0
      %429 = vdwg.mxu0
      %v430 = vmax.f32 %v368, 0.0
      %v431 = vmax.f32 %v371, 0.0
      %v432 = vmax.f32 %v376, 0.0
      %v433 = vmax.f32 %v379, 0.0
      %v434 = vmax.f32 %v384, 0.0
      %v435 = vmax.f32 %v387, 0.0
      %v436 = vmax.f32 %v392, 0.0
      %v437 = vmax.f32 %v395, 0.0
      %v438 = vmax.f32 %v400, 0.0
      %v439 = vmax.f32 %v403, 0.0
      %v440 = vmax.f32 %v408, 0.0
      %v441 = vmax.f32 %v411, 0.0
      %v442 = vmax.f32 %v416, 0.0
      %v443 = vmax.f32 %v419, 0.0
      %v444 = vmax.f32 %v424, 0.0
      %v445 = vmax.f32 %v427, 0.0
      %v446 = vpack.c.bf16 %v431, %v430
      %v447 = vpack.c.bf16 %v433, %v432
      %v448 = vpack.c.bf16 %v435, %v434
      %v449 = vpack.c.bf16 %v437, %v436
      %v450 = vpack.c.bf16 %v439, %v438
      %v451 = vpack.c.bf16 %v441, %v440
      %v452 = vpack.c.bf16 %v443, %v442
      %v453 = vpack.c.bf16 %v445, %v444
      %v454 = vld [vmem:[%s3] sm:$0xf]
      %v455 = vld [vmem:[%s3 + $0x4] sm:$0xf]
      %v456 = vld [vmem:[%s3 + $0x8] sm:$0xf]
      %v457 = vld [vmem:[%s3 + $0xc] sm:$0xf]
      %v458 = vld [vmem:[%s3 + $0x10] sm:$0xf]
      %v459 = vld [vmem:[%s3 + $0x14] sm:$0xf]
      %v460 = vld [vmem:[%s3 + $0x18] sm:$0xf]
      %v461 = vld [vmem:[%s3 + $0x1c] sm:$0xf]
      %v462 = vld [vmem:[%s3 + $0x20] sm:$0xf]
      %v463 = vld [vmem:[%s3 + $0x24] sm:$0xf]
      %v464 = vld [vmem:[%s3 + $0x28] sm:$0xf]
      %v465 = vld [vmem:[%s3 + $0x2c] sm:$0xf]
      %v466 = vld [vmem:[%s3 + $0x30] sm:$0xf]
      %v467 = vld [vmem:[%s3 + $0x34] sm:$0xf]
      %v468 = vld [vmem:[%s3 + $0x38] sm:$0xf]
      %v469 = vld [vmem:[%s3 + $0x3c] sm:$0xf]
      %v470 = vld [vmem:[%s4] sm:$0x1]
      %v472 = vlaneseq
      %v473 = vshrl.u32 %v472, 7
      %v474 = vsub.s32 0, %v473
      %v475 = vrot.slane %v470, %v474
      %v493 = vunpack.c.l.b16 %v454
      %v494 = vunpack.c.l.b16 %v455
      %v495 = vunpack.c.l.b16 %v456
      %v496 = vunpack.c.l.b16 %v457
      %v497 = vunpack.c.l.b16 %v458
      %v498 = vunpack.c.l.b16 %v459
      %v499 = vunpack.c.l.b16 %v460
      %v500 = vunpack.c.l.b16 %v461
      %v501 = vunpack.c.l.b16 %v462
      %v502 = vunpack.c.l.b16 %v463
      %v503 = vunpack.c.l.b16 %v464
      %v504 = vunpack.c.l.b16 %v465
      %v505 = vunpack.c.l.b16 %v466
      %v506 = vunpack.c.l.b16 %v467
      %v507 = vunpack.c.l.b16 %v468
      %v508 = vunpack.c.l.b16 %v469
      %v509 = vpack.c.b16 %v494, %v493
      %v510 = vpack.c.b16 %v496, %v495
      %v511 = vpack.c.b16 %v498, %v497
      %v512 = vpack.c.b16 %v500, %v499
      %v513 = vpack.c.b16 %v502, %v501
      %v514 = vpack.c.b16 %v504, %v503
      %v515 = vpack.c.b16 %v506, %v505
      %v516 = vpack.c.b16 %v508, %v507
      %525 = vmatprep.subr.bf16.mxu0 0
      %526 = vmatpush1.bf16.msra.mxu0 %v509
      %527 = vmatprep.subr.bf16.mxu0 0
      %528 = vmatpush1.bf16.msra.mxu0 %v510
      %529 = vmatprep.subr.bf16.mxu0 0
      %530 = vmatpush1.bf16.msra.mxu0 %v511
      %531 = vmatprep.subr.bf16.mxu0 0
      %532 = vmatpush1.bf16.msra.mxu0 %v512
      %533 = vmatprep.subr.bf16.mxu0 0
      %534 = vmatpush1.bf16.msra.mxu0 %v513
      %535 = vmatprep.subr.bf16.mxu0 0
      %536 = vmatpush1.bf16.msra.mxu0 %v514
      %537 = vmatprep.subr.bf16.mxu0 0
      %538 = vmatpush1.bf16.msra.mxu0 %v515
      %539 = vmatprep.subr.bf16.mxu0 0
      %540 = vmatpush1.bf16.msra.mxu0 %v516
      %541 = vmatprep.subr.bf16.mxu0 0
      %542 = vmatpush1.bf16.msra.mxu0 0
      %543 = vmatprep.subr.bf16.mxu0 0
      %544 = vmatpush1.bf16.msra.mxu0 0
      %545 = vmatprep.subr.bf16.mxu0 0
      %546 = vmatpush1.bf16.msra.mxu0 0
      %547 = vmatprep.subr.bf16.mxu0 0
      %548 = vmatpush1.bf16.msra.mxu0 0
      %549 = vmatprep.subr.bf16.mxu0 0
      %550 = vmatpush1.bf16.msra.mxu0 0
      %551 = vmatprep.subr.bf16.mxu0 0
      %552 = vmatpush1.bf16.msra.mxu0 0
      %553 = vmatprep.subr.bf16.mxu0 0
      %554 = vmatpush1.bf16.msra.mxu0 0
      %555 = vmatprep.subr.bf16.mxu0 0
      %556 = vmatpush1.bf16.msra.mxu0 0
      %557 = vmatprep.mubr.bf16.mxu0 0
      %558 = vmatmul.mubr.bf16.gmra.mrb[0].mxu0 %v446
      %v559 = vpop.f32.mrb[0].mxu0
      %v560 = vadd.f32 %v475, %v559
      %v561 = vpop.f32.mrb[0].mxu0
      %v562 = vpop.f32.mrb[0].mxu0
      %v563 = vadd.f32 %v475, %v562
      %v564 = vpop.f32.mrb[0].mxu0
      %565 = vmatprep.mubr.bf16.mxu0 0
      %566 = vmatmul.mubr.bf16.gmra.mrb[0].mxu0 %v447
      %v567 = vpop.f32.mrb[0].mxu0
      %v568 = vadd.f32 %v475, %v567
      %v569 = vpop.f32.mrb[0].mxu0
      %v570 = vpop.f32.mrb[0].mxu0
      %v571 = vadd.f32 %v475, %v570
      %v572 = vpop.f32.mrb[0].mxu0
      %573 = vmatprep.mubr.bf16.mxu0 0
      %574 = vmatmul.mubr.bf16.gmra.mrb[0].mxu0 %v448
      %v575 = vpop.f32.mrb[0].mxu0
      %v576 = vadd.f32 %v475, %v575
      %v577 = vpop.f32.mrb[0].mxu0
      %v578 = vpop.f32.mrb[0].mxu0
      %v579 = vadd.f32 %v475, %v578
      %v580 = vpop.f32.mrb[0].mxu0
      %581 = vmatprep.mubr.bf16.mxu0 0
      %582 = vmatmul.mubr.bf16.gmra.mrb[0].mxu0 %v449
      %v583 = vpop.f32.mrb[0].mxu0
      %v584 = vadd.f32 %v475, %v583
      %v585 = vpop.f32.mrb[0].mxu0
      %v586 = vpop.f32.mrb[0].mxu0
      %v587 = vadd.f32 %v475, %v586
      %v588 = vpop.f32.mrb[0].mxu0
      %589 = vmatprep.mubr.bf16.mxu0 0
      %590 = vmatmul.mubr.bf16.gmra.mrb[0].mxu0 %v450
      %v591 = vpop.f32.mrb[0].mxu0
      %v592 = vadd.f32 %v475, %v591
      %v593 = vpop.f32.mrb[0].mxu0
      %v594 = vpop.f32.mrb[0].mxu0
      %v595 = vadd.f32 %v475, %v594
      %v596 = vpop.f32.mrb[0].mxu0
      %597 = vmatprep.mubr.bf16.mxu0 0
      %598 = vmatmul.mubr.bf16.gmra.mrb[0].mxu0 %v451
      %v599 = vpop.f32.mrb[0].mxu0
      %v600 = vadd.f32 %v475, %v599
      %v601 = vpop.f32.mrb[0].mxu0
      %v602 = vpop.f32.mrb[0].mxu0
      %v603 = vadd.f32 %v475, %v602
      %v604 = vpop.f32.mrb[0].mxu0
      %605 = vmatprep.mubr.bf16.mxu0 0
      %606 = vmatmul.mubr.bf16.gmra.mrb[0].mxu0 %v452
      %v607 = vpop.f32.mrb[0].mxu0
      %v608 = vadd.f32 %v475, %v607
      %v609 = vpop.f32.mrb[0].mxu0
      %v610 = vpop.f32.mrb[0].mxu0
      %v611 = vadd.f32 %v475, %v610
      %v612 = vpop.f32.mrb[0].mxu0
      %613 = vmatprep.mubr.bf16.mxu0 0
      %614 = vmatmul.mubr.bf16.gmra.mrb[0].mxu0 %v453
      %v615 = vpop.f32.mrb[0].mxu0
      %v616 = vadd.f32 %v475, %v615
      %v617 = vpop.f32.mrb[0].mxu0
      %v618 = vpop.f32.mrb[0].mxu0
      %v619 = vadd.f32 %v475, %v618
      %v620 = vpop.f32.mrb[0].mxu0
      %621 = vdwg.mxu0
      %622 = vst [vmem:[%s226] sm:$0xff] %v560
      %623 = vst [vmem:[%s226 + $0x8] sm:$0xff] %v563
      %624 = vst [vmem:[%s226 + $0x10] sm:$0xff] %v568
      %625 = vst [vmem:[%s226 + $0x18] sm:$0xff] %v571
      %626 = vst [vmem:[%s226 + $0x20] sm:$0xff] %v576
      %627 = vst [vmem:[%s226 + $0x28] sm:$0xff] %v579
      %628 = vst [vmem:[%s226 + $0x30] sm:$0xff] %v584
      %629 = vst [vmem:[%s226 + $0x38] sm:$0xff] %v587
      %630 = vst [vmem:[%s226 + $0x40] sm:$0xff] %v592
      %631 = vst [vmem:[%s226 + $0x48] sm:$0xff] %v595
      %632 = vst [vmem:[%s226 + $0x50] sm:$0xff] %v600
      %633 = vst [vmem:[%s226 + $0x58] sm:$0xff] %v603
      %634 = vst [vmem:[%s226 + $0x60] sm:$0xff] %v608
      %635 = vst [vmem:[%s226 + $0x68] sm:$0xff] %v611
      %636 = vst [vmem:[%s226 + $0x70] sm:$0xff] %v616
      %637 = vst [vmem:[%s226 + $0x78] sm:$0xff] %v619
      %s638 = smul.u32 16, %s16
      %p639 = scmp.lt.s32.totalorder %s638, 63
      %s640 = scalar_select %p639, %s638, 63
      %s641 = smul.addr %s640, 8
      %s642 = scalar_lea.vmem %s5, %s641
      // Predicated region
      $region41: #{fno_forward.15} parent=39 // pred_check
        %p643 = pneg %p144
      $region42: #{fno_forward.15} parent=39 // pred_check_branch
        %645 = sbr.rel (%p643) target = $region44
      $region43: #{fno_forward.15} parent=39 // pred_region
        %s646 = smul.u32 16, %s16
      $region44: #{fno_forward.15} parent=39 // pred_fallthru
        _
    $region40: #{fno_forward.15} parent=5 // pred_fallthru
      _
    %p647 = scmp.le.s32.totalorder 2, %s11
    // Predicated region
    $region45: #{fno_forward.15} parent=5 // pred_check
      %p648 = pneg %p647
    $region46: #{fno_forward.15} parent=5 // pred_check_branch
      %650 = sbr.rel (%p648) target = $region48
    $region47: #{fno_forward.15} parent=5 // pred_region
      %s651 = ssub.s32 %s11, 2
      // Predicated region
      $region49: #{fno_forward.15} parent=47 // pred_check
        %p652 = pneg %p150
      $region50: #{fno_forward.15} parent=47 // pred_check_branch
        %654 = sbr.rel (%p652) target = $region52
      $region51: #{fno_forward.15} parent=47 // pred_region
        %s655 = smul.u32 16, %s17
        %p656 = scmp.lt.s32.totalorder %s655, 63
        %s657 = scalar_select %p656, %s655, 63
        %s658 = smul.addr %s657, 8
        %s659 = scalar_lea.vmem %s5, %s658
      $region52: #{fno_forward.15} parent=47 // pred_fallthru
        _
    $region48: #{fno_forward.15} parent=5 // pred_fallthru
      _
  $region6: #{fno_forward.15} parent=0 // loop_footer
    %s15 = sadd.s32 1, %s11
  $region7: #{fno_forward.15} parent=0 // loop_footer_branch
    %10 = sbr.rel target = $region3
  $region8: #{fno_forward.15} parent=0 // loop_exit
    _

</llo_original>
